<compile_context>
chip_gen: v7x
topology: tpu7x:2x2x1
jax: 0.10.0
libtpu: 0.0.40
codegen_flags: <defaults>
</compile_context>

<pallas_src>
import functools

import jax
import jax.numpy as jnp
import numpy as np
from jax.experimental import pallas as pl
from jax.experimental.pallas import tpu as pltpu


# -----------------------------------------------------------------------------
# pltpu.roll sign-convention probe (with concat fallback)
# -----------------------------------------------------------------------------
_ROLL_MODE = None  # "pltpu_jnp" | "pltpu_neg" | "concat"


def _detect_roll_mode():
    """Empirically determine pltpu.roll's shift convention on this jax/TPU."""
    global _ROLL_MODE
    if _ROLL_MODE is not None:
        return _ROLL_MODE
    try:
        def probe(x_ref, o_ref):
            o_ref[...] = pltpu.roll(x_ref[...], 1, 1)

        x = jnp.broadcast_to(jnp.arange(128, dtype=jnp.float32)[None, :], (8, 128))
        y = np.asarray(pl.pallas_call(
            probe, out_shape=jax.ShapeDtypeStruct((8, 128), jnp.float32))(x))
        # jnp.roll convention: element at lane 0 moves to lane 1.
        _ROLL_MODE = "pltpu_jnp" if y[0, 1] == 0.0 else "pltpu_neg"
    except Exception:  # pragma: no cover - safety net if roll fails to lower
        _ROLL_MODE = "concat"
    return _ROLL_MODE


def _roll_lanes(x, jnp_shift, length, mode):
    """Equivalent of jnp.roll(x, jnp_shift, axis=-1); XLU rotate when possible."""
    s = int(jnp_shift) % length
    if s == 0:
        return x
    if mode == "concat":
        k = length - s  # left-rotate by (L - s) == jnp.roll(x, s)
        return jnp.concatenate([x[:, k:], x[:, :k]], axis=1)
    shift = s if mode == "pltpu_jnp" else (length - s)
    return pltpu.roll(x, shift, x.ndim - 1)


# -----------------------------------------------------------------------------
# In-kernel helpers
# -----------------------------------------------------------------------------
def _tree_sum(terms):
    """Pairwise (tree) accumulation: halves dependency depth vs a serial chain."""
    terms = list(terms)
    while len(terms) > 1:
        nxt = [terms[i] + terms[i + 1] for i in range(0, len(terms) - 1, 2)]
        if len(terms) % 2:
            nxt.append(terms[-1])
        terms = nxt
    return terms[0]


def _stable_sigmoid_kernel(z):
    """Overflow-safe logistic; divide replaced by EUP approximate reciprocal."""
    ez = jnp.exp(-jnp.abs(z))                      # exp(-|z|) in (0, 1]
    inv = pl.reciprocal(1.0 + ez, approx=True)
    return jnp.where(z >= 0, inv, ez * inv)


def _gate_kernel(y, left, right, t):
    return y * (_stable_sigmoid_kernel(t * (y - right))
                + _stable_sigmoid_kernel(-t * (y + left)))


# -----------------------------------------------------------------------------
# Fused FMWN kernel: all analysis levels + per-band HT + all synthesis levels
# -----------------------------------------------------------------------------
def _fmwn_fused_kernel(*refs, m, lf, level, length, t, roll_mode):
    it = iter(refs)
    x_ref = next(it)                               # (BT, L) f32, VMEM
    mask_ref = next(it)                            # (level, L) keep masks
    sel_refs = [next(it) for _ in range(level)]    # (L, L/m**(lev+1)) 0/1
    filt_ref = next(it)                            # (m, lf) SMEM
    thrl_ref = next(it)                            # (level, m-1) SMEM
    thrr_ref = next(it)                            # (level, m-1) SMEM
    tal_ref = next(it)                             # (1,) SMEM
    tar_ref = next(it)                             # (1,) SMEM
    re_ref = next(it)                              # (BT, L)
    dec_refs = [next(it) for _ in range(level)]    # (m-1, BT, L/m**(lev+1))
    low_ref = next(it)                             # (BT, L/m**level)
    det_scr = next(it)                             # VMEM scratch (n_det, BT, L)

    rot = functools.partial(_roll_lanes, length=length, mode=roll_mode)

    x = x_ref[...]

    # Hoist all filter taps (SMEM scalars) once; CF => shared across levels.
    h = [[filt_ref[band, j] for j in range(lf)] for band in range(m)]

    # ----------------- analysis ("algorithme a trous") -----------------
    low = x
    for lev in range(level):
        p_in = m ** lev                            # tap stride at this level
        # lf lane rotations per level -> XLU (free slot in this VPU kernel)
        rolled = [rot(low, -(p_in * j)) for j in range(lf)]
        bands = [_tree_sum([rolled[j] * h[band][j] for j in range(lf)])
                 for band in range(m)]
        for band in range(1, m):                   # detail bands -> learnable HT
            td = _gate_kernel(bands[band],
                              thrl_ref[lev, band - 1],
                              thrr_ref[lev, band - 1], t)
            det_scr[lev * (m - 1) + band - 1, :, :] = td
            # decimated, lane-dense coefficient writeback via the idle MXU
            dec_refs[lev][band - 1, :, :] = jnp.dot(
                td, sel_refs[lev][...], preferred_element_type=jnp.float32)
        low = bands[0]                             # intermediate low-pass: no HT

    # final low-pass threshold (thre_a) + decimated writeback
    low_t = _gate_kernel(low, tal_ref[0], tar_ref[0], t)
    low_ref[...] = jnp.dot(low_t, sel_refs[level - 1][...],
                           preferred_element_type=jnp.float32)

    # ----------------- synthesis (exact adjoint of analysis) -----------------
    rec = low_t
    for lev in range(level - 1, -1, -1):
        p_in = m ** lev
        keep = mask_ref[pl.ds(lev, 1), :]          # (1, L): keep m**(lev+1) grid
        bands_syn = [rec * keep]
        for band in range(1, m):                   # re-read from VMEM scratch
            bands_syn.append(det_scr[lev * (m - 1) + band - 1, :, :] * keep)
        terms = []
        for j in range(lf):
            mix = _tree_sum([bands_syn[band] * h[band][j] for band in range(m)])
            terms.append(rot(mix, p_in * j))       # right-rotate = jnp.roll(+s)
        rec = _tree_sum(terms)
    re_ref[...] = rec


def _fmwn_pallas(sig, masks, sels, filters, thr_left, thr_right, ta_left,
                 ta_right, *, m, k, level, t, b_tile, roll_mode):
    b, length = sig.shape
    assert b % b_tile == 0
    lf = m * k
    n_det_per_lev = m - 1
    dec_lens = [length // m ** (lev + 1) for lev in range(level)]

    kernel = functools.partial(_fmwn_fused_kernel, m=m, lf=lf, level=level,
                               length=length, t=float(t), roll_mode=roll_mode)

    in_specs = (
        [pl.BlockSpec((b_tile, length), lambda i: (i, 0)),        # signal
         pl.BlockSpec((level, length), lambda i: (0, 0))]         # keep masks
        + [pl.BlockSpec((length, dec_lens[lev]), lambda i: (0, 0))  # selection
           for lev in range(level)]
        + [pl.BlockSpec(memory_space=pltpu.MemorySpace.SMEM)] * 5)  # params

    out_shape = tuple(
        [jax.ShapeDtypeStruct((b, length), jnp.float32)]
        + [jax.ShapeDtypeStruct((n_det_per_lev, b, dec_lens[lev]), jnp.float32)
           for lev in range(level)]
        + [jax.ShapeDtypeStruct((b, dec_lens[-1]), jnp.float32)])

    out_specs = tuple(
        [pl.BlockSpec((b_tile, length), lambda i: (i, 0))]
        + [pl.BlockSpec((n_det_per_lev, b_tile, dec_lens[lev]),
                        lambda i: (0, i, 0)) for lev in range(level)]
        + [pl.BlockSpec((b_tile, dec_lens[-1]), lambda i: (i, 0))])

    outs = pl.pallas_call(
        kernel,
        out_shape=out_shape,
        grid=(b // b_tile,),
        in_specs=in_specs,
        out_specs=out_specs,
        scratch_shapes=[pltpu.VMEM((level * n_det_per_lev, b_tile, length),
                                   jnp.float32)],
        compiler_params=pltpu.CompilerParams(
            dimension_semantics=("parallel",),
            vmem_limit_bytes=32 * 1024 * 1024),
    )(sig, masks, *sels, filters, thr_left, thr_right, ta_left, ta_right)

    re2d = outs[0]
    dec = list(outs[1:1 + level])
    low = outs[1 + level]
    return re2d, dec, low


# -----------------------------------------------------------------------------
# Glue: filter loss, threshold sums, coefficient packing (pure JAX)
# -----------------------------------------------------------------------------
def filter_loss(filters, m, k, coeff):
    h = filters                                    # (M, M*K)
    fc = (jnp.sum(h[0]) - jnp.sqrt(jnp.float32(m))) ** 2
    for i in range(1, m):
        fc = fc + jnp.sum(h[i]) ** 2
    km = k * m
    width = k * m + (k - 1) * m
    p = jnp.zeros((km, width), dtype=jnp.float32)
    q = jnp.zeros((km, width), dtype=jnp.float32)
    for i in range(k):
        p = p.at[i * m:(i + 1) * m, i * m:i * m + m * k].set(h)
    for i in range(k):
        for j in range(k):
            q = q.at[i * m:(i + 1) * m,
                     i * m + j * m:i * m + (j + 1) * m].set(h[:, j * m:(j + 1) * m].T)
    eye = jnp.eye(km, dtype=jnp.float32)
    orth = (jnp.sum(jnp.square(p @ p.T - eye))
            + jnp.sum(jnp.square(q @ q.T - eye)))
    return coeff * fc + orth


def fmwn_forward(x, params, *, m_band, k_reg, level, t, filter_coeff,
                 b_tile, roll_mode):
    b, l_in, ch = x.shape
    assert ch == 1
    assert l_in % (m_band ** level) == 0
    assert b % b_tile == 0

    filters = params["filters"].astype(jnp.float32)      # (M, M*K), shared (CF)
    thr_left = params["thr_left"].astype(jnp.float32)    # (level, M-1)
    thr_right = params["thr_right"].astype(jnp.float32)  # (level, M-1)
    ta_left = params["thre_a_left"].astype(jnp.float32)  # (1,)
    ta_right = params["thre_a_right"].astype(jnp.float32)

    sig = x[..., 0].astype(jnp.float32)                  # (B, L)

    pos = np.arange(l_in)
    masks = jnp.asarray(np.stack(
        [(pos % (m_band ** (lev + 1)) == 0).astype(np.float32)
         for lev in range(level)]))                      # (level, L)

    # 0/1 lane-compaction ("decimation") matrices for the in-kernel MXU matmul.
    sels = []
    for lev in range(level):
        p = m_band ** (lev + 1)
        sels.append(jnp.asarray(
            (pos[:, None] == np.arange(l_in // p)[None, :] * p).astype(np.float32)))

    re2d, dec, low = _fmwn_pallas(
        sig, masks, sels, filters, thr_left, thr_right, ta_left, ta_right,
        m=m_band, k=k_reg, level=level, t=t, b_tile=b_tile, roll_mode=roll_mode)

    all_coefficients = []
    for lev in range(level):
        all_coefficients.append(
            [dec[lev][band][..., None] for band in range(m_band - 1)])
    all_coefficients.append([low[..., None]])

    re_signal = re2d[..., None]                          # (B, L, 1)
    v_loss_filters = filter_loss(filters, m_band, k_reg, filter_coeff)

    # hard-threshold sum (thre_a re-added every level, as in the torch code)
    ht = jnp.float32(0.0)
    for lev in range(level):
        ht = ht + jnp.sum(thr_left[lev]) + jnp.sum(thr_right[lev])
        ht = ht + jnp.sum(ta_left) + jnp.sum(ta_right)

    return re_signal, all_coefficients, v_loss_filters, ht


# -----------------------------------------------------------------------------
# Pure-JAX decimated reference (same circular-conv / threshold assumptions)
# -----------------------------------------------------------------------------
def _stable_sigmoid_ref(z):
    ez = jnp.exp(-jnp.abs(z))
    return jnp.where(z >= 0, 1.0 / (1.0 + ez), ez / (1.0 + ez))


def _gate_ref(y, left, right, t):
    return y * (_stable_sigmoid_ref(t * (y - right))
                + _stable_sigmoid_ref(-t * (y + left)))


def _reference_forward(sig, filters, thr_left, thr_right, ta_left, ta_right,
                       *, m, level, t):
    lf = filters.shape[1]

    def analysis(xv):
        bb, lin = xv.shape
        lout = lin // m
        n = jnp.arange(lout)
        out = []
        for band in range(m):
            acc = jnp.zeros((bb, lout), jnp.float32)
            for j in range(lf):
                acc = acc + filters[band, j] * xv[:, (m * n + j) % lin]
            out.append(acc)
        return out

    def synthesis(coefs):
        bb, lout = coefs[0].shape
        lin = lout * m
        idx = (m * jnp.arange(lout)[:, None] + jnp.arange(lf)[None, :]) % lin
        rec = jnp.zeros((bb, lin), jnp.float32)
        for band in range(m):
            contrib = coefs[band][:, :, None] * filters[band][None, None, :]
            rec = rec.at[:, idx].add(contrib)
        return rec

    low = sig
    details = []
    for lev in range(level):
        bands = analysis(low)
        details.append([_gate_ref(bands[band], thr_left[lev, band - 1],
                                  thr_right[lev, band - 1], t)
                        for band in range(1, m)])
        low = bands[0]
    low_t = _gate_ref(low, ta_left[0], ta_right[0], t)

    rec = low_t
    for lev in range(level - 1, -1, -1):
        rec = synthesis([rec] + details[lev])
    return rec, details, low_t


# -----------------------------------------------------------------------------
# Driver
# -----------------------------------------------------------------------------
if __name__ == "__main__":
    B = 16                 # 2 grid steps of 8 sublane-dense rows
    L = 1152               # 9 * 128 -> lane-dense at every level (1152/384/128)
    M_BAND = 3             # m = [3, 3]
    K_REG = 2              # k = [2, 2]
    LEVEL = 2
    T_TEMP = 100.0
    FILTER_COEFF = 1.0
    B_TILE = 8

    roll_mode = _detect_roll_mode()

    key = jax.random.PRNGKey(0)
    k_x, k_f = jax.random.split(key)

    x = jax.random.normal(k_x, (B, L, 1), dtype=jnp.float32)

    lf = M_BAND * K_REG    # FIR filter length = M * K
    params = {
        "filters": jax.random.normal(k_f, (M_BAND, lf), dtype=jnp.float32)
        / jnp.sqrt(jnp.float32(lf)),
        "thr_left": jnp.ones((LEVEL, M_BAND - 1), jnp.float32),   # initHT=1.0
        "thr_right": jnp.ones((LEVEL, M_BAND - 1), jnp.float32),
        "thre_a_left": jnp.ones((1,), jnp.float32),
        "thre_a_right": jnp.ones((1,), jnp.float32),
    }

    fwd = jax.jit(functools.partial(
        fmwn_forward, m_band=M_BAND, k_reg=K_REG, level=LEVEL,
        t=T_TEMP, filter_coeff=FILTER_COEFF, b_tile=B_TILE,
        roll_mode=roll_mode))

    re_signal, all_coeffs, v_loss, ht = fwd(x, params)
    jax.block_until_ready((re_signal, all_coeffs, v_loss, ht))

    # shape checks
    assert re_signal.shape == (B, L, 1)
    assert len(all_coeffs) == LEVEL + 1
    for lev in range(LEVEL):
        for c in all_coeffs[lev]:
            assert c.shape == (B, L // M_BAND ** (lev + 1), 1)
    assert all_coeffs[-1][0].shape == (B, L // M_BAND ** LEVEL, 1)
    assert np.isfinite(float(v_loss)) and np.isfinite(float(ht))

    # numerical self-check vs the decimated pure-JAX reference.  Tolerance is
    # loosened vs 1e-3 to accommodate pl.reciprocal(approx=True) in the steep
    # (t=100) threshold gate; structural bugs would be O(0.1-1) errors.
    RTOL, ATOL = 1e-2, 5e-2
    ref_re, ref_details, ref_low = _reference_forward(
        x[..., 0].astype(jnp.float32), params["filters"],
        params["thr_left"], params["thr_right"],
        params["thre_a_left"], params["thre_a_right"],
        m=M_BAND, level=LEVEL, t=T_TEMP)
    np.testing.assert_allclose(np.asarray(re_signal[..., 0]),
                               np.asarray(ref_re), rtol=RTOL, atol=ATOL)
    for lev in range(LEVEL):
        for band in range(M_BAND - 1):
            np.testing.assert_allclose(
                np.asarray(all_coeffs[lev][band][..., 0]),
                np.asarray(ref_details[lev][band]), rtol=RTOL, atol=ATOL)
    np.testing.assert_allclose(np.asarray(all_coeffs[-1][0][..., 0]),
                               np.asarray(ref_low), rtol=RTOL, atol=ATOL)

    print("KERNEL_OK")
</pallas_src>

<mosaic_0001>
module attributes {stable_mosaic.version = 11 : i64} {
  func.func @probe(%arg0: memref<8x128xf32, #tpu.memory_space<vmem>>, %arg1: memref<8x128xf32, #tpu.memory_space<vmem>>) attributes {dimension_semantics = [], scalar_prefetch = 0 : i64, scratch_operands = 0 : i64, tpu.core_type = #tpu.core_type<tc>} {
    %c0 = arith.constant 0 : index
    %c0_0 = arith.constant 0 : index
    %0 = vector.load %arg0[%c0, %c0_0] : memref<8x128xf32, #tpu.memory_space<vmem>>, vector<8x128xf32>
    %c1_i32 = arith.constant 1 : i32
    %1 = tpu.dynamic_rotate %0 by %c1_i32 dim 1 : vector<8x128xf32>, i32 -> vector<8x128xf32>
    %c0_1 = arith.constant 0 : index
    %c0_2 = arith.constant 0 : index
    %2 = vector.load %arg1[%c0_1, %c0_2] : memref<8x128xf32, #tpu.memory_space<vmem>>, vector<8x128xf32>
    tpu.vector_store %arg1[%c0_1, %c0_2], %1 {strides = array<i32>} : memref<8x128xf32, #tpu.memory_space<vmem>>, vector<8x128xf32>,
    return
  }
}

module attributes {stable_mosaic.version = 11 : i64} {
  func.func @_fmwn_fused_kernel(%arg0: i32, %arg1: memref<8x1152xf32, #tpu.memory_space<vmem>>, %arg2: memref<2x1152xf32, #tpu.memory_space<vmem>>, %arg3: memref<1152x384xf32, #tpu.memory_space<vmem>>, %arg4: memref<1152x128xf32, #tpu.memory_space<vmem>>, %arg5: memref<3x6xf32, #tpu.memory_space<smem>>, %arg6: memref<2x2xf32, #tpu.memory_space<smem>>, %arg7: memref<2x2xf32, #tpu.memory_space<smem>>, %arg8: memref<1xf32, #tpu.memory_space<smem>>, %arg9: memref<1xf32, #tpu.memory_space<smem>>, %arg10: memref<8x1152xf32, #tpu.memory_space<vmem>>, %arg11: memref<2x8x384xf32, #tpu.memory_space<vmem>>, %arg12: memref<2x8x128xf32, #tpu.memory_space<vmem>>, %arg13: memref<8x128xf32, #tpu.memory_space<vmem>>, %arg14: memref<4x8x1152xf32, #tpu.memory_space<vmem>>) attributes {dimension_semantics = [#tpu.dimension_semantics<parallel>], iteration_bounds = array<i64: 2>, scalar_prefetch = 0 : i64, scratch_operands = 1 : i64, tpu.core_type = #tpu.core_type<tc>, window_params = [{transform_indices = @transform_0, window_bounds = array<i64: 8, 1152>}, {pipeline_mode = #tpu.pipeline_mode<synchronous>, transform_indices = @transform_1, window_bounds = array<i64: 2, 1152>}, {pipeline_mode = #tpu.pipeline_mode<synchronous>, transform_indices = @transform_2, window_bounds = array<i64: 1152, 384>}, {pipeline_mode = #tpu.pipeline_mode<synchronous>, transform_indices = @transform_3, window_bounds = array<i64: 1152, 128>}, {transform_indices = @transform_4, window_bounds = array<i64: 3, 6>}, {transform_indices = @transform_5, window_bounds = array<i64: 2, 2>}, {transform_indices = @transform_6, window_bounds = array<i64: 2, 2>}, {transform_indices = @transform_7, window_bounds = array<i64: 1>}, {transform_indices = @transform_8, window_bounds = array<i64: 1>}, {transform_indices = @transform_9, window_bounds = array<i64: 8, 1152>}, {transform_indices = @transform_10, window_bounds = array<i64: 2, 8, 384>}, {transform_indices = @transform_11, window_bounds = array<i64: 2, 8, 128>}, {transform_indices = @transform_12, window_bounds = array<i64: 8, 128>}]} {
    %c0 = arith.constant 0 : index
    %c0_0 = arith.constant 0 : index
    %0 = vector.load %arg1[%c0, %c0_0] : memref<8x1152xf32, #tpu.memory_space<vmem>>, vector<8x1152xf32>
    %c0_1 = arith.constant 0 : index
    %c0_2 = arith.constant 0 : index
    %1 = memref.load %arg5[%c0_1, %c0_2] : memref<3x6xf32, #tpu.memory_space<smem>>
    %c0_3 = arith.constant 0 : index
    %c1 = arith.constant 1 : index
    %2 = memref.load %arg5[%c0_3, %c1] : memref<3x6xf32, #tpu.memory_space<smem>>
    %c0_4 = arith.constant 0 : index
    %c2 = arith.constant 2 : index
    %3 = memref.load %arg5[%c0_4, %c2] : memref<3x6xf32, #tpu.memory_space<smem>>
    %c0_5 = arith.constant 0 : index
    %c3 = arith.constant 3 : index
    %4 = memref.load %arg5[%c0_5, %c3] : memref<3x6xf32, #tpu.memory_space<smem>>
    %c0_6 = arith.constant 0 : index
    %c4 = arith.constant 4 : index
    %5 = memref.load %arg5[%c0_6, %c4] : memref<3x6xf32, #tpu.memory_space<smem>>
    %c0_7 = arith.constant 0 : index
    %c5 = arith.constant 5 : index
    %6 = memref.load %arg5[%c0_7, %c5] : memref<3x6xf32, #tpu.memory_space<smem>>
    %c1_8 = arith.constant 1 : index
    %c0_9 = arith.constant 0 : index
    %7 = memref.load %arg5[%c1_8, %c0_9] : memref<3x6xf32, #tpu.memory_space<smem>>
    %c1_10 = arith.constant 1 : index
    %c1_11 = arith.constant 1 : index
    %8 = memref.load %arg5[%c1_10, %c1_11] : memref<3x6xf32, #tpu.memory_space<smem>>
    %c1_12 = arith.constant 1 : index
    %c2_13 = arith.constant 2 : index
    %9 = memref.load %arg5[%c1_12, %c2_13] : memref<3x6xf32, #tpu.memory_space<smem>>
    %c1_14 = arith.constant 1 : index
    %c3_15 = arith.constant 3 : index
    %10 = memref.load %arg5[%c1_14, %c3_15] : memref<3x6xf32, #tpu.memory_space<smem>>
    %c1_16 = arith.constant 1 : index
    %c4_17 = arith.constant 4 : index
    %11 = memref.load %arg5[%c1_16, %c4_17] : memref<3x6xf32, #tpu.memory_space<smem>>
    %c1_18 = arith.constant 1 : index
    %c5_19 = arith.constant 5 : index
    %12 = memref.load %arg5[%c1_18, %c5_19] : memref<3x6xf32, #tpu.memory_space<smem>>
    %c2_20 = arith.constant 2 : index
    %c0_21 = arith.constant 0 : index
    %13 = memref.load %arg5[%c2_20, %c0_21] : memref<3x6xf32, #tpu.memory_space<smem>>
    %c2_22 = arith.constant 2 : index
    %c1_23 = arith.constant 1 : index
    %14 = memref.load %arg5[%c2_22, %c1_23] : memref<3x6xf32, #tpu.memory_space<smem>>
    %c2_24 = arith.constant 2 : index
    %c2_25 = arith.constant 2 : index
    %15 = memref.load %arg5[%c2_24, %c2_25] : memref<3x6xf32, #tpu.memory_space<smem>>
    %c2_26 = arith.constant 2 : index
    %c3_27 = arith.constant 3 : index
    %16 = memref.load %arg5[%c2_26, %c3_27] : memref<3x6xf32, #tpu.memory_space<smem>>
    %c2_28 = arith.constant 2 : index
    %c4_29 = arith.constant 4 : index
    %17 = memref.load %arg5[%c2_28, %c4_29] : memref<3x6xf32, #tpu.memory_space<smem>>
    %c2_30 = arith.constant 2 : index
    %c5_31 = arith.constant 5 : index
    %18 = memref.load %arg5[%c2_30, %c5_31] : memref<3x6xf32, #tpu.memory_space<smem>>
    %19 = vector.extract_strided_slice %0 {offsets = [0, 1], sizes = [8, 1151], strides = [1, 1]} : vector<8x1152xf32> to vector<8x1151xf32>
    %20 = vector.extract_strided_slice %0 {offsets = [0, 0], sizes = [8, 1], strides = [1, 1]} : vector<8x1152xf32> to vector<8x1xf32>
    %21 = tpu.concatenate %19, %20 in 1 : vector<8x1151xf32>, vector<8x1xf32> -> vector<8x1152xf32>
    %22 = vector.extract_strided_slice %0 {offsets = [0, 2], sizes = [8, 1150], strides = [1, 1]} : vector<8x1152xf32> to vector<8x1150xf32>
    %23 = vector.extract_strided_slice %0 {offsets = [0, 0], sizes = [8, 2], strides = [1, 1]} : vector<8x1152xf32> to vector<8x2xf32>
    %24 = tpu.concatenate %22, %23 in 1 : vector<8x1150xf32>, vector<8x2xf32> -> vector<8x1152xf32>
    %25 = vector.extract_strided_slice %0 {offsets = [0, 3], sizes = [8, 1149], strides = [1, 1]} : vector<8x1152xf32> to vector<8x1149xf32>
    %26 = vector.extract_strided_slice %0 {offsets = [0, 0], sizes = [8, 3], strides = [1, 1]} : vector<8x1152xf32> to vector<8x3xf32>
    %27 = tpu.concatenate %25, %26 in 1 : vector<8x1149xf32>, vector<8x3xf32> -> vector<8x1152xf32>
    %28 = vector.extract_strided_slice %0 {offsets = [0, 4], sizes = [8, 1148], strides = [1, 1]} : vector<8x1152xf32> to vector<8x1148xf32>
    %29 = vector.extract_strided_slice %0 {offsets = [0, 0], sizes = [8, 4], strides = [1, 1]} : vector<8x1152xf32> to vector<8x4xf32>
    %30 = tpu.concatenate %28, %29 in 1 : vector<8x1148xf32>, vector<8x4xf32> -> vector<8x1152xf32>
    %31 = vector.extract_strided_slice %0 {offsets = [0, 5], sizes = [8, 1147], strides = [1, 1]} : vector<8x1152xf32> to vector<8x1147xf32>
    %32 = vector.extract_strided_slice %0 {offsets = [0, 0], sizes = [8, 5], strides = [1, 1]} : vector<8x1152xf32> to vector<8x5xf32>
    %33 = tpu.concatenate %31, %32 in 1 : vector<8x1147xf32>, vector<8x5xf32> -> vector<8x1152xf32>
    %34 = vector.broadcast %1 : f32 to vector<8x1152xf32>
    %35 = arith.mulf %0, %34 : vector<8x1152xf32>
    %36 = vector.broadcast %2 : f32 to vector<8x1152xf32>
    %37 = arith.mulf %21, %36 : vector<8x1152xf32>
    %38 = vector.broadcast %3 : f32 to vector<8x1152xf32>
    %39 = arith.mulf %24, %38 : vector<8x1152xf32>
    %40 = vector.broadcast %4 : f32 to vector<8x1152xf32>
    %41 = arith.mulf %27, %40 : vector<8x1152xf32>
    %42 = vector.broadcast %5 : f32 to vector<8x1152xf32>
    %43 = arith.mulf %30, %42 : vector<8x1152xf32>
    %44 = vector.broadcast %6 : f32 to vector<8x1152xf32>
    %45 = arith.mulf %33, %44 : vector<8x1152xf32>
    %46 = arith.addf %35, %37 : vector<8x1152xf32>
    %47 = arith.addf %39, %41 : vector<8x1152xf32>
    %48 = arith.addf %43, %45 : vector<8x1152xf32>
    %49 = arith.addf %46, %47 : vector<8x1152xf32>
    %50 = arith.addf %49, %48 : vector<8x1152xf32>
    %51 = vector.broadcast %7 : f32 to vector<8x1152xf32>
    %52 = arith.mulf %0, %51 : vector<8x1152xf32>
    %53 = vector.broadcast %8 : f32 to vector<8x1152xf32>
    %54 = arith.mulf %21, %53 : vector<8x1152xf32>
    %55 = vector.broadcast %9 : f32 to vector<8x1152xf32>
    %56 = arith.mulf %24, %55 : vector<8x1152xf32>
    %57 = vector.broadcast %10 : f32 to vector<8x1152xf32>
    %58 = arith.mulf %27, %57 : vector<8x1152xf32>
    %59 = vector.broadcast %11 : f32 to vector<8x1152xf32>
    %60 = arith.mulf %30, %59 : vector<8x1152xf32>
    %61 = vector.broadcast %12 : f32 to vector<8x1152xf32>
    %62 = arith.mulf %33, %61 : vector<8x1152xf32>
    %63 = arith.addf %52, %54 : vector<8x1152xf32>
    %64 = arith.addf %56, %58 : vector<8x1152xf32>
    %65 = arith.addf %60, %62 : vector<8x1152xf32>
    %66 = arith.addf %63, %64 : vector<8x1152xf32>
    %67 = arith.addf %66, %65 : vector<8x1152xf32>
    %68 = vector.broadcast %13 : f32 to vector<8x1152xf32>
    %69 = arith.mulf %0, %68 : vector<8x1152xf32>
    %70 = vector.broadcast %14 : f32 to vector<8x1152xf32>
    %71 = arith.mulf %21, %70 : vector<8x1152xf32>
    %72 = vector.broadcast %15 : f32 to vector<8x1152xf32>
    %73 = arith.mulf %24, %72 : vector<8x1152xf32>
    %74 = vector.broadcast %16 : f32 to vector<8x1152xf32>
    %75 = arith.mulf %27, %74 : vector<8x1152xf32>
    %76 = vector.broadcast %17 : f32 to vector<8x1152xf32>
    %77 = arith.mulf %30, %76 : vector<8x1152xf32>
    %78 = vector.broadcast %18 : f32 to vector<8x1152xf32>
    %79 = arith.mulf %33, %78 : vector<8x1152xf32>
    %80 = arith.addf %69, %71 : vector<8x1152xf32>
    %81 = arith.addf %73, %75 : vector<8x1152xf32>
    %82 = arith.addf %77, %79 : vector<8x1152xf32>
    %83 = arith.addf %80, %81 : vector<8x1152xf32>
    %84 = arith.addf %83, %82 : vector<8x1152xf32>
    %c0_32 = arith.constant 0 : index
    %c0_33 = arith.constant 0 : index
    %85 = memref.load %arg6[%c0_32, %c0_33] : memref<2x2xf32, #tpu.memory_space<smem>>
    %c0_34 = arith.constant 0 : index
    %c0_35 = arith.constant 0 : index
    %86 = memref.load %arg7[%c0_34, %c0_35] : memref<2x2xf32, #tpu.memory_space<smem>>
    %87 = vector.broadcast %86 : f32 to vector<8x1152xf32>
    %88 = arith.subf %67, %87 : vector<8x1152xf32>
    %cst = arith.constant 1.000000e+02 : f32
    %89 = vector.broadcast %cst : f32 to vector<8x1152xf32>
    %90 = arith.mulf %89, %88 : vector<8x1152xf32>
    %91 = math.absf %90 : vector<8x1152xf32>
    %cst_36 = arith.constant 0.000000e+00 : f32
    %92 = vector.broadcast %cst_36 : f32 to vector<8x1152xf32>
    %93 = arith.subf %92, %91 : vector<8x1152xf32>
    %94 = math.exp %93 : vector<8x1152xf32>
    %cst_37 = arith.constant 1.000000e+00 : f32
    %95 = vector.broadcast %cst_37 : f32 to vector<8x1152xf32>
    %96 = arith.addf %95, %94 : vector<8x1152xf32>
    %97 = tpu.reciprocal %96 {approx = true} : vector<8x1152xf32> -> vector<8x1152xf32>
    %cst_38 = arith.constant 0.000000e+00 : f32
    %98 = vector.broadcast %cst_38 : f32 to vector<8x1152xf32>
    %99 = arith.cmpf oge, %90, %98 : vector<8x1152xf32>
    %100 = arith.mulf %94, %97 : vector<8x1152xf32>
    %101 = arith.select %99, %97, %100 : vector<8x1152xi1>, vector<8x1152xf32>
    %102 = vector.broadcast %85 : f32 to vector<8x1152xf32>
    %103 = arith.addf %67, %102 : vector<8x1152xf32>
    %cst_39 = arith.constant -1.000000e+02 : f32
    %104 = vector.broadcast %cst_39 : f32 to vector<8x1152xf32>
    %105 = arith.mulf %104, %103 : vector<8x1152xf32>
    %106 = math.absf %105 : vector<8x1152xf32>
    %cst_40 = arith.constant 0.000000e+00 : f32
    %107 = vector.broadcast %cst_40 : f32 to vector<8x1152xf32>
    %108 = arith.subf %107, %106 : vector<8x1152xf32>
    %109 = math.exp %108 : vector<8x1152xf32>
    %cst_41 = arith.constant 1.000000e+00 : f32
    %110 = vector.broadcast %cst_41 : f32 to vector<8x1152xf32>
    %111 = arith.addf %110, %109 : vector<8x1152xf32>
    %112 = tpu.reciprocal %111 {approx = true} : vector<8x1152xf32> -> vector<8x1152xf32>
    %cst_42 = arith.constant 0.000000e+00 : f32
    %113 = vector.broadcast %cst_42 : f32 to vector<8x1152xf32>
    %114 = arith.cmpf oge, %105, %113 : vector<8x1152xf32>
    %115 = arith.mulf %109, %112 : vector<8x1152xf32>
    %116 = arith.select %114, %112, %115 : vector<8x1152xi1>, vector<8x1152xf32>
    %117 = arith.addf %101, %116 : vector<8x1152xf32>
    %118 = arith.mulf %67, %117 : vector<8x1152xf32>
    %c0_43 = arith.constant 0 : index
    %c0_44 = arith.constant 0 : index
    %c0_45 = arith.constant 0 : index
    %119 = vector.load %arg14[%c0_43, %c0_44, %c0_45] : memref<4x8x1152xf32, #tpu.memory_space<vmem>>, vector<1x8x1152xf32>
    %120 = vector.shape_cast %119 : vector<1x8x1152xf32> to vector<8x1152xf32>
    %121 = vector.shape_cast %118 : vector<8x1152xf32> to vector<1x8x1152xf32>
    tpu.vector_store %arg14[%c0_43, %c0_44, %c0_45], %121 {strides = array<i32>} : memref<4x8x1152xf32, #tpu.memory_space<vmem>>, vector<1x8x1152xf32>,
    %c0_46 = arith.constant 0 : index
    %c0_47 = arith.constant 0 : index
    %122 = vector.load %arg3[%c0_46, %c0_47] : memref<1152x384xf32, #tpu.memory_space<vmem>>, vector<1152x384xf32>
    %cst_48 = arith.constant dense<0.000000e+00> : vector<8x384xf32>
    %123 = tpu.matmul %118, %122, %cst_48 {dimension_numbers = #tpu.dot_dimension_numbers<[1], [0], [0], [1], [0, 0, 1, 1], [], []>} : vector<8x1152xf32>, vector<1152x384xf32>, vector<8x384xf32> -> vector<8x384xf32>
    %c0_49 = arith.constant 0 : index
    %c0_50 = arith.constant 0 : index
    %c0_51 = arith.constant 0 : index
    %124 = vector.load %arg11[%c0_49, %c0_50, %c0_51] : memref<2x8x384xf32, #tpu.memory_space<vmem>>, vector<1x8x384xf32>
    %125 = vector.shape_cast %124 : vector<1x8x384xf32> to vector<8x384xf32>
    %126 = vector.shape_cast %123 : vector<8x384xf32> to vector<1x8x384xf32>
    tpu.vector_store %arg11[%c0_49, %c0_50, %c0_51], %126 {strides = array<i32>} : memref<2x8x384xf32, #tpu.memory_space<vmem>>, vector<1x8x384xf32>,
    %c0_52 = arith.constant 0 : index
    %c1_53 = arith.constant 1 : index
    %127 = memref.load %arg6[%c0_52, %c1_53] : memref<2x2xf32, #tpu.memory_space<smem>>
    %c0_54 = arith.constant 0 : index
    %c1_55 = arith.constant 1 : index
    %128 = memref.load %arg7[%c0_54, %c1_55] : memref<2x2xf32, #tpu.memory_space<smem>>
    %129 = vector.broadcast %128 : f32 to vector<8x1152xf32>
    %130 = arith.subf %84, %129 : vector<8x1152xf32>
    %cst_56 = arith.constant 1.000000e+02 : f32
    %131 = vector.broadcast %cst_56 : f32 to vector<8x1152xf32>
    %132 = arith.mulf %131, %130 : vector<8x1152xf32>
    %133 = math.absf %132 : vector<8x1152xf32>
    %cst_57 = arith.constant 0.000000e+00 : f32
    %134 = vector.broadcast %cst_57 : f32 to vector<8x1152xf32>
    %135 = arith.subf %134, %133 : vector<8x1152xf32>
    %136 = math.exp %135 : vector<8x1152xf32>
    %cst_58 = arith.constant 1.000000e+00 : f32
    %137 = vector.broadcast %cst_58 : f32 to vector<8x1152xf32>
    %138 = arith.addf %137, %136 : vector<8x1152xf32>
    %139 = tpu.reciprocal %138 {approx = true} : vector<8x1152xf32> -> vector<8x1152xf32>
    %cst_59 = arith.constant 0.000000e+00 : f32
    %140 = vector.broadcast %cst_59 : f32 to vector<8x1152xf32>
    %141 = arith.cmpf oge, %132, %140 : vector<8x1152xf32>
    %142 = arith.mulf %136, %139 : vector<8x1152xf32>
    %143 = arith.select %141, %139, %142 : vector<8x1152xi1>, vector<8x1152xf32>
    %144 = vector.broadcast %127 : f32 to vector<8x1152xf32>
    %145 = arith.addf %84, %144 : vector<8x1152xf32>
    %cst_60 = arith.constant -1.000000e+02 : f32
    %146 = vector.broadcast %cst_60 : f32 to vector<8x1152xf32>
    %147 = arith.mulf %146, %145 : vector<8x1152xf32>
    %148 = math.absf %147 : vector<8x1152xf32>
    %cst_61 = arith.constant 0.000000e+00 : f32
    %149 = vector.broadcast %cst_61 : f32 to vector<8x1152xf32>
    %150 = arith.subf %149, %148 : vector<8x1152xf32>
    %151 = math.exp %150 : vector<8x1152xf32>
    %cst_62 = arith.constant 1.000000e+00 : f32
    %152 = vector.broadcast %cst_62 : f32 to vector<8x1152xf32>
    %153 = arith.addf %152, %151 : vector<8x1152xf32>
    %154 = tpu.reciprocal %153 {approx = true} : vector<8x1152xf32> -> vector<8x1152xf32>
    %cst_63 = arith.constant 0.000000e+00 : f32
    %155 = vector.broadcast %cst_63 : f32 to vector<8x1152xf32>
    %156 = arith.cmpf oge, %147, %155 : vector<8x1152xf32>
    %157 = arith.mulf %151, %154 : vector<8x1152xf32>
    %158 = arith.select %156, %154, %157 : vector<8x1152xi1>, vector<8x1152xf32>
    %159 = arith.addf %143, %158 : vector<8x1152xf32>
    %160 = arith.mulf %84, %159 : vector<8x1152xf32>
    %c1_64 = arith.constant 1 : index
    %c0_65 = arith.constant 0 : index
    %c0_66 = arith.constant 0 : index
    %161 = vector.load %arg14[%c1_64, %c0_65, %c0_66] : memref<4x8x1152xf32, #tpu.memory_space<vmem>>, vector<1x8x1152xf32>
    %162 = vector.shape_cast %161 : vector<1x8x1152xf32> to vector<8x1152xf32>
    %163 = vector.shape_cast %160 : vector<8x1152xf32> to vector<1x8x1152xf32>
    tpu.vector_store %arg14[%c1_64, %c0_65, %c0_66], %163 {strides = array<i32>} : memref<4x8x1152xf32, #tpu.memory_space<vmem>>, vector<1x8x1152xf32>,
    %c0_67 = arith.constant 0 : index
    %c0_68 = arith.constant 0 : index
    %164 = vector.load %arg3[%c0_67, %c0_68] : memref<1152x384xf32, #tpu.memory_space<vmem>>, vector<1152x384xf32>
    %cst_69 = arith.constant dense<0.000000e+00> : vector<8x384xf32>
    %165 = tpu.matmul %160, %164, %cst_69 {dimension_numbers = #tpu.dot_dimension_numbers<[1], [0], [0], [1], [0, 0, 1, 1], [], []>} : vector<8x1152xf32>, vector<1152x384xf32>, vector<8x384xf32> -> vector<8x384xf32>
    %c1_70 = arith.constant 1 : index
    %c0_71 = arith.constant 0 : index
    %c0_72 = arith.constant 0 : index
    %166 = vector.load %arg11[%c1_70, %c0_71, %c0_72] : memref<2x8x384xf32, #tpu.memory_space<vmem>>, vector<1x8x384xf32>
    %167 = vector.shape_cast %166 : vector<1x8x384xf32> to vector<8x384xf32>
    %168 = vector.shape_cast %165 : vector<8x384xf32> to vector<1x8x384xf32>
    tpu.vector_store %arg11[%c1_70, %c0_71, %c0_72], %168 {strides = array<i32>} : memref<2x8x384xf32, #tpu.memory_space<vmem>>, vector<1x8x384xf32>,
    %169 = vector.extract_strided_slice %50 {offsets = [0, 3], sizes = [8, 1149], strides = [1, 1]} : vector<8x1152xf32> to vector<8x1149xf32>
    %170 = vector.extract_strided_slice %50 {offsets = [0, 0], sizes = [8, 3], strides = [1, 1]} : vector<8x1152xf32> to vector<8x3xf32>
    %171 = tpu.concatenate %169, %170 in 1 : vector<8x1149xf32>, vector<8x3xf32> -> vector<8x1152xf32>
    %172 = vector.extract_strided_slice %50 {offsets = [0, 6], sizes = [8, 1146], strides = [1, 1]} : vector<8x1152xf32> to vector<8x1146xf32>
    %173 = vector.extract_strided_slice %50 {offsets = [0, 0], sizes = [8, 6], strides = [1, 1]} : vector<8x1152xf32> to vector<8x6xf32>
    %174 = tpu.concatenate %172, %173 in 1 : vector<8x1146xf32>, vector<8x6xf32> -> vector<8x1152xf32>
    %175 = vector.extract_strided_slice %50 {offsets = [0, 9], sizes = [8, 1143], strides = [1, 1]} : vector<8x1152xf32> to vector<8x1143xf32>
    %176 = vector.extract_strided_slice %50 {offsets = [0, 0], sizes = [8, 9], strides = [1, 1]} : vector<8x1152xf32> to vector<8x9xf32>
    %177 = tpu.concatenate %175, %176 in 1 : vector<8x1143xf32>, vector<8x9xf32> -> vector<8x1152xf32>
    %178 = vector.extract_strided_slice %50 {offsets = [0, 12], sizes = [8, 1140], strides = [1, 1]} : vector<8x1152xf32> to vector<8x1140xf32>
    %179 = vector.extract_strided_slice %50 {offsets = [0, 0], sizes = [8, 12], strides = [1, 1]} : vector<8x1152xf32> to vector<8x12xf32>
    %180 = tpu.concatenate %178, %179 in 1 : vector<8x1140xf32>, vector<8x12xf32> -> vector<8x1152xf32>
    %181 = vector.extract_strided_slice %50 {offsets = [0, 15], sizes = [8, 1137], strides = [1, 1]} : vector<8x1152xf32> to vector<8x1137xf32>
    %182 = vector.extract_strided_slice %50 {offsets = [0, 0], sizes = [8, 15], strides = [1, 1]} : vector<8x1152xf32> to vector<8x15xf32>
    %183 = tpu.concatenate %181, %182 in 1 : vector<8x1137xf32>, vector<8x15xf32> -> vector<8x1152xf32>
    %184 = vector.broadcast %1 : f32 to vector<8x1152xf32>
    %185 = arith.mulf %50, %184 : vector<8x1152xf32>
    %186 = vector.broadcast %2 : f32 to vector<8x1152xf32>
    %187 = arith.mulf %171, %186 : vector<8x1152xf32>
    %188 = vector.broadcast %3 : f32 to vector<8x1152xf32>
    %189 = arith.mulf %174, %188 : vector<8x1152xf32>
    %190 = vector.broadcast %4 : f32 to vector<8x1152xf32>
    %191 = arith.mulf %177, %190 : vector<8x1152xf32>
    %192 = vector.broadcast %5 : f32 to vector<8x1152xf32>
    %193 = arith.mulf %180, %192 : vector<8x1152xf32>
    %194 = vector.broadcast %6 : f32 to vector<8x1152xf32>
    %195 = arith.mulf %183, %194 : vector<8x1152xf32>
    %196 = arith.addf %185, %187 : vector<8x1152xf32>
    %197 = arith.addf %189, %191 : vector<8x1152xf32>
    %198 = arith.addf %193, %195 : vector<8x1152xf32>
    %199 = arith.addf %196, %197 : vector<8x1152xf32>
    %200 = arith.addf %199, %198 : vector<8x1152xf32>
    %201 = vector.broadcast %7 : f32 to vector<8x1152xf32>
    %202 = arith.mulf %50, %201 : vector<8x1152xf32>
    %203 = vector.broadcast %8 : f32 to vector<8x1152xf32>
    %204 = arith.mulf %171, %203 : vector<8x1152xf32>
    %205 = vector.broadcast %9 : f32 to vector<8x1152xf32>
    %206 = arith.mulf %174, %205 : vector<8x1152xf32>
    %207 = vector.broadcast %10 : f32 to vector<8x1152xf32>
    %208 = arith.mulf %177, %207 : vector<8x1152xf32>
    %209 = vector.broadcast %11 : f32 to vector<8x1152xf32>
    %210 = arith.mulf %180, %209 : vector<8x1152xf32>
    %211 = vector.broadcast %12 : f32 to vector<8x1152xf32>
    %212 = arith.mulf %183, %211 : vector<8x1152xf32>
    %213 = arith.addf %202, %204 : vector<8x1152xf32>
    %214 = arith.addf %206, %208 : vector<8x1152xf32>
    %215 = arith.addf %210, %212 : vector<8x1152xf32>
    %216 = arith.addf %213, %214 : vector<8x1152xf32>
    %217 = arith.addf %216, %215 : vector<8x1152xf32>
    %218 = vector.broadcast %13 : f32 to vector<8x1152xf32>
    %219 = arith.mulf %50, %218 : vector<8x1152xf32>
    %220 = vector.broadcast %14 : f32 to vector<8x1152xf32>
    %221 = arith.mulf %171, %220 : vector<8x1152xf32>
    %222 = vector.broadcast %15 : f32 to vector<8x1152xf32>
    %223 = arith.mulf %174, %222 : vector<8x1152xf32>
    %224 = vector.broadcast %16 : f32 to vector<8x1152xf32>
    %225 = arith.mulf %177, %224 : vector<8x1152xf32>
    %226 = vector.broadcast %17 : f32 to vector<8x1152xf32>
    %227 = arith.mulf %180, %226 : vector<8x1152xf32>
    %228 = vector.broadcast %18 : f32 to vector<8x1152xf32>
    %229 = arith.mulf %183, %228 : vector<8x1152xf32>
    %230 = arith.addf %219, %221 : vector<8x1152xf32>
    %231 = arith.addf %223, %225 : vector<8x1152xf32>
    %232 = arith.addf %227, %229 : vector<8x1152xf32>
    %233 = arith.addf %230, %231 : vector<8x1152xf32>
    %234 = arith.addf %233, %232 : vector<8x1152xf32>
    %c1_73 = arith.constant 1 : index
    %c0_74 = arith.constant 0 : index
    %235 = memref.load %arg6[%c1_73, %c0_74] : memref<2x2xf32, #tpu.memory_space<smem>>
    %c1_75 = arith.constant 1 : index
    %c0_76 = arith.constant 0 : index
    %236 = memref.load %arg7[%c1_75, %c0_76] : memref<2x2xf32, #tpu.memory_space<smem>>
    %237 = vector.broadcast %236 : f32 to vector<8x1152xf32>
    %238 = arith.subf %217, %237 : vector<8x1152xf32>
    %cst_77 = arith.constant 1.000000e+02 : f32
    %239 = vector.broadcast %cst_77 : f32 to vector<8x1152xf32>
    %240 = arith.mulf %239, %238 : vector<8x1152xf32>
    %241 = math.absf %240 : vector<8x1152xf32>
    %cst_78 = arith.constant 0.000000e+00 : f32
    %242 = vector.broadcast %cst_78 : f32 to vector<8x1152xf32>
    %243 = arith.subf %242, %241 : vector<8x1152xf32>
    %244 = math.exp %243 : vector<8x1152xf32>
    %cst_79 = arith.constant 1.000000e+00 : f32
    %245 = vector.broadcast %cst_79 : f32 to vector<8x1152xf32>
    %246 = arith.addf %245, %244 : vector<8x1152xf32>
    %247 = tpu.reciprocal %246 {approx = true} : vector<8x1152xf32> -> vector<8x1152xf32>
    %cst_80 = arith.constant 0.000000e+00 : f32
    %248 = vector.broadcast %cst_80 : f32 to vector<8x1152xf32>
    %249 = arith.cmpf oge, %240, %248 : vector<8x1152xf32>
    %250 = arith.mulf %244, %247 : vector<8x1152xf32>
    %251 = arith.select %249, %247, %250 : vector<8x1152xi1>, vector<8x1152xf32>
    %252 = vector.broadcast %235 : f32 to vector<8x1152xf32>
    %253 = arith.addf %217, %252 : vector<8x1152xf32>
    %cst_81 = arith.constant -1.000000e+02 : f32
    %254 = vector.broadcast %cst_81 : f32 to vector<8x1152xf32>
    %255 = arith.mulf %254, %253 : vector<8x1152xf32>
    %256 = math.absf %255 : vector<8x1152xf32>
    %cst_82 = arith.constant 0.000000e+00 : f32
    %257 = vector.broadcast %cst_82 : f32 to vector<8x1152xf32>
    %258 = arith.subf %257, %256 : vector<8x1152xf32>
    %259 = math.exp %258 : vector<8x1152xf32>
    %cst_83 = arith.constant 1.000000e+00 : f32
    %260 = vector.broadcast %cst_83 : f32 to vector<8x1152xf32>
    %261 = arith.addf %260, %259 : vector<8x1152xf32>
    %262 = tpu.reciprocal %261 {approx = true} : vector<8x1152xf32> -> vector<8x1152xf32>
    %cst_84 = arith.constant 0.000000e+00 : f32
    %263 = vector.broadcast %cst_84 : f32 to vector<8x1152xf32>
    %264 = arith.cmpf oge, %255, %263 : vector<8x1152xf32>
    %265 = arith.mulf %259, %262 : vector<8x1152xf32>
    %266 = arith.select %264, %262, %265 : vector<8x1152xi1>, vector<8x1152xf32>
    %267 = arith.addf %251, %266 : vector<8x1152xf32>
    %268 = arith.mulf %217, %267 : vector<8x1152xf32>
    %c2_85 = arith.constant 2 : index
    %c0_86 = arith.constant 0 : index
    %c0_87 = arith.constant 0 : index
    %269 = vector.load %arg14[%c2_85, %c0_86, %c0_87] : memref<4x8x1152xf32, #tpu.memory_space<vmem>>, vector<1x8x1152xf32>
    %270 = vector.shape_cast %269 : vector<1x8x1152xf32> to vector<8x1152xf32>
    %271 = vector.shape_cast %268 : vector<8x1152xf32> to vector<1x8x1152xf32>
    tpu.vector_store %arg14[%c2_85, %c0_86, %c0_87], %271 {strides = array<i32>} : memref<4x8x1152xf32, #tpu.memory_space<vmem>>, vector<1x8x1152xf32>,
    %c0_88 = arith.constant 0 : index
    %c0_89 = arith.constant 0 : index
    %272 = vector.load %arg4[%c0_88, %c0_89] : memref<1152x128xf32, #tpu.memory_space<vmem>>, vector<1152x128xf32>
    %cst_90 = arith.constant dense<0.000000e+00> : vector<8x128xf32>
    %273 = tpu.matmul %268, %272, %cst_90 {dimension_numbers = #tpu.dot_dimension_numbers<[1], [0], [0], [1], [0, 0, 1, 1], [], []>} : vector<8x1152xf32>, vector<1152x128xf32>, vector<8x128xf32> -> vector<8x128xf32>
    %c0_91 = arith.constant 0 : index
    %c0_92 = arith.constant 0 : index
    %c0_93 = arith.constant 0 : index
    %274 = vector.load %arg12[%c0_91, %c0_92, %c0_93] : memref<2x8x128xf32, #tpu.memory_space<vmem>>, vector<1x8x128xf32>
    %275 = vector.shape_cast %274 : vector<1x8x128xf32> to vector<8x128xf32>
    %276 = vector.shape_cast %273 : vector<8x128xf32> to vector<1x8x128xf32>
    tpu.vector_store %arg12[%c0_91, %c0_92, %c0_93], %276 {strides = array<i32>} : memref<2x8x128xf32, #tpu.memory_space<vmem>>, vector<1x8x128xf32>,
    %c1_94 = arith.constant 1 : index
    %c1_95 = arith.constant 1 : index
    %277 = memref.load %arg6[%c1_94, %c1_95] : memref<2x2xf32, #tpu.memory_space<smem>>
    %c1_96 = arith.constant 1 : index
    %c1_97 = arith.constant 1 : index
    %278 = memref.load %arg7[%c1_96, %c1_97] : memref<2x2xf32, #tpu.memory_space<smem>>
    %279 = vector.broadcast %278 : f32 to vector<8x1152xf32>
    %280 = arith.subf %234, %279 : vector<8x1152xf32>
    %cst_98 = arith.constant 1.000000e+02 : f32
    %281 = vector.broadcast %cst_98 : f32 to vector<8x1152xf32>
    %282 = arith.mulf %281, %280 : vector<8x1152xf32>
    %283 = math.absf %282 : vector<8x1152xf32>
    %cst_99 = arith.constant 0.000000e+00 : f32
    %284 = vector.broadcast %cst_99 : f32 to vector<8x1152xf32>
    %285 = arith.subf %284, %283 : vector<8x1152xf32>
    %286 = math.exp %285 : vector<8x1152xf32>
    %cst_100 = arith.constant 1.000000e+00 : f32
    %287 = vector.broadcast %cst_100 : f32 to vector<8x1152xf32>
    %288 = arith.addf %287, %286 : vector<8x1152xf32>
    %289 = tpu.reciprocal %288 {approx = true} : vector<8x1152xf32> -> vector<8x1152xf32>
    %cst_101 = arith.constant 0.000000e+00 : f32
    %290 = vector.broadcast %cst_101 : f32 to vector<8x1152xf32>
    %291 = arith.cmpf oge, %282, %290 : vector<8x1152xf32>
    %292 = arith.mulf %286, %289 : vector<8x1152xf32>
    %293 = arith.select %291, %289, %292 : vector<8x1152xi1>, vector<8x1152xf32>
    %294 = vector.broadcast %277 : f32 to vector<8x1152xf32>
    %295 = arith.addf %234, %294 : vector<8x1152xf32>
    %cst_102 = arith.constant -1.000000e+02 : f32
    %296 = vector.broadcast %cst_102 : f32 to vector<8x1152xf32>
    %297 = arith.mulf %296, %295 : vector<8x1152xf32>
    %298 = math.absf %297 : vector<8x1152xf32>
    %cst_103 = arith.constant 0.000000e+00 : f32
    %299 = vector.broadcast %cst_103 : f32 to vector<8x1152xf32>
    %300 = arith.subf %299, %298 : vector<8x1152xf32>
    %301 = math.exp %300 : vector<8x1152xf32>
    %cst_104 = arith.constant 1.000000e+00 : f32
    %302 = vector.broadcast %cst_104 : f32 to vector<8x1152xf32>
    %303 = arith.addf %302, %301 : vector<8x1152xf32>
    %304 = tpu.reciprocal %303 {approx = true} : vector<8x1152xf32> -> vector<8x1152xf32>
    %cst_105 = arith.constant 0.000000e+00 : f32
    %305 = vector.broadcast %cst_105 : f32 to vector<8x1152xf32>
    %306 = arith.cmpf oge, %297, %305 : vector<8x1152xf32>
    %307 = arith.mulf %301, %304 : vector<8x1152xf32>
    %308 = arith.select %306, %304, %307 : vector<8x1152xi1>, vector<8x1152xf32>
    %309 = arith.addf %293, %308 : vector<8x1152xf32>
    %310 = arith.mulf %234, %309 : vector<8x1152xf32>
    %c3_106 = arith.constant 3 : index
    %c0_107 = arith.constant 0 : index
    %c0_108 = arith.constant 0 : index
    %311 = vector.load %arg14[%c3_106, %c0_107, %c0_108] : memref<4x8x1152xf32, #tpu.memory_space<vmem>>, vector<1x8x1152xf32>
    %312 = vector.shape_cast %311 : vector<1x8x1152xf32> to vector<8x1152xf32>
    %313 = vector.shape_cast %310 : vector<8x1152xf32> to vector<1x8x1152xf32>
    tpu.vector_store %arg14[%c3_106, %c0_107, %c0_108], %313 {strides = array<i32>} : memref<4x8x1152xf32, #tpu.memory_space<vmem>>, vector<1x8x1152xf32>,
    %c0_109 = arith.constant 0 : index
    %c0_110 = arith.constant 0 : index
    %314 = vector.load %arg4[%c0_109, %c0_110] : memref<1152x128xf32, #tpu.memory_space<vmem>>, vector<1152x128xf32>
    %cst_111 = arith.constant dense<0.000000e+00> : vector<8x128xf32>
    %315 = tpu.matmul %310, %314, %cst_111 {dimension_numbers = #tpu.dot_dimension_numbers<[1], [0], [0], [1], [0, 0, 1, 1], [], []>} : vector<8x1152xf32>, vector<1152x128xf32>, vector<8x128xf32> -> vector<8x128xf32>
    %c1_112 = arith.constant 1 : index
    %c0_113 = arith.constant 0 : index
    %c0_114 = arith.constant 0 : index
    %316 = vector.load %arg12[%c1_112, %c0_113, %c0_114] : memref<2x8x128xf32, #tpu.memory_space<vmem>>, vector<1x8x128xf32>
    %317 = vector.shape_cast %316 : vector<1x8x128xf32> to vector<8x128xf32>
    %318 = vector.shape_cast %315 : vector<8x128xf32> to vector<1x8x128xf32>
    tpu.vector_store %arg12[%c1_112, %c0_113, %c0_114], %318 {strides = array<i32>} : memref<2x8x128xf32, #tpu.memory_space<vmem>>, vector<1x8x128xf32>,
    %c0_115 = arith.constant 0 : index
    %319 = memref.load %arg8[%c0_115] : memref<1xf32, #tpu.memory_space<smem>>
    %c0_116 = arith.constant 0 : index
    %320 = memref.load %arg9[%c0_116] : memref<1xf32, #tpu.memory_space<smem>>
    %321 = vector.broadcast %320 : f32 to vector<8x1152xf32>
    %322 = arith.subf %200, %321 : vector<8x1152xf32>
    %cst_117 = arith.constant 1.000000e+02 : f32
    %323 = vector.broadcast %cst_117 : f32 to vector<8x1152xf32>
    %324 = arith.mulf %323, %322 : vector<8x1152xf32>
    %325 = math.absf %324 : vector<8x1152xf32>
    %cst_118 = arith.constant 0.000000e+00 : f32
    %326 = vector.broadcast %cst_118 : f32 to vector<8x1152xf32>
    %327 = arith.subf %326, %325 : vector<8x1152xf32>
    %328 = math.exp %327 : vector<8x1152xf32>
    %cst_119 = arith.constant 1.000000e+00 : f32
    %329 = vector.broadcast %cst_119 : f32 to vector<8x1152xf32>
    %330 = arith.addf %329, %328 : vector<8x1152xf32>
    %331 = tpu.reciprocal %330 {approx = true} : vector<8x1152xf32> -> vector<8x1152xf32>
    %cst_120 = arith.constant 0.000000e+00 : f32
    %332 = vector.broadcast %cst_120 : f32 to vector<8x1152xf32>
    %333 = arith.cmpf oge, %324, %332 : vector<8x1152xf32>
    %334 = arith.mulf %328, %331 : vector<8x1152xf32>
    %335 = arith.select %333, %331, %334 : vector<8x1152xi1>, vector<8x1152xf32>
    %336 = vector.broadcast %319 : f32 to vector<8x1152xf32>
    %337 = arith.addf %200, %336 : vector<8x1152xf32>
    %cst_121 = arith.constant -1.000000e+02 : f32
    %338 = vector.broadcast %cst_121 : f32 to vector<8x1152xf32>
    %339 = arith.mulf %338, %337 : vector<8x1152xf32>
    %340 = math.absf %339 : vector<8x1152xf32>
    %cst_122 = arith.constant 0.000000e+00 : f32
    %341 = vector.broadcast %cst_122 : f32 to vector<8x1152xf32>
    %342 = arith.subf %341, %340 : vector<8x1152xf32>
    %343 = math.exp %342 : vector<8x1152xf32>
    %cst_123 = arith.constant 1.000000e+00 : f32
    %344 = vector.broadcast %cst_123 : f32 to vector<8x1152xf32>
    %345 = arith.addf %344, %343 : vector<8x1152xf32>
    %346 = tpu.reciprocal %345 {approx = true} : vector<8x1152xf32> -> vector<8x1152xf32>
    %cst_124 = arith.constant 0.000000e+00 : f32
    %347 = vector.broadcast %cst_124 : f32 to vector<8x1152xf32>
    %348 = arith.cmpf oge, %339, %347 : vector<8x1152xf32>
    %349 = arith.mulf %343, %346 : vector<8x1152xf32>
    %350 = arith.select %348, %346, %349 : vector<8x1152xi1>, vector<8x1152xf32>
    %351 = arith.addf %335, %350 : vector<8x1152xf32>
    %352 = arith.mulf %200, %351 : vector<8x1152xf32>
    %c0_125 = arith.constant 0 : index
    %c0_126 = arith.constant 0 : index
    %353 = vector.load %arg4[%c0_125, %c0_126] : memref<1152x128xf32, #tpu.memory_space<vmem>>, vector<1152x128xf32>
    %cst_127 = arith.constant dense<0.000000e+00> : vector<8x128xf32>
    %354 = tpu.matmul %352, %353, %cst_127 {dimension_numbers = #tpu.dot_dimension_numbers<[1], [0], [0], [1], [0, 0, 1, 1], [], []>} : vector<8x1152xf32>, vector<1152x128xf32>, vector<8x128xf32> -> vector<8x128xf32>
    %c0_128 = arith.constant 0 : index
    %c0_129 = arith.constant 0 : index
    %355 = vector.load %arg13[%c0_128, %c0_129] : memref<8x128xf32, #tpu.memory_space<vmem>>, vector<8x128xf32>
    tpu.vector_store %arg13[%c0_128, %c0_129], %354 {strides = array<i32>} : memref<8x128xf32, #tpu.memory_space<vmem>>, vector<8x128xf32>,
    %c1_130 = arith.constant 1 : index
    %c0_131 = arith.constant 0 : index
    %356 = vector.load %arg2[%c1_130, %c0_131] : memref<2x1152xf32, #tpu.memory_space<vmem>>, vector<1x1152xf32>
    %357 = vector.broadcast %356 : vector<1x1152xf32> to vector<8x1152xf32>
    %358 = arith.mulf %352, %357 : vector<8x1152xf32>
    %c2_132 = arith.constant 2 : index
    %c0_133 = arith.constant 0 : index
    %c0_134 = arith.constant 0 : index
    %359 = vector.load %arg14[%c2_132, %c0_133, %c0_134] : memref<4x8x1152xf32, #tpu.memory_space<vmem>>, vector<1x8x1152xf32>
    %360 = vector.shape_cast %359 : vector<1x8x1152xf32> to vector<8x1152xf32>
    %361 = vector.broadcast %356 : vector<1x1152xf32> to vector<8x1152xf32>
    %362 = arith.mulf %360, %361 : vector<8x1152xf32>
    %c3_135 = arith.constant 3 : index
    %c0_136 = arith.constant 0 : index
    %c0_137 = arith.constant 0 : index
    %363 = vector.load %arg14[%c3_135, %c0_136, %c0_137] : memref<4x8x1152xf32, #tpu.memory_space<vmem>>, vector<1x8x1152xf32>
    %364 = vector.shape_cast %363 : vector<1x8x1152xf32> to vector<8x1152xf32>
    %365 = vector.broadcast %356 : vector<1x1152xf32> to vector<8x1152xf32>
    %366 = arith.mulf %364, %365 : vector<8x1152xf32>
    %367 = vector.broadcast %1 : f32 to vector<8x1152xf32>
    %368 = arith.mulf %358, %367 : vector<8x1152xf32>
    %369 = vector.broadcast %7 : f32 to vector<8x1152xf32>
    %370 = arith.mulf %362, %369 : vector<8x1152xf32>
    %371 = vector.broadcast %13 : f32 to vector<8x1152xf32>
    %372 = arith.mulf %366, %371 : vector<8x1152xf32>
    %373 = arith.addf %368, %370 : vector<8x1152xf32>
    %374 = arith.addf %373, %372 : vector<8x1152xf32>
    %375 = vector.broadcast %2 : f32 to vector<8x1152xf32>
    %376 = arith.mulf %358, %375 : vector<8x1152xf32>
    %377 = vector.broadcast %8 : f32 to vector<8x1152xf32>
    %378 = arith.mulf %362, %377 : vector<8x1152xf32>
    %379 = vector.broadcast %14 : f32 to vector<8x1152xf32>
    %380 = arith.mulf %366, %379 : vector<8x1152xf32>
    %381 = arith.addf %376, %378 : vector<8x1152xf32>
    %382 = arith.addf %381, %380 : vector<8x1152xf32>
    %383 = vector.extract_strided_slice %382 {offsets = [0, 1149], sizes = [8, 3], strides = [1, 1]} : vector<8x1152xf32> to vector<8x3xf32>
    %384 = vector.extract_strided_slice %382 {offsets = [0, 0], sizes = [8, 1149], strides = [1, 1]} : vector<8x1152xf32> to vector<8x1149xf32>
    %385 = tpu.concatenate %383, %384 in 1 : vector<8x3xf32>, vector<8x1149xf32> -> vector<8x1152xf32>
    %386 = vector.broadcast %3 : f32 to vector<8x1152xf32>
    %387 = arith.mulf %358, %386 : vector<8x1152xf32>
    %388 = vector.broadcast %9 : f32 to vector<8x1152xf32>
    %389 = arith.mulf %362, %388 : vector<8x1152xf32>
    %390 = vector.broadcast %15 : f32 to vector<8x1152xf32>
    %391 = arith.mulf %366, %390 : vector<8x1152xf32>
    %392 = arith.addf %387, %389 : vector<8x1152xf32>
    %393 = arith.addf %392, %391 : vector<8x1152xf32>
    %394 = vector.extract_strided_slice %393 {offsets = [0, 1146], sizes = [8, 6], strides = [1, 1]} : vector<8x1152xf32> to vector<8x6xf32>
    %395 = vector.extract_strided_slice %393 {offsets = [0, 0], sizes = [8, 1146], strides = [1, 1]} : vector<8x1152xf32> to vector<8x1146xf32>
    %396 = tpu.concatenate %394, %395 in 1 : vector<8x6xf32>, vector<8x1146xf32> -> vector<8x1152xf32>
    %397 = vector.broadcast %4 : f32 to vector<8x1152xf32>
    %398 = arith.mulf %358, %397 : vector<8x1152xf32>
    %399 = vector.broadcast %10 : f32 to vector<8x1152xf32>
    %400 = arith.mulf %362, %399 : vector<8x1152xf32>
    %401 = vector.broadcast %16 : f32 to vector<8x1152xf32>
    %402 = arith.mulf %366, %401 : vector<8x1152xf32>
    %403 = arith.addf %398, %400 : vector<8x1152xf32>
    %404 = arith.addf %403, %402 : vector<8x1152xf32>
    %405 = vector.extract_strided_slice %404 {offsets = [0, 1143], sizes = [8, 9], strides = [1, 1]} : vector<8x1152xf32> to vector<8x9xf32>
    %406 = vector.extract_strided_slice %404 {offsets = [0, 0], sizes = [8, 1143], strides = [1, 1]} : vector<8x1152xf32> to vector<8x1143xf32>
    %407 = tpu.concatenate %405, %406 in 1 : vector<8x9xf32>, vector<8x1143xf32> -> vector<8x1152xf32>
    %408 = vector.broadcast %5 : f32 to vector<8x1152xf32>
    %409 = arith.mulf %358, %408 : vector<8x1152xf32>
    %410 = vector.broadcast %11 : f32 to vector<8x1152xf32>
    %411 = arith.mulf %362, %410 : vector<8x1152xf32>
    %412 = vector.broadcast %17 : f32 to vector<8x1152xf32>
    %413 = arith.mulf %366, %412 : vector<8x1152xf32>
    %414 = arith.addf %409, %411 : vector<8x1152xf32>
    %415 = arith.addf %414, %413 : vector<8x1152xf32>
    %416 = vector.extract_strided_slice %415 {offsets = [0, 1140], sizes = [8, 12], strides = [1, 1]} : vector<8x1152xf32> to vector<8x12xf32>
    %417 = vector.extract_strided_slice %415 {offsets = [0, 0], sizes = [8, 1140], strides = [1, 1]} : vector<8x1152xf32> to vector<8x1140xf32>
    %418 = tpu.concatenate %416, %417 in 1 : vector<8x12xf32>, vector<8x1140xf32> -> vector<8x1152xf32>
    %419 = vector.broadcast %6 : f32 to vector<8x1152xf32>
    %420 = arith.mulf %358, %419 : vector<8x1152xf32>
    %421 = vector.broadcast %12 : f32 to vector<8x1152xf32>
    %422 = arith.mulf %362, %421 : vector<8x1152xf32>
    %423 = vector.broadcast %18 : f32 to vector<8x1152xf32>
    %424 = arith.mulf %366, %423 : vector<8x1152xf32>
    %425 = arith.addf %420, %422 : vector<8x1152xf32>
    %426 = arith.addf %425, %424 : vector<8x1152xf32>
    %427 = vector.extract_strided_slice %426 {offsets = [0, 1137], sizes = [8, 15], strides = [1, 1]} : vector<8x1152xf32> to vector<8x15xf32>
    %428 = vector.extract_strided_slice %426 {offsets = [0, 0], sizes = [8, 1137], strides = [1, 1]} : vector<8x1152xf32> to vector<8x1137xf32>
    %429 = tpu.concatenate %427, %428 in 1 : vector<8x15xf32>, vector<8x1137xf32> -> vector<8x1152xf32>
    %430 = arith.addf %374, %385 : vector<8x1152xf32>
    %431 = arith.addf %396, %407 : vector<8x1152xf32>
    %432 = arith.addf %418, %429 : vector<8x1152xf32>
    %433 = arith.addf %430, %431 : vector<8x1152xf32>
    %434 = arith.addf %433, %432 : vector<8x1152xf32>
    %c0_138 = arith.constant 0 : index
    %c0_139 = arith.constant 0 : index
    %435 = vector.load %arg2[%c0_138, %c0_139] : memref<2x1152xf32, #tpu.memory_space<vmem>>, vector<1x1152xf32>
    %436 = vector.broadcast %435 : vector<1x1152xf32> to vector<8x1152xf32>
    %437 = arith.mulf %434, %436 : vector<8x1152xf32>
    %c0_140 = arith.constant 0 : index
    %c0_141 = arith.constant 0 : index
    %c0_142 = arith.constant 0 : index
    %438 = vector.load %arg14[%c0_140, %c0_141, %c0_142] : memref<4x8x1152xf32, #tpu.memory_space<vmem>>, vector<1x8x1152xf32>
    %439 = vector.shape_cast %438 : vector<1x8x1152xf32> to vector<8x1152xf32>
    %440 = vector.broadcast %435 : vector<1x1152xf32> to vector<8x1152xf32>
    %441 = arith.mulf %439, %440 : vector<8x1152xf32>
    %c1_143 = arith.constant 1 : index
    %c0_144 = arith.constant 0 : index
    %c0_145 = arith.constant 0 : index
    %442 = vector.load %arg14[%c1_143, %c0_144, %c0_145] : memref<4x8x1152xf32, #tpu.memory_space<vmem>>, vector<1x8x1152xf32>
    %443 = vector.shape_cast %442 : vector<1x8x1152xf32> to vector<8x1152xf32>
    %444 = vector.broadcast %435 : vector<1x1152xf32> to vector<8x1152xf32>
    %445 = arith.mulf %443, %444 : vector<8x1152xf32>
    %446 = vector.broadcast %1 : f32 to vector<8x1152xf32>
    %447 = arith.mulf %437, %446 : vector<8x1152xf32>
    %448 = vector.broadcast %7 : f32 to vector<8x1152xf32>
    %449 = arith.mulf %441, %448 : vector<8x1152xf32>
    %450 = vector.broadcast %13 : f32 to vector<8x1152xf32>
    %451 = arith.mulf %445, %450 : vector<8x1152xf32>
    %452 = arith.addf %447, %449 : vector<8x1152xf32>
    %453 = arith.addf %452, %451 : vector<8x1152xf32>
    %454 = vector.broadcast %2 : f32 to vector<8x1152xf32>
    %455 = arith.mulf %437, %454 : vector<8x1152xf32>
    %456 = vector.broadcast %8 : f32 to vector<8x1152xf32>
    %457 = arith.mulf %441, %456 : vector<8x1152xf32>
    %458 = vector.broadcast %14 : f32 to vector<8x1152xf32>
    %459 = arith.mulf %445, %458 : vector<8x1152xf32>
    %460 = arith.addf %455, %457 : vector<8x1152xf32>
    %461 = arith.addf %460, %459 : vector<8x1152xf32>
    %462 = vector.extract_strided_slice %461 {offsets = [0, 1151], sizes = [8, 1], strides = [1, 1]} : vector<8x1152xf32> to vector<8x1xf32>
    %463 = vector.extract_strided_slice %461 {offsets = [0, 0], sizes = [8, 1151], strides = [1, 1]} : vector<8x1152xf32> to vector<8x1151xf32>
    %464 = tpu.concatenate %462, %463 in 1 : vector<8x1xf32>, vector<8x1151xf32> -> vector<8x1152xf32>
    %465 = vector.broadcast %3 : f32 to vector<8x1152xf32>
    %466 = arith.mulf %437, %465 : vector<8x1152xf32>
    %467 = vector.broadcast %9 : f32 to vector<8x1152xf32>
    %468 = arith.mulf %441, %467 : vector<8x1152xf32>
    %469 = vector.broadcast %15 : f32 to vector<8x1152xf32>
    %470 = arith.mulf %445, %469 : vector<8x1152xf32>
    %471 = arith.addf %466, %468 : vector<8x1152xf32>
    %472 = arith.addf %471, %470 : vector<8x1152xf32>
    %473 = vector.extract_strided_slice %472 {offsets = [0, 1150], sizes = [8, 2], strides = [1, 1]} : vector<8x1152xf32> to vector<8x2xf32>
    %474 = vector.extract_strided_slice %472 {offsets = [0, 0], sizes = [8, 1150], strides = [1, 1]} : vector<8x1152xf32> to vector<8x1150xf32>
    %475 = tpu.concatenate %473, %474 in 1 : vector<8x2xf32>, vector<8x1150xf32> -> vector<8x1152xf32>
    %476 = vector.broadcast %4 : f32 to vector<8x1152xf32>
    %477 = arith.mulf %437, %476 : vector<8x1152xf32>
    %478 = vector.broadcast %10 : f32 to vector<8x1152xf32>
    %479 = arith.mulf %441, %478 : vector<8x1152xf32>
    %480 = vector.broadcast %16 : f32 to vector<8x1152xf32>
    %481 = arith.mulf %445, %480 : vector<8x1152xf32>
    %482 = arith.addf %477, %479 : vector<8x1152xf32>
    %483 = arith.addf %482, %481 : vector<8x1152xf32>
    %484 = vector.extract_strided_slice %483 {offsets = [0, 1149], sizes = [8, 3], strides = [1, 1]} : vector<8x1152xf32> to vector<8x3xf32>
    %485 = vector.extract_strided_slice %483 {offsets = [0, 0], sizes = [8, 1149], strides = [1, 1]} : vector<8x1152xf32> to vector<8x1149xf32>
    %486 = tpu.concatenate %484, %485 in 1 : vector<8x3xf32>, vector<8x1149xf32> -> vector<8x1152xf32>
    %487 = vector.broadcast %5 : f32 to vector<8x1152xf32>
    %488 = arith.mulf %437, %487 : vector<8x1152xf32>
    %489 = vector.broadcast %11 : f32 to vector<8x1152xf32>
    %490 = arith.mulf %441, %489 : vector<8x1152xf32>
    %491 = vector.broadcast %17 : f32 to vector<8x1152xf32>
    %492 = arith.mulf %445, %491 : vector<8x1152xf32>
    %493 = arith.addf %488, %490 : vector<8x1152xf32>
    %494 = arith.addf %493, %492 : vector<8x1152xf32>
    %495 = vector.extract_strided_slice %494 {offsets = [0, 1148], sizes = [8, 4], strides = [1, 1]} : vector<8x1152xf32> to vector<8x4xf32>
    %496 = vector.extract_strided_slice %494 {offsets = [0, 0], sizes = [8, 1148], strides = [1, 1]} : vector<8x1152xf32> to vector<8x1148xf32>
    %497 = tpu.concatenate %495, %496 in 1 : vector<8x4xf32>, vector<8x1148xf32> -> vector<8x1152xf32>
    %498 = vector.broadcast %6 : f32 to vector<8x1152xf32>
    %499 = arith.mulf %437, %498 : vector<8x1152xf32>
    %500 = vector.broadcast %12 : f32 to vector<8x1152xf32>
    %501 = arith.mulf %441, %500 : vector<8x1152xf32>
    %502 = vector.broadcast %18 : f32 to vector<8x1152xf32>
    %503 = arith.mulf %445, %502 : vector<8x1152xf32>
    %504 = arith.addf %499, %501 : vector<8x1152xf32>
    %505 = arith.addf %504, %503 : vector<8x1152xf32>
    %506 = vector.extract_strided_slice %505 {offsets = [0, 1147], sizes = [8, 5], strides = [1, 1]} : vector<8x1152xf32> to vector<8x5xf32>
    %507 = vector.extract_strided_slice %505 {offsets = [0, 0], sizes = [8, 1147], strides = [1, 1]} : vector<8x1152xf32> to vector<8x1147xf32>
    %508 = tpu.concatenate %506, %507 in 1 : vector<8x5xf32>, vector<8x1147xf32> -> vector<8x1152xf32>
    %509 = arith.addf %453, %464 : vector<8x1152xf32>
    %510 = arith.addf %475, %486 : vector<8x1152xf32>
    %511 = arith.addf %497, %508 : vector<8x1152xf32>
    %512 = arith.addf %509, %510 : vector<8x1152xf32>
    %513 = arith.addf %512, %511 : vector<8x1152xf32>
    %c0_146 = arith.constant 0 : index
    %c0_147 = arith.constant 0 : index
    %514 = vector.load %arg10[%c0_146, %c0_147] : memref<8x1152xf32, #tpu.memory_space<vmem>>, vector<8x1152xf32>
    tpu.vector_store %arg10[%c0_146, %c0_147], %513 {strides = array<i32>} : memref<8x1152xf32, #tpu.memory_space<vmem>>, vector<8x1152xf32>,
    return
  }
  func.func @transform_0(%arg0: i32) -> (i32, i32) {
    %c0_i32 = arith.constant 0 : i32
    %c0_i32_0 = arith.constant 0 : i32
    return %arg0, %c0_i32 : i32, i32
  }
  func.func @transform_1(%arg0: i32) -> (i32, i32) {
    %c0_i32 = arith.constant 0 : i32
    %c0_i32_0 = arith.constant 0 : i32
    %c0_i32_1 = arith.constant 0 : i32
    return %c0_i32, %c0_i32_0 : i32, i32
  }
  func.func @transform_2(%arg0: i32) -> (i32, i32) {
    %c0_i32 = arith.constant 0 : i32
    %c0_i32_0 = arith.constant 0 : i32
    %c0_i32_1 = arith.constant 0 : i32
    return %c0_i32, %c0_i32_0 : i32, i32
  }
  func.func @transform_3(%arg0: i32) -> (i32, i32) {
    %c0_i32 = arith.constant 0 : i32
    %c0_i32_0 = arith.constant 0 : i32
    %c0_i32_1 = arith.constant 0 : i32
    return %c0_i32, %c0_i32_0 : i32, i32
  }
  func.func @transform_4(%arg0: i32) -> (i32, i32) {
    %c0_i32 = arith.constant 0 : i32
    %c0_i32_0 = arith.constant 0 : i32
    %c0_i32_1 = arith.constant 0 : i32
    return %c0_i32, %c0_i32_0 : i32, i32
  }
  func.func @transform_5(%arg0: i32) -> (i32, i32) {
    %c0_i32 = arith.constant 0 : i32
    %c0_i32_0 = arith.constant 0 : i32
    %c0_i32_1 = arith.constant 0 : i32
    return %c0_i32, %c0_i32_0 : i32, i32
  }
  func.func @transform_6(%arg0: i32) -> (i32, i32) {
    %c0_i32 = arith.constant 0 : i32
    %c0_i32_0 = arith.constant 0 : i32
    %c0_i32_1 = arith.constant 0 : i32
    return %c0_i32, %c0_i32_0 : i32, i32
  }
  func.func @transform_7(%arg0: i32) -> i32 {
    %c0_i32 = arith.constant 0 : i32
    %c0_i32_0 = arith.constant 0 : i32
    return %c0_i32 : i32
  }
  func.func @transform_8(%arg0: i32) -> i32 {
    %c0_i32 = arith.constant 0 : i32
    %c0_i32_0 = arith.constant 0 : i32
    return %c0_i32 : i32
  }
  func.func @transform_9(%arg0: i32) -> (i32, i32) {
    %c0_i32 = arith.constant 0 : i32
    %c0_i32_0 = arith.constant 0 : i32
    return %arg0, %c0_i32 : i32, i32
  }
  func.func @transform_10(%arg0: i32) -> (i32, i32, i32) {
    %c0_i32 = arith.constant 0 : i32
    %c0_i32_0 = arith.constant 0 : i32
    %c0_i32_1 = arith.constant 0 : i32
    return %c0_i32, %arg0, %c0_i32_0 : i32, i32, i32
  }
  func.func @transform_11(%arg0: i32) -> (i32, i32, i32) {
    %c0_i32 = arith.constant 0 : i32
    %c0_i32_0 = arith.constant 0 : i32
    %c0_i32_1 = arith.constant 0 : i32
    return %c0_i32, %arg0, %c0_i32_0 : i32, i32, i32
  }
  func.func @transform_12(%arg0: i32) -> (i32, i32) {
    %c0_i32 = arith.constant 0 : i32
    %c0_i32_0 = arith.constant 0 : i32
    return %arg0, %c0_i32 : i32, i32
  }
}

</mosaic_0001>

<llo_original>
// kernel: tpu_custom_call.1
$region0: #{tpu_custom_call.1}
  #allocation0 [shape = 'u32[]', space=smem, size = 0x4, offset = 0x4, fixed_abs, tag = 'smem constant byte address 0x4 - core index']
  #allocation1 [shape = 'u32[144,128]{1,0:T(1,128)}', space=vmem, size = 0x12000, scoped, tag = 'internal scratch']
  %s0 = inlined_call_operand.hbm [shape: f32[8,128], index: 0, kind: input, shape index: {}]
  %s1 = inlined_call_operand.hbm [shape: f32[8,128], index: 1, kind: output, shape index: {}]
  %s2 = sld [smem:[#allocation0]]
  $region18: #{tpu_custom_call.1} parent=0
    _
  %s4 = ssub.s32 1, %s2
  %s5 = scalar_select 0, %s4, %s2
  $region1: #{tpu_custom_call.1} parent=0
    #allocation2 [shape = 'u8[4096]{0}', space=vmem, size = 0x1000, scoped, tag = 'input window, operand 0, single buffered']
    #allocation3 [shape = 's32[1]{0}', space=sflag, size = 0x4, scoped, tag = 'scoped memory for tpu_custom_call.1']
    #allocation4 [shape = 's32[1]{0}', space=sflag, size = 0x4, scoped, tag = 'scoped memory for tpu_custom_call.1']
    #allocation5 [shape = 'u8[4096]{0}', space=vmem, size = 0x1000, scoped, tag = 'output window, operand 0, single buffered']
    %6 = vsyncpa [#allocation3], 0
    %7 = vsyncpa [#allocation4], 0
    // Predicated region
    $region2: #{tpu_custom_call.1} parent=1 // pred_check
      _
    $region3: #{tpu_custom_call.1} parent=1 // pred_check_branch
      %9 = sbr.rel (0) target = $region5
    $region4: #{tpu_custom_call.1} parent=1 // pred_region
      %s11 = ssub.s32 128, 128
      %12 = vsyncadd [#allocation3], %s11
      %s14 = sshll.u32 [#allocation2], 4
      %s15 = int_to_ptr.vmem [resolvable:$true] %s14
      %17 = dma.hbm_to_vmem [thread:$0]  %s0, 128, %s15, [#allocation3]
    $region5: #{tpu_custom_call.1} parent=1 // pred_fallthru
      _
    // Predicated region
    $region6: #{tpu_custom_call.1} parent=1 // pred_check
      _
    $region7: #{tpu_custom_call.1} parent=1 // pred_check_branch
      %19 = sbr.rel (0) target = $region9
    $region8: #{tpu_custom_call.1} parent=1 // pred_region
      %20 = dma.done [#allocation3], 128
    $region9: #{tpu_custom_call.1} parent=1 // pred_fallthru
      _
    %v21 = vld [vmem:[#allocation2] sm:$0xff]
    %22 = vrot.lane.b32.xlu0 %v21, 1
    %v23 = vpop.permute.xlu0 %22
    %24 = vst [vmem:[#allocation5] sm:$0xff] %v23
    // Predicated region
    $region10: #{tpu_custom_call.1} parent=1 // pred_check
      _
    $region11: #{tpu_custom_call.1} parent=1 // pred_check_branch
      %26 = sbr.rel (0) target = $region13
    $region12: #{tpu_custom_call.1} parent=1 // pred_region
      %s28 = ssub.s32 128, 128
      %29 = vsyncadd [#allocation4], %s28
      %s31 = sshll.u32 [#allocation5], 4
      %s32 = int_to_ptr.vmem [resolvable:$true] %s31
      %34 = dma.vmem_to_hbm [thread:$0]  %s32, 128, %s1, [#allocation4]
    $region13: #{tpu_custom_call.1} parent=1 // pred_fallthru
      _
    // Predicated region
    $region14: #{tpu_custom_call.1} parent=1 // pred_check
      _
    $region15: #{tpu_custom_call.1} parent=1 // pred_check_branch
      %36 = sbr.rel (0) target = $region17
    $region16: #{tpu_custom_call.1} parent=1 // pred_region
      %37 = dma.done [#allocation4], 128
    $region17: #{tpu_custom_call.1} parent=1 // pred_fallthru
      _
    %38 = vsyncpa [#allocation3], 1
    %39 = vsyncpa [#allocation4], 1

// kernel: fmwn_forward.1
$region0: #{fmwn_forward.1}
  #allocation0 [shape = 'u32[]', space=smem, size = 0x4, offset = 0x4, fixed_abs, tag = 'smem constant byte address 0x4 - core index']
  #allocation1 [shape = 'u32[144,128]{1,0:T(1,128)}', space=vmem, size = 0x12000, scoped, tag = 'internal scratch']
  #allocation2 [shape = 'f32[4,8,1152]{2,1,0:T(8,128)}', space=vmem, size = 0x24000, scoped, tag = 'scratch operand']
  #allocation3 [shape = 'f32[1]{0:T(128)S(6)}', space=smem, size = 0x200, scoped, tag = 'scoped memory for fmwn_forward.1']
  #allocation4 [shape = 'f32[1]{0:T(128)S(6)}', space=smem, size = 0x200, scoped, tag = 'scoped memory for fmwn_forward.1']
  %s0 = inlined_call_operand.vmem [shape: f32[16,1152], index: 0, kind: input, shape index: {}]
  %s1 = inlined_call_operand.hbm [shape: f32[2,1152], index: 1, kind: input, shape index: {}]
  %s2 = inlined_call_operand.hbm [shape: f32[1152,384], index: 2, kind: input, shape index: {}]
  %s3 = inlined_call_operand.hbm [shape: f32[1152,128], index: 3, kind: input, shape index: {}]
  %s4 = inlined_call_operand.hbm [shape: f32[3,6], index: 4, kind: input, shape index: {}]
  %s5 = inlined_call_operand.hbm [shape: f32[2,2], index: 5, kind: input, shape index: {}]
  %s6 = inlined_call_operand.hbm [shape: f32[2,2], index: 6, kind: input, shape index: {}]
  %s7 = inlined_call_operand.<no memory space> [shape: f32[1], index: 7, kind: input, shape index: {}]
  %s8 = inlined_call_operand.<no memory space> [shape: f32[1], index: 8, kind: input, shape index: {}]
  %s9 = inlined_call_operand.vmem [shape: f32[16,1152], index: 9, kind: output, shape index: {0}]
  %s10 = inlined_call_operand.vmem [shape: f32[2,16,384], index: 10, kind: output, shape index: {1}]
  %s11 = inlined_call_operand.vmem [shape: f32[2,16,128], index: 11, kind: output, shape index: {2}]
  %s12 = inlined_call_operand.hbm [shape: f32[16,128], index: 12, kind: output, shape index: {3}]
  %13 = xla_tuple %s9, %s10, %s11, %s12
  %s14 = sld [smem:[#allocation0]]
  $region170: #{fmwn_forward.1} parent=0
    _
  %s16 = ssub.s32 1, %s14
  %s17 = scalar_select 0, %s16, %s14
  %18 = sst [smem:[#allocation3]] %s7
  %19 = sst [smem:[#allocation4]] %s8
  $region1: #{fmwn_forward.1} parent=0
    #allocation5 [shape = 'u8[9216]{0}', space=vmem, size = 0x2400, scoped, tag = 'input window, operand 1, single buffered']
    #allocation6 [shape = 's32[2]{0}', space=sflag, size = 0x8, scoped, tag = 'scoped memory for fmwn_forward.1']
    #allocation7 [shape = 's32[2]{0}', space=sflag, size = 0x8, scoped, tag = 'scoped memory for fmwn_forward.1']
    #allocation8 [shape = 's32[2]{0}', space=sflag, size = 0x8, scoped, tag = 'scoped memory for fmwn_forward.1']
    #allocation9 [shape = 'u8[1769472]{0}', space=vmem, size = 0x1b0000, scoped, tag = 'input window, operand 2, single buffered']
    #allocation10 [shape = 's32[1]{0}', space=sflag, size = 0x4, scoped, tag = 'scoped memory for fmwn_forward.1']
    #allocation11 [shape = 'u8[589824]{0}', space=vmem, size = 0x90000, scoped, tag = 'input window, operand 3, single buffered']
    #allocation12 [shape = 'u8[2048]{0}', space=smem, size = 0x800, scoped, tag = 'input window, operand 4, single buffered']
    #allocation13 [shape = 'u8[1024]{0}', space=smem, size = 0x400, scoped, tag = 'input window, operand 5, single buffered']
    #allocation14 [shape = 's32[1]{0}', space=sflag, size = 0x4, scoped, tag = 'scoped memory for fmwn_forward.1']
    #allocation15 [shape = 'u8[1024]{0}', space=smem, size = 0x400, scoped, tag = 'input window, operand 6, single buffered']
    #allocation16 [shape = 'u8[49152]{0}', space=vmem, size = 0xc000, scoped, tag = 'output window, operand 1']
    #allocation17 [shape = 'u8[16384]{0}', space=vmem, size = 0x4000, scoped, tag = 'output window, operand 2']
    #allocation18 [shape = 'u8[8192]{0}', space=vmem, size = 0x2000, scoped, tag = 'output window, operand 3']
    %20 = vsyncpa [#allocation6], 0
    %21 = vsyncpa [#allocation10], 0
    %22 = vsyncpa [#allocation8], 0
    %23 = vsyncpa [#allocation14], 0
    %24 = vsyncpa [#allocation7], 0
    %s25 = scalar_lea.sflag [#allocation7], 1
    %26 = vsyncpa %s25, 0
    loop: start=0, step=1, limit=4
    $region2: #{fmwn_forward.1} parent=1 // loop_pre_header
      _
    $region3: #{fmwn_forward.1} parent=1 // loop_header
      %s28 = sphi 0, %s32
      %p29 = scmp.ge.s32.totalorder %s28, 4
      %s38 = sphi 0, %s40
      %s41 = sphi 0, %s38
      %s42 = sphi 0, %s41
      %s58 = sphi 0, %s42
      %s62 = sphi 0, %s62
      %s64 = sphi 0, %s62
      %s65 = sphi 0, %s64
      %s79 = sphi 0, %s65
      %s83 = sphi 0, %s83
      %s85 = sphi 0, %s83
      %s86 = sphi 0, %s85
      %s100 = sphi 0, %s86
      %s104 = sphi 0, %s104
      %s106 = sphi 0, %s104
      %s107 = sphi 0, %s106
      %s121 = sphi 0, %s107
      %s125 = sphi 0, %s125
      %s127 = sphi 0, %s125
      %s128 = sphi 0, %s127
      %s142 = sphi 0, %s128
      %s146 = sphi 0, %s146
      %s148 = sphi 0, %s146
      %s149 = sphi 0, %s148
      %s163 = sphi 0, %s149
      %s167 = sphi 0, %s167
      %s169 = sphi 0, %s167
      %s170 = sphi 0, %s169
      %s184 = sphi 0, %s170
      %s188 = sphi 0, %s188
      %s190 = sphi 0, %s188
      %s191 = sphi 0, %s190
      %s205 = sphi 0, %s191
      %s209 = sphi 0, %s209
      %s211 = sphi 0, %s209
      %s212 = sphi 0, %s211
      %s226 = sphi 0, %s212
      %s232 = sphi 0, %s234
      %s235 = sphi 0, %s232
      %s236 = sphi 0, %s235
      %s252 = sphi 0, %s236
      %s258 = sphi 0, %s260
      %s261 = sphi 0, %s258
      %s262 = sphi 0, %s261
      %s278 = sphi 0, %s262
      %s284 = sphi 0, %s286
      %s287 = sphi 0, %s284
      %s288 = sphi 0, %s287
      %s304 = sphi 0, %s288
      %s310 = sphi 0, %s312
      %s313 = sphi 0, %s310
      %s314 = sphi 0, %s313
      %s330 = sphi 0, %s314
    $region4: #{fmwn_forward.1} parent=1 // loop_header_branch
      %31 = sbr.rel (%p29) target = $region8
    $region5: #{fmwn_forward.1} parent=1 // loop_body
      %s33 = ssub.s32 %s28, 1
      %s34 = ssub.s32 %s28, 2
      %s35 = sadd.s32 %s28, 1
      %s36 = ssub.s32 %s28, %s35
      %p37 = scmp.eq.s32.totalorder %s36, 0
      %s39 = sadd.s32 %s38, 1
      %s40 = scalar_select %p37, %s38, %s39
      %p43 = pneg %p37
      %p44 = scmp.eq.s32.totalorder %s28, 1
      %p45 = por %p43, %p44
      %p46 = scmp.ne.s32.totalorder %s38, %s41
      %p47 = scmp.eq.s32.totalorder %s28, 0
      %p48 = por %p46, %p47
      %p49 = scmp.ne.s32.totalorder %s38, %s41
      %p50 = scmp.eq.s32.totalorder %s33, 1
      %p51 = por %p49, %p50
      %p52 = scmp.ne.s32.totalorder %s41, %s42
      %p53 = scmp.eq.s32.totalorder %s33, 0
      %p54 = por %p52, %p53
      %p55 = scmp.ne.s32.totalorder %s41, %s42
      %p56 = scmp.eq.s32.totalorder %s34, 1
      %p57 = por %p55, %p56
      %p59 = scmp.ne.s32.totalorder %s42, %s58
      %p60 = scmp.eq.s32.totalorder %s34, 0
      %p61 = por %p59, %p60
      %s63 = sadd.s32 %s62, 1
      %p66 = scmp.eq.s32.totalorder %s28, 1
      %p67 = scmp.ne.s32.totalorder %s62, %s64
      %p68 = scmp.eq.s32.totalorder %s28, 0
      %p69 = por %p67, %p68
      %p70 = scmp.ne.s32.totalorder %s62, %s64
      %p71 = scmp.eq.s32.totalorder %s33, 1
      %p72 = por %p70, %p71
      %p73 = scmp.ne.s32.totalorder %s64, %s65
      %p74 = scmp.eq.s32.totalorder %s33, 0
      %p75 = por %p73, %p74
      %p76 = scmp.ne.s32.totalorder %s64, %s65
      %p77 = scmp.eq.s32.totalorder %s34, 1
      %p78 = por %p76, %p77
      %p80 = scmp.ne.s32.totalorder %s65, %s79
      %p81 = scmp.eq.s32.totalorder %s34, 0
      %p82 = por %p80, %p81
      %s84 = sadd.s32 %s83, 1
      %p87 = scmp.eq.s32.totalorder %s28, 1
      %p88 = scmp.ne.s32.totalorder %s83, %s85
      %p89 = scmp.eq.s32.totalorder %s28, 0
      %p90 = por %p88, %p89
      %p91 = scmp.ne.s32.totalorder %s83, %s85
      %p92 = scmp.eq.s32.totalorder %s33, 1
      %p93 = por %p91, %p92
      %p94 = scmp.ne.s32.totalorder %s85, %s86
      %p95 = scmp.eq.s32.totalorder %s33, 0
      %p96 = por %p94, %p95
      %p97 = scmp.ne.s32.totalorder %s85, %s86
      %p98 = scmp.eq.s32.totalorder %s34, 1
      %p99 = por %p97, %p98
      %p101 = scmp.ne.s32.totalorder %s86, %s100
      %p102 = scmp.eq.s32.totalorder %s34, 0
      %p103 = por %p101, %p102
      %s105 = sadd.s32 %s104, 1
      %p108 = scmp.eq.s32.totalorder %s28, 1
      %p109 = scmp.ne.s32.totalorder %s104, %s106
      %p110 = scmp.eq.s32.totalorder %s28, 0
      %p111 = por %p109, %p110
      %p112 = scmp.ne.s32.totalorder %s104, %s106
      %p113 = scmp.eq.s32.totalorder %s33, 1
      %p114 = por %p112, %p113
      %p115 = scmp.ne.s32.totalorder %s106, %s107
      %p116 = scmp.eq.s32.totalorder %s33, 0
      %p117 = por %p115, %p116
      %p118 = scmp.ne.s32.totalorder %s106, %s107
      %p119 = scmp.eq.s32.totalorder %s34, 1
      %p120 = por %p118, %p119
      %p122 = scmp.ne.s32.totalorder %s107, %s121
      %p123 = scmp.eq.s32.totalorder %s34, 0
      %p124 = por %p122, %p123
      %s126 = sadd.s32 %s125, 1
      %p129 = scmp.eq.s32.totalorder %s28, 1
      %p130 = scmp.ne.s32.totalorder %s125, %s127
      %p131 = scmp.eq.s32.totalorder %s28, 0
      %p132 = por %p130, %p131
      %p133 = scmp.ne.s32.totalorder %s125, %s127
      %p134 = scmp.eq.s32.totalorder %s33, 1
      %p135 = por %p133, %p134
      %p136 = scmp.ne.s32.totalorder %s127, %s128
      %p137 = scmp.eq.s32.totalorder %s33, 0
      %p138 = por %p136, %p137
      %p139 = scmp.ne.s32.totalorder %s127, %s128
      %p140 = scmp.eq.s32.totalorder %s34, 1
      %p141 = por %p139, %p140
      %p143 = scmp.ne.s32.totalorder %s128, %s142
      %p144 = scmp.eq.s32.totalorder %s34, 0
      %p145 = por %p143, %p144
      %s147 = sadd.s32 %s146, 1
      %p150 = scmp.eq.s32.totalorder %s28, 1
      %p151 = scmp.ne.s32.totalorder %s146, %s148
      %p152 = scmp.eq.s32.totalorder %s28, 0
      %p153 = por %p151, %p152
      %p154 = scmp.ne.s32.totalorder %s146, %s148
      %p155 = scmp.eq.s32.totalorder %s33, 1
      %p156 = por %p154, %p155
      %p157 = scmp.ne.s32.totalorder %s148, %s149
      %p158 = scmp.eq.s32.totalorder %s33, 0
      %p159 = por %p157, %p158
      %p160 = scmp.ne.s32.totalorder %s148, %s149
      %p161 = scmp.eq.s32.totalorder %s34, 1
      %p162 = por %p160, %p161
      %p164 = scmp.ne.s32.totalorder %s149, %s163
      %p165 = scmp.eq.s32.totalorder %s34, 0
      %p166 = por %p164, %p165
      %s168 = sadd.s32 %s167, 1
      %p171 = scmp.eq.s32.totalorder %s28, 1
      %p172 = scmp.ne.s32.totalorder %s167, %s169
      %p173 = scmp.eq.s32.totalorder %s28, 0
      %p174 = por %p172, %p173
      %p175 = scmp.ne.s32.totalorder %s167, %s169
      %p176 = scmp.eq.s32.totalorder %s33, 1
      %p177 = por %p175, %p176
      %p178 = scmp.ne.s32.totalorder %s169, %s170
      %p179 = scmp.eq.s32.totalorder %s33, 0
      %p180 = por %p178, %p179
      %p181 = scmp.ne.s32.totalorder %s169, %s170
      %p182 = scmp.eq.s32.totalorder %s34, 1
      %p183 = por %p181, %p182
      %p185 = scmp.ne.s32.totalorder %s170, %s184
      %p186 = scmp.eq.s32.totalorder %s34, 0
      %p187 = por %p185, %p186
      %s189 = sadd.s32 %s188, 1
      %p192 = scmp.eq.s32.totalorder %s28, 1
      %p193 = scmp.ne.s32.totalorder %s188, %s190
      %p194 = scmp.eq.s32.totalorder %s28, 0
      %p195 = por %p193, %p194
      %p196 = scmp.ne.s32.totalorder %s188, %s190
      %p197 = scmp.eq.s32.totalorder %s33, 1
      %p198 = por %p196, %p197
      %p199 = scmp.ne.s32.totalorder %s190, %s191
      %p200 = scmp.eq.s32.totalorder %s33, 0
      %p201 = por %p199, %p200
      %p202 = scmp.ne.s32.totalorder %s190, %s191
      %p203 = scmp.eq.s32.totalorder %s34, 1
      %p204 = por %p202, %p203
      %p206 = scmp.ne.s32.totalorder %s191, %s205
      %p207 = scmp.eq.s32.totalorder %s34, 0
      %p208 = por %p206, %p207
      %s210 = sadd.s32 %s209, 1
      %p213 = scmp.eq.s32.totalorder %s28, 1
      %p214 = scmp.ne.s32.totalorder %s209, %s211
      %p215 = scmp.eq.s32.totalorder %s28, 0
      %p216 = por %p214, %p215
      %p217 = scmp.ne.s32.totalorder %s209, %s211
      %p218 = scmp.eq.s32.totalorder %s33, 1
      %p219 = por %p217, %p218
      %p220 = scmp.ne.s32.totalorder %s211, %s212
      %p221 = scmp.eq.s32.totalorder %s33, 0
      %p222 = por %p220, %p221
      %p223 = scmp.ne.s32.totalorder %s211, %s212
      %p224 = scmp.eq.s32.totalorder %s34, 1
      %p225 = por %p223, %p224
      %p227 = scmp.ne.s32.totalorder %s212, %s226
      %p228 = scmp.eq.s32.totalorder %s34, 0
      %p229 = por %p227, %p228
      %s230 = ssub.s32 %s28, %s35
      %p231 = scmp.eq.s32.totalorder %s230, 0
      %s233 = sadd.s32 %s232, 1
      %s234 = scalar_select %p231, %s232, %s233
      %p237 = pneg %p231
      %p238 = scmp.eq.s32.totalorder %s28, 1
      %p239 = por %p237, %p238
      %p240 = scmp.ne.s32.totalorder %s232, %s235
      %p241 = scmp.eq.s32.totalorder %s28, 0
      %p242 = por %p240, %p241
      %p243 = scmp.ne.s32.totalorder %s232, %s235
      %p244 = scmp.eq.s32.totalorder %s33, 1
      %p245 = por %p243, %p244
      %p246 = scmp.ne.s32.totalorder %s235, %s236
      %p247 = scmp.eq.s32.totalorder %s33, 0
      %p248 = por %p246, %p247
      %p249 = scmp.ne.s32.totalorder %s235, %s236
      %p250 = scmp.eq.s32.totalorder %s34, 1
      %p251 = por %p249, %p250
      %p253 = scmp.ne.s32.totalorder %s236, %s252
      %p254 = scmp.eq.s32.totalorder %s34, 0
      %p255 = por %p253, %p254
      %s256 = ssub.s32 %s28, %s35
      %p257 = scmp.eq.s32.totalorder %s256, 0
      %s259 = sadd.s32 %s258, 1
      %s260 = scalar_select %p257, %s258, %s259
      %p263 = pneg %p257
      %p264 = scmp.eq.s32.totalorder %s28, 1
      %p265 = por %p263, %p264
      %p266 = scmp.ne.s32.totalorder %s258, %s261
      %p267 = scmp.eq.s32.totalorder %s28, 0
      %p268 = por %p266, %p267
      %p269 = scmp.ne.s32.totalorder %s258, %s261
      %p270 = scmp.eq.s32.totalorder %s33, 1
      %p271 = por %p269, %p270
      %p272 = scmp.ne.s32.totalorder %s261, %s262
      %p273 = scmp.eq.s32.totalorder %s33, 0
      %p274 = por %p272, %p273
      %p275 = scmp.ne.s32.totalorder %s261, %s262
      %p276 = scmp.eq.s32.totalorder %s34, 1
      %p277 = por %p275, %p276
      %p279 = scmp.ne.s32.totalorder %s262, %s278
      %p280 = scmp.eq.s32.totalorder %s34, 0
      %p281 = por %p279, %p280
      %s282 = ssub.s32 %s28, %s35
      %p283 = scmp.eq.s32.totalorder %s282, 0
      %s285 = sadd.s32 %s284, 1
      %s286 = scalar_select %p283, %s284, %s285
      %p289 = pneg %p283
      %p290 = scmp.eq.s32.totalorder %s28, 1
      %p291 = por %p289, %p290
      %p292 = scmp.ne.s32.totalorder %s284, %s287
      %p293 = scmp.eq.s32.totalorder %s28, 0
      %p294 = por %p292, %p293
      %p295 = scmp.ne.s32.totalorder %s284, %s287
      %p296 = scmp.eq.s32.totalorder %s33, 1
      %p297 = por %p295, %p296
      %p298 = scmp.ne.s32.totalorder %s287, %s288
      %p299 = scmp.eq.s32.totalorder %s33, 0
      %p300 = por %p298, %p299
      %p301 = scmp.ne.s32.totalorder %s287, %s288
      %p302 = scmp.eq.s32.totalorder %s34, 1
      %p303 = por %p301, %p302
      %p305 = scmp.ne.s32.totalorder %s288, %s304
      %p306 = scmp.eq.s32.totalorder %s34, 0
      %p307 = por %p305, %p306
      %s308 = ssub.s32 %s28, %s35
      %p309 = scmp.eq.s32.totalorder %s308, 0
      %s311 = sadd.s32 %s310, 1
      %s312 = scalar_select %p309, %s310, %s311
      %p315 = pneg %p309
      %p316 = scmp.eq.s32.totalorder %s28, 1
      %p317 = por %p315, %p316
      %p318 = scmp.ne.s32.totalorder %s310, %s313
      %p319 = scmp.eq.s32.totalorder %s28, 0
      %p320 = por %p318, %p319
      %p321 = scmp.ne.s32.totalorder %s310, %s313
      %p322 = scmp.eq.s32.totalorder %s33, 1
      %p323 = por %p321, %p322
      %p324 = scmp.ne.s32.totalorder %s313, %s314
      %p325 = scmp.eq.s32.totalorder %s33, 0
      %p326 = por %p324, %p325
      %p327 = scmp.ne.s32.totalorder %s313, %s314
      %p328 = scmp.eq.s32.totalorder %s34, 1
      %p329 = por %p327, %p328
      %p331 = scmp.ne.s32.totalorder %s314, %s330
      %p332 = scmp.eq.s32.totalorder %s34, 0
      %p333 = por %p331, %p332
      %p334 = scmp.le.s32.totalorder 1, %s28
      %p335 = scmp.lt.s32.totalorder %s28, 3
      %p336 = pnand %p334, %p335
      %p337 = pneg %p336
      // Predicated region
      $region9: #{fmwn_forward.1} parent=5 // pred_check
        _
      $region10: #{fmwn_forward.1} parent=5 // pred_check_branch
        %339 = sbr.rel (%p336) target = $region12
      $region11: #{fmwn_forward.1} parent=5 // pred_region
        %s340 = ssub.s32 %s28, 1
        // Predicated region
        $region13: #{fmwn_forward.1} parent=11 // pred_check
          %p341 = pneg %p75
        $region14: #{fmwn_forward.1} parent=11 // pred_check_branch
          %343 = sbr.rel (%p341) target = $region16
        $region15: #{fmwn_forward.1} parent=11 // pred_region
          %s345 = ssub.s32 288, 288
          %346 = vsyncadd [#allocation6], %s345
          %s348 = sshll.u32 [#allocation5], 4
          %s349 = int_to_ptr.vmem [resolvable:$true] %s348
          %351 = dma.hbm_to_vmem [thread:$0]  %s1, 288, %s349, [#allocation6]
        $region16: #{fmwn_forward.1} parent=11 // pred_fallthru
          _
        // Predicated region
        $region17: #{fmwn_forward.1} parent=11 // pred_check
          %p352 = pneg %p96
        $region18: #{fmwn_forward.1} parent=11 // pred_check_branch
          %354 = sbr.rel (%p352) target = $region20
        $region19: #{fmwn_forward.1} parent=11 // pred_region
          %s356 = ssub.s32 55296, 55296
          %357 = vsyncadd [#allocation10], %s356
          %s358 = sshll.u32 [#allocation9], 4
          %s359 = int_to_ptr.vmem [resolvable:$true] %s358
          %364 = dma.hbm_to_vmem [thread:$0]  %s2, 55296, %s359, [#allocation10], 384, 384, 24
        $region20: #{fmwn_forward.1} parent=11 // pred_fallthru
          _
        // Predicated region
        $region21: #{fmwn_forward.1} parent=11 // pred_check
          %p365 = pneg %p117
        $region22: #{fmwn_forward.1} parent=11 // pred_check_branch
          %367 = sbr.rel (%p365) target = $region24
        $region23: #{fmwn_forward.1} parent=11 // pred_region
          %s369 = ssub.s32 18432, 18432
          %370 = vsyncadd [#allocation10], %s369
          %s371 = sshll.u32 [#allocation11], 4
          %s372 = int_to_ptr.vmem [resolvable:$true] %s371
          %377 = dma.hbm_to_vmem [thread:$0]  %s3, 18432, %s372, [#allocation10], 128, 128, 8
        $region24: #{fmwn_forward.1} parent=11 // pred_fallthru
          _
        // Predicated region
        $region25: #{fmwn_forward.1} parent=11 // pred_check
          %p378 = pneg %p138
        $region26: #{fmwn_forward.1} parent=11 // pred_check_branch
          %380 = sbr.rel (%p378) target = $region28
        $region27: #{fmwn_forward.1} parent=11 // pred_region
          %s382 = ssub.s32 64, 64
          %383 = vsyncadd [#allocation8], %s382
          %386 = dma.hbm_to_smem %s4, 64, [#allocation12], [#allocation8]
        $region28: #{fmwn_forward.1} parent=11 // pred_fallthru
          _
        // Predicated region
        $region29: #{fmwn_forward.1} parent=11 // pred_check
          %p387 = pneg %p159
        $region30: #{fmwn_forward.1} parent=11 // pred_check_branch
          %389 = sbr.rel (%p387) target = $region32
        $region31: #{fmwn_forward.1} parent=11 // pred_region
          %s391 = ssub.s32 32, 32
          %392 = vsyncadd [#allocation14], %s391
          %395 = dma.hbm_to_smem %s5, 32, [#allocation13], [#allocation14]
        $region32: #{fmwn_forward.1} parent=11 // pred_fallthru
          _
        // Predicated region
        $region33: #{fmwn_forward.1} parent=11 // pred_check
          %p396 = pneg %p180
        $region34: #{fmwn_forward.1} parent=11 // pred_check_branch
          %398 = sbr.rel (%p396) target = $region36
        $region35: #{fmwn_forward.1} parent=11 // pred_region
          %s400 = ssub.s32 32, 32
          %401 = vsyncadd [#allocation14], %s400
          %404 = dma.hbm_to_smem %s6, 32, [#allocation15], [#allocation14]
        $region36: #{fmwn_forward.1} parent=11 // pred_fallthru
          _
        // Predicated region
        $region37: #{fmwn_forward.1} parent=11 // pred_check
          %p405 = pneg %p201
        $region38: #{fmwn_forward.1} parent=11 // pred_check_branch
          %407 = sbr.rel (%p405) target = $region40
        $region39: #{fmwn_forward.1} parent=11 // pred_region
          _
        $region40: #{fmwn_forward.1} parent=11 // pred_fallthru
          _
        // Predicated region
        $region41: #{fmwn_forward.1} parent=11 // pred_check
          %p408 = pneg %p222
        $region42: #{fmwn_forward.1} parent=11 // pred_check_branch
          %410 = sbr.rel (%p408) target = $region44
        $region43: #{fmwn_forward.1} parent=11 // pred_region
          _
        $region44: #{fmwn_forward.1} parent=11 // pred_fallthru
          _
      $region12: #{fmwn_forward.1} parent=5 // pred_fallthru
        _
      %p411 = scmp.lt.s32.totalorder %s28, 2
      // Predicated region
      $region45: #{fmwn_forward.1} parent=5 // pred_check
        %p412 = pneg %p411
      $region46: #{fmwn_forward.1} parent=5 // pred_check_branch
        %414 = sbr.rel (%p412) target = $region48
      $region47: #{fmwn_forward.1} parent=5 // pred_region
        // Predicated region
        $region49: #{fmwn_forward.1} parent=47 // pred_check
          %p415 = pneg %p48
        $region50: #{fmwn_forward.1} parent=47 // pred_check_branch
          %417 = sbr.rel (%p415) target = $region52
        $region51: #{fmwn_forward.1} parent=47 // pred_region
          %p418 = scmp.lt.s32.totalorder %s28, 1
          %s419 = scalar_select %p418, %s28, 1
          %s420 = smul.addr %s419, 9
          %s421 = smul.addr %s420, 8
          %s422 = scalar_lea.vmem %s0, %s421
        $region52: #{fmwn_forward.1} parent=47 // pred_fallthru
          _
      $region48: #{fmwn_forward.1} parent=5 // pred_fallthru
        _
      %p423 = scmp.le.s32.totalorder 1, %s28
      %p424 = scmp.lt.s32.totalorder %s28, 3
      %p425 = pnand %p423, %p424
      %p426 = pneg %p425
      // Predicated region
      $region53: #{fmwn_forward.1} parent=5 // pred_check
        _
      $region54: #{fmwn_forward.1} parent=5 // pred_check_branch
        %428 = sbr.rel (%p425) target = $region56
      $region55: #{fmwn_forward.1} parent=5 // pred_region
        %s429 = ssub.s32 %s28, 1
        // Predicated region
        $region57: #{fmwn_forward.1} parent=55 // pred_check
          %p430 = pneg %p75
        $region58: #{fmwn_forward.1} parent=55 // pred_check_branch
          %432 = sbr.rel (%p430) target = $region60
        $region59: #{fmwn_forward.1} parent=55 // pred_region
          %433 = dma.done [#allocation6], 288
        $region60: #{fmwn_forward.1} parent=55 // pred_fallthru
          _
        // Predicated region
        $region61: #{fmwn_forward.1} parent=55 // pred_check
          %p434 = pneg %p96
        $region62: #{fmwn_forward.1} parent=55 // pred_check_branch
          %436 = sbr.rel (%p434) target = $region64
        $region63: #{fmwn_forward.1} parent=55 // pred_region
          %437 = dma.done [#allocation10], 55296
        $region64: #{fmwn_forward.1} parent=55 // pred_fallthru
          _
        // Predicated region
        $region65: #{fmwn_forward.1} parent=55 // pred_check
          %p438 = pneg %p117
        $region66: #{fmwn_forward.1} parent=55 // pred_check_branch
          %440 = sbr.rel (%p438) target = $region68
        $region67: #{fmwn_forward.1} parent=55 // pred_region
          %441 = dma.done [#allocation10], 18432
        $region68: #{fmwn_forward.1} parent=55 // pred_fallthru
          _
        // Predicated region
        $region69: #{fmwn_forward.1} parent=55 // pred_check
          %p442 = pneg %p138
        $region70: #{fmwn_forward.1} parent=55 // pred_check_branch
          %444 = sbr.rel (%p442) target = $region72
        $region71: #{fmwn_forward.1} parent=55 // pred_region
          %445 = dma.done [#allocation8], 64
        $region72: #{fmwn_forward.1} parent=55 // pred_fallthru
          _
        // Predicated region
        $region73: #{fmwn_forward.1} parent=55 // pred_check
          %p446 = pneg %p159
        $region74: #{fmwn_forward.1} parent=55 // pred_check_branch
          %448 = sbr.rel (%p446) target = $region76
        $region75: #{fmwn_forward.1} parent=55 // pred_region
          %449 = dma.done [#allocation14], 32
        $region76: #{fmwn_forward.1} parent=55 // pred_fallthru
          _
        // Predicated region
        $region77: #{fmwn_forward.1} parent=55 // pred_check
          %p450 = pneg %p180
        $region78: #{fmwn_forward.1} parent=55 // pred_check_branch
          %452 = sbr.rel (%p450) target = $region80
        $region79: #{fmwn_forward.1} parent=55 // pred_region
          %453 = dma.done [#allocation14], 32
        $region80: #{fmwn_forward.1} parent=55 // pred_fallthru
          _
        %454 = sfence
        %p455 = scmp.lt.s32.totalorder %s33, 1
        %s456 = scalar_select %p455, %s33, 1
        %s457 = smul.addr %s456, 9
        %s458 = smul.addr %s457, 8
        %s459 = scalar_lea.vmem %s0, %s458
        %p460 = pneg %p54
        %p461 = pneg %p51
        %p462 = pneg %p75
        %p463 = pneg %p72
        %p464 = pneg %p96
        %p465 = pneg %p93
        %p466 = pneg %p117
        %p467 = pneg %p114
        %p468 = pneg %p138
        %p469 = pneg %p135
        %p470 = pneg %p159
        %p471 = pneg %p156
        %p472 = pneg %p180
        %p473 = pneg %p177
        %p474 = pneg %p201
        %p475 = pneg %p198
        %p476 = pneg %p222
        %p477 = pneg %p219
        %p478 = pneg %p248
        %p479 = pneg %p245
        %p480 = scmp.lt.s32.totalorder %s33, 1
        %s481 = scalar_select %p480, %s33, 1
        %s482 = smul.addr %s481, 9
        %s483 = smul.addr %s482, 8
        %s484 = scalar_lea.vmem %s9, %s483
        %p485 = pneg %p274
        %p486 = pneg %p271
        %s487 = sand.u32 %s261, 1
        %s488 = sand.u32 %s261, 1
        %s489 = smul.addr %s488, 48
        %s490 = scalar_lea.vmem [#allocation16], %s489
        %p491 = pneg %p300
        %p492 = pneg %p297
        %s493 = sand.u32 %s287, 1
        %s494 = sand.u32 %s287, 1
        %s495 = smul.addr %s494, 16
        %s496 = scalar_lea.vmem [#allocation17], %s495
        %p497 = pneg %p326
        %p498 = pneg %p323
        %s499 = sand.u32 %s313, 1
        %s500 = scalar_lea.sflag [#allocation7], %s499
        %s501 = sand.u32 %s313, 1
        %s502 = smul.addr %s501, 8
        %s503 = scalar_lea.vmem [#allocation18], %s502
        %p504 = scmp.lt.s32.totalorder %s33, 1
        %s505 = scalar_select %p504, %s33, 1
        %s506 = smul.addr %s505, 9
        %s507 = smul.addr %s506, 8
        %s508 = scalar_lea.vmem %s0, %s507
        %p509 = scmp.lt.s32.totalorder %s33, 1
        %s510 = scalar_select %p509, %s33, 1
        %s511 = smul.addr %s510, 9
        %s512 = smul.addr %s511, 8
        %s513 = scalar_lea.vmem %s9, %s512
        %v514 = vld [vmem:[%s508] sm:$0xff]
        %v515 = vld [vmem:[%s508 + $0x8] sm:$0xff]
        %v516 = vld [vmem:[%s508 + $0x10] sm:$0xff]
        %v517 = vld [vmem:[%s508 + $0x18] sm:$0xff]
        %v518 = vld [vmem:[%s508 + $0x20] sm:$0xff]
        %v519 = vld [vmem:[%s508 + $0x28] sm:$0xff]
        %v520 = vld [vmem:[%s508 + $0x30] sm:$0xff]
        %v521 = vld [vmem:[%s508 + $0x38] sm:$0xff]
        %v522 = vld [vmem:[%s508 + $0x40] sm:$0xff]
        %s523 = sld [smem:[#allocation12]]
        %s524 = sld [smem:[#allocation12 + $0x1]]
        %s525 = sld [smem:[#allocation12 + $0x2]]
        %s526 = sld [smem:[#allocation12 + $0x3]]
        %s527 = sld [smem:[#allocation12 + $0x4]]
        %s528 = sld [smem:[#allocation12 + $0x5]]
        %s529 = sld [smem:[#allocation12 + $0x80]]
        %s530 = sld [smem:[#allocation12 + $0x81]]
        %s531 = sld [smem:[#allocation12 + $0x82]]
        %s532 = sld [smem:[#allocation12 + $0x83]]
        %s533 = sld [smem:[#allocation12 + $0x84]]
        %s534 = sld [smem:[#allocation12 + $0x85]]
        %s535 = sld [smem:[#allocation12 + $0x100]]
        %s536 = sld [smem:[#allocation12 + $0x101]]
        %s537 = sld [smem:[#allocation12 + $0x102]]
        %s538 = sld [smem:[#allocation12 + $0x103]]
        %s539 = sld [smem:[#allocation12 + $0x104]]
        %s540 = sld [smem:[#allocation12 + $0x105]]
        %550 = vrot.lane.b32.xlu0 %v514, 127
        %v551 = vpop.permute.xlu0 %550
        %552 = vrot.lane.b32.xlu0 %v515, 127
        %v553 = vpop.permute.xlu0 %552
        %554 = vrot.lane.b32.xlu0 %v516, 127
        %v555 = vpop.permute.xlu0 %554
        %556 = vrot.lane.b32.xlu0 %v517, 127
        %v557 = vpop.permute.xlu0 %556
        %558 = vrot.lane.b32.xlu0 %v518, 127
        %v559 = vpop.permute.xlu0 %558
        %560 = vrot.lane.b32.xlu0 %v519, 127
        %v561 = vpop.permute.xlu0 %560
        %562 = vrot.lane.b32.xlu0 %v520, 127
        %v563 = vpop.permute.xlu0 %562
        %564 = vrot.lane.b32.xlu0 %v521, 127
        %v565 = vpop.permute.xlu0 %564
        %566 = vrot.lane.b32.xlu0 %v522, 127
        %v567 = vpop.permute.xlu0 %566
        %vm568 = vcmask 1039360
        %v569 = vsel %vm568, %v551, %v553
        %v570 = vsel %vm568, %v553, %v555
        %v571 = vsel %vm568, %v555, %v557
        %v572 = vsel %vm568, %v557, %v559
        %v573 = vsel %vm568, %v559, %v561
        %v574 = vsel %vm568, %v561, %v563
        %v575 = vsel %vm568, %v563, %v565
        %v576 = vsel %vm568, %v565, %v567
        %v587 = vsel %vm568, %v567, %v551
        %588 = vrot.lane.b32.xlu0 %v514, 126
        %v589 = vpop.permute.xlu0 %588
        %590 = vrot.lane.b32.xlu0 %v515, 126
        %v591 = vpop.permute.xlu0 %590
        %592 = vrot.lane.b32.xlu0 %v516, 126
        %v593 = vpop.permute.xlu0 %592
        %594 = vrot.lane.b32.xlu0 %v517, 126
        %v595 = vpop.permute.xlu0 %594
        %596 = vrot.lane.b32.xlu0 %v518, 126
        %v597 = vpop.permute.xlu0 %596
        %598 = vrot.lane.b32.xlu0 %v519, 126
        %v599 = vpop.permute.xlu0 %598
        %600 = vrot.lane.b32.xlu0 %v520, 126
        %v601 = vpop.permute.xlu0 %600
        %602 = vrot.lane.b32.xlu0 %v521, 126
        %v603 = vpop.permute.xlu0 %602
        %604 = vrot.lane.b32.xlu0 %v522, 126
        %v605 = vpop.permute.xlu0 %604
        %vm606 = vcmask 1031168
        %v607 = vsel %vm606, %v589, %v591
        %v608 = vsel %vm606, %v591, %v593
        %v609 = vsel %vm606, %v593, %v595
        %v610 = vsel %vm606, %v595, %v597
        %v611 = vsel %vm606, %v597, %v599
        %v612 = vsel %vm606, %v599, %v601
        %v613 = vsel %vm606, %v601, %v603
        %v614 = vsel %vm606, %v603, %v605
        %v625 = vsel %vm606, %v605, %v589
        %626 = vrot.lane.b32.xlu0 %v514, 125
        %v627 = vpop.permute.xlu0 %626
        %628 = vrot.lane.b32.xlu0 %v515, 125
        %v629 = vpop.permute.xlu0 %628
        %630 = vrot.lane.b32.xlu0 %v516, 125
        %v631 = vpop.permute.xlu0 %630
        %632 = vrot.lane.b32.xlu0 %v517, 125
        %v633 = vpop.permute.xlu0 %632
        %634 = vrot.lane.b32.xlu0 %v518, 125
        %v635 = vpop.permute.xlu0 %634
        %636 = vrot.lane.b32.xlu0 %v519, 125
        %v637 = vpop.permute.xlu0 %636
        %638 = vrot.lane.b32.xlu0 %v520, 125
        %v639 = vpop.permute.xlu0 %638
        %640 = vrot.lane.b32.xlu0 %v521, 125
        %v641 = vpop.permute.xlu0 %640
        %642 = vrot.lane.b32.xlu0 %v522, 125
        %v643 = vpop.permute.xlu0 %642
        %vm644 = vcmask 1022976
        %v645 = vsel %vm644, %v627, %v629
        %v646 = vsel %vm644, %v629, %v631
        %v647 = vsel %vm644, %v631, %v633
        %v648 = vsel %vm644, %v633, %v635
        %v649 = vsel %vm644, %v635, %v637
        %v650 = vsel %vm644, %v637, %v639
        %v651 = vsel %vm644, %v639, %v641
        %v652 = vsel %vm644, %v641, %v643
        %v663 = vsel %vm644, %v643, %v627
        %664 = vrot.lane.b32.xlu0 %v514, 124
        %v665 = vpop.permute.xlu0 %664
        %666 = vrot.lane.b32.xlu0 %v515, 124
        %v667 = vpop.permute.xlu0 %666
        %668 = vrot.lane.b32.xlu0 %v516, 124
        %v669 = vpop.permute.xlu0 %668
        %670 = vrot.lane.b32.xlu0 %v517, 124
        %v671 = vpop.permute.xlu0 %670
        %672 = vrot.lane.b32.xlu0 %v518, 124
        %v673 = vpop.permute.xlu0 %672
        %674 = vrot.lane.b32.xlu0 %v519, 124
        %v675 = vpop.permute.xlu0 %674
        %676 = vrot.lane.b32.xlu0 %v520, 124
        %v677 = vpop.permute.xlu0 %676
        %678 = vrot.lane.b32.xlu0 %v521, 124
        %v679 = vpop.permute.xlu0 %678
        %680 = vrot.lane.b32.xlu0 %v522, 124
        %v681 = vpop.permute.xlu0 %680
        %vm682 = vcmask 1014784
        %v683 = vsel %vm682, %v665, %v667
        %v684 = vsel %vm682, %v667, %v669
        %v685 = vsel %vm682, %v669, %v671
        %v686 = vsel %vm682, %v671, %v673
        %v687 = vsel %vm682, %v673, %v675
        %v688 = vsel %vm682, %v675, %v677
        %v689 = vsel %vm682, %v677, %v679
        %v690 = vsel %vm682, %v679, %v681
        %v701 = vsel %vm682, %v681, %v665
        %702 = vrot.lane.b32.xlu0 %v514, 123
        %v703 = vpop.permute.xlu0 %702
        %704 = vrot.lane.b32.xlu0 %v515, 123
        %v705 = vpop.permute.xlu0 %704
        %706 = vrot.lane.b32.xlu0 %v516, 123
        %v707 = vpop.permute.xlu0 %706
        %708 = vrot.lane.b32.xlu0 %v517, 123
        %v709 = vpop.permute.xlu0 %708
        %710 = vrot.lane.b32.xlu0 %v518, 123
        %v711 = vpop.permute.xlu0 %710
        %712 = vrot.lane.b32.xlu0 %v519, 123
        %v713 = vpop.permute.xlu0 %712
        %714 = vrot.lane.b32.xlu0 %v520, 123
        %v715 = vpop.permute.xlu0 %714
        %716 = vrot.lane.b32.xlu0 %v521, 123
        %v717 = vpop.permute.xlu0 %716
        %718 = vrot.lane.b32.xlu0 %v522, 123
        %v719 = vpop.permute.xlu0 %718
        %vm720 = vcmask 1006592
        %v721 = vsel %vm720, %v703, %v705
        %v722 = vsel %vm720, %v705, %v707
        %v723 = vsel %vm720, %v707, %v709
        %v724 = vsel %vm720, %v709, %v711
        %v725 = vsel %vm720, %v711, %v713
        %v726 = vsel %vm720, %v713, %v715
        %v727 = vsel %vm720, %v715, %v717
        %v728 = vsel %vm720, %v717, %v719
        %v739 = vsel %vm720, %v719, %v703
        %v740 = vstv %s523
        %v741 = vmul.f32 %v514, %v740
        %v742 = vmul.f32 %v515, %v740
        %v743 = vmul.f32 %v516, %v740
        %v744 = vmul.f32 %v517, %v740
        %v745 = vmul.f32 %v518, %v740
        %v746 = vmul.f32 %v519, %v740
        %v747 = vmul.f32 %v520, %v740
        %v748 = vmul.f32 %v521, %v740
        %v749 = vmul.f32 %v522, %v740
        %v750 = vstv %s524
        %v751 = vmul.f32 %v569, %v750
        %v752 = vmul.f32 %v570, %v750
        %v753 = vmul.f32 %v571, %v750
        %v754 = vmul.f32 %v572, %v750
        %v755 = vmul.f32 %v573, %v750
        %v756 = vmul.f32 %v574, %v750
        %v757 = vmul.f32 %v575, %v750
        %v758 = vmul.f32 %v576, %v750
        %v759 = vmul.f32 %v587, %v750
        %v760 = vstv %s525
        %v761 = vmul.f32 %v607, %v760
        %v762 = vmul.f32 %v608, %v760
        %v763 = vmul.f32 %v609, %v760
        %v764 = vmul.f32 %v610, %v760
        %v765 = vmul.f32 %v611, %v760
        %v766 = vmul.f32 %v612, %v760
        %v767 = vmul.f32 %v613, %v760
        %v768 = vmul.f32 %v614, %v760
        %v769 = vmul.f32 %v625, %v760
        %v770 = vstv %s526
        %v771 = vmul.f32 %v645, %v770
        %v772 = vmul.f32 %v646, %v770
        %v773 = vmul.f32 %v647, %v770
        %v774 = vmul.f32 %v648, %v770
        %v775 = vmul.f32 %v649, %v770
        %v776 = vmul.f32 %v650, %v770
        %v777 = vmul.f32 %v651, %v770
        %v778 = vmul.f32 %v652, %v770
        %v779 = vmul.f32 %v663, %v770
        %v780 = vstv %s527
        %v781 = vmul.f32 %v683, %v780
        %v782 = vmul.f32 %v684, %v780
        %v783 = vmul.f32 %v685, %v780
        %v784 = vmul.f32 %v686, %v780
        %v785 = vmul.f32 %v687, %v780
        %v786 = vmul.f32 %v688, %v780
        %v787 = vmul.f32 %v689, %v780
        %v788 = vmul.f32 %v690, %v780
        %v789 = vmul.f32 %v701, %v780
        %v790 = vstv %s528
        %v791 = vmul.f32 %v721, %v790
        %v792 = vmul.f32 %v722, %v790
        %v793 = vmul.f32 %v723, %v790
        %v794 = vmul.f32 %v724, %v790
        %v795 = vmul.f32 %v725, %v790
        %v796 = vmul.f32 %v726, %v790
        %v797 = vmul.f32 %v727, %v790
        %v798 = vmul.f32 %v728, %v790
        %v799 = vmul.f32 %v739, %v790
        %v800 = vadd.f32 %v741, %v751
        %v801 = vadd.f32 %v742, %v752
        %v802 = vadd.f32 %v743, %v753
        %v803 = vadd.f32 %v744, %v754
        %v804 = vadd.f32 %v745, %v755
        %v805 = vadd.f32 %v746, %v756
        %v806 = vadd.f32 %v747, %v757
        %v807 = vadd.f32 %v748, %v758
        %v808 = vadd.f32 %v749, %v759
        %v809 = vadd.f32 %v761, %v771
        %v810 = vadd.f32 %v762, %v772
        %v811 = vadd.f32 %v763, %v773
        %v812 = vadd.f32 %v764, %v774
        %v813 = vadd.f32 %v765, %v775
        %v814 = vadd.f32 %v766, %v776
        %v815 = vadd.f32 %v767, %v777
        %v816 = vadd.f32 %v768, %v778
        %v817 = vadd.f32 %v769, %v779
        %v818 = vadd.f32 %v781, %v791
        %v819 = vadd.f32 %v782, %v792
        %v820 = vadd.f32 %v783, %v793
        %v821 = vadd.f32 %v784, %v794
        %v822 = vadd.f32 %v785, %v795
        %v823 = vadd.f32 %v786, %v796
        %v824 = vadd.f32 %v787, %v797
        %v825 = vadd.f32 %v788, %v798
        %v826 = vadd.f32 %v789, %v799
        %v827 = vadd.f32 %v800, %v809
        %v828 = vadd.f32 %v801, %v810
        %v829 = vadd.f32 %v802, %v811
        %v830 = vadd.f32 %v803, %v812
        %v831 = vadd.f32 %v804, %v813
        %v832 = vadd.f32 %v805, %v814
        %v833 = vadd.f32 %v806, %v815
        %v834 = vadd.f32 %v807, %v816
        %v835 = vadd.f32 %v808, %v817
        %v836 = vadd.f32 %v827, %v818
        %v837 = vadd.f32 %v828, %v819
        %v838 = vadd.f32 %v829, %v820
        %v839 = vadd.f32 %v830, %v821
        %v840 = vadd.f32 %v831, %v822
        %v841 = vadd.f32 %v832, %v823
        %v842 = vadd.f32 %v833, %v824
        %v843 = vadd.f32 %v834, %v825
        %v844 = vadd.f32 %v835, %v826
        %v845 = vstv %s529
        %v846 = vmul.f32 %v514, %v845
        %v847 = vmul.f32 %v515, %v845
        %v848 = vmul.f32 %v516, %v845
        %v849 = vmul.f32 %v517, %v845
        %v850 = vmul.f32 %v518, %v845
        %v851 = vmul.f32 %v519, %v845
        %v852 = vmul.f32 %v520, %v845
        %v853 = vmul.f32 %v521, %v845
        %v854 = vmul.f32 %v522, %v845
        %v855 = vstv %s530
        %v856 = vmul.f32 %v569, %v855
        %v857 = vmul.f32 %v570, %v855
        %v858 = vmul.f32 %v571, %v855
        %v859 = vmul.f32 %v572, %v855
        %v860 = vmul.f32 %v573, %v855
        %v861 = vmul.f32 %v574, %v855
        %v862 = vmul.f32 %v575, %v855
        %v863 = vmul.f32 %v576, %v855
        %v864 = vmul.f32 %v587, %v855
        %v865 = vstv %s531
        %v866 = vmul.f32 %v607, %v865
        %v867 = vmul.f32 %v608, %v865
        %v868 = vmul.f32 %v609, %v865
        %v869 = vmul.f32 %v610, %v865
        %v870 = vmul.f32 %v611, %v865
        %v871 = vmul.f32 %v612, %v865
        %v872 = vmul.f32 %v613, %v865
        %v873 = vmul.f32 %v614, %v865
        %v874 = vmul.f32 %v625, %v865
        %v875 = vstv %s532
        %v876 = vmul.f32 %v645, %v875
        %v877 = vmul.f32 %v646, %v875
        %v878 = vmul.f32 %v647, %v875
        %v879 = vmul.f32 %v648, %v875
        %v880 = vmul.f32 %v649, %v875
        %v881 = vmul.f32 %v650, %v875
        %v882 = vmul.f32 %v651, %v875
        %v883 = vmul.f32 %v652, %v875
        %v884 = vmul.f32 %v663, %v875
        %v885 = vstv %s533
        %v886 = vmul.f32 %v683, %v885
        %v887 = vmul.f32 %v684, %v885
        %v888 = vmul.f32 %v685, %v885
        %v889 = vmul.f32 %v686, %v885
        %v890 = vmul.f32 %v687, %v885
        %v891 = vmul.f32 %v688, %v885
        %v892 = vmul.f32 %v689, %v885
        %v893 = vmul.f32 %v690, %v885
        %v894 = vmul.f32 %v701, %v885
        %v895 = vstv %s534
        %v896 = vmul.f32 %v721, %v895
        %v897 = vmul.f32 %v722, %v895
        %v898 = vmul.f32 %v723, %v895
        %v899 = vmul.f32 %v724, %v895
        %v900 = vmul.f32 %v725, %v895
        %v901 = vmul.f32 %v726, %v895
        %v902 = vmul.f32 %v727, %v895
        %v903 = vmul.f32 %v728, %v895
        %v904 = vmul.f32 %v739, %v895
        %v905 = vadd.f32 %v846, %v856
        %v906 = vadd.f32 %v847, %v857
        %v907 = vadd.f32 %v848, %v858
        %v908 = vadd.f32 %v849, %v859
        %v909 = vadd.f32 %v850, %v860
        %v910 = vadd.f32 %v851, %v861
        %v911 = vadd.f32 %v852, %v862
        %v912 = vadd.f32 %v853, %v863
        %v913 = vadd.f32 %v854, %v864
        %v914 = vadd.f32 %v866, %v876
        %v915 = vadd.f32 %v867, %v877
        %v916 = vadd.f32 %v868, %v878
        %v917 = vadd.f32 %v869, %v879
        %v918 = vadd.f32 %v870, %v880
        %v919 = vadd.f32 %v871, %v881
        %v920 = vadd.f32 %v872, %v882
        %v921 = vadd.f32 %v873, %v883
        %v922 = vadd.f32 %v874, %v884
        %v923 = vadd.f32 %v886, %v896
        %v924 = vadd.f32 %v887, %v897
        %v925 = vadd.f32 %v888, %v898
        %v926 = vadd.f32 %v889, %v899
        %v927 = vadd.f32 %v890, %v900
        %v928 = vadd.f32 %v891, %v901
        %v929 = vadd.f32 %v892, %v902
        %v930 = vadd.f32 %v893, %v903
        %v931 = vadd.f32 %v894, %v904
        %v932 = vadd.f32 %v905, %v914
        %v933 = vadd.f32 %v906, %v915
        %v934 = vadd.f32 %v907, %v916
        %v935 = vadd.f32 %v908, %v917
        %v936 = vadd.f32 %v909, %v918
        %v937 = vadd.f32 %v910, %v919
        %v938 = vadd.f32 %v911, %v920
        %v939 = vadd.f32 %v912, %v921
        %v940 = vadd.f32 %v913, %v922
        %v941 = vadd.f32 %v932, %v923
        %v942 = vadd.f32 %v933, %v924
        %v943 = vadd.f32 %v934, %v925
        %v944 = vadd.f32 %v935, %v926
        %v945 = vadd.f32 %v936, %v927
        %v946 = vadd.f32 %v937, %v928
        %v947 = vadd.f32 %v938, %v929
        %v948 = vadd.f32 %v939, %v930
        %v949 = vadd.f32 %v940, %v931
        %v950 = vstv %s535
        %v951 = vmul.f32 %v514, %v950
        %v952 = vmul.f32 %v515, %v950
        %v953 = vmul.f32 %v516, %v950
        %v954 = vmul.f32 %v517, %v950
        %v955 = vmul.f32 %v518, %v950
        %v956 = vmul.f32 %v519, %v950
        %v957 = vmul.f32 %v520, %v950
        %v958 = vmul.f32 %v521, %v950
        %v959 = vmul.f32 %v522, %v950
        %v960 = vstv %s536
        %v961 = vmul.f32 %v569, %v960
        %v962 = vmul.f32 %v570, %v960
        %v963 = vmul.f32 %v571, %v960
        %v964 = vmul.f32 %v572, %v960
        %v965 = vmul.f32 %v573, %v960
        %v966 = vmul.f32 %v574, %v960
        %v967 = vmul.f32 %v575, %v960
        %v968 = vmul.f32 %v576, %v960
        %v969 = vmul.f32 %v587, %v960
        %v970 = vstv %s537
        %v971 = vmul.f32 %v607, %v970
        %v972 = vmul.f32 %v608, %v970
        %v973 = vmul.f32 %v609, %v970
        %v974 = vmul.f32 %v610, %v970
        %v975 = vmul.f32 %v611, %v970
        %v976 = vmul.f32 %v612, %v970
        %v977 = vmul.f32 %v613, %v970
        %v978 = vmul.f32 %v614, %v970
        %v979 = vmul.f32 %v625, %v970
        %v980 = vstv %s538
        %v981 = vmul.f32 %v645, %v980
        %v982 = vmul.f32 %v646, %v980
        %v983 = vmul.f32 %v647, %v980
        %v984 = vmul.f32 %v648, %v980
        %v985 = vmul.f32 %v649, %v980
        %v986 = vmul.f32 %v650, %v980
        %v987 = vmul.f32 %v651, %v980
        %v988 = vmul.f32 %v652, %v980
        %v989 = vmul.f32 %v663, %v980
        %v990 = vstv %s539
        %v991 = vmul.f32 %v683, %v990
        %v992 = vmul.f32 %v684, %v990
        %v993 = vmul.f32 %v685, %v990
        %v994 = vmul.f32 %v686, %v990
        %v995 = vmul.f32 %v687, %v990
        %v996 = vmul.f32 %v688, %v990
        %v997 = vmul.f32 %v689, %v990
        %v998 = vmul.f32 %v690, %v990
        %v999 = vmul.f32 %v701, %v990
        %v1000 = vstv %s540
        %v1001 = vmul.f32 %v721, %v1000
        %v1002 = vmul.f32 %v722, %v1000
        %v1003 = vmul.f32 %v723, %v1000
        %v1004 = vmul.f32 %v724, %v1000
        %v1005 = vmul.f32 %v725, %v1000
        %v1006 = vmul.f32 %v726, %v1000
        %v1007 = vmul.f32 %v727, %v1000
        %v1008 = vmul.f32 %v728, %v1000
        %v1009 = vmul.f32 %v739, %v1000
        %v1010 = vadd.f32 %v951, %v961
        %v1011 = vadd.f32 %v952, %v962
        %v1012 = vadd.f32 %v953, %v963
        %v1013 = vadd.f32 %v954, %v964
        %v1014 = vadd.f32 %v955, %v965
        %v1015 = vadd.f32 %v956, %v966
        %v1016 = vadd.f32 %v957, %v967
        %v1017 = vadd.f32 %v958, %v968
        %v1018 = vadd.f32 %v959, %v969
        %v1019 = vadd.f32 %v971, %v981
        %v1020 = vadd.f32 %v972, %v982
        %v1021 = vadd.f32 %v973, %v983
        %v1022 = vadd.f32 %v974, %v984
        %v1023 = vadd.f32 %v975, %v985
        %v1024 = vadd.f32 %v976, %v986
        %v1025 = vadd.f32 %v977, %v987
        %v1026 = vadd.f32 %v978, %v988
        %v1027 = vadd.f32 %v979, %v989
        %v1028 = vadd.f32 %v991, %v1001
        %v1029 = vadd.f32 %v992, %v1002
        %v1030 = vadd.f32 %v993, %v1003
        %v1031 = vadd.f32 %v994, %v1004
        %v1032 = vadd.f32 %v995, %v1005
        %v1033 = vadd.f32 %v996, %v1006
        %v1034 = vadd.f32 %v997, %v1007
        %v1035 = vadd.f32 %v998, %v1008
        %v1036 = vadd.f32 %v999, %v1009
        %v1037 = vadd.f32 %v1010, %v1019
        %v1038 = vadd.f32 %v1011, %v1020
        %v1039 = vadd.f32 %v1012, %v1021
        %v1040 = vadd.f32 %v1013, %v1022
        %v1041 = vadd.f32 %v1014, %v1023
        %v1042 = vadd.f32 %v1015, %v1024
        %v1043 = vadd.f32 %v1016, %v1025
        %v1044 = vadd.f32 %v1017, %v1026
        %v1045 = vadd.f32 %v1018, %v1027
        %v1046 = vadd.f32 %v1037, %v1028
        %v1047 = vadd.f32 %v1038, %v1029
        %v1048 = vadd.f32 %v1039, %v1030
        %v1049 = vadd.f32 %v1040, %v1031
        %v1050 = vadd.f32 %v1041, %v1032
        %v1051 = vadd.f32 %v1042, %v1033
        %v1052 = vadd.f32 %v1043, %v1034
        %v1053 = vadd.f32 %v1044, %v1035
        %v1054 = vadd.f32 %v1045, %v1036
        %s1055 = sld [smem:[#allocation13]]
        %s1056 = sld [smem:[#allocation15]]
        %v1057 = vstv %s1056
        %v1058 = vsub.f32 %v941, %v1057
        %v1059 = vsub.f32 %v942, %v1057
        %v1060 = vsub.f32 %v943, %v1057
        %v1061 = vsub.f32 %v944, %v1057
        %v1062 = vsub.f32 %v945, %v1057
        %v1063 = vsub.f32 %v946, %v1057
        %v1064 = vsub.f32 %v947, %v1057
        %v1065 = vsub.f32 %v948, %v1057
        %v1066 = vsub.f32 %v949, %v1057
        %v1067 = vmul.f32 %v1058, 100.0
        %v1068 = vmul.f32 %v1059, 100.0
        %v1069 = vmul.f32 %v1060, 100.0
        %v1070 = vmul.f32 %v1061, 100.0
        %v1071 = vmul.f32 %v1062, 100.0
        %v1072 = vmul.f32 %v1063, 100.0
        %v1073 = vmul.f32 %v1064, 100.0
        %v1074 = vmul.f32 %v1065, 100.0
        %v1075 = vmul.f32 %v1066, 100.0
        %v1076 = vand.u32 2147483647, %v1067
        %v1077 = vand.u32 2147483647, %v1068
        %v1078 = vand.u32 2147483647, %v1069
        %v1079 = vand.u32 2147483647, %v1070
        %v1080 = vand.u32 2147483647, %v1071
        %v1081 = vand.u32 2147483647, %v1072
        %v1082 = vand.u32 2147483647, %v1073
        %v1083 = vand.u32 2147483647, %v1074
        %v1084 = vand.u32 2147483647, %v1075
        %v1085 = vsub.f32 0.0, %v1076
        %v1086 = vsub.f32 0.0, %v1077
        %v1087 = vsub.f32 0.0, %v1078
        %v1088 = vsub.f32 0.0, %v1079
        %v1089 = vsub.f32 0.0, %v1080
        %v1090 = vsub.f32 0.0, %v1081
        %v1091 = vsub.f32 0.0, %v1082
        %v1092 = vsub.f32 0.0, %v1083
        %v1093 = vsub.f32 0.0, %v1084
        %v1094 = vmul.f32 %v1085, 1.442695
        %v1095 = vpow.pop %v1094
        %v1096 = vmul.f32 %v1086, 1.442695
        %v1097 = vpow.pop %v1096
        %v1098 = vmul.f32 %v1087, 1.442695
        %v1099 = vpow.pop %v1098
        %v1100 = vmul.f32 %v1088, 1.442695
        %v1101 = vpow.pop %v1100
        %v1102 = vmul.f32 %v1089, 1.442695
        %v1103 = vpow.pop %v1102
        %v1104 = vmul.f32 %v1090, 1.442695
        %v1105 = vpow.pop %v1104
        %v1106 = vmul.f32 %v1091, 1.442695
        %v1107 = vpow.pop %v1106
        %v1108 = vmul.f32 %v1092, 1.442695
        %v1109 = vpow.pop %v1108
        %v1110 = vmul.f32 %v1093, 1.442695
        %v1111 = vpow.pop %v1110
        %v1112 = vadd.f32 %v1095, 1.0
        %v1113 = vadd.f32 %v1097, 1.0
        %v1114 = vadd.f32 %v1099, 1.0
        %v1115 = vadd.f32 %v1101, 1.0
        %v1116 = vadd.f32 %v1103, 1.0
        %v1117 = vadd.f32 %v1105, 1.0
        %v1118 = vadd.f32 %v1107, 1.0
        %v1119 = vadd.f32 %v1109, 1.0
        %v1120 = vadd.f32 %v1111, 1.0
        %v1121 = vrcp.pop %v1112
        %v1122 = vrcp.pop %v1113
        %v1123 = vrcp.pop %v1114
        %v1124 = vrcp.pop %v1115
        %v1125 = vrcp.pop %v1116
        %v1126 = vrcp.pop %v1117
        %v1127 = vrcp.pop %v1118
        %v1128 = vrcp.pop %v1119
        %v1129 = vrcp.pop %v1120
        %vm1130 = vcmp.ge.f32.partialorder %v1067, 0.0
        %vm1131 = vcmp.ge.f32.partialorder %v1068, 0.0
        %vm1132 = vcmp.ge.f32.partialorder %v1069, 0.0
        %vm1133 = vcmp.ge.f32.partialorder %v1070, 0.0
        %vm1134 = vcmp.ge.f32.partialorder %v1071, 0.0
        %vm1135 = vcmp.ge.f32.partialorder %v1072, 0.0
        %vm1136 = vcmp.ge.f32.partialorder %v1073, 0.0
        %vm1137 = vcmp.ge.f32.partialorder %v1074, 0.0
        %vm1138 = vcmp.ge.f32.partialorder %v1075, 0.0
        %v1139 = vmul.f32 %v1095, %v1121
        %v1140 = vmul.f32 %v1097, %v1122
        %v1141 = vmul.f32 %v1099, %v1123
        %v1142 = vmul.f32 %v1101, %v1124
        %v1143 = vmul.f32 %v1103, %v1125
        %v1144 = vmul.f32 %v1105, %v1126
        %v1145 = vmul.f32 %v1107, %v1127
        %v1146 = vmul.f32 %v1109, %v1128
        %v1147 = vmul.f32 %v1111, %v1129
        %v1148 = vsel %vm1130, %v1121, %v1139
        %v1149 = vsel %vm1131, %v1122, %v1140
        %v1150 = vsel %vm1132, %v1123, %v1141
        %v1151 = vsel %vm1133, %v1124, %v1142
        %v1152 = vsel %vm1134, %v1125, %v1143
        %v1153 = vsel %vm1135, %v1126, %v1144
        %v1154 = vsel %vm1136, %v1127, %v1145
        %v1155 = vsel %vm1137, %v1128, %v1146
        %v1156 = vsel %vm1138, %v1129, %v1147
        %v1157 = vstv %s1055
        %v1158 = vadd.f32 %v941, %v1157
        %v1159 = vadd.f32 %v942, %v1157
        %v1160 = vadd.f32 %v943, %v1157
        %v1161 = vadd.f32 %v944, %v1157
        %v1162 = vadd.f32 %v945, %v1157
        %v1163 = vadd.f32 %v946, %v1157
        %v1164 = vadd.f32 %v947, %v1157
        %v1165 = vadd.f32 %v948, %v1157
        %v1166 = vadd.f32 %v949, %v1157
        %v1167 = vmul.f32 %v1158, -100.0
        %v1168 = vmul.f32 %v1159, -100.0
        %v1169 = vmul.f32 %v1160, -100.0
        %v1170 = vmul.f32 %v1161, -100.0
        %v1171 = vmul.f32 %v1162, -100.0
        %v1172 = vmul.f32 %v1163, -100.0
        %v1173 = vmul.f32 %v1164, -100.0
        %v1174 = vmul.f32 %v1165, -100.0
        %v1175 = vmul.f32 %v1166, -100.0
        %v1176 = vand.u32 2147483647, %v1167
        %v1177 = vand.u32 2147483647, %v1168
        %v1178 = vand.u32 2147483647, %v1169
        %v1179 = vand.u32 2147483647, %v1170
        %v1180 = vand.u32 2147483647, %v1171
        %v1181 = vand.u32 2147483647, %v1172
        %v1182 = vand.u32 2147483647, %v1173
        %v1183 = vand.u32 2147483647, %v1174
        %v1184 = vand.u32 2147483647, %v1175
        %v1185 = vsub.f32 0.0, %v1176
        %v1186 = vsub.f32 0.0, %v1177
        %v1187 = vsub.f32 0.0, %v1178
        %v1188 = vsub.f32 0.0, %v1179
        %v1189 = vsub.f32 0.0, %v1180
        %v1190 = vsub.f32 0.0, %v1181
        %v1191 = vsub.f32 0.0, %v1182
        %v1192 = vsub.f32 0.0, %v1183
        %v1193 = vsub.f32 0.0, %v1184
        %v1194 = vmul.f32 %v1185, 1.442695
        %v1195 = vpow.pop %v1194
        %v1196 = vmul.f32 %v1186, 1.442695
        %v1197 = vpow.pop %v1196
        %v1198 = vmul.f32 %v1187, 1.442695
        %v1199 = vpow.pop %v1198
        %v1200 = vmul.f32 %v1188, 1.442695
        %v1201 = vpow.pop %v1200
        %v1202 = vmul.f32 %v1189, 1.442695
        %v1203 = vpow.pop %v1202
        %v1204 = vmul.f32 %v1190, 1.442695
        %v1205 = vpow.pop %v1204
        %v1206 = vmul.f32 %v1191, 1.442695
        %v1207 = vpow.pop %v1206
        %v1208 = vmul.f32 %v1192, 1.442695
        %v1209 = vpow.pop %v1208
        %v1210 = vmul.f32 %v1193, 1.442695
        %v1211 = vpow.pop %v1210
        %v1212 = vadd.f32 %v1195, 1.0
        %v1213 = vadd.f32 %v1197, 1.0
        %v1214 = vadd.f32 %v1199, 1.0
        %v1215 = vadd.f32 %v1201, 1.0
        %v1216 = vadd.f32 %v1203, 1.0
        %v1217 = vadd.f32 %v1205, 1.0
        %v1218 = vadd.f32 %v1207, 1.0
        %v1219 = vadd.f32 %v1209, 1.0
        %v1220 = vadd.f32 %v1211, 1.0
        %v1221 = vrcp.pop %v1212
        %v1222 = vrcp.pop %v1213
        %v1223 = vrcp.pop %v1214
        %v1224 = vrcp.pop %v1215
        %v1225 = vrcp.pop %v1216
        %v1226 = vrcp.pop %v1217
        %v1227 = vrcp.pop %v1218
        %v1228 = vrcp.pop %v1219
        %v1229 = vrcp.pop %v1220
        %vm1230 = vcmp.ge.f32.partialorder %v1167, 0.0
        %vm1231 = vcmp.ge.f32.partialorder %v1168, 0.0
        %vm1232 = vcmp.ge.f32.partialorder %v1169, 0.0
        %vm1233 = vcmp.ge.f32.partialorder %v1170, 0.0
        %vm1234 = vcmp.ge.f32.partialorder %v1171, 0.0
        %vm1235 = vcmp.ge.f32.partialorder %v1172, 0.0
        %vm1236 = vcmp.ge.f32.partialorder %v1173, 0.0
        %vm1237 = vcmp.ge.f32.partialorder %v1174, 0.0
        %vm1238 = vcmp.ge.f32.partialorder %v1175, 0.0
        %v1239 = vmul.f32 %v1195, %v1221
        %v1240 = vmul.f32 %v1197, %v1222
        %v1241 = vmul.f32 %v1199, %v1223
        %v1242 = vmul.f32 %v1201, %v1224
        %v1243 = vmul.f32 %v1203, %v1225
        %v1244 = vmul.f32 %v1205, %v1226
        %v1245 = vmul.f32 %v1207, %v1227
        %v1246 = vmul.f32 %v1209, %v1228
        %v1247 = vmul.f32 %v1211, %v1229
        %v1248 = vsel %vm1230, %v1221, %v1239
        %v1249 = vsel %vm1231, %v1222, %v1240
        %v1250 = vsel %vm1232, %v1223, %v1241
        %v1251 = vsel %vm1233, %v1224, %v1242
        %v1252 = vsel %vm1234, %v1225, %v1243
        %v1253 = vsel %vm1235, %v1226, %v1244
        %v1254 = vsel %vm1236, %v1227, %v1245
        %v1255 = vsel %vm1237, %v1228, %v1246
        %v1256 = vsel %vm1238, %v1229, %v1247
        %v1257 = vadd.f32 %v1148, %v1248
        %v1258 = vadd.f32 %v1149, %v1249
        %v1259 = vadd.f32 %v1150, %v1250
        %v1260 = vadd.f32 %v1151, %v1251
        %v1261 = vadd.f32 %v1152, %v1252
        %v1262 = vadd.f32 %v1153, %v1253
        %v1263 = vadd.f32 %v1154, %v1254
        %v1264 = vadd.f32 %v1155, %v1255
        %v1265 = vadd.f32 %v1156, %v1256
        %v1266 = vmul.f32 %v941, %v1257
        %v1267 = vmul.f32 %v942, %v1258
        %v1268 = vmul.f32 %v943, %v1259
        %v1269 = vmul.f32 %v944, %v1260
        %v1270 = vmul.f32 %v945, %v1261
        %v1271 = vmul.f32 %v946, %v1262
        %v1272 = vmul.f32 %v947, %v1263
        %v1273 = vmul.f32 %v948, %v1264
        %v1274 = vmul.f32 %v949, %v1265
        %1275 = vst [vmem:[#allocation2] sm:$0xff] %v1266
        %1276 = vst [vmem:[#allocation2 + $0x8] sm:$0xff] %v1267
        %1277 = vst [vmem:[#allocation2 + $0x10] sm:$0xff] %v1268
        %1278 = vst [vmem:[#allocation2 + $0x18] sm:$0xff] %v1269
        %1279 = vst [vmem:[#allocation2 + $0x20] sm:$0xff] %v1270
        %1280 = vst [vmem:[#allocation2 + $0x28] sm:$0xff] %v1271
        %1281 = vst [vmem:[#allocation2 + $0x30] sm:$0xff] %v1272
        %1282 = vst [vmem:[#allocation2 + $0x38] sm:$0xff] %v1273
        %1283 = vst [vmem:[#allocation2 + $0x40] sm:$0xff] %v1274
        %v1284 = vld [vmem:[#allocation9] sm:$0xff]
        %v1285 = vld [vmem:[#allocation9 + $0x8] sm:$0xff]
        %v1286 = vld [vmem:[#allocation9 + $0x10] sm:$0xff]
        %v1287 = vld [vmem:[#allocation9 + $0x18] sm:$0xff]
        %v1288 = vld [vmem:[#allocation9 + $0x20] sm:$0xff]
        %v1289 = vld [vmem:[#allocation9 + $0x28] sm:$0xff]
        %v1290 = vld [vmem:[#allocation9 + $0x30] sm:$0xff]
        %v1291 = vld [vmem:[#allocation9 + $0x38] sm:$0xff]
        %v1292 = vld [vmem:[#allocation9 + $0x40] sm:$0xff]
        %v1293 = vld [vmem:[#allocation9 + $0x48] sm:$0xff]
        %v1294 = vld [vmem:[#allocation9 + $0x50] sm:$0xff]
        %v1295 = vld [vmem:[#allocation9 + $0x58] sm:$0xff]
        %v1296 = vld [vmem:[#allocation9 + $0x60] sm:$0xff]
        %v1297 = vld [vmem:[#allocation9 + $0x68] sm:$0xff]
        %v1298 = vld [vmem:[#allocation9 + $0x70] sm:$0xff]
        %v1299 = vld [vmem:[#allocation9 + $0x78] sm:$0xff]
        %v1300 = vld [vmem:[#allocation9 + $0x80] sm:$0xff]
        %v1301 = vld [vmem:[#allocation9 + $0x88] sm:$0xff]
        %v1302 = vld [vmem:[#allocation9 + $0x90] sm:$0xff]
        %v1303 = vld [vmem:[#allocation9 + $0x98] sm:$0xff]
        %v1304 = vld [vmem:[#allocation9 + $0xa0] sm:$0xff]
        %v1305 = vld [vmem:[#allocation9 + $0xa8] sm:$0xff]
        %v1306 = vld [vmem:[#allocation9 + $0xb0] sm:$0xff]
        %v1307 = vld [vmem:[#allocation9 + $0xb8] sm:$0xff]
        %v1308 = vld [vmem:[#allocation9 + $0xc0] sm:$0xff]
        %v1309 = vld [vmem:[#allocation9 + $0xc8] sm:$0xff]
        %v1310 = vld [vmem:[#allocation9 + $0xd0] sm:$0xff]
        %v1311 = vld [vmem:[#allocation9 + $0xd8] sm:$0xff]
        %v1312 = vld [vmem:[#allocation9 + $0xe0] sm:$0xff]
        %v1313 = vld [vmem:[#allocation9 + $0xe8] sm:$0xff]
        %v1314 = vld [vmem:[#allocation9 + $0xf0] sm:$0xff]
        %v1315 = vld [vmem:[#allocation9 + $0xf8] sm:$0xff]
        %v1316 = vld [vmem:[#allocation9 + $0x100] sm:$0xff]
        %v1317 = vld [vmem:[#allocation9 + $0x108] sm:$0xff]
        %v1318 = vld [vmem:[#allocation9 + $0x110] sm:$0xff]
        %v1319 = vld [vmem:[#allocation9 + $0x118] sm:$0xff]
        %v1320 = vld [vmem:[#allocation9 + $0x120] sm:$0xff]
        %v1321 = vld [vmem:[#allocation9 + $0x128] sm:$0xff]
        %v1322 = vld [vmem:[#allocation9 + $0x130] sm:$0xff]
        %v1323 = vld [vmem:[#allocation9 + $0x138] sm:$0xff]
        %v1324 = vld [vmem:[#allocation9 + $0x140] sm:$0xff]
        %v1325 = vld [vmem:[#allocation9 + $0x148] sm:$0xff]
        %v1326 = vld [vmem:[#allocation9 + $0x150] sm:$0xff]
        %v1327 = vld [vmem:[#allocation9 + $0x158] sm:$0xff]
        %v1328 = vld [vmem:[#allocation9 + $0x160] sm:$0xff]
        %v1329 = vld [vmem:[#allocation9 + $0x168] sm:$0xff]
        %v1330 = vld [vmem:[#allocation9 + $0x170] sm:$0xff]
        %v1331 = vld [vmem:[#allocation9 + $0x178] sm:$0xff]
        %v1332 = vld [vmem:[#allocation9 + $0x180] sm:$0xff]
        %v1333 = vld [vmem:[#allocation9 + $0x188] sm:$0xff]
        %v1334 = vld [vmem:[#allocation9 + $0x190] sm:$0xff]
        %v1335 = vld [vmem:[#allocation9 + $0x198] sm:$0xff]
        %v1336 = vld [vmem:[#allocation9 + $0x1a0] sm:$0xff]
        %v1337 = vld [vmem:[#allocation9 + $0x1a8] sm:$0xff]
        %v1338 = vld [vmem:[#allocation9 + $0x1b0] sm:$0xff]
        %v1339 = vld [vmem:[#allocation9 + $0x1b8] sm:$0xff]
        %v1340 = vld [vmem:[#allocation9 + $0x1c0] sm:$0xff]
        %v1341 = vld [vmem:[#allocation9 + $0x1c8] sm:$0xff]
        %v1342 = vld [vmem:[#allocation9 + $0x1d0] sm:$0xff]
        %v1343 = vld [vmem:[#allocation9 + $0x1d8] sm:$0xff]
        %v1344 = vld [vmem:[#allocation9 + $0x1e0] sm:$0xff]
        %v1345 = vld [vmem:[#allocation9 + $0x1e8] sm:$0xff]
        %v1346 = vld [vmem:[#allocation9 + $0x1f0] sm:$0xff]
        %v1347 = vld [vmem:[#allocation9 + $0x1f8] sm:$0xff]
        %v1348 = vld [vmem:[#allocation9 + $0x200] sm:$0xff]
        %v1349 = vld [vmem:[#allocation9 + $0x208] sm:$0xff]
        %v1350 = vld [vmem:[#allocation9 + $0x210] sm:$0xff]
        %v1351 = vld [vmem:[#allocation9 + $0x218] sm:$0xff]
        %v1352 = vld [vmem:[#allocation9 + $0x220] sm:$0xff]
        %v1353 = vld [vmem:[#allocation9 + $0x228] sm:$0xff]
        %v1354 = vld [vmem:[#allocation9 + $0x230] sm:$0xff]
        %v1355 = vld [vmem:[#allocation9 + $0x238] sm:$0xff]
        %v1356 = vld [vmem:[#allocation9 + $0x240] sm:$0xff]
        %v1357 = vld [vmem:[#allocation9 + $0x248] sm:$0xff]
        %v1358 = vld [vmem:[#allocation9 + $0x250] sm:$0xff]
        %v1359 = vld [vmem:[#allocation9 + $0x258] sm:$0xff]
        %v1360 = vld [vmem:[#allocation9 + $0x260] sm:$0xff]
        %v1361 = vld [vmem:[#allocation9 + $0x268] sm:$0xff]
        %v1362 = vld [vmem:[#allocation9 + $0x270] sm:$0xff]
        %v1363 = vld [vmem:[#allocation9 + $0x278] sm:$0xff]
        %v1364 = vld [vmem:[#allocation9 + $0x280] sm:$0xff]
        %v1365 = vld [vmem:[#allocation9 + $0x288] sm:$0xff]
        %v1366 = vld [vmem:[#allocation9 + $0x290] sm:$0xff]
        %v1367 = vld [vmem:[#allocation9 + $0x298] sm:$0xff]
        %v1368 = vld [vmem:[#allocation9 + $0x2a0] sm:$0xff]
        %v1369 = vld [vmem:[#allocation9 + $0x2a8] sm:$0xff]
        %v1370 = vld [vmem:[#allocation9 + $0x2b0] sm:$0xff]
        %v1371 = vld [vmem:[#allocation9 + $0x2b8] sm:$0xff]
        %v1372 = vld [vmem:[#allocation9 + $0x2c0] sm:$0xff]
        %v1373 = vld [vmem:[#allocation9 + $0x2c8] sm:$0xff]
        %v1374 = vld [vmem:[#allocation9 + $0x2d0] sm:$0xff]
        %v1375 = vld [vmem:[#allocation9 + $0x2d8] sm:$0xff]
        %v1376 = vld [vmem:[#allocation9 + $0x2e0] sm:$0xff]
        %v1377 = vld [vmem:[#allocation9 + $0x2e8] sm:$0xff]
        %v1378 = vld [vmem:[#allocation9 + $0x2f0] sm:$0xff]
        %v1379 = vld [vmem:[#allocation9 + $0x2f8] sm:$0xff]
        %v1380 = vld [vmem:[#allocation9 + $0x300] sm:$0xff]
        %v1381 = vld [vmem:[#allocation9 + $0x308] sm:$0xff]
        %v1382 = vld [vmem:[#allocation9 + $0x310] sm:$0xff]
        %v1383 = vld [vmem:[#allocation9 + $0x318] sm:$0xff]
        %v1384 = vld [vmem:[#allocation9 + $0x320] sm:$0xff]
        %v1385 = vld [vmem:[#allocation9 + $0x328] sm:$0xff]
        %v1386 = vld [vmem:[#allocation9 + $0x330] sm:$0xff]
        %v1387 = vld [vmem:[#allocation9 + $0x338] sm:$0xff]
        %v1388 = vld [vmem:[#allocation9 + $0x340] sm:$0xff]
        %v1389 = vld [vmem:[#allocation9 + $0x348] sm:$0xff]
        %v1390 = vld [vmem:[#allocation9 + $0x350] sm:$0xff]
        %v1391 = vld [vmem:[#allocation9 + $0x358] sm:$0xff]
        %v1392 = vld [vmem:[#allocation9 + $0x360] sm:$0xff]
        %v1393 = vld [vmem:[#allocation9 + $0x368] sm:$0xff]
        %v1394 = vld [vmem:[#allocation9 + $0x370] sm:$0xff]
        %v1395 = vld [vmem:[#allocation9 + $0x378] sm:$0xff]
        %v1396 = vld [vmem:[#allocation9 + $0x380] sm:$0xff]
        %v1397 = vld [vmem:[#allocation9 + $0x388] sm:$0xff]
        %v1398 = vld [vmem:[#allocation9 + $0x390] sm:$0xff]
        %v1399 = vld [vmem:[#allocation9 + $0x398] sm:$0xff]
        %v1400 = vld [vmem:[#allocation9 + $0x3a0] sm:$0xff]
        %v1401 = vld [vmem:[#allocation9 + $0x3a8] sm:$0xff]
        %v1402 = vld [vmem:[#allocation9 + $0x3b0] sm:$0xff]
        %v1403 = vld [vmem:[#allocation9 + $0x3b8] sm:$0xff]
        %v1404 = vld [vmem:[#allocation9 + $0x3c0] sm:$0xff]
        %v1405 = vld [vmem:[#allocation9 + $0x3c8] sm:$0xff]
        %v1406 = vld [vmem:[#allocation9 + $0x3d0] sm:$0xff]
        %v1407 = vld [vmem:[#allocation9 + $0x3d8] sm:$0xff]
        %v1408 = vld [vmem:[#allocation9 + $0x3e0] sm:$0xff]
        %v1409 = vld [vmem:[#allocation9 + $0x3e8] sm:$0xff]
        %v1410 = vld [vmem:[#allocation9 + $0x3f0] sm:$0xff]
        %v1411 = vld [vmem:[#allocation9 + $0x3f8] sm:$0xff]
        %v1412 = vld [vmem:[#allocation9 + $0x400] sm:$0xff]
        %v1413 = vld [vmem:[#allocation9 + $0x408] sm:$0xff]
        %v1414 = vld [vmem:[#allocation9 + $0x410] sm:$0xff]
        %v1415 = vld [vmem:[#allocation9 + $0x418] sm:$0xff]
        %v1416 = vld [vmem:[#allocation9 + $0x420] sm:$0xff]
        %v1417 = vld [vmem:[#allocation9 + $0x428] sm:$0xff]
        %v1418 = vld [vmem:[#allocation9 + $0x430] sm:$0xff]
        %v1419 = vld [vmem:[#allocation9 + $0x438] sm:$0xff]
        %v1420 = vld [vmem:[#allocation9 + $0x440] sm:$0xff]
        %v1421 = vld [vmem:[#allocation9 + $0x448] sm:$0xff]
        %v1422 = vld [vmem:[#allocation9 + $0x450] sm:$0xff]
        %v1423 = vld [vmem:[#allocation9 + $0x458] sm:$0xff]
        %v1424 = vld [vmem:[#allocation9 + $0x460] sm:$0xff]
        %v1425 = vld [vmem:[#allocation9 + $0x468] sm:$0xff]
        %v1426 = vld [vmem:[#allocation9 + $0x470] sm:$0xff]
        %v1427 = vld [vmem:[#allocation9 + $0x478] sm:$0xff]
        %v1428 = vld [vmem:[#allocation9 + $0x480] sm:$0xff]
        %v1429 = vld [vmem:[#allocation9 + $0x488] sm:$0xff]
        %v1430 = vld [vmem:[#allocation9 + $0x490] sm:$0xff]
        %v1431 = vld [vmem:[#allocation9 + $0x498] sm:$0xff]
        %v1432 = vld [vmem:[#allocation9 + $0x4a0] sm:$0xff]
        %v1433 = vld [vmem:[#allocation9 + $0x4a8] sm:$0xff]
        %v1434 = vld [vmem:[#allocation9 + $0x4b0] sm:$0xff]
        %v1435 = vld [vmem:[#allocation9 + $0x4b8] sm:$0xff]
        %v1436 = vld [vmem:[#allocation9 + $0x4c0] sm:$0xff]
        %v1437 = vld [vmem:[#allocation9 + $0x4c8] sm:$0xff]
        %v1438 = vld [vmem:[#allocation9 + $0x4d0] sm:$0xff]
        %v1439 = vld [vmem:[#allocation9 + $0x4d8] sm:$0xff]
        %v1440 = vld [vmem:[#allocation9 + $0x4e0] sm:$0xff]
        %v1441 = vld [vmem:[#allocation9 + $0x4e8] sm:$0xff]
        %v1442 = vld [vmem:[#allocation9 + $0x4f0] sm:$0xff]
        %v1443 = vld [vmem:[#allocation9 + $0x4f8] sm:$0xff]
        %v1444 = vld [vmem:[#allocation9 + $0x500] sm:$0xff]
        %v1445 = vld [vmem:[#allocation9 + $0x508] sm:$0xff]
        %v1446 = vld [vmem:[#allocation9 + $0x510] sm:$0xff]
        %v1447 = vld [vmem:[#allocation9 + $0x518] sm:$0xff]
        %v1448 = vld [vmem:[#allocation9 + $0x520] sm:$0xff]
        %v1449 = vld [vmem:[#allocation9 + $0x528] sm:$0xff]
        %v1450 = vld [vmem:[#allocation9 + $0x530] sm:$0xff]
        %v1451 = vld [vmem:[#allocation9 + $0x538] sm:$0xff]
        %v1452 = vld [vmem:[#allocation9 + $0x540] sm:$0xff]
        %v1453 = vld [vmem:[#allocation9 + $0x548] sm:$0xff]
        %v1454 = vld [vmem:[#allocation9 + $0x550] sm:$0xff]
        %v1455 = vld [vmem:[#allocation9 + $0x558] sm:$0xff]
        %v1456 = vld [vmem:[#allocation9 + $0x560] sm:$0xff]
        %v1457 = vld [vmem:[#allocation9 + $0x568] sm:$0xff]
        %v1458 = vld [vmem:[#allocation9 + $0x570] sm:$0xff]
        %v1459 = vld [vmem:[#allocation9 + $0x578] sm:$0xff]
        %v1460 = vld [vmem:[#allocation9 + $0x580] sm:$0xff]
        %v1461 = vld [vmem:[#allocation9 + $0x588] sm:$0xff]
        %v1462 = vld [vmem:[#allocation9 + $0x590] sm:$0xff]
        %v1463 = vld [vmem:[#allocation9 + $0x598] sm:$0xff]
        %v1464 = vld [vmem:[#allocation9 + $0x5a0] sm:$0xff]
        %v1465 = vld [vmem:[#allocation9 + $0x5a8] sm:$0xff]
        %v1466 = vld [vmem:[#allocation9 + $0x5b0] sm:$0xff]
        %v1467 = vld [vmem:[#allocation9 + $0x5b8] sm:$0xff]
        %v1468 = vld [vmem:[#allocation9 + $0x5c0] sm:$0xff]
        %v1469 = vld [vmem:[#allocation9 + $0x5c8] sm:$0xff]
        %v1470 = vld [vmem:[#allocation9 + $0x5d0] sm:$0xff]
        %v1471 = vld [vmem:[#allocation9 + $0x5d8] sm:$0xff]
        %v1472 = vld [vmem:[#allocation9 + $0x5e0] sm:$0xff]
        %v1473 = vld [vmem:[#allocation9 + $0x5e8] sm:$0xff]
        %v1474 = vld [vmem:[#allocation9 + $0x5f0] sm:$0xff]
        %v1475 = vld [vmem:[#allocation9 + $0x5f8] sm:$0xff]
        %v1476 = vld [vmem:[#allocation9 + $0x600] sm:$0xff]
        %v1477 = vld [vmem:[#allocation9 + $0x608] sm:$0xff]
        %v1478 = vld [vmem:[#allocation9 + $0x610] sm:$0xff]
        %v1479 = vld [vmem:[#allocation9 + $0x618] sm:$0xff]
        %v1480 = vld [vmem:[#allocation9 + $0x620] sm:$0xff]
        %v1481 = vld [vmem:[#allocation9 + $0x628] sm:$0xff]
        %v1482 = vld [vmem:[#allocation9 + $0x630] sm:$0xff]
        %v1483 = vld [vmem:[#allocation9 + $0x638] sm:$0xff]
        %v1484 = vld [vmem:[#allocation9 + $0x640] sm:$0xff]
        %v1485 = vld [vmem:[#allocation9 + $0x648] sm:$0xff]
        %v1486 = vld [vmem:[#allocation9 + $0x650] sm:$0xff]
        %v1487 = vld [vmem:[#allocation9 + $0x658] sm:$0xff]
        %v1488 = vld [vmem:[#allocation9 + $0x660] sm:$0xff]
        %v1489 = vld [vmem:[#allocation9 + $0x668] sm:$0xff]
        %v1490 = vld [vmem:[#allocation9 + $0x670] sm:$0xff]
        %v1491 = vld [vmem:[#allocation9 + $0x678] sm:$0xff]
        %v1492 = vld [vmem:[#allocation9 + $0x680] sm:$0xff]
        %v1493 = vld [vmem:[#allocation9 + $0x688] sm:$0xff]
        %v1494 = vld [vmem:[#allocation9 + $0x690] sm:$0xff]
        %v1495 = vld [vmem:[#allocation9 + $0x698] sm:$0xff]
        %v1496 = vld [vmem:[#allocation9 + $0x6a0] sm:$0xff]
        %v1497 = vld [vmem:[#allocation9 + $0x6a8] sm:$0xff]
        %v1498 = vld [vmem:[#allocation9 + $0x6b0] sm:$0xff]
        %v1499 = vld [vmem:[#allocation9 + $0x6b8] sm:$0xff]
        %v1500 = vld [vmem:[#allocation9 + $0x6c0] sm:$0xff]
        %v1501 = vld [vmem:[#allocation9 + $0x6c8] sm:$0xff]
        %v1502 = vld [vmem:[#allocation9 + $0x6d0] sm:$0xff]
        %v1503 = vld [vmem:[#allocation9 + $0x6d8] sm:$0xff]
        %v1504 = vld [vmem:[#allocation9 + $0x6e0] sm:$0xff]
        %v1505 = vld [vmem:[#allocation9 + $0x6e8] sm:$0xff]
        %v1506 = vld [vmem:[#allocation9 + $0x6f0] sm:$0xff]
        %v1507 = vld [vmem:[#allocation9 + $0x6f8] sm:$0xff]
        %v1508 = vld [vmem:[#allocation9 + $0x700] sm:$0xff]
        %v1509 = vld [vmem:[#allocation9 + $0x708] sm:$0xff]
        %v1510 = vld [vmem:[#allocation9 + $0x710] sm:$0xff]
        %v1511 = vld [vmem:[#allocation9 + $0x718] sm:$0xff]
        %v1512 = vld [vmem:[#allocation9 + $0x720] sm:$0xff]
        %v1513 = vld [vmem:[#allocation9 + $0x728] sm:$0xff]
        %v1514 = vld [vmem:[#allocation9 + $0x730] sm:$0xff]
        %v1515 = vld [vmem:[#allocation9 + $0x738] sm:$0xff]
        %v1516 = vld [vmem:[#allocation9 + $0x740] sm:$0xff]
        %v1517 = vld [vmem:[#allocation9 + $0x748] sm:$0xff]
        %v1518 = vld [vmem:[#allocation9 + $0x750] sm:$0xff]
        %v1519 = vld [vmem:[#allocation9 + $0x758] sm:$0xff]
        %v1520 = vld [vmem:[#allocation9 + $0x760] sm:$0xff]
        %v1521 = vld [vmem:[#allocation9 + $0x768] sm:$0xff]
        %v1522 = vld [vmem:[#allocation9 + $0x770] sm:$0xff]
        %v1523 = vld [vmem:[#allocation9 + $0x778] sm:$0xff]
        %v1524 = vld [vmem:[#allocation9 + $0x780] sm:$0xff]
        %v1525 = vld [vmem:[#allocation9 + $0x788] sm:$0xff]
        %v1526 = vld [vmem:[#allocation9 + $0x790] sm:$0xff]
        %v1527 = vld [vmem:[#allocation9 + $0x798] sm:$0xff]
        %v1528 = vld [vmem:[#allocation9 + $0x7a0] sm:$0xff]
        %v1529 = vld [vmem:[#allocation9 + $0x7a8] sm:$0xff]
        %v1530 = vld [vmem:[#allocation9 + $0x7b0] sm:$0xff]
        %v1531 = vld [vmem:[#allocation9 + $0x7b8] sm:$0xff]
        %v1532 = vld [vmem:[#allocation9 + $0x7c0] sm:$0xff]
        %v1533 = vld [vmem:[#allocation9 + $0x7c8] sm:$0xff]
        %v1534 = vld [vmem:[#allocation9 + $0x7d0] sm:$0xff]
        %v1535 = vld [vmem:[#allocation9 + $0x7d8] sm:$0xff]
        %v1536 = vld [vmem:[#allocation9 + $0x7e0] sm:$0xff]
        %v1537 = vld [vmem:[#allocation9 + $0x7e8] sm:$0xff]
        %v1538 = vld [vmem:[#allocation9 + $0x7f0] sm:$0xff]
        %v1539 = vld [vmem:[#allocation9 + $0x7f8] sm:$0xff]
        %v1540 = vld [vmem:[#allocation9 + $0x800] sm:$0xff]
        %v1541 = vld [vmem:[#allocation9 + $0x808] sm:$0xff]
        %v1542 = vld [vmem:[#allocation9 + $0x810] sm:$0xff]
        %v1543 = vld [vmem:[#allocation9 + $0x818] sm:$0xff]
        %v1544 = vld [vmem:[#allocation9 + $0x820] sm:$0xff]
        %v1545 = vld [vmem:[#allocation9 + $0x828] sm:$0xff]
        %v1546 = vld [vmem:[#allocation9 + $0x830] sm:$0xff]
        %v1547 = vld [vmem:[#allocation9 + $0x838] sm:$0xff]
        %v1548 = vld [vmem:[#allocation9 + $0x840] sm:$0xff]
        %v1549 = vld [vmem:[#allocation9 + $0x848] sm:$0xff]
        %v1550 = vld [vmem:[#allocation9 + $0x850] sm:$0xff]
        %v1551 = vld [vmem:[#allocation9 + $0x858] sm:$0xff]
        %v1552 = vld [vmem:[#allocation9 + $0x860] sm:$0xff]
        %v1553 = vld [vmem:[#allocation9 + $0x868] sm:$0xff]
        %v1554 = vld [vmem:[#allocation9 + $0x870] sm:$0xff]
        %v1555 = vld [vmem:[#allocation9 + $0x878] sm:$0xff]
        %v1556 = vld [vmem:[#allocation9 + $0x880] sm:$0xff]
        %v1557 = vld [vmem:[#allocation9 + $0x888] sm:$0xff]
        %v1558 = vld [vmem:[#allocation9 + $0x890] sm:$0xff]
        %v1559 = vld [vmem:[#allocation9 + $0x898] sm:$0xff]
        %v1560 = vld [vmem:[#allocation9 + $0x8a0] sm:$0xff]
        %v1561 = vld [vmem:[#allocation9 + $0x8a8] sm:$0xff]
        %v1562 = vld [vmem:[#allocation9 + $0x8b0] sm:$0xff]
        %v1563 = vld [vmem:[#allocation9 + $0x8b8] sm:$0xff]
        %v1564 = vld [vmem:[#allocation9 + $0x8c0] sm:$0xff]
        %v1565 = vld [vmem:[#allocation9 + $0x8c8] sm:$0xff]
        %v1566 = vld [vmem:[#allocation9 + $0x8d0] sm:$0xff]
        %v1567 = vld [vmem:[#allocation9 + $0x8d8] sm:$0xff]
        %v1568 = vld [vmem:[#allocation9 + $0x8e0] sm:$0xff]
        %v1569 = vld [vmem:[#allocation9 + $0x8e8] sm:$0xff]
        %v1570 = vld [vmem:[#allocation9 + $0x8f0] sm:$0xff]
        %v1571 = vld [vmem:[#allocation9 + $0x8f8] sm:$0xff]
        %v1572 = vld [vmem:[#allocation9 + $0x900] sm:$0xff]
        %v1573 = vld [vmem:[#allocation9 + $0x908] sm:$0xff]
        %v1574 = vld [vmem:[#allocation9 + $0x910] sm:$0xff]
        %v1575 = vld [vmem:[#allocation9 + $0x918] sm:$0xff]
        %v1576 = vld [vmem:[#allocation9 + $0x920] sm:$0xff]
        %v1577 = vld [vmem:[#allocation9 + $0x928] sm:$0xff]
        %v1578 = vld [vmem:[#allocation9 + $0x930] sm:$0xff]
        %v1579 = vld [vmem:[#allocation9 + $0x938] sm:$0xff]
        %v1580 = vld [vmem:[#allocation9 + $0x940] sm:$0xff]
        %v1581 = vld [vmem:[#allocation9 + $0x948] sm:$0xff]
        %v1582 = vld [vmem:[#allocation9 + $0x950] sm:$0xff]
        %v1583 = vld [vmem:[#allocation9 + $0x958] sm:$0xff]
        %v1584 = vld [vmem:[#allocation9 + $0x960] sm:$0xff]
        %v1585 = vld [vmem:[#allocation9 + $0x968] sm:$0xff]
        %v1586 = vld [vmem:[#allocation9 + $0x970] sm:$0xff]
        %v1587 = vld [vmem:[#allocation9 + $0x978] sm:$0xff]
        %v1588 = vld [vmem:[#allocation9 + $0x980] sm:$0xff]
        %v1589 = vld [vmem:[#allocation9 + $0x988] sm:$0xff]
        %v1590 = vld [vmem:[#allocation9 + $0x990] sm:$0xff]
        %v1591 = vld [vmem:[#allocation9 + $0x998] sm:$0xff]
        %v1592 = vld [vmem:[#allocation9 + $0x9a0] sm:$0xff]
        %v1593 = vld [vmem:[#allocation9 + $0x9a8] sm:$0xff]
        %v1594 = vld [vmem:[#allocation9 + $0x9b0] sm:$0xff]
        %v1595 = vld [vmem:[#allocation9 + $0x9b8] sm:$0xff]
        %v1596 = vld [vmem:[#allocation9 + $0x9c0] sm:$0xff]
        %v1597 = vld [vmem:[#allocation9 + $0x9c8] sm:$0xff]
        %v1598 = vld [vmem:[#allocation9 + $0x9d0] sm:$0xff]
        %v1599 = vld [vmem:[#allocation9 + $0x9d8] sm:$0xff]
        %v1600 = vld [vmem:[#allocation9 + $0x9e0] sm:$0xff]
        %v1601 = vld [vmem:[#allocation9 + $0x9e8] sm:$0xff]
        %v1602 = vld [vmem:[#allocation9 + $0x9f0] sm:$0xff]
        %v1603 = vld [vmem:[#allocation9 + $0x9f8] sm:$0xff]
        %v1604 = vld [vmem:[#allocation9 + $0xa00] sm:$0xff]
        %v1605 = vld [vmem:[#allocation9 + $0xa08] sm:$0xff]
        %v1606 = vld [vmem:[#allocation9 + $0xa10] sm:$0xff]
        %v1607 = vld [vmem:[#allocation9 + $0xa18] sm:$0xff]
        %v1608 = vld [vmem:[#allocation9 + $0xa20] sm:$0xff]
        %v1609 = vld [vmem:[#allocation9 + $0xa28] sm:$0xff]
        %v1610 = vld [vmem:[#allocation9 + $0xa30] sm:$0xff]
        %v1611 = vld [vmem:[#allocation9 + $0xa38] sm:$0xff]
        %v1612 = vld [vmem:[#allocation9 + $0xa40] sm:$0xff]
        %v1613 = vld [vmem:[#allocation9 + $0xa48] sm:$0xff]
        %v1614 = vld [vmem:[#allocation9 + $0xa50] sm:$0xff]
        %v1615 = vld [vmem:[#allocation9 + $0xa58] sm:$0xff]
        %v1616 = vld [vmem:[#allocation9 + $0xa60] sm:$0xff]
        %v1617 = vld [vmem:[#allocation9 + $0xa68] sm:$0xff]
        %v1618 = vld [vmem:[#allocation9 + $0xa70] sm:$0xff]
        %v1619 = vld [vmem:[#allocation9 + $0xa78] sm:$0xff]
        %v1620 = vld [vmem:[#allocation9 + $0xa80] sm:$0xff]
        %v1621 = vld [vmem:[#allocation9 + $0xa88] sm:$0xff]
        %v1622 = vld [vmem:[#allocation9 + $0xa90] sm:$0xff]
        %v1623 = vld [vmem:[#allocation9 + $0xa98] sm:$0xff]
        %v1624 = vld [vmem:[#allocation9 + $0xaa0] sm:$0xff]
        %v1625 = vld [vmem:[#allocation9 + $0xaa8] sm:$0xff]
        %v1626 = vld [vmem:[#allocation9 + $0xab0] sm:$0xff]
        %v1627 = vld [vmem:[#allocation9 + $0xab8] sm:$0xff]
        %v1628 = vld [vmem:[#allocation9 + $0xac0] sm:$0xff]
        %v1629 = vld [vmem:[#allocation9 + $0xac8] sm:$0xff]
        %v1630 = vld [vmem:[#allocation9 + $0xad0] sm:$0xff]
        %v1631 = vld [vmem:[#allocation9 + $0xad8] sm:$0xff]
        %v1632 = vld [vmem:[#allocation9 + $0xae0] sm:$0xff]
        %v1633 = vld [vmem:[#allocation9 + $0xae8] sm:$0xff]
        %v1634 = vld [vmem:[#allocation9 + $0xaf0] sm:$0xff]
        %v1635 = vld [vmem:[#allocation9 + $0xaf8] sm:$0xff]
        %v1636 = vld [vmem:[#allocation9 + $0xb00] sm:$0xff]
        %v1637 = vld [vmem:[#allocation9 + $0xb08] sm:$0xff]
        %v1638 = vld [vmem:[#allocation9 + $0xb10] sm:$0xff]
        %v1639 = vld [vmem:[#allocation9 + $0xb18] sm:$0xff]
        %v1640 = vld [vmem:[#allocation9 + $0xb20] sm:$0xff]
        %v1641 = vld [vmem:[#allocation9 + $0xb28] sm:$0xff]
        %v1642 = vld [vmem:[#allocation9 + $0xb30] sm:$0xff]
        %v1643 = vld [vmem:[#allocation9 + $0xb38] sm:$0xff]
        %v1644 = vld [vmem:[#allocation9 + $0xb40] sm:$0xff]
        %v1645 = vld [vmem:[#allocation9 + $0xb48] sm:$0xff]
        %v1646 = vld [vmem:[#allocation9 + $0xb50] sm:$0xff]
        %v1647 = vld [vmem:[#allocation9 + $0xb58] sm:$0xff]
        %v1648 = vld [vmem:[#allocation9 + $0xb60] sm:$0xff]
        %v1649 = vld [vmem:[#allocation9 + $0xb68] sm:$0xff]
        %v1650 = vld [vmem:[#allocation9 + $0xb70] sm:$0xff]
        %v1651 = vld [vmem:[#allocation9 + $0xb78] sm:$0xff]
        %v1652 = vld [vmem:[#allocation9 + $0xb80] sm:$0xff]
        %v1653 = vld [vmem:[#allocation9 + $0xb88] sm:$0xff]
        %v1654 = vld [vmem:[#allocation9 + $0xb90] sm:$0xff]
        %v1655 = vld [vmem:[#allocation9 + $0xb98] sm:$0xff]
        %v1656 = vld [vmem:[#allocation9 + $0xba0] sm:$0xff]
        %v1657 = vld [vmem:[#allocation9 + $0xba8] sm:$0xff]
        %v1658 = vld [vmem:[#allocation9 + $0xbb0] sm:$0xff]
        %v1659 = vld [vmem:[#allocation9 + $0xbb8] sm:$0xff]
        %v1660 = vld [vmem:[#allocation9 + $0xbc0] sm:$0xff]
        %v1661 = vld [vmem:[#allocation9 + $0xbc8] sm:$0xff]
        %v1662 = vld [vmem:[#allocation9 + $0xbd0] sm:$0xff]
        %v1663 = vld [vmem:[#allocation9 + $0xbd8] sm:$0xff]
        %v1664 = vld [vmem:[#allocation9 + $0xbe0] sm:$0xff]
        %v1665 = vld [vmem:[#allocation9 + $0xbe8] sm:$0xff]
        %v1666 = vld [vmem:[#allocation9 + $0xbf0] sm:$0xff]
        %v1667 = vld [vmem:[#allocation9 + $0xbf8] sm:$0xff]
        %v1668 = vld [vmem:[#allocation9 + $0xc00] sm:$0xff]
        %v1669 = vld [vmem:[#allocation9 + $0xc08] sm:$0xff]
        %v1670 = vld [vmem:[#allocation9 + $0xc10] sm:$0xff]
        %v1671 = vld [vmem:[#allocation9 + $0xc18] sm:$0xff]
        %v1672 = vld [vmem:[#allocation9 + $0xc20] sm:$0xff]
        %v1673 = vld [vmem:[#allocation9 + $0xc28] sm:$0xff]
        %v1674 = vld [vmem:[#allocation9 + $0xc30] sm:$0xff]
        %v1675 = vld [vmem:[#allocation9 + $0xc38] sm:$0xff]
        %v1676 = vld [vmem:[#allocation9 + $0xc40] sm:$0xff]
        %v1677 = vld [vmem:[#allocation9 + $0xc48] sm:$0xff]
        %v1678 = vld [vmem:[#allocation9 + $0xc50] sm:$0xff]
        %v1679 = vld [vmem:[#allocation9 + $0xc58] sm:$0xff]
        %v1680 = vld [vmem:[#allocation9 + $0xc60] sm:$0xff]
        %v1681 = vld [vmem:[#allocation9 + $0xc68] sm:$0xff]
        %v1682 = vld [vmem:[#allocation9 + $0xc70] sm:$0xff]
        %v1683 = vld [vmem:[#allocation9 + $0xc78] sm:$0xff]
        %v1684 = vld [vmem:[#allocation9 + $0xc80] sm:$0xff]
        %v1685 = vld [vmem:[#allocation9 + $0xc88] sm:$0xff]
        %v1686 = vld [vmem:[#allocation9 + $0xc90] sm:$0xff]
        %v1687 = vld [vmem:[#allocation9 + $0xc98] sm:$0xff]
        %v1688 = vld [vmem:[#allocation9 + $0xca0] sm:$0xff]
        %v1689 = vld [vmem:[#allocation9 + $0xca8] sm:$0xff]
        %v1690 = vld [vmem:[#allocation9 + $0xcb0] sm:$0xff]
        %v1691 = vld [vmem:[#allocation9 + $0xcb8] sm:$0xff]
        %v1692 = vld [vmem:[#allocation9 + $0xcc0] sm:$0xff]
        %v1693 = vld [vmem:[#allocation9 + $0xcc8] sm:$0xff]
        %v1694 = vld [vmem:[#allocation9 + $0xcd0] sm:$0xff]
        %v1695 = vld [vmem:[#allocation9 + $0xcd8] sm:$0xff]
        %v1696 = vld [vmem:[#allocation9 + $0xce0] sm:$0xff]
        %v1697 = vld [vmem:[#allocation9 + $0xce8] sm:$0xff]
        %v1698 = vld [vmem:[#allocation9 + $0xcf0] sm:$0xff]
        %v1699 = vld [vmem:[#allocation9 + $0xcf8] sm:$0xff]
        %v1700 = vld [vmem:[#allocation9 + $0xd00] sm:$0xff]
        %v1701 = vld [vmem:[#allocation9 + $0xd08] sm:$0xff]
        %v1702 = vld [vmem:[#allocation9 + $0xd10] sm:$0xff]
        %v1703 = vld [vmem:[#allocation9 + $0xd18] sm:$0xff]
        %v1704 = vld [vmem:[#allocation9 + $0xd20] sm:$0xff]
        %v1705 = vld [vmem:[#allocation9 + $0xd28] sm:$0xff]
        %v1706 = vld [vmem:[#allocation9 + $0xd30] sm:$0xff]
        %v1707 = vld [vmem:[#allocation9 + $0xd38] sm:$0xff]
        %v1708 = vld [vmem:[#allocation9 + $0xd40] sm:$0xff]
        %v1709 = vld [vmem:[#allocation9 + $0xd48] sm:$0xff]
        %v1710 = vld [vmem:[#allocation9 + $0xd50] sm:$0xff]
        %v1711 = vld [vmem:[#allocation9 + $0xd58] sm:$0xff]
        %v1712 = vld [vmem:[#allocation9 + $0xd60] sm:$0xff]
        %v1713 = vld [vmem:[#allocation9 + $0xd68] sm:$0xff]
        %v1714 = vld [vmem:[#allocation9 + $0xd70] sm:$0xff]
        %v1715 = vld [vmem:[#allocation9 + $0xd78] sm:$0xff]
        %1716 = vmatprep.subr.mxu0 %v1285
        %1717 = vmatpush1.msra.mxu0 %v1284
        %1718 = vmatprep.subr.mxu0 %v1288
        %1719 = vmatpush1.msra.mxu0 %v1287
        %1720 = vmatprep.subr.mxu0 %v1291
        %1721 = vmatpush1.msra.mxu0 %v1290
        %1722 = vmatprep.subr.mxu0 %v1294
        %1723 = vmatpush1.msra.mxu0 %v1293
        %1724 = vmatprep.subr.mxu0 %v1297
        %1725 = vmatpush1.msra.mxu0 %v1296
        %1726 = vmatprep.subr.mxu0 %v1300
        %1727 = vmatpush1.msra.mxu0 %v1299
        %1728 = vmatprep.subr.mxu0 %v1303
        %1729 = vmatpush1.msra.mxu0 %v1302
        %1730 = vmatprep.subr.mxu0 %v1306
        %1731 = vmatpush1.msra.mxu0 %v1305
        %1732 = vmatprep.subr.mxu0 %v1309
        %1733 = vmatpush1.msra.mxu0 %v1308
        %1734 = vmatprep.subr.mxu0 %v1312
        %1735 = vmatpush1.msra.mxu0 %v1311
        %1736 = vmatprep.subr.mxu0 %v1315
        %1737 = vmatpush1.msra.mxu0 %v1314
        %1738 = vmatprep.subr.mxu0 %v1318
        %1739 = vmatpush1.msra.mxu0 %v1317
        %1740 = vmatprep.subr.mxu0 %v1321
        %1741 = vmatpush1.msra.mxu0 %v1320
        %1742 = vmatprep.subr.mxu0 %v1324
        %1743 = vmatpush1.msra.mxu0 %v1323
        %1744 = vmatprep.subr.mxu0 %v1327
        %1745 = vmatpush1.msra.mxu0 %v1326
        %1746 = vmatprep.subr.mxu0 %v1330
        %1747 = vmatpush1.msra.mxu0 %v1329
        %1748 = vmatprep.subr.mxu0 %v1333
        %1749 = vmatpush1.msra.mxu0 %v1332
        %1750 = vmatprep.subr.mxu0 %v1336
        %1751 = vmatpush1.msra.mxu0 %v1335
        %1752 = vmatprep.subr.mxu0 %v1339
        %1753 = vmatpush1.msra.mxu0 %v1338
        %1754 = vmatprep.subr.mxu0 %v1342
        %1755 = vmatpush1.msra.mxu0 %v1341
        %1756 = vmatprep.subr.mxu0 %v1345
        %1757 = vmatpush1.msra.mxu0 %v1344
        %1758 = vmatprep.subr.mxu0 %v1348
        %1759 = vmatpush1.msra.mxu0 %v1347
        %1760 = vmatprep.subr.mxu0 %v1351
        %1761 = vmatpush1.msra.mxu0 %v1350
        %1762 = vmatprep.subr.mxu0 %v1354
        %1763 = vmatpush1.msra.mxu0 %v1353
        %1764 = vmatprep.subr.mxu0 %v1357
        %1765 = vmatpush1.msra.mxu0 %v1356
        %1766 = vmatprep.subr.mxu0 %v1360
        %1767 = vmatpush1.msra.mxu0 %v1359
        %1768 = vmatprep.subr.mxu0 %v1363
        %1769 = vmatpush1.msra.mxu0 %v1362
        %1770 = vmatprep.subr.mxu0 %v1366
        %1771 = vmatpush1.msra.mxu0 %v1365
        %1772 = vmatprep.subr.mxu0 %v1369
        %1773 = vmatpush1.msra.mxu0 %v1368
        %1774 = vmatprep.subr.mxu0 %v1372
        %1775 = vmatpush1.msra.mxu0 %v1371
        %1776 = vmatprep.subr.mxu0 %v1375
        %1777 = vmatpush1.msra.mxu0 %v1374
        %1778 = vmatprep.subr.mxu0 %v1378
        %1779 = vmatpush1.msra.mxu0 %v1377
        %1780 = vmatprep.mubr.f32.mxu0 %v1267
        %1781 = vmatmul.mubr.f32.gmra.mrb[0].mxu0 %v1266
        %v1782 = vpop.f32.mrb[0].mxu0
        %v1783 = vadd.f32 0.0, %v1782
        %v1784 = vpop.f32.mrb[0].mxu0
        %v1785 = vadd.f32 0.0, %v1784
        %1786 = vdwg.mxu0
        %1787 = vmatprep.subr.mxu0 %v1381
        %1788 = vmatpush1.msra.mxu0 %v1380
        %1789 = vmatprep.subr.mxu0 %v1384
        %1790 = vmatpush1.msra.mxu0 %v1383
        %1791 = vmatprep.subr.mxu0 %v1387
        %1792 = vmatpush1.msra.mxu0 %v1386
        %1793 = vmatprep.subr.mxu0 %v1390
        %1794 = vmatpush1.msra.mxu0 %v1389
        %1795 = vmatprep.subr.mxu0 %v1393
        %1796 = vmatpush1.msra.mxu0 %v1392
        %1797 = vmatprep.subr.mxu0 %v1396
        %1798 = vmatpush1.msra.mxu0 %v1395
        %1799 = vmatprep.subr.mxu0 %v1399
        %1800 = vmatpush1.msra.mxu0 %v1398
        %1801 = vmatprep.subr.mxu0 %v1402
        %1802 = vmatpush1.msra.mxu0 %v1401
        %1803 = vmatprep.subr.mxu0 %v1405
        %1804 = vmatpush1.msra.mxu0 %v1404
        %1805 = vmatprep.subr.mxu0 %v1408
        %1806 = vmatpush1.msra.mxu0 %v1407
        %1807 = vmatprep.subr.mxu0 %v1411
        %1808 = vmatpush1.msra.mxu0 %v1410
        %1809 = vmatprep.subr.mxu0 %v1414
        %1810 = vmatpush1.msra.mxu0 %v1413
        %1811 = vmatprep.subr.mxu0 %v1417
        %1812 = vmatpush1.msra.mxu0 %v1416
        %1813 = vmatprep.subr.mxu0 %v1420
        %1814 = vmatpush1.msra.mxu0 %v1419
        %1815 = vmatprep.subr.mxu0 %v1423
        %1816 = vmatpush1.msra.mxu0 %v1422
        %1817 = vmatprep.subr.mxu0 %v1426
        %1818 = vmatpush1.msra.mxu0 %v1425
        %1819 = vmatprep.subr.mxu0 %v1429
        %1820 = vmatpush1.msra.mxu0 %v1428
        %1821 = vmatprep.subr.mxu0 %v1432
        %1822 = vmatpush1.msra.mxu0 %v1431
        %1823 = vmatprep.subr.mxu0 %v1435
        %1824 = vmatpush1.msra.mxu0 %v1434
        %1825 = vmatprep.subr.mxu0 %v1438
        %1826 = vmatpush1.msra.mxu0 %v1437
        %1827 = vmatprep.subr.mxu0 %v1441
        %1828 = vmatpush1.msra.mxu0 %v1440
        %1829 = vmatprep.subr.mxu0 %v1444
        %1830 = vmatpush1.msra.mxu0 %v1443
        %1831 = vmatprep.subr.mxu0 %v1447
        %1832 = vmatpush1.msra.mxu0 %v1446
        %1833 = vmatprep.subr.mxu0 %v1450
        %1834 = vmatpush1.msra.mxu0 %v1449
        %1835 = vmatprep.subr.mxu0 %v1453
        %1836 = vmatpush1.msra.mxu0 %v1452
        %1837 = vmatprep.subr.mxu0 %v1456
        %1838 = vmatpush1.msra.mxu0 %v1455
        %1839 = vmatprep.subr.mxu0 %v1459
        %1840 = vmatpush1.msra.mxu0 %v1458
        %1841 = vmatprep.subr.mxu0 %v1462
        %1842 = vmatpush1.msra.mxu0 %v1461
        %1843 = vmatprep.subr.mxu0 %v1465
        %1844 = vmatpush1.msra.mxu0 %v1464
        %1845 = vmatprep.subr.mxu0 %v1468
        %1846 = vmatpush1.msra.mxu0 %v1467
        %1847 = vmatprep.subr.mxu0 %v1471
        %1848 = vmatpush1.msra.mxu0 %v1470
        %1849 = vmatprep.subr.mxu0 %v1474
        %1850 = vmatpush1.msra.mxu0 %v1473
        %1851 = vmatprep.mubr.f32.mxu0 %v1269
        %1852 = vmatmul.mubr.f32.gmra.mrb[0].mxu0 %v1268
        %v1853 = vpop.f32.mrb[0].mxu0
        %v1854 = vadd.f32 %v1783, %v1853
        %v1855 = vpop.f32.mrb[0].mxu0
        %v1856 = vadd.f32 %v1785, %v1855
        %1857 = vdwg.mxu0
        %1858 = vmatprep.subr.mxu0 %v1477
        %1859 = vmatpush1.msra.mxu0 %v1476
        %1860 = vmatprep.subr.mxu0 %v1480
        %1861 = vmatpush1.msra.mxu0 %v1479
        %1862 = vmatprep.subr.mxu0 %v1483
        %1863 = vmatpush1.msra.mxu0 %v1482
        %1864 = vmatprep.subr.mxu0 %v1486
        %1865 = vmatpush1.msra.mxu0 %v1485
        %1866 = vmatprep.subr.mxu0 %v1489
        %1867 = vmatpush1.msra.mxu0 %v1488
        %1868 = vmatprep.subr.mxu0 %v1492
        %1869 = vmatpush1.msra.mxu0 %v1491
        %1870 = vmatprep.subr.mxu0 %v1495
        %1871 = vmatpush1.msra.mxu0 %v1494
        %1872 = vmatprep.subr.mxu0 %v1498
        %1873 = vmatpush1.msra.mxu0 %v1497
        %1874 = vmatprep.subr.mxu0 %v1501
        %1875 = vmatpush1.msra.mxu0 %v1500
        %1876 = vmatprep.subr.mxu0 %v1504
        %1877 = vmatpush1.msra.mxu0 %v1503
        %1878 = vmatprep.subr.mxu0 %v1507
        %1879 = vmatpush1.msra.mxu0 %v1506
        %1880 = vmatprep.subr.mxu0 %v1510
        %1881 = vmatpush1.msra.mxu0 %v1509
        %1882 = vmatprep.subr.mxu0 %v1513
        %1883 = vmatpush1.msra.mxu0 %v1512
        %1884 = vmatprep.subr.mxu0 %v1516
        %1885 = vmatpush1.msra.mxu0 %v1515
        %1886 = vmatprep.subr.mxu0 %v1519
        %1887 = vmatpush1.msra.mxu0 %v1518
        %1888 = vmatprep.subr.mxu0 %v1522
        %1889 = vmatpush1.msra.mxu0 %v1521
        %1890 = vmatprep.subr.mxu0 %v1525
        %1891 = vmatpush1.msra.mxu0 %v1524
        %1892 = vmatprep.subr.mxu0 %v1528
        %1893 = vmatpush1.msra.mxu0 %v1527
        %1894 = vmatprep.subr.mxu0 %v1531
        %1895 = vmatpush1.msra.mxu0 %v1530
        %1896 = vmatprep.subr.mxu0 %v1534
        %1897 = vmatpush1.msra.mxu0 %v1533
        %1898 = vmatprep.subr.mxu0 %v1537
        %1899 = vmatpush1.msra.mxu0 %v1536
        %1900 = vmatprep.subr.mxu0 %v1540
        %1901 = vmatpush1.msra.mxu0 %v1539
        %1902 = vmatprep.subr.mxu0 %v1543
        %1903 = vmatpush1.msra.mxu0 %v1542
        %1904 = vmatprep.subr.mxu0 %v1546
        %1905 = vmatpush1.msra.mxu0 %v1545
        %1906 = vmatprep.subr.mxu0 %v1549
        %1907 = vmatpush1.msra.mxu0 %v1548
        %1908 = vmatprep.subr.mxu0 %v1552
        %1909 = vmatpush1.msra.mxu0 %v1551
        %1910 = vmatprep.subr.mxu0 %v1555
        %1911 = vmatpush1.msra.mxu0 %v1554
        %1912 = vmatprep.subr.mxu0 %v1558
        %1913 = vmatpush1.msra.mxu0 %v1557
        %1914 = vmatprep.subr.mxu0 %v1561
        %1915 = vmatpush1.msra.mxu0 %v1560
        %1916 = vmatprep.subr.mxu0 %v1564
        %1917 = vmatpush1.msra.mxu0 %v1563
        %1918 = vmatprep.subr.mxu0 %v1567
        %1919 = vmatpush1.msra.mxu0 %v1566
        %1920 = vmatprep.subr.mxu0 %v1570
        %1921 = vmatpush1.msra.mxu0 %v1569
        %1922 = vmatprep.mubr.f32.mxu0 %v1271
        %1923 = vmatmul.mubr.f32.gmra.mrb[0].mxu0 %v1270
        %v1924 = vpop.f32.mrb[0].mxu0
        %v1925 = vadd.f32 %v1854, %v1924
        %v1926 = vpop.f32.mrb[0].mxu0
        %v1927 = vadd.f32 %v1856, %v1926
        %1928 = vdwg.mxu0
        %1929 = vmatprep.subr.mxu0 %v1573
        %1930 = vmatpush1.msra.mxu0 %v1572
        %1931 = vmatprep.subr.mxu0 %v1576
        %1932 = vmatpush1.msra.mxu0 %v1575
        %1933 = vmatprep.subr.mxu0 %v1579
        %1934 = vmatpush1.msra.mxu0 %v1578
        %1935 = vmatprep.subr.mxu0 %v1582
        %1936 = vmatpush1.msra.mxu0 %v1581
        %1937 = vmatprep.subr.mxu0 %v1585
        %1938 = vmatpush1.msra.mxu0 %v1584
        %1939 = vmatprep.subr.mxu0 %v1588
        %1940 = vmatpush1.msra.mxu0 %v1587
        %1941 = vmatprep.subr.mxu0 %v1591
        %1942 = vmatpush1.msra.mxu0 %v1590
        %1943 = vmatprep.subr.mxu0 %v1594
        %1944 = vmatpush1.msra.mxu0 %v1593
        %1945 = vmatprep.subr.mxu0 %v1597
        %1946 = vmatpush1.msra.mxu0 %v1596
        %1947 = vmatprep.subr.mxu0 %v1600
        %1948 = vmatpush1.msra.mxu0 %v1599
        %1949 = vmatprep.subr.mxu0 %v1603
        %1950 = vmatpush1.msra.mxu0 %v1602
        %1951 = vmatprep.subr.mxu0 %v1606
        %1952 = vmatpush1.msra.mxu0 %v1605
        %1953 = vmatprep.subr.mxu0 %v1609
        %1954 = vmatpush1.msra.mxu0 %v1608
        %1955 = vmatprep.subr.mxu0 %v1612
        %1956 = vmatpush1.msra.mxu0 %v1611
        %1957 = vmatprep.subr.mxu0 %v1615
        %1958 = vmatpush1.msra.mxu0 %v1614
        %1959 = vmatprep.subr.mxu0 %v1618
        %1960 = vmatpush1.msra.mxu0 %v1617
        %1961 = vmatprep.subr.mxu0 %v1621
        %1962 = vmatpush1.msra.mxu0 %v1620
        %1963 = vmatprep.subr.mxu0 %v1624
        %1964 = vmatpush1.msra.mxu0 %v1623
        %1965 = vmatprep.subr.mxu0 %v1627
        %1966 = vmatpush1.msra.mxu0 %v1626
        %1967 = vmatprep.subr.mxu0 %v1630
        %1968 = vmatpush1.msra.mxu0 %v1629
        %1969 = vmatprep.subr.mxu0 %v1633
        %1970 = vmatpush1.msra.mxu0 %v1632
        %1971 = vmatprep.subr.mxu0 %v1636
        %1972 = vmatpush1.msra.mxu0 %v1635
        %1973 = vmatprep.subr.mxu0 %v1639
        %1974 = vmatpush1.msra.mxu0 %v1638
        %1975 = vmatprep.subr.mxu0 %v1642
        %1976 = vmatpush1.msra.mxu0 %v1641
        %1977 = vmatprep.subr.mxu0 %v1645
        %1978 = vmatpush1.msra.mxu0 %v1644
        %1979 = vmatprep.subr.mxu0 %v1648
        %1980 = vmatpush1.msra.mxu0 %v1647
        %1981 = vmatprep.subr.mxu0 %v1651
        %1982 = vmatpush1.msra.mxu0 %v1650
        %1983 = vmatprep.subr.mxu0 %v1654
        %1984 = vmatpush1.msra.mxu0 %v1653
        %1985 = vmatprep.subr.mxu0 %v1657
        %1986 = vmatpush1.msra.mxu0 %v1656
        %1987 = vmatprep.subr.mxu0 %v1660
        %1988 = vmatpush1.msra.mxu0 %v1659
        %1989 = vmatprep.subr.mxu0 %v1663
        %1990 = vmatpush1.msra.mxu0 %v1662
        %1991 = vmatprep.subr.mxu0 %v1666
        %1992 = vmatpush1.msra.mxu0 %v1665
        %1993 = vmatprep.mubr.f32.mxu0 %v1273
        %1994 = vmatmul.mubr.f32.gmra.mrb[0].mxu0 %v1272
        %v1995 = vpop.f32.mrb[0].mxu0
        %v1996 = vadd.f32 %v1925, %v1995
        %v1997 = vpop.f32.mrb[0].mxu0
        %v1998 = vadd.f32 %v1927, %v1997
        %1999 = vdwg.mxu0
        %2000 = vmatprep.subr.mxu0 %v1669
        %2001 = vmatpush1.msra.mxu0 %v1668
        %2002 = vmatprep.subr.mxu0 %v1672
        %2003 = vmatpush1.msra.mxu0 %v1671
        %2004 = vmatprep.subr.mxu0 %v1675
        %2005 = vmatpush1.msra.mxu0 %v1674
        %2006 = vmatprep.subr.mxu0 %v1678
        %2007 = vmatpush1.msra.mxu0 %v1677
        %2008 = vmatprep.subr.mxu0 %v1681
        %2009 = vmatpush1.msra.mxu0 %v1680
        %2010 = vmatprep.subr.mxu0 %v1684
        %2011 = vmatpush1.msra.mxu0 %v1683
        %2012 = vmatprep.subr.mxu0 %v1687
        %2013 = vmatpush1.msra.mxu0 %v1686
        %2014 = vmatprep.subr.mxu0 %v1690
        %2015 = vmatpush1.msra.mxu0 %v1689
        %2016 = vmatprep.subr.mxu0 %v1693
        %2017 = vmatpush1.msra.mxu0 %v1692
        %2018 = vmatprep.subr.mxu0 %v1696
        %2019 = vmatpush1.msra.mxu0 %v1695
        %2020 = vmatprep.subr.mxu0 %v1699
        %2021 = vmatpush1.msra.mxu0 %v1698
        %2022 = vmatprep.subr.mxu0 %v1702
        %2023 = vmatpush1.msra.mxu0 %v1701
        %2024 = vmatprep.subr.mxu0 %v1705
        %2025 = vmatpush1.msra.mxu0 %v1704
        %2026 = vmatprep.subr.mxu0 %v1708
        %2027 = vmatpush1.msra.mxu0 %v1707
        %2028 = vmatprep.subr.mxu0 %v1711
        %2029 = vmatpush1.msra.mxu0 %v1710
        %2030 = vmatprep.subr.mxu0 %v1714
        %2031 = vmatpush1.msra.mxu0 %v1713
        %2032 = vmatprep.subr.mxu0 0.0
        %2033 = vmatpush1.msra.mxu0 0.0
        %2034 = vmatprep.subr.mxu0 0.0
        %2035 = vmatpush1.msra.mxu0 0.0
        %2036 = vmatprep.subr.mxu0 0.0
        %2037 = vmatpush1.msra.mxu0 0.0
        %2038 = vmatprep.subr.mxu0 0.0
        %2039 = vmatpush1.msra.mxu0 0.0
        %2040 = vmatprep.subr.mxu0 0.0
        %2041 = vmatpush1.msra.mxu0 0.0
        %2042 = vmatprep.subr.mxu0 0.0
        %2043 = vmatpush1.msra.mxu0 0.0
        %2044 = vmatprep.subr.mxu0 0.0
        %2045 = vmatpush1.msra.mxu0 0.0
        %2046 = vmatprep.subr.mxu0 0.0
        %2047 = vmatpush1.msra.mxu0 0.0
        %2048 = vmatprep.subr.mxu0 0.0
        %2049 = vmatpush1.msra.mxu0 0.0
        %2050 = vmatprep.subr.mxu0 0.0
        %2051 = vmatpush1.msra.mxu0 0.0
        %2052 = vmatprep.subr.mxu0 0.0
        %2053 = vmatpush1.msra.mxu0 0.0
        %2054 = vmatprep.subr.mxu0 0.0
        %2055 = vmatpush1.msra.mxu0 0.0
        %2056 = vmatprep.subr.mxu0 0.0
        %2057 = vmatpush1.msra.mxu0 0.0
        %2058 = vmatprep.subr.mxu0 0.0
        %2059 = vmatpush1.msra.mxu0 0.0
        %2060 = vmatprep.subr.mxu0 0.0
        %2061 = vmatpush1.msra.mxu0 0.0
        %2062 = vmatprep.subr.mxu0 0.0
        %2063 = vmatpush1.msra.mxu0 0.0
        %2064 = vmatprep.mubr.f32.mxu0 0.0
        %2065 = vmatmul.mubr.f32.gmra.mrb[0].mxu0 %v1274
        %v2066 = vpop.f32.mrb[0].mxu0
        %v2067 = vadd.f32 %v1996, %v2066
        %v2068 = vpop.f32.mrb[0].mxu0
        %v2069 = vadd.f32 %v1998, %v2068
        %2070 = vdwg.mxu0
        %2071 = vmatprep.subr.mxu0 0.0
        %2072 = vmatpush1.msra.mxu0 %v1286
        %2073 = vmatprep.subr.mxu0 0.0
        %2074 = vmatpush1.msra.mxu0 %v1289
        %2075 = vmatprep.subr.mxu0 0.0
        %2076 = vmatpush1.msra.mxu0 %v1292
        %2077 = vmatprep.subr.mxu0 0.0
        %2078 = vmatpush1.msra.mxu0 %v1295
        %2079 = vmatprep.subr.mxu0 0.0
        %2080 = vmatpush1.msra.mxu0 %v1298
        %2081 = vmatprep.subr.mxu0 0.0
        %2082 = vmatpush1.msra.mxu0 %v1301
        %2083 = vmatprep.subr.mxu0 0.0
        %2084 = vmatpush1.msra.mxu0 %v1304
        %2085 = vmatprep.subr.mxu0 0.0
        %2086 = vmatpush1.msra.mxu0 %v1307
        %2087 = vmatprep.subr.mxu0 0.0
        %2088 = vmatpush1.msra.mxu0 %v1310
        %2089 = vmatprep.subr.mxu0 0.0
        %2090 = vmatpush1.msra.mxu0 %v1313
        %2091 = vmatprep.subr.mxu0 0.0
        %2092 = vmatpush1.msra.mxu0 %v1316
        %2093 = vmatprep.subr.mxu0 0.0
        %2094 = vmatpush1.msra.mxu0 %v1319
        %2095 = vmatprep.subr.mxu0 0.0
        %2096 = vmatpush1.msra.mxu0 %v1322
        %2097 = vmatprep.subr.mxu0 0.0
        %2098 = vmatpush1.msra.mxu0 %v1325
        %2099 = vmatprep.subr.mxu0 0.0
        %2100 = vmatpush1.msra.mxu0 %v1328
        %2101 = vmatprep.subr.mxu0 0.0
        %2102 = vmatpush1.msra.mxu0 %v1331
        %2103 = vmatprep.subr.mxu0 0.0
        %2104 = vmatpush1.msra.mxu0 %v1334
        %2105 = vmatprep.subr.mxu0 0.0
        %2106 = vmatpush1.msra.mxu0 %v1337
        %2107 = vmatprep.subr.mxu0 0.0
        %2108 = vmatpush1.msra.mxu0 %v1340
        %2109 = vmatprep.subr.mxu0 0.0
        %2110 = vmatpush1.msra.mxu0 %v1343
        %2111 = vmatprep.subr.mxu0 0.0
        %2112 = vmatpush1.msra.mxu0 %v1346
        %2113 = vmatprep.subr.mxu0 0.0
        %2114 = vmatpush1.msra.mxu0 %v1349
        %2115 = vmatprep.subr.mxu0 0.0
        %2116 = vmatpush1.msra.mxu0 %v1352
        %2117 = vmatprep.subr.mxu0 0.0
        %2118 = vmatpush1.msra.mxu0 %v1355
        %2119 = vmatprep.subr.mxu0 0.0
        %2120 = vmatpush1.msra.mxu0 %v1358
        %2121 = vmatprep.subr.mxu0 0.0
        %2122 = vmatpush1.msra.mxu0 %v1361
        %2123 = vmatprep.subr.mxu0 0.0
        %2124 = vmatpush1.msra.mxu0 %v1364
        %2125 = vmatprep.subr.mxu0 0.0
        %2126 = vmatpush1.msra.mxu0 %v1367
        %2127 = vmatprep.subr.mxu0 0.0
        %2128 = vmatpush1.msra.mxu0 %v1370
        %2129 = vmatprep.subr.mxu0 0.0
        %2130 = vmatpush1.msra.mxu0 %v1373
        %2131 = vmatprep.subr.mxu0 0.0
        %2132 = vmatpush1.msra.mxu0 %v1376
        %2133 = vmatprep.subr.mxu0 0.0
        %2134 = vmatpush1.msra.mxu0 %v1379
        %2135 = vmatprep.mubr.f32.mxu0 %v1267
        %2136 = vmatmul.mubr.f32.gmra.mrb[0].mxu0 %v1266
        %v2137 = vpop.f32.mrb[0].mxu0
        %v2138 = vadd.f32 0.0, %v2137
        %v2139 = vpop.f32.mrb[0].mxu0
        %2140 = vdwg.mxu0
        %2141 = vmatprep.subr.mxu0 0.0
        %2142 = vmatpush1.msra.mxu0 %v1382
        %2143 = vmatprep.subr.mxu0 0.0
        %2144 = vmatpush1.msra.mxu0 %v1385
        %2145 = vmatprep.subr.mxu0 0.0
        %2146 = vmatpush1.msra.mxu0 %v1388
        %2147 = vmatprep.subr.mxu0 0.0
        %2148 = vmatpush1.msra.mxu0 %v1391
        %2149 = vmatprep.subr.mxu0 0.0
        %2150 = vmatpush1.msra.mxu0 %v1394
        %2151 = vmatprep.subr.mxu0 0.0
        %2152 = vmatpush1.msra.mxu0 %v1397
        %2153 = vmatprep.subr.mxu0 0.0
        %2154 = vmatpush1.msra.mxu0 %v1400
        %2155 = vmatprep.subr.mxu0 0.0
        %2156 = vmatpush1.msra.mxu0 %v1403
        %2157 = vmatprep.subr.mxu0 0.0
        %2158 = vmatpush1.msra.mxu0 %v1406
        %2159 = vmatprep.subr.mxu0 0.0
        %2160 = vmatpush1.msra.mxu0 %v1409
        %2161 = vmatprep.subr.mxu0 0.0
        %2162 = vmatpush1.msra.mxu0 %v1412
        %2163 = vmatprep.subr.mxu0 0.0
        %2164 = vmatpush1.msra.mxu0 %v1415
        %2165 = vmatprep.subr.mxu0 0.0
        %2166 = vmatpush1.msra.mxu0 %v1418
        %2167 = vmatprep.subr.mxu0 0.0
        %2168 = vmatpush1.msra.mxu0 %v1421
        %2169 = vmatprep.subr.mxu0 0.0
        %2170 = vmatpush1.msra.mxu0 %v1424
        %2171 = vmatprep.subr.mxu0 0.0
        %2172 = vmatpush1.msra.mxu0 %v1427
        %2173 = vmatprep.subr.mxu0 0.0
        %2174 = vmatpush1.msra.mxu0 %v1430
        %2175 = vmatprep.subr.mxu0 0.0
        %2176 = vmatpush1.msra.mxu0 %v1433
        %2177 = vmatprep.subr.mxu0 0.0
        %2178 = vmatpush1.msra.mxu0 %v1436
        %2179 = vmatprep.subr.mxu0 0.0
        %2180 = vmatpush1.msra.mxu0 %v1439
        %2181 = vmatprep.subr.mxu0 0.0
        %2182 = vmatpush1.msra.mxu0 %v1442
        %2183 = vmatprep.subr.mxu0 0.0
        %2184 = vmatpush1.msra.mxu0 %v1445
        %2185 = vmatprep.subr.mxu0 0.0
        %2186 = vmatpush1.msra.mxu0 %v1448
        %2187 = vmatprep.subr.mxu0 0.0
        %2188 = vmatpush1.msra.mxu0 %v1451
        %2189 = vmatprep.subr.mxu0 0.0
        %2190 = vmatpush1.msra.mxu0 %v1454
        %2191 = vmatprep.subr.mxu0 0.0
        %2192 = vmatpush1.msra.mxu0 %v1457
        %2193 = vmatprep.subr.mxu0 0.0
        %2194 = vmatpush1.msra.mxu0 %v1460
        %2195 = vmatprep.subr.mxu0 0.0
        %2196 = vmatpush1.msra.mxu0 %v1463
        %2197 = vmatprep.subr.mxu0 0.0
        %2198 = vmatpush1.msra.mxu0 %v1466
        %2199 = vmatprep.subr.mxu0 0.0
        %2200 = vmatpush1.msra.mxu0 %v1469
        %2201 = vmatprep.subr.mxu0 0.0
        %2202 = vmatpush1.msra.mxu0 %v1472
        %2203 = vmatprep.subr.mxu0 0.0
        %2204 = vmatpush1.msra.mxu0 %v1475
        %2205 = vmatprep.mubr.f32.mxu0 %v1269
        %2206 = vmatmul.mubr.f32.gmra.mrb[0].mxu0 %v1268
        %v2207 = vpop.f32.mrb[0].mxu0
        %v2208 = vadd.f32 %v2138, %v2207
        %v2209 = vpop.f32.mrb[0].mxu0
        %2210 = vdwg.mxu0
        %2211 = vmatprep.subr.mxu0 0.0
        %2212 = vmatpush1.msra.mxu0 %v1478
        %2213 = vmatprep.subr.mxu0 0.0
        %2214 = vmatpush1.msra.mxu0 %v1481
        %2215 = vmatprep.subr.mxu0 0.0
        %2216 = vmatpush1.msra.mxu0 %v1484
        %2217 = vmatprep.subr.mxu0 0.0
        %2218 = vmatpush1.msra.mxu0 %v1487
        %2219 = vmatprep.subr.mxu0 0.0
        %2220 = vmatpush1.msra.mxu0 %v1490
        %2221 = vmatprep.subr.mxu0 0.0
        %2222 = vmatpush1.msra.mxu0 %v1493
        %2223 = vmatprep.subr.mxu0 0.0
        %2224 = vmatpush1.msra.mxu0 %v1496
        %2225 = vmatprep.subr.mxu0 0.0
        %2226 = vmatpush1.msra.mxu0 %v1499
        %2227 = vmatprep.subr.mxu0 0.0
        %2228 = vmatpush1.msra.mxu0 %v1502
        %2229 = vmatprep.subr.mxu0 0.0
        %2230 = vmatpush1.msra.mxu0 %v1505
        %2231 = vmatprep.subr.mxu0 0.0
        %2232 = vmatpush1.msra.mxu0 %v1508
        %2233 = vmatprep.subr.mxu0 0.0
        %2234 = vmatpush1.msra.mxu0 %v1511
        %2235 = vmatprep.subr.mxu0 0.0
        %2236 = vmatpush1.msra.mxu0 %v1514
        %2237 = vmatprep.subr.mxu0 0.0
        %2238 = vmatpush1.msra.mxu0 %v1517
        %2239 = vmatprep.subr.mxu0 0.0
        %2240 = vmatpush1.msra.mxu0 %v1520
        %2241 = vmatprep.subr.mxu0 0.0
        %2242 = vmatpush1.msra.mxu0 %v1523
        %2243 = vmatprep.subr.mxu0 0.0
        %2244 = vmatpush1.msra.mxu0 %v1526
        %2245 = vmatprep.subr.mxu0 0.0
        %2246 = vmatpush1.msra.mxu0 %v1529
        %2247 = vmatprep.subr.mxu0 0.0
        %2248 = vmatpush1.msra.mxu0 %v1532
        %2249 = vmatprep.subr.mxu0 0.0
        %2250 = vmatpush1.msra.mxu0 %v1535
        %2251 = vmatprep.subr.mxu0 0.0
        %2252 = vmatpush1.msra.mxu0 %v1538
        %2253 = vmatprep.subr.mxu0 0.0
        %2254 = vmatpush1.msra.mxu0 %v1541
        %2255 = vmatprep.subr.mxu0 0.0
        %2256 = vmatpush1.msra.mxu0 %v1544
        %2257 = vmatprep.subr.mxu0 0.0
        %2258 = vmatpush1.msra.mxu0 %v1547
        %2259 = vmatprep.subr.mxu0 0.0
        %2260 = vmatpush1.msra.mxu0 %v1550
        %2261 = vmatprep.subr.mxu0 0.0
        %2262 = vmatpush1.msra.mxu0 %v1553
        %2263 = vmatprep.subr.mxu0 0.0
        %2264 = vmatpush1.msra.mxu0 %v1556
        %2265 = vmatprep.subr.mxu0 0.0
        %2266 = vmatpush1.msra.mxu0 %v1559
        %2267 = vmatprep.subr.mxu0 0.0
        %2268 = vmatpush1.msra.mxu0 %v1562
        %2269 = vmatprep.subr.mxu0 0.0
        %2270 = vmatpush1.msra.mxu0 %v1565
        %2271 = vmatprep.subr.mxu0 0.0
        %2272 = vmatpush1.msra.mxu0 %v1568
        %2273 = vmatprep.subr.mxu0 0.0
        %2274 = vmatpush1.msra.mxu0 %v1571
        %2275 = vmatprep.mubr.f32.mxu0 %v1271
        %2276 = vmatmul.mubr.f32.gmra.mrb[0].mxu0 %v1270
        %v2277 = vpop.f32.mrb[0].mxu0
        %v2278 = vadd.f32 %v2208, %v2277
        %v2279 = vpop.f32.mrb[0].mxu0
        %2280 = vdwg.mxu0
        %2281 = vmatprep.subr.mxu0 0.0
        %2282 = vmatpush1.msra.mxu0 %v1574
        %2283 = vmatprep.subr.mxu0 0.0
        %2284 = vmatpush1.msra.mxu0 %v1577
        %2285 = vmatprep.subr.mxu0 0.0
        %2286 = vmatpush1.msra.mxu0 %v1580
        %2287 = vmatprep.subr.mxu0 0.0
        %2288 = vmatpush1.msra.mxu0 %v1583
        %2289 = vmatprep.subr.mxu0 0.0
        %2290 = vmatpush1.msra.mxu0 %v1586
        %2291 = vmatprep.subr.mxu0 0.0
        %2292 = vmatpush1.msra.mxu0 %v1589
        %2293 = vmatprep.subr.mxu0 0.0
        %2294 = vmatpush1.msra.mxu0 %v1592
        %2295 = vmatprep.subr.mxu0 0.0
        %2296 = vmatpush1.msra.mxu0 %v1595
        %2297 = vmatprep.subr.mxu0 0.0
        %2298 = vmatpush1.msra.mxu0 %v1598
        %2299 = vmatprep.subr.mxu0 0.0
        %2300 = vmatpush1.msra.mxu0 %v1601
        %2301 = vmatprep.subr.mxu0 0.0
        %2302 = vmatpush1.msra.mxu0 %v1604
        %2303 = vmatprep.subr.mxu0 0.0
        %2304 = vmatpush1.msra.mxu0 %v1607
        %2305 = vmatprep.subr.mxu0 0.0
        %2306 = vmatpush1.msra.mxu0 %v1610
        %2307 = vmatprep.subr.mxu0 0.0
        %2308 = vmatpush1.msra.mxu0 %v1613
        %2309 = vmatprep.subr.mxu0 0.0
        %2310 = vmatpush1.msra.mxu0 %v1616
        %2311 = vmatprep.subr.mxu0 0.0
        %2312 = vmatpush1.msra.mxu0 %v1619
        %2313 = vmatprep.subr.mxu0 0.0
        %2314 = vmatpush1.msra.mxu0 %v1622
        %2315 = vmatprep.subr.mxu0 0.0
        %2316 = vmatpush1.msra.mxu0 %v1625
        %2317 = vmatprep.subr.mxu0 0.0
        %2318 = vmatpush1.msra.mxu0 %v1628
        %2319 = vmatprep.subr.mxu0 0.0
        %2320 = vmatpush1.msra.mxu0 %v1631
        %2321 = vmatprep.subr.mxu0 0.0
        %2322 = vmatpush1.msra.mxu0 %v1634
        %2323 = vmatprep.subr.mxu0 0.0
        %2324 = vmatpush1.msra.mxu0 %v1637
        %2325 = vmatprep.subr.mxu0 0.0
        %2326 = vmatpush1.msra.mxu0 %v1640
        %2327 = vmatprep.subr.mxu0 0.0
        %2328 = vmatpush1.msra.mxu0 %v1643
        %2329 = vmatprep.subr.mxu0 0.0
        %2330 = vmatpush1.msra.mxu0 %v1646
        %2331 = vmatprep.subr.mxu0 0.0
        %2332 = vmatpush1.msra.mxu0 %v1649
        %2333 = vmatprep.subr.mxu0 0.0
        %2334 = vmatpush1.msra.mxu0 %v1652
        %2335 = vmatprep.subr.mxu0 0.0
        %2336 = vmatpush1.msra.mxu0 %v1655
        %2337 = vmatprep.subr.mxu0 0.0
        %2338 = vmatpush1.msra.mxu0 %v1658
        %2339 = vmatprep.subr.mxu0 0.0
        %2340 = vmatpush1.msra.mxu0 %v1661
        %2341 = vmatprep.subr.mxu0 0.0
        %2342 = vmatpush1.msra.mxu0 %v1664
        %2343 = vmatprep.subr.mxu0 0.0
        %2344 = vmatpush1.msra.mxu0 %v1667
        %2345 = vmatprep.mubr.f32.mxu0 %v1273
        %2346 = vmatmul.mubr.f32.gmra.mrb[0].mxu0 %v1272
        %v2347 = vpop.f32.mrb[0].mxu0
        %v2348 = vadd.f32 %v2278, %v2347
        %v2349 = vpop.f32.mrb[0].mxu0
        %2350 = vdwg.mxu0
        %2351 = vmatprep.subr.mxu0 0.0
        %2352 = vmatpush1.msra.mxu0 %v1670
        %2353 = vmatprep.subr.mxu0 0.0
        %2354 = vmatpush1.msra.mxu0 %v1673
        %2355 = vmatprep.subr.mxu0 0.0
        %2356 = vmatpush1.msra.mxu0 %v1676
        %2357 = vmatprep.subr.mxu0 0.0
        %2358 = vmatpush1.msra.mxu0 %v1679
        %2359 = vmatprep.subr.mxu0 0.0
        %2360 = vmatpush1.msra.mxu0 %v1682
        %2361 = vmatprep.subr.mxu0 0.0
        %2362 = vmatpush1.msra.mxu0 %v1685
        %2363 = vmatprep.subr.mxu0 0.0
        %2364 = vmatpush1.msra.mxu0 %v1688
        %2365 = vmatprep.subr.mxu0 0.0
        %2366 = vmatpush1.msra.mxu0 %v1691
        %2367 = vmatprep.subr.mxu0 0.0
        %2368 = vmatpush1.msra.mxu0 %v1694
        %2369 = vmatprep.subr.mxu0 0.0
        %2370 = vmatpush1.msra.mxu0 %v1697
        %2371 = vmatprep.subr.mxu0 0.0
        %2372 = vmatpush1.msra.mxu0 %v1700
        %2373 = vmatprep.subr.mxu0 0.0
        %2374 = vmatpush1.msra.mxu0 %v1703
        %2375 = vmatprep.subr.mxu0 0.0
        %2376 = vmatpush1.msra.mxu0 %v1706
        %2377 = vmatprep.subr.mxu0 0.0
        %2378 = vmatpush1.msra.mxu0 %v1709
        %2379 = vmatprep.subr.mxu0 0.0
        %2380 = vmatpush1.msra.mxu0 %v1712
        %2381 = vmatprep.subr.mxu0 0.0
        %2382 = vmatpush1.msra.mxu0 %v1715
        %2383 = vmatprep.subr.mxu0 0.0
        %2384 = vmatpush1.msra.mxu0 0.0
        %2385 = vmatprep.subr.mxu0 0.0
        %2386 = vmatpush1.msra.mxu0 0.0
        %2387 = vmatprep.subr.mxu0 0.0
        %2388 = vmatpush1.msra.mxu0 0.0
        %2389 = vmatprep.subr.mxu0 0.0
        %2390 = vmatpush1.msra.mxu0 0.0
        %2391 = vmatprep.subr.mxu0 0.0
        %2392 = vmatpush1.msra.mxu0 0.0
        %2393 = vmatprep.subr.mxu0 0.0
        %2394 = vmatpush1.msra.mxu0 0.0
        %2395 = vmatprep.subr.mxu0 0.0
        %2396 = vmatpush1.msra.mxu0 0.0
        %2397 = vmatprep.subr.mxu0 0.0
        %2398 = vmatpush1.msra.mxu0 0.0
        %2399 = vmatprep.subr.mxu0 0.0
        %2400 = vmatpush1.msra.mxu0 0.0
        %2401 = vmatprep.subr.mxu0 0.0
        %2402 = vmatpush1.msra.mxu0 0.0
        %2403 = vmatprep.subr.mxu0 0.0
        %2404 = vmatpush1.msra.mxu0 0.0
        %2405 = vmatprep.subr.mxu0 0.0
        %2406 = vmatpush1.msra.mxu0 0.0
        %2407 = vmatprep.subr.mxu0 0.0
        %2408 = vmatpush1.msra.mxu0 0.0
        %2409 = vmatprep.subr.mxu0 0.0
        %2410 = vmatpush1.msra.mxu0 0.0
        %2411 = vmatprep.subr.mxu0 0.0
        %2412 = vmatpush1.msra.mxu0 0.0
        %2413 = vmatprep.subr.mxu0 0.0
        %2414 = vmatpush1.msra.mxu0 0.0
        %2415 = vmatprep.mubr.f32.mxu0 0.0
        %2416 = vmatmul.mubr.f32.gmra.mrb[0].mxu0 %v1274
        %v2417 = vpop.f32.mrb[0].mxu0
        %v2418 = vadd.f32 %v2348, %v2417
        %v2419 = vpop.f32.mrb[0].mxu0
        %2420 = vdwg.mxu0
        %2421 = vst [vmem:[%s490] sm:$0xff] %v2067
        %2422 = vst [vmem:[%s490 + $0x8] sm:$0xff] %v2069
        %2423 = vst [vmem:[%s490 + $0x10] sm:$0xff] %v2418
        %s2424 = sld [smem:[#allocation13 + $0x1]]
        %s2425 = sld [smem:[#allocation15 + $0x1]]
        %v2426 = vstv %s2425
        %v2427 = vsub.f32 %v1046, %v2426
        %v2428 = vsub.f32 %v1047, %v2426
        %v2429 = vsub.f32 %v1048, %v2426
        %v2430 = vsub.f32 %v1049, %v2426
        %v2431 = vsub.f32 %v1050, %v2426
        %v2432 = vsub.f32 %v1051, %v2426
        %v2433 = vsub.f32 %v1052, %v2426
        %v2434 = vsub.f32 %v1053, %v2426
        %v2435 = vsub.f32 %v1054, %v2426
        %v2436 = vmul.f32 %v2427, 100.0
        %v2437 = vmul.f32 %v2428, 100.0
        %v2438 = vmul.f32 %v2429, 100.0
        %v2439 = vmul.f32 %v2430, 100.0
        %v2440 = vmul.f32 %v2431, 100.0
        %v2441 = vmul.f32 %v2432, 100.0
        %v2442 = vmul.f32 %v2433, 100.0
        %v2443 = vmul.f32 %v2434, 100.0
        %v2444 = vmul.f32 %v2435, 100.0
        %v2445 = vand.u32 2147483647, %v2436
        %v2446 = vand.u32 2147483647, %v2437
        %v2447 = vand.u32 2147483647, %v2438
        %v2448 = vand.u32 2147483647, %v2439
        %v2449 = vand.u32 2147483647, %v2440
        %v2450 = vand.u32 2147483647, %v2441
        %v2451 = vand.u32 2147483647, %v2442
        %v2452 = vand.u32 2147483647, %v2443
        %v2453 = vand.u32 2147483647, %v2444
        %v2454 = vsub.f32 0.0, %v2445
        %v2455 = vsub.f32 0.0, %v2446
        %v2456 = vsub.f32 0.0, %v2447
        %v2457 = vsub.f32 0.0, %v2448
        %v2458 = vsub.f32 0.0, %v2449
        %v2459 = vsub.f32 0.0, %v2450
        %v2460 = vsub.f32 0.0, %v2451
        %v2461 = vsub.f32 0.0, %v2452
        %v2462 = vsub.f32 0.0, %v2453
        %v2463 = vmul.f32 %v2454, 1.442695
        %v2464 = vpow.pop %v2463
        %v2465 = vmul.f32 %v2455, 1.442695
        %v2466 = vpow.pop %v2465
        %v2467 = vmul.f32 %v2456, 1.442695
        %v2468 = vpow.pop %v2467
        %v2469 = vmul.f32 %v2457, 1.442695
        %v2470 = vpow.pop %v2469
        %v2471 = vmul.f32 %v2458, 1.442695
        %v2472 = vpow.pop %v2471
        %v2473 = vmul.f32 %v2459, 1.442695
        %v2474 = vpow.pop %v2473
        %v2475 = vmul.f32 %v2460, 1.442695
        %v2476 = vpow.pop %v2475
        %v2477 = vmul.f32 %v2461, 1.442695
        %v2478 = vpow.pop %v2477
        %v2479 = vmul.f32 %v2462, 1.442695
        %v2480 = vpow.pop %v2479
        %v2481 = vadd.f32 %v2464, 1.0
        %v2482 = vadd.f32 %v2466, 1.0
        %v2483 = vadd.f32 %v2468, 1.0
        %v2484 = vadd.f32 %v2470, 1.0
        %v2485 = vadd.f32 %v2472, 1.0
        %v2486 = vadd.f32 %v2474, 1.0
        %v2487 = vadd.f32 %v2476, 1.0
        %v2488 = vadd.f32 %v2478, 1.0
        %v2489 = vadd.f32 %v2480, 1.0
        %v2490 = vrcp.pop %v2481
        %v2491 = vrcp.pop %v2482
        %v2492 = vrcp.pop %v2483
        %v2493 = vrcp.pop %v2484
        %v2494 = vrcp.pop %v2485
        %v2495 = vrcp.pop %v2486
        %v2496 = vrcp.pop %v2487
        %v2497 = vrcp.pop %v2488
        %v2498 = vrcp.pop %v2489
        %vm2499 = vcmp.ge.f32.partialorder %v2436, 0.0
        %vm2500 = vcmp.ge.f32.partialorder %v2437, 0.0
        %vm2501 = vcmp.ge.f32.partialorder %v2438, 0.0
        %vm2502 = vcmp.ge.f32.partialorder %v2439, 0.0
        %vm2503 = vcmp.ge.f32.partialorder %v2440, 0.0
        %vm2504 = vcmp.ge.f32.partialorder %v2441, 0.0
        %vm2505 = vcmp.ge.f32.partialorder %v2442, 0.0
        %vm2506 = vcmp.ge.f32.partialorder %v2443, 0.0
        %vm2507 = vcmp.ge.f32.partialorder %v2444, 0.0
        %v2508 = vmul.f32 %v2464, %v2490
        %v2509 = vmul.f32 %v2466, %v2491
        %v2510 = vmul.f32 %v2468, %v2492
        %v2511 = vmul.f32 %v2470, %v2493
        %v2512 = vmul.f32 %v2472, %v2494
        %v2513 = vmul.f32 %v2474, %v2495
        %v2514 = vmul.f32 %v2476, %v2496
        %v2515 = vmul.f32 %v2478, %v2497
        %v2516 = vmul.f32 %v2480, %v2498
        %v2517 = vsel %vm2499, %v2490, %v2508
        %v2518 = vsel %vm2500, %v2491, %v2509
        %v2519 = vsel %vm2501, %v2492, %v2510
        %v2520 = vsel %vm2502, %v2493, %v2511
        %v2521 = vsel %vm2503, %v2494, %v2512
        %v2522 = vsel %vm2504, %v2495, %v2513
        %v2523 = vsel %vm2505, %v2496, %v2514
        %v2524 = vsel %vm2506, %v2497, %v2515
        %v2525 = vsel %vm2507, %v2498, %v2516
        %v2526 = vstv %s2424
        %v2527 = vadd.f32 %v1046, %v2526
        %v2528 = vadd.f32 %v1047, %v2526
        %v2529 = vadd.f32 %v1048, %v2526
        %v2530 = vadd.f32 %v1049, %v2526
        %v2531 = vadd.f32 %v1050, %v2526
        %v2532 = vadd.f32 %v1051, %v2526
        %v2533 = vadd.f32 %v1052, %v2526
        %v2534 = vadd.f32 %v1053, %v2526
        %v2535 = vadd.f32 %v1054, %v2526
        %v2536 = vmul.f32 %v2527, -100.0
        %v2537 = vmul.f32 %v2528, -100.0
        %v2538 = vmul.f32 %v2529, -100.0
        %v2539 = vmul.f32 %v2530, -100.0
        %v2540 = vmul.f32 %v2531, -100.0
        %v2541 = vmul.f32 %v2532, -100.0
        %v2542 = vmul.f32 %v2533, -100.0
        %v2543 = vmul.f32 %v2534, -100.0
        %v2544 = vmul.f32 %v2535, -100.0
        %v2545 = vand.u32 2147483647, %v2536
        %v2546 = vand.u32 2147483647, %v2537
        %v2547 = vand.u32 2147483647, %v2538
        %v2548 = vand.u32 2147483647, %v2539
        %v2549 = vand.u32 2147483647, %v2540
        %v2550 = vand.u32 2147483647, %v2541
        %v2551 = vand.u32 2147483647, %v2542
        %v2552 = vand.u32 2147483647, %v2543
        %v2553 = vand.u32 2147483647, %v2544
        %v2554 = vsub.f32 0.0, %v2545
        %v2555 = vsub.f32 0.0, %v2546
        %v2556 = vsub.f32 0.0, %v2547
        %v2557 = vsub.f32 0.0, %v2548
        %v2558 = vsub.f32 0.0, %v2549
        %v2559 = vsub.f32 0.0, %v2550
        %v2560 = vsub.f32 0.0, %v2551
        %v2561 = vsub.f32 0.0, %v2552
        %v2562 = vsub.f32 0.0, %v2553
        %v2563 = vmul.f32 %v2554, 1.442695
        %v2564 = vpow.pop %v2563
        %v2565 = vmul.f32 %v2555, 1.442695
        %v2566 = vpow.pop %v2565
        %v2567 = vmul.f32 %v2556, 1.442695
        %v2568 = vpow.pop %v2567
        %v2569 = vmul.f32 %v2557, 1.442695
        %v2570 = vpow.pop %v2569
        %v2571 = vmul.f32 %v2558, 1.442695
        %v2572 = vpow.pop %v2571
        %v2573 = vmul.f32 %v2559, 1.442695
        %v2574 = vpow.pop %v2573
        %v2575 = vmul.f32 %v2560, 1.442695
        %v2576 = vpow.pop %v2575
        %v2577 = vmul.f32 %v2561, 1.442695
        %v2578 = vpow.pop %v2577
        %v2579 = vmul.f32 %v2562, 1.442695
        %v2580 = vpow.pop %v2579
        %v2581 = vadd.f32 %v2564, 1.0
        %v2582 = vadd.f32 %v2566, 1.0
        %v2583 = vadd.f32 %v2568, 1.0
        %v2584 = vadd.f32 %v2570, 1.0
        %v2585 = vadd.f32 %v2572, 1.0
        %v2586 = vadd.f32 %v2574, 1.0
        %v2587 = vadd.f32 %v2576, 1.0
        %v2588 = vadd.f32 %v2578, 1.0
        %v2589 = vadd.f32 %v2580, 1.0
        %v2590 = vrcp.pop %v2581
        %v2591 = vrcp.pop %v2582
        %v2592 = vrcp.pop %v2583
        %v2593 = vrcp.pop %v2584
        %v2594 = vrcp.pop %v2585
        %v2595 = vrcp.pop %v2586
        %v2596 = vrcp.pop %v2587
        %v2597 = vrcp.pop %v2588
        %v2598 = vrcp.pop %v2589
        %vm2599 = vcmp.ge.f32.partialorder %v2536, 0.0
        %vm2600 = vcmp.ge.f32.partialorder %v2537, 0.0
        %vm2601 = vcmp.ge.f32.partialorder %v2538, 0.0
        %vm2602 = vcmp.ge.f32.partialorder %v2539, 0.0
        %vm2603 = vcmp.ge.f32.partialorder %v2540, 0.0
        %vm2604 = vcmp.ge.f32.partialorder %v2541, 0.0
        %vm2605 = vcmp.ge.f32.partialorder %v2542, 0.0
        %vm2606 = vcmp.ge.f32.partialorder %v2543, 0.0
        %vm2607 = vcmp.ge.f32.partialorder %v2544, 0.0
        %v2608 = vmul.f32 %v2564, %v2590
        %v2609 = vmul.f32 %v2566, %v2591
        %v2610 = vmul.f32 %v2568, %v2592
        %v2611 = vmul.f32 %v2570, %v2593
        %v2612 = vmul.f32 %v2572, %v2594
        %v2613 = vmul.f32 %v2574, %v2595
        %v2614 = vmul.f32 %v2576, %v2596
        %v2615 = vmul.f32 %v2578, %v2597
        %v2616 = vmul.f32 %v2580, %v2598
        %v2617 = vsel %vm2599, %v2590, %v2608
        %v2618 = vsel %vm2600, %v2591, %v2609
        %v2619 = vsel %vm2601, %v2592, %v2610
        %v2620 = vsel %vm2602, %v2593, %v2611
        %v2621 = vsel %vm2603, %v2594, %v2612
        %v2622 = vsel %vm2604, %v2595, %v2613
        %v2623 = vsel %vm2605, %v2596, %v2614
        %v2624 = vsel %vm2606, %v2597, %v2615
        %v2625 = vsel %vm2607, %v2598, %v2616
        %v2626 = vadd.f32 %v2517, %v2617
        %v2627 = vadd.f32 %v2518, %v2618
        %v2628 = vadd.f32 %v2519, %v2619
        %v2629 = vadd.f32 %v2520, %v2620
        %v2630 = vadd.f32 %v2521, %v2621
        %v2631 = vadd.f32 %v2522, %v2622
        %v2632 = vadd.f32 %v2523, %v2623
        %v2633 = vadd.f32 %v2524, %v2624
        %v2634 = vadd.f32 %v2525, %v2625
        %v2635 = vmul.f32 %v1046, %v2626
        %v2636 = vmul.f32 %v1047, %v2627
        %v2637 = vmul.f32 %v1048, %v2628
        %v2638 = vmul.f32 %v1049, %v2629
        %v2639 = vmul.f32 %v1050, %v2630
        %v2640 = vmul.f32 %v1051, %v2631
        %v2641 = vmul.f32 %v1052, %v2632
        %v2642 = vmul.f32 %v1053, %v2633
        %v2643 = vmul.f32 %v1054, %v2634
        %s2644 = scalar_lea.vmem [#allocation2], 72
        %2645 = vst [vmem:[%s2644] sm:$0xff] %v2635
        %2646 = vst [vmem:[%s2644 + $0x8] sm:$0xff] %v2636
        %2647 = vst [vmem:[%s2644 + $0x10] sm:$0xff] %v2637
        %2648 = vst [vmem:[%s2644 + $0x18] sm:$0xff] %v2638
        %2649 = vst [vmem:[%s2644 + $0x20] sm:$0xff] %v2639
        %2650 = vst [vmem:[%s2644 + $0x28] sm:$0xff] %v2640
        %2651 = vst [vmem:[%s2644 + $0x30] sm:$0xff] %v2641
        %2652 = vst [vmem:[%s2644 + $0x38] sm:$0xff] %v2642
        %2653 = vst [vmem:[%s2644 + $0x40] sm:$0xff] %v2643
        %v2654 = vld [vmem:[#allocation9] sm:$0xff]
        %v2655 = vld [vmem:[#allocation9 + $0x8] sm:$0xff]
        %v2656 = vld [vmem:[#allocation9 + $0x10] sm:$0xff]
        %v2657 = vld [vmem:[#allocation9 + $0x18] sm:$0xff]
        %v2658 = vld [vmem:[#allocation9 + $0x20] sm:$0xff]
        %v2659 = vld [vmem:[#allocation9 + $0x28] sm:$0xff]
        %v2660 = vld [vmem:[#allocation9 + $0x30] sm:$0xff]
        %v2661 = vld [vmem:[#allocation9 + $0x38] sm:$0xff]
        %v2662 = vld [vmem:[#allocation9 + $0x40] sm:$0xff]
        %v2663 = vld [vmem:[#allocation9 + $0x48] sm:$0xff]
        %v2664 = vld [vmem:[#allocation9 + $0x50] sm:$0xff]
        %v2665 = vld [vmem:[#allocation9 + $0x58] sm:$0xff]
        %v2666 = vld [vmem:[#allocation9 + $0x60] sm:$0xff]
        %v2667 = vld [vmem:[#allocation9 + $0x68] sm:$0xff]
        %v2668 = vld [vmem:[#allocation9 + $0x70] sm:$0xff]
        %v2669 = vld [vmem:[#allocation9 + $0x78] sm:$0xff]
        %v2670 = vld [vmem:[#allocation9 + $0x80] sm:$0xff]
        %v2671 = vld [vmem:[#allocation9 + $0x88] sm:$0xff]
        %v2672 = vld [vmem:[#allocation9 + $0x90] sm:$0xff]
        %v2673 = vld [vmem:[#allocation9 + $0x98] sm:$0xff]
        %v2674 = vld [vmem:[#allocation9 + $0xa0] sm:$0xff]
        %v2675 = vld [vmem:[#allocation9 + $0xa8] sm:$0xff]
        %v2676 = vld [vmem:[#allocation9 + $0xb0] sm:$0xff]
        %v2677 = vld [vmem:[#allocation9 + $0xb8] sm:$0xff]
        %v2678 = vld [vmem:[#allocation9 + $0xc0] sm:$0xff]
        %v2679 = vld [vmem:[#allocation9 + $0xc8] sm:$0xff]
        %v2680 = vld [vmem:[#allocation9 + $0xd0] sm:$0xff]
        %v2681 = vld [vmem:[#allocation9 + $0xd8] sm:$0xff]
        %v2682 = vld [vmem:[#allocation9 + $0xe0] sm:$0xff]
        %v2683 = vld [vmem:[#allocation9 + $0xe8] sm:$0xff]
        %v2684 = vld [vmem:[#allocation9 + $0xf0] sm:$0xff]
        %v2685 = vld [vmem:[#allocation9 + $0xf8] sm:$0xff]
        %v2686 = vld [vmem:[#allocation9 + $0x100] sm:$0xff]
        %v2687 = vld [vmem:[#allocation9 + $0x108] sm:$0xff]
        %v2688 = vld [vmem:[#allocation9 + $0x110] sm:$0xff]
        %v2689 = vld [vmem:[#allocation9 + $0x118] sm:$0xff]
        %v2690 = vld [vmem:[#allocation9 + $0x120] sm:$0xff]
        %v2691 = vld [vmem:[#allocation9 + $0x128] sm:$0xff]
        %v2692 = vld [vmem:[#allocation9 + $0x130] sm:$0xff]
        %v2693 = vld [vmem:[#allocation9 + $0x138] sm:$0xff]
        %v2694 = vld [vmem:[#allocation9 + $0x140] sm:$0xff]
        %v2695 = vld [vmem:[#allocation9 + $0x148] sm:$0xff]
        %v2696 = vld [vmem:[#allocation9 + $0x150] sm:$0xff]
        %v2697 = vld [vmem:[#allocation9 + $0x158] sm:$0xff]
        %v2698 = vld [vmem:[#allocation9 + $0x160] sm:$0xff]
        %v2699 = vld [vmem:[#allocation9 + $0x168] sm:$0xff]
        %v2700 = vld [vmem:[#allocation9 + $0x170] sm:$0xff]
        %v2701 = vld [vmem:[#allocation9 + $0x178] sm:$0xff]
        %v2702 = vld [vmem:[#allocation9 + $0x180] sm:$0xff]
        %v2703 = vld [vmem:[#allocation9 + $0x188] sm:$0xff]
        %v2704 = vld [vmem:[#allocation9 + $0x190] sm:$0xff]
        %v2705 = vld [vmem:[#allocation9 + $0x198] sm:$0xff]
        %v2706 = vld [vmem:[#allocation9 + $0x1a0] sm:$0xff]
        %v2707 = vld [vmem:[#allocation9 + $0x1a8] sm:$0xff]
        %v2708 = vld [vmem:[#allocation9 + $0x1b0] sm:$0xff]
        %v2709 = vld [vmem:[#allocation9 + $0x1b8] sm:$0xff]
        %v2710 = vld [vmem:[#allocation9 + $0x1c0] sm:$0xff]
        %v2711 = vld [vmem:[#allocation9 + $0x1c8] sm:$0xff]
        %v2712 = vld [vmem:[#allocation9 + $0x1d0] sm:$0xff]
        %v2713 = vld [vmem:[#allocation9 + $0x1d8] sm:$0xff]
        %v2714 = vld [vmem:[#allocation9 + $0x1e0] sm:$0xff]
        %v2715 = vld [vmem:[#allocation9 + $0x1e8] sm:$0xff]
        %v2716 = vld [vmem:[#allocation9 + $0x1f0] sm:$0xff]
        %v2717 = vld [vmem:[#allocation9 + $0x1f8] sm:$0xff]
        %v2718 = vld [vmem:[#allocation9 + $0x200] sm:$0xff]
        %v2719 = vld [vmem:[#allocation9 + $0x208] sm:$0xff]
        %v2720 = vld [vmem:[#allocation9 + $0x210] sm:$0xff]
        %v2721 = vld [vmem:[#allocation9 + $0x218] sm:$0xff]
        %v2722 = vld [vmem:[#allocation9 + $0x220] sm:$0xff]
        %v2723 = vld [vmem:[#allocation9 + $0x228] sm:$0xff]
        %v2724 = vld [vmem:[#allocation9 + $0x230] sm:$0xff]
        %v2725 = vld [vmem:[#allocation9 + $0x238] sm:$0xff]
        %v2726 = vld [vmem:[#allocation9 + $0x240] sm:$0xff]
        %v2727 = vld [vmem:[#allocation9 + $0x248] sm:$0xff]
        %v2728 = vld [vmem:[#allocation9 + $0x250] sm:$0xff]
        %v2729 = vld [vmem:[#allocation9 + $0x258] sm:$0xff]
        %v2730 = vld [vmem:[#allocation9 + $0x260] sm:$0xff]
        %v2731 = vld [vmem:[#allocation9 + $0x268] sm:$0xff]
        %v2732 = vld [vmem:[#allocation9 + $0x270] sm:$0xff]
        %v2733 = vld [vmem:[#allocation9 + $0x278] sm:$0xff]
        %v2734 = vld [vmem:[#allocation9 + $0x280] sm:$0xff]
        %v2735 = vld [vmem:[#allocation9 + $0x288] sm:$0xff]
        %v2736 = vld [vmem:[#allocation9 + $0x290] sm:$0xff]
        %v2737 = vld [vmem:[#allocation9 + $0x298] sm:$0xff]
        %v2738 = vld [vmem:[#allocation9 + $0x2a0] sm:$0xff]
        %v2739 = vld [vmem:[#allocation9 + $0x2a8] sm:$0xff]
        %v2740 = vld [vmem:[#allocation9 + $0x2b0] sm:$0xff]
        %v2741 = vld [vmem:[#allocation9 + $0x2b8] sm:$0xff]
        %v2742 = vld [vmem:[#allocation9 + $0x2c0] sm:$0xff]
        %v2743 = vld [vmem:[#allocation9 + $0x2c8] sm:$0xff]
        %v2744 = vld [vmem:[#allocation9 + $0x2d0] sm:$0xff]
        %v2745 = vld [vmem:[#allocation9 + $0x2d8] sm:$0xff]
        %v2746 = vld [vmem:[#allocation9 + $0x2e0] sm:$0xff]
        %v2747 = vld [vmem:[#allocation9 + $0x2e8] sm:$0xff]
        %v2748 = vld [vmem:[#allocation9 + $0x2f0] sm:$0xff]
        %v2749 = vld [vmem:[#allocation9 + $0x2f8] sm:$0xff]
        %v2750 = vld [vmem:[#allocation9 + $0x300] sm:$0xff]
        %v2751 = vld [vmem:[#allocation9 + $0x308] sm:$0xff]
        %v2752 = vld [vmem:[#allocation9 + $0x310] sm:$0xff]
        %v2753 = vld [vmem:[#allocation9 + $0x318] sm:$0xff]
        %v2754 = vld [vmem:[#allocation9 + $0x320] sm:$0xff]
        %v2755 = vld [vmem:[#allocation9 + $0x328] sm:$0xff]
        %v2756 = vld [vmem:[#allocation9 + $0x330] sm:$0xff]
        %v2757 = vld [vmem:[#allocation9 + $0x338] sm:$0xff]
        %v2758 = vld [vmem:[#allocation9 + $0x340] sm:$0xff]
        %v2759 = vld [vmem:[#allocation9 + $0x348] sm:$0xff]
        %v2760 = vld [vmem:[#allocation9 + $0x350] sm:$0xff]
        %v2761 = vld [vmem:[#allocation9 + $0x358] sm:$0xff]
        %v2762 = vld [vmem:[#allocation9 + $0x360] sm:$0xff]
        %v2763 = vld [vmem:[#allocation9 + $0x368] sm:$0xff]
        %v2764 = vld [vmem:[#allocation9 + $0x370] sm:$0xff]
        %v2765 = vld [vmem:[#allocation9 + $0x378] sm:$0xff]
        %v2766 = vld [vmem:[#allocation9 + $0x380] sm:$0xff]
        %v2767 = vld [vmem:[#allocation9 + $0x388] sm:$0xff]
        %v2768 = vld [vmem:[#allocation9 + $0x390] sm:$0xff]
        %v2769 = vld [vmem:[#allocation9 + $0x398] sm:$0xff]
        %v2770 = vld [vmem:[#allocation9 + $0x3a0] sm:$0xff]
        %v2771 = vld [vmem:[#allocation9 + $0x3a8] sm:$0xff]
        %v2772 = vld [vmem:[#allocation9 + $0x3b0] sm:$0xff]
        %v2773 = vld [vmem:[#allocation9 + $0x3b8] sm:$0xff]
        %v2774 = vld [vmem:[#allocation9 + $0x3c0] sm:$0xff]
        %v2775 = vld [vmem:[#allocation9 + $0x3c8] sm:$0xff]
        %v2776 = vld [vmem:[#allocation9 + $0x3d0] sm:$0xff]
        %v2777 = vld [vmem:[#allocation9 + $0x3d8] sm:$0xff]
        %v2778 = vld [vmem:[#allocation9 + $0x3e0] sm:$0xff]
        %v2779 = vld [vmem:[#allocation9 + $0x3e8] sm:$0xff]
        %v2780 = vld [vmem:[#allocation9 + $0x3f0] sm:$0xff]
        %v2781 = vld [vmem:[#allocation9 + $0x3f8] sm:$0xff]
        %v2782 = vld [vmem:[#allocation9 + $0x400] sm:$0xff]
        %v2783 = vld [vmem:[#allocation9 + $0x408] sm:$0xff]
        %v2784 = vld [vmem:[#allocation9 + $0x410] sm:$0xff]
        %v2785 = vld [vmem:[#allocation9 + $0x418] sm:$0xff]
        %v2786 = vld [vmem:[#allocation9 + $0x420] sm:$0xff]
        %v2787 = vld [vmem:[#allocation9 + $0x428] sm:$0xff]
        %v2788 = vld [vmem:[#allocation9 + $0x430] sm:$0xff]
        %v2789 = vld [vmem:[#allocation9 + $0x438] sm:$0xff]
        %v2790 = vld [vmem:[#allocation9 + $0x440] sm:$0xff]
        %v2791 = vld [vmem:[#allocation9 + $0x448] sm:$0xff]
        %v2792 = vld [vmem:[#allocation9 + $0x450] sm:$0xff]
        %v2793 = vld [vmem:[#allocation9 + $0x458] sm:$0xff]
        %v2794 = vld [vmem:[#allocation9 + $0x460] sm:$0xff]
        %v2795 = vld [vmem:[#allocation9 + $0x468] sm:$0xff]
        %v2796 = vld [vmem:[#allocation9 + $0x470] sm:$0xff]
        %v2797 = vld [vmem:[#allocation9 + $0x478] sm:$0xff]
        %v2798 = vld [vmem:[#allocation9 + $0x480] sm:$0xff]
        %v2799 = vld [vmem:[#allocation9 + $0x488] sm:$0xff]
        %v2800 = vld [vmem:[#allocation9 + $0x490] sm:$0xff]
        %v2801 = vld [vmem:[#allocation9 + $0x498] sm:$0xff]
        %v2802 = vld [vmem:[#allocation9 + $0x4a0] sm:$0xff]
        %v2803 = vld [vmem:[#allocation9 + $0x4a8] sm:$0xff]
        %v2804 = vld [vmem:[#allocation9 + $0x4b0] sm:$0xff]
        %v2805 = vld [vmem:[#allocation9 + $0x4b8] sm:$0xff]
        %v2806 = vld [vmem:[#allocation9 + $0x4c0] sm:$0xff]
        %v2807 = vld [vmem:[#allocation9 + $0x4c8] sm:$0xff]
        %v2808 = vld [vmem:[#allocation9 + $0x4d0] sm:$0xff]
        %v2809 = vld [vmem:[#allocation9 + $0x4d8] sm:$0xff]
        %v2810 = vld [vmem:[#allocation9 + $0x4e0] sm:$0xff]
        %v2811 = vld [vmem:[#allocation9 + $0x4e8] sm:$0xff]
        %v2812 = vld [vmem:[#allocation9 + $0x4f0] sm:$0xff]
        %v2813 = vld [vmem:[#allocation9 + $0x4f8] sm:$0xff]
        %v2814 = vld [vmem:[#allocation9 + $0x500] sm:$0xff]
        %v2815 = vld [vmem:[#allocation9 + $0x508] sm:$0xff]
        %v2816 = vld [vmem:[#allocation9 + $0x510] sm:$0xff]
        %v2817 = vld [vmem:[#allocation9 + $0x518] sm:$0xff]
        %v2818 = vld [vmem:[#allocation9 + $0x520] sm:$0xff]
        %v2819 = vld [vmem:[#allocation9 + $0x528] sm:$0xff]
        %v2820 = vld [vmem:[#allocation9 + $0x530] sm:$0xff]
        %v2821 = vld [vmem:[#allocation9 + $0x538] sm:$0xff]
        %v2822 = vld [vmem:[#allocation9 + $0x540] sm:$0xff]
        %v2823 = vld [vmem:[#allocation9 + $0x548] sm:$0xff]
        %v2824 = vld [vmem:[#allocation9 + $0x550] sm:$0xff]
        %v2825 = vld [vmem:[#allocation9 + $0x558] sm:$0xff]
        %v2826 = vld [vmem:[#allocation9 + $0x560] sm:$0xff]
        %v2827 = vld [vmem:[#allocation9 + $0x568] sm:$0xff]
        %v2828 = vld [vmem:[#allocation9 + $0x570] sm:$0xff]
        %v2829 = vld [vmem:[#allocation9 + $0x578] sm:$0xff]
        %v2830 = vld [vmem:[#allocation9 + $0x580] sm:$0xff]
        %v2831 = vld [vmem:[#allocation9 + $0x588] sm:$0xff]
        %v2832 = vld [vmem:[#allocation9 + $0x590] sm:$0xff]
        %v2833 = vld [vmem:[#allocation9 + $0x598] sm:$0xff]
        %v2834 = vld [vmem:[#allocation9 + $0x5a0] sm:$0xff]
        %v2835 = vld [vmem:[#allocation9 + $0x5a8] sm:$0xff]
        %v2836 = vld [vmem:[#allocation9 + $0x5b0] sm:$0xff]
        %v2837 = vld [vmem:[#allocation9 + $0x5b8] sm:$0xff]
        %v2838 = vld [vmem:[#allocation9 + $0x5c0] sm:$0xff]
        %v2839 = vld [vmem:[#allocation9 + $0x5c8] sm:$0xff]
        %v2840 = vld [vmem:[#allocation9 + $0x5d0] sm:$0xff]
        %v2841 = vld [vmem:[#allocation9 + $0x5d8] sm:$0xff]
        %v2842 = vld [vmem:[#allocation9 + $0x5e0] sm:$0xff]
        %v2843 = vld [vmem:[#allocation9 + $0x5e8] sm:$0xff]
        %v2844 = vld [vmem:[#allocation9 + $0x5f0] sm:$0xff]
        %v2845 = vld [vmem:[#allocation9 + $0x5f8] sm:$0xff]
        %v2846 = vld [vmem:[#allocation9 + $0x600] sm:$0xff]
        %v2847 = vld [vmem:[#allocation9 + $0x608] sm:$0xff]
        %v2848 = vld [vmem:[#allocation9 + $0x610] sm:$0xff]
        %v2849 = vld [vmem:[#allocation9 + $0x618] sm:$0xff]
        %v2850 = vld [vmem:[#allocation9 + $0x620] sm:$0xff]
        %v2851 = vld [vmem:[#allocation9 + $0x628] sm:$0xff]
        %v2852 = vld [vmem:[#allocation9 + $0x630] sm:$0xff]
        %v2853 = vld [vmem:[#allocation9 + $0x638] sm:$0xff]
        %v2854 = vld [vmem:[#allocation9 + $0x640] sm:$0xff]
        %v2855 = vld [vmem:[#allocation9 + $0x648] sm:$0xff]
        %v2856 = vld [vmem:[#allocation9 + $0x650] sm:$0xff]
        %v2857 = vld [vmem:[#allocation9 + $0x658] sm:$0xff]
        %v2858 = vld [vmem:[#allocation9 + $0x660] sm:$0xff]
        %v2859 = vld [vmem:[#allocation9 + $0x668] sm:$0xff]
        %v2860 = vld [vmem:[#allocation9 + $0x670] sm:$0xff]
        %v2861 = vld [vmem:[#allocation9 + $0x678] sm:$0xff]
        %v2862 = vld [vmem:[#allocation9 + $0x680] sm:$0xff]
        %v2863 = vld [vmem:[#allocation9 + $0x688] sm:$0xff]
        %v2864 = vld [vmem:[#allocation9 + $0x690] sm:$0xff]
        %v2865 = vld [vmem:[#allocation9 + $0x698] sm:$0xff]
        %v2866 = vld [vmem:[#allocation9 + $0x6a0] sm:$0xff]
        %v2867 = vld [vmem:[#allocation9 + $0x6a8] sm:$0xff]
        %v2868 = vld [vmem:[#allocation9 + $0x6b0] sm:$0xff]
        %v2869 = vld [vmem:[#allocation9 + $0x6b8] sm:$0xff]
        %v2870 = vld [vmem:[#allocation9 + $0x6c0] sm:$0xff]
        %v2871 = vld [vmem:[#allocation9 + $0x6c8] sm:$0xff]
        %v2872 = vld [vmem:[#allocation9 + $0x6d0] sm:$0xff]
        %v2873 = vld [vmem:[#allocation9 + $0x6d8] sm:$0xff]
        %v2874 = vld [vmem:[#allocation9 + $0x6e0] sm:$0xff]
        %v2875 = vld [vmem:[#allocation9 + $0x6e8] sm:$0xff]
        %v2876 = vld [vmem:[#allocation9 + $0x6f0] sm:$0xff]
        %v2877 = vld [vmem:[#allocation9 + $0x6f8] sm:$0xff]
        %v2878 = vld [vmem:[#allocation9 + $0x700] sm:$0xff]
        %v2879 = vld [vmem:[#allocation9 + $0x708] sm:$0xff]
        %v2880 = vld [vmem:[#allocation9 + $0x710] sm:$0xff]
        %v2881 = vld [vmem:[#allocation9 + $0x718] sm:$0xff]
        %v2882 = vld [vmem:[#allocation9 + $0x720] sm:$0xff]
        %v2883 = vld [vmem:[#allocation9 + $0x728] sm:$0xff]
        %v2884 = vld [vmem:[#allocation9 + $0x730] sm:$0xff]
        %v2885 = vld [vmem:[#allocation9 + $0x738] sm:$0xff]
        %v2886 = vld [vmem:[#allocation9 + $0x740] sm:$0xff]
        %v2887 = vld [vmem:[#allocation9 + $0x748] sm:$0xff]
        %v2888 = vld [vmem:[#allocation9 + $0x750] sm:$0xff]
        %v2889 = vld [vmem:[#allocation9 + $0x758] sm:$0xff]
        %v2890 = vld [vmem:[#allocation9 + $0x760] sm:$0xff]
        %v2891 = vld [vmem:[#allocation9 + $0x768] sm:$0xff]
        %v2892 = vld [vmem:[#allocation9 + $0x770] sm:$0xff]
        %v2893 = vld [vmem:[#allocation9 + $0x778] sm:$0xff]
        %v2894 = vld [vmem:[#allocation9 + $0x780] sm:$0xff]
        %v2895 = vld [vmem:[#allocation9 + $0x788] sm:$0xff]
        %v2896 = vld [vmem:[#allocation9 + $0x790] sm:$0xff]
        %v2897 = vld [vmem:[#allocation9 + $0x798] sm:$0xff]
        %v2898 = vld [vmem:[#allocation9 + $0x7a0] sm:$0xff]
        %v2899 = vld [vmem:[#allocation9 + $0x7a8] sm:$0xff]
        %v2900 = vld [vmem:[#allocation9 + $0x7b0] sm:$0xff]
        %v2901 = vld [vmem:[#allocation9 + $0x7b8] sm:$0xff]
        %v2902 = vld [vmem:[#allocation9 + $0x7c0] sm:$0xff]
        %v2903 = vld [vmem:[#allocation9 + $0x7c8] sm:$0xff]
        %v2904 = vld [vmem:[#allocation9 + $0x7d0] sm:$0xff]
        %v2905 = vld [vmem:[#allocation9 + $0x7d8] sm:$0xff]
        %v2906 = vld [vmem:[#allocation9 + $0x7e0] sm:$0xff]
        %v2907 = vld [vmem:[#allocation9 + $0x7e8] sm:$0xff]
        %v2908 = vld [vmem:[#allocation9 + $0x7f0] sm:$0xff]
        %v2909 = vld [vmem:[#allocation9 + $0x7f8] sm:$0xff]
        %v2910 = vld [vmem:[#allocation9 + $0x800] sm:$0xff]
        %v2911 = vld [vmem:[#allocation9 + $0x808] sm:$0xff]
        %v2912 = vld [vmem:[#allocation9 + $0x810] sm:$0xff]
        %v2913 = vld [vmem:[#allocation9 + $0x818] sm:$0xff]
        %v2914 = vld [vmem:[#allocation9 + $0x820] sm:$0xff]
        %v2915 = vld [vmem:[#allocation9 + $0x828] sm:$0xff]
        %v2916 = vld [vmem:[#allocation9 + $0x830] sm:$0xff]
        %v2917 = vld [vmem:[#allocation9 + $0x838] sm:$0xff]
        %v2918 = vld [vmem:[#allocation9 + $0x840] sm:$0xff]
        %v2919 = vld [vmem:[#allocation9 + $0x848] sm:$0xff]
        %v2920 = vld [vmem:[#allocation9 + $0x850] sm:$0xff]
        %v2921 = vld [vmem:[#allocation9 + $0x858] sm:$0xff]
        %v2922 = vld [vmem:[#allocation9 + $0x860] sm:$0xff]
        %v2923 = vld [vmem:[#allocation9 + $0x868] sm:$0xff]
        %v2924 = vld [vmem:[#allocation9 + $0x870] sm:$0xff]
        %v2925 = vld [vmem:[#allocation9 + $0x878] sm:$0xff]
        %v2926 = vld [vmem:[#allocation9 + $0x880] sm:$0xff]
        %v2927 = vld [vmem:[#allocation9 + $0x888] sm:$0xff]
        %v2928 = vld [vmem:[#allocation9 + $0x890] sm:$0xff]
        %v2929 = vld [vmem:[#allocation9 + $0x898] sm:$0xff]
        %v2930 = vld [vmem:[#allocation9 + $0x8a0] sm:$0xff]
        %v2931 = vld [vmem:[#allocation9 + $0x8a8] sm:$0xff]
        %v2932 = vld [vmem:[#allocation9 + $0x8b0] sm:$0xff]
        %v2933 = vld [vmem:[#allocation9 + $0x8b8] sm:$0xff]
        %v2934 = vld [vmem:[#allocation9 + $0x8c0] sm:$0xff]
        %v2935 = vld [vmem:[#allocation9 + $0x8c8] sm:$0xff]
        %v2936 = vld [vmem:[#allocation9 + $0x8d0] sm:$0xff]
        %v2937 = vld [vmem:[#allocation9 + $0x8d8] sm:$0xff]
        %v2938 = vld [vmem:[#allocation9 + $0x8e0] sm:$0xff]
        %v2939 = vld [vmem:[#allocation9 + $0x8e8] sm:$0xff]
        %v2940 = vld [vmem:[#allocation9 + $0x8f0] sm:$0xff]
        %v2941 = vld [vmem:[#allocation9 + $0x8f8] sm:$0xff]
        %v2942 = vld [vmem:[#allocation9 + $0x900] sm:$0xff]
        %v2943 = vld [vmem:[#allocation9 + $0x908] sm:$0xff]
        %v2944 = vld [vmem:[#allocation9 + $0x910] sm:$0xff]
        %v2945 = vld [vmem:[#allocation9 + $0x918] sm:$0xff]
        %v2946 = vld [vmem:[#allocation9 + $0x920] sm:$0xff]
        %v2947 = vld [vmem:[#allocation9 + $0x928] sm:$0xff]
        %v2948 = vld [vmem:[#allocation9 + $0x930] sm:$0xff]
        %v2949 = vld [vmem:[#allocation9 + $0x938] sm:$0xff]
        %v2950 = vld [vmem:[#allocation9 + $0x940] sm:$0xff]
        %v2951 = vld [vmem:[#allocation9 + $0x948] sm:$0xff]
        %v2952 = vld [vmem:[#allocation9 + $0x950] sm:$0xff]
        %v2953 = vld [vmem:[#allocation9 + $0x958] sm:$0xff]
        %v2954 = vld [vmem:[#allocation9 + $0x960] sm:$0xff]
        %v2955 = vld [vmem:[#allocation9 + $0x968] sm:$0xff]
        %v2956 = vld [vmem:[#allocation9 + $0x970] sm:$0xff]
        %v2957 = vld [vmem:[#allocation9 + $0x978] sm:$0xff]
        %v2958 = vld [vmem:[#allocation9 + $0x980] sm:$0xff]
        %v2959 = vld [vmem:[#allocation9 + $0x988] sm:$0xff]
        %v2960 = vld [vmem:[#allocation9 + $0x990] sm:$0xff]
        %v2961 = vld [vmem:[#allocation9 + $0x998] sm:$0xff]
        %v2962 = vld [vmem:[#allocation9 + $0x9a0] sm:$0xff]
        %v2963 = vld [vmem:[#allocation9 + $0x9a8] sm:$0xff]
        %v2964 = vld [vmem:[#allocation9 + $0x9b0] sm:$0xff]
        %v2965 = vld [vmem:[#allocation9 + $0x9b8] sm:$0xff]
        %v2966 = vld [vmem:[#allocation9 + $0x9c0] sm:$0xff]
        %v2967 = vld [vmem:[#allocation9 + $0x9c8] sm:$0xff]
        %v2968 = vld [vmem:[#allocation9 + $0x9d0] sm:$0xff]
        %v2969 = vld [vmem:[#allocation9 + $0x9d8] sm:$0xff]
        %v2970 = vld [vmem:[#allocation9 + $0x9e0] sm:$0xff]
        %v2971 = vld [vmem:[#allocation9 + $0x9e8] sm:$0xff]
        %v2972 = vld [vmem:[#allocation9 + $0x9f0] sm:$0xff]
        %v2973 = vld [vmem:[#allocation9 + $0x9f8] sm:$0xff]
        %v2974 = vld [vmem:[#allocation9 + $0xa00] sm:$0xff]
        %v2975 = vld [vmem:[#allocation9 + $0xa08] sm:$0xff]
        %v2976 = vld [vmem:[#allocation9 + $0xa10] sm:$0xff]
        %v2977 = vld [vmem:[#allocation9 + $0xa18] sm:$0xff]
        %v2978 = vld [vmem:[#allocation9 + $0xa20] sm:$0xff]
        %v2979 = vld [vmem:[#allocation9 + $0xa28] sm:$0xff]
        %v2980 = vld [vmem:[#allocation9 + $0xa30] sm:$0xff]
        %v2981 = vld [vmem:[#allocation9 + $0xa38] sm:$0xff]
        %v2982 = vld [vmem:[#allocation9 + $0xa40] sm:$0xff]
        %v2983 = vld [vmem:[#allocation9 + $0xa48] sm:$0xff]
        %v2984 = vld [vmem:[#allocation9 + $0xa50] sm:$0xff]
        %v2985 = vld [vmem:[#allocation9 + $0xa58] sm:$0xff]
        %v2986 = vld [vmem:[#allocation9 + $0xa60] sm:$0xff]
        %v2987 = vld [vmem:[#allocation9 + $0xa68] sm:$0xff]
        %v2988 = vld [vmem:[#allocation9 + $0xa70] sm:$0xff]
        %v2989 = vld [vmem:[#allocation9 + $0xa78] sm:$0xff]
        %v2990 = vld [vmem:[#allocation9 + $0xa80] sm:$0xff]
        %v2991 = vld [vmem:[#allocation9 + $0xa88] sm:$0xff]
        %v2992 = vld [vmem:[#allocation9 + $0xa90] sm:$0xff]
        %v2993 = vld [vmem:[#allocation9 + $0xa98] sm:$0xff]
        %v2994 = vld [vmem:[#allocation9 + $0xaa0] sm:$0xff]
        %v2995 = vld [vmem:[#allocation9 + $0xaa8] sm:$0xff]
        %v2996 = vld [vmem:[#allocation9 + $0xab0] sm:$0xff]
        %v2997 = vld [vmem:[#allocation9 + $0xab8] sm:$0xff]
        %v2998 = vld [vmem:[#allocation9 + $0xac0] sm:$0xff]
        %v2999 = vld [vmem:[#allocation9 + $0xac8] sm:$0xff]
        %v3000 = vld [vmem:[#allocation9 + $0xad0] sm:$0xff]
        %v3001 = vld [vmem:[#allocation9 + $0xad8] sm:$0xff]
        %v3002 = vld [vmem:[#allocation9 + $0xae0] sm:$0xff]
        %v3003 = vld [vmem:[#allocation9 + $0xae8] sm:$0xff]
        %v3004 = vld [vmem:[#allocation9 + $0xaf0] sm:$0xff]
        %v3005 = vld [vmem:[#allocation9 + $0xaf8] sm:$0xff]
        %v3006 = vld [vmem:[#allocation9 + $0xb00] sm:$0xff]
        %v3007 = vld [vmem:[#allocation9 + $0xb08] sm:$0xff]
        %v3008 = vld [vmem:[#allocation9 + $0xb10] sm:$0xff]
        %v3009 = vld [vmem:[#allocation9 + $0xb18] sm:$0xff]
        %v3010 = vld [vmem:[#allocation9 + $0xb20] sm:$0xff]
        %v3011 = vld [vmem:[#allocation9 + $0xb28] sm:$0xff]
        %v3012 = vld [vmem:[#allocation9 + $0xb30] sm:$0xff]
        %v3013 = vld [vmem:[#allocation9 + $0xb38] sm:$0xff]
        %v3014 = vld [vmem:[#allocation9 + $0xb40] sm:$0xff]
        %v3015 = vld [vmem:[#allocation9 + $0xb48] sm:$0xff]
        %v3016 = vld [vmem:[#allocation9 + $0xb50] sm:$0xff]
        %v3017 = vld [vmem:[#allocation9 + $0xb58] sm:$0xff]
        %v3018 = vld [vmem:[#allocation9 + $0xb60] sm:$0xff]
        %v3019 = vld [vmem:[#allocation9 + $0xb68] sm:$0xff]
        %v3020 = vld [vmem:[#allocation9 + $0xb70] sm:$0xff]
        %v3021 = vld [vmem:[#allocation9 + $0xb78] sm:$0xff]
        %v3022 = vld [vmem:[#allocation9 + $0xb80] sm:$0xff]
        %v3023 = vld [vmem:[#allocation9 + $0xb88] sm:$0xff]
        %v3024 = vld [vmem:[#allocation9 + $0xb90] sm:$0xff]
        %v3025 = vld [vmem:[#allocation9 + $0xb98] sm:$0xff]
        %v3026 = vld [vmem:[#allocation9 + $0xba0] sm:$0xff]
        %v3027 = vld [vmem:[#allocation9 + $0xba8] sm:$0xff]
        %v3028 = vld [vmem:[#allocation9 + $0xbb0] sm:$0xff]
        %v3029 = vld [vmem:[#allocation9 + $0xbb8] sm:$0xff]
        %v3030 = vld [vmem:[#allocation9 + $0xbc0] sm:$0xff]
        %v3031 = vld [vmem:[#allocation9 + $0xbc8] sm:$0xff]
        %v3032 = vld [vmem:[#allocation9 + $0xbd0] sm:$0xff]
        %v3033 = vld [vmem:[#allocation9 + $0xbd8] sm:$0xff]
        %v3034 = vld [vmem:[#allocation9 + $0xbe0] sm:$0xff]
        %v3035 = vld [vmem:[#allocation9 + $0xbe8] sm:$0xff]
        %v3036 = vld [vmem:[#allocation9 + $0xbf0] sm:$0xff]
        %v3037 = vld [vmem:[#allocation9 + $0xbf8] sm:$0xff]
        %v3038 = vld [vmem:[#allocation9 + $0xc00] sm:$0xff]
        %v3039 = vld [vmem:[#allocation9 + $0xc08] sm:$0xff]
        %v3040 = vld [vmem:[#allocation9 + $0xc10] sm:$0xff]
        %v3041 = vld [vmem:[#allocation9 + $0xc18] sm:$0xff]
        %v3042 = vld [vmem:[#allocation9 + $0xc20] sm:$0xff]
        %v3043 = vld [vmem:[#allocation9 + $0xc28] sm:$0xff]
        %v3044 = vld [vmem:[#allocation9 + $0xc30] sm:$0xff]
        %v3045 = vld [vmem:[#allocation9 + $0xc38] sm:$0xff]
        %v3046 = vld [vmem:[#allocation9 + $0xc40] sm:$0xff]
        %v3047 = vld [vmem:[#allocation9 + $0xc48] sm:$0xff]
        %v3048 = vld [vmem:[#allocation9 + $0xc50] sm:$0xff]
        %v3049 = vld [vmem:[#allocation9 + $0xc58] sm:$0xff]
        %v3050 = vld [vmem:[#allocation9 + $0xc60] sm:$0xff]
        %v3051 = vld [vmem:[#allocation9 + $0xc68] sm:$0xff]
        %v3052 = vld [vmem:[#allocation9 + $0xc70] sm:$0xff]
        %v3053 = vld [vmem:[#allocation9 + $0xc78] sm:$0xff]
        %v3054 = vld [vmem:[#allocation9 + $0xc80] sm:$0xff]
        %v3055 = vld [vmem:[#allocation9 + $0xc88] sm:$0xff]
        %v3056 = vld [vmem:[#allocation9 + $0xc90] sm:$0xff]
        %v3057 = vld [vmem:[#allocation9 + $0xc98] sm:$0xff]
        %v3058 = vld [vmem:[#allocation9 + $0xca0] sm:$0xff]
        %v3059 = vld [vmem:[#allocation9 + $0xca8] sm:$0xff]
        %v3060 = vld [vmem:[#allocation9 + $0xcb0] sm:$0xff]
        %v3061 = vld [vmem:[#allocation9 + $0xcb8] sm:$0xff]
        %v3062 = vld [vmem:[#allocation9 + $0xcc0] sm:$0xff]
        %v3063 = vld [vmem:[#allocation9 + $0xcc8] sm:$0xff]
        %v3064 = vld [vmem:[#allocation9 + $0xcd0] sm:$0xff]
        %v3065 = vld [vmem:[#allocation9 + $0xcd8] sm:$0xff]
        %v3066 = vld [vmem:[#allocation9 + $0xce0] sm:$0xff]
        %v3067 = vld [vmem:[#allocation9 + $0xce8] sm:$0xff]
        %v3068 = vld [vmem:[#allocation9 + $0xcf0] sm:$0xff]
        %v3069 = vld [vmem:[#allocation9 + $0xcf8] sm:$0xff]
        %v3070 = vld [vmem:[#allocation9 + $0xd00] sm:$0xff]
        %v3071 = vld [vmem:[#allocation9 + $0xd08] sm:$0xff]
        %v3072 = vld [vmem:[#allocation9 + $0xd10] sm:$0xff]
        %v3073 = vld [vmem:[#allocation9 + $0xd18] sm:$0xff]
        %v3074 = vld [vmem:[#allocation9 + $0xd20] sm:$0xff]
        %v3075 = vld [vmem:[#allocation9 + $0xd28] sm:$0xff]
        %v3076 = vld [vmem:[#allocation9 + $0xd30] sm:$0xff]
        %v3077 = vld [vmem:[#allocation9 + $0xd38] sm:$0xff]
        %v3078 = vld [vmem:[#allocation9 + $0xd40] sm:$0xff]
        %v3079 = vld [vmem:[#allocation9 + $0xd48] sm:$0xff]
        %v3080 = vld [vmem:[#allocation9 + $0xd50] sm:$0xff]
        %v3081 = vld [vmem:[#allocation9 + $0xd58] sm:$0xff]
        %v3082 = vld [vmem:[#allocation9 + $0xd60] sm:$0xff]
        %v3083 = vld [vmem:[#allocation9 + $0xd68] sm:$0xff]
        %v3084 = vld [vmem:[#allocation9 + $0xd70] sm:$0xff]
        %v3085 = vld [vmem:[#allocation9 + $0xd78] sm:$0xff]
        %3086 = vmatprep.subr.mxu0 %v2655
        %3087 = vmatpush1.msra.mxu0 %v2654
        %3088 = vmatprep.subr.mxu0 %v2658
        %3089 = vmatpush1.msra.mxu0 %v2657
        %3090 = vmatprep.subr.mxu0 %v2661
        %3091 = vmatpush1.msra.mxu0 %v2660
        %3092 = vmatprep.subr.mxu0 %v2664
        %3093 = vmatpush1.msra.mxu0 %v2663
        %3094 = vmatprep.subr.mxu0 %v2667
        %3095 = vmatpush1.msra.mxu0 %v2666
        %3096 = vmatprep.subr.mxu0 %v2670
        %3097 = vmatpush1.msra.mxu0 %v2669
        %3098 = vmatprep.subr.mxu0 %v2673
        %3099 = vmatpush1.msra.mxu0 %v2672
        %3100 = vmatprep.subr.mxu0 %v2676
        %3101 = vmatpush1.msra.mxu0 %v2675
        %3102 = vmatprep.subr.mxu0 %v2679
        %3103 = vmatpush1.msra.mxu0 %v2678
        %3104 = vmatprep.subr.mxu0 %v2682
        %3105 = vmatpush1.msra.mxu0 %v2681
        %3106 = vmatprep.subr.mxu0 %v2685
        %3107 = vmatpush1.msra.mxu0 %v2684
        %3108 = vmatprep.subr.mxu0 %v2688
        %3109 = vmatpush1.msra.mxu0 %v2687
        %3110 = vmatprep.subr.mxu0 %v2691
        %3111 = vmatpush1.msra.mxu0 %v2690
        %3112 = vmatprep.subr.mxu0 %v2694
        %3113 = vmatpush1.msra.mxu0 %v2693
        %3114 = vmatprep.subr.mxu0 %v2697
        %3115 = vmatpush1.msra.mxu0 %v2696
        %3116 = vmatprep.subr.mxu0 %v2700
        %3117 = vmatpush1.msra.mxu0 %v2699
        %3118 = vmatprep.subr.mxu0 %v2703
        %3119 = vmatpush1.msra.mxu0 %v2702
        %3120 = vmatprep.subr.mxu0 %v2706
        %3121 = vmatpush1.msra.mxu0 %v2705
        %3122 = vmatprep.subr.mxu0 %v2709
        %3123 = vmatpush1.msra.mxu0 %v2708
        %3124 = vmatprep.subr.mxu0 %v2712
        %3125 = vmatpush1.msra.mxu0 %v2711
        %3126 = vmatprep.subr.mxu0 %v2715
        %3127 = vmatpush1.msra.mxu0 %v2714
        %3128 = vmatprep.subr.mxu0 %v2718
        %3129 = vmatpush1.msra.mxu0 %v2717
        %3130 = vmatprep.subr.mxu0 %v2721
        %3131 = vmatpush1.msra.mxu0 %v2720
        %3132 = vmatprep.subr.mxu0 %v2724
        %3133 = vmatpush1.msra.mxu0 %v2723
        %3134 = vmatprep.subr.mxu0 %v2727
        %3135 = vmatpush1.msra.mxu0 %v2726
        %3136 = vmatprep.subr.mxu0 %v2730
        %3137 = vmatpush1.msra.mxu0 %v2729
        %3138 = vmatprep.subr.mxu0 %v2733
        %3139 = vmatpush1.msra.mxu0 %v2732
        %3140 = vmatprep.subr.mxu0 %v2736
        %3141 = vmatpush1.msra.mxu0 %v2735
        %3142 = vmatprep.subr.mxu0 %v2739
        %3143 = vmatpush1.msra.mxu0 %v2738
        %3144 = vmatprep.subr.mxu0 %v2742
        %3145 = vmatpush1.msra.mxu0 %v2741
        %3146 = vmatprep.subr.mxu0 %v2745
        %3147 = vmatpush1.msra.mxu0 %v2744
        %3148 = vmatprep.subr.mxu0 %v2748
        %3149 = vmatpush1.msra.mxu0 %v2747
        %3150 = vmatprep.mubr.f32.mxu0 %v2636
        %3151 = vmatmul.mubr.f32.gmra.mrb[0].mxu0 %v2635
        %v3152 = vpop.f32.mrb[0].mxu0
        %v3153 = vadd.f32 0.0, %v3152
        %v3154 = vpop.f32.mrb[0].mxu0
        %v3155 = vadd.f32 0.0, %v3154
        %3156 = vdwg.mxu0
        %3157 = vmatprep.subr.mxu0 %v2751
        %3158 = vmatpush1.msra.mxu0 %v2750
        %3159 = vmatprep.subr.mxu0 %v2754
        %3160 = vmatpush1.msra.mxu0 %v2753
        %3161 = vmatprep.subr.mxu0 %v2757
        %3162 = vmatpush1.msra.mxu0 %v2756
        %3163 = vmatprep.subr.mxu0 %v2760
        %3164 = vmatpush1.msra.mxu0 %v2759
        %3165 = vmatprep.subr.mxu0 %v2763
        %3166 = vmatpush1.msra.mxu0 %v2762
        %3167 = vmatprep.subr.mxu0 %v2766
        %3168 = vmatpush1.msra.mxu0 %v2765
        %3169 = vmatprep.subr.mxu0 %v2769
        %3170 = vmatpush1.msra.mxu0 %v2768
        %3171 = vmatprep.subr.mxu0 %v2772
        %3172 = vmatpush1.msra.mxu0 %v2771
        %3173 = vmatprep.subr.mxu0 %v2775
        %3174 = vmatpush1.msra.mxu0 %v2774
        %3175 = vmatprep.subr.mxu0 %v2778
        %3176 = vmatpush1.msra.mxu0 %v2777
        %3177 = vmatprep.subr.mxu0 %v2781
        %3178 = vmatpush1.msra.mxu0 %v2780
        %3179 = vmatprep.subr.mxu0 %v2784
        %3180 = vmatpush1.msra.mxu0 %v2783
        %3181 = vmatprep.subr.mxu0 %v2787
        %3182 = vmatpush1.msra.mxu0 %v2786
        %3183 = vmatprep.subr.mxu0 %v2790
        %3184 = vmatpush1.msra.mxu0 %v2789
        %3185 = vmatprep.subr.mxu0 %v2793
        %3186 = vmatpush1.msra.mxu0 %v2792
        %3187 = vmatprep.subr.mxu0 %v2796
        %3188 = vmatpush1.msra.mxu0 %v2795
        %3189 = vmatprep.subr.mxu0 %v2799
        %3190 = vmatpush1.msra.mxu0 %v2798
        %3191 = vmatprep.subr.mxu0 %v2802
        %3192 = vmatpush1.msra.mxu0 %v2801
        %3193 = vmatprep.subr.mxu0 %v2805
        %3194 = vmatpush1.msra.mxu0 %v2804
        %3195 = vmatprep.subr.mxu0 %v2808
        %3196 = vmatpush1.msra.mxu0 %v2807
        %3197 = vmatprep.subr.mxu0 %v2811
        %3198 = vmatpush1.msra.mxu0 %v2810
        %3199 = vmatprep.subr.mxu0 %v2814
        %3200 = vmatpush1.msra.mxu0 %v2813
        %3201 = vmatprep.subr.mxu0 %v2817
        %3202 = vmatpush1.msra.mxu0 %v2816
        %3203 = vmatprep.subr.mxu0 %v2820
        %3204 = vmatpush1.msra.mxu0 %v2819
        %3205 = vmatprep.subr.mxu0 %v2823
        %3206 = vmatpush1.msra.mxu0 %v2822
        %3207 = vmatprep.subr.mxu0 %v2826
        %3208 = vmatpush1.msra.mxu0 %v2825
        %3209 = vmatprep.subr.mxu0 %v2829
        %3210 = vmatpush1.msra.mxu0 %v2828
        %3211 = vmatprep.subr.mxu0 %v2832
        %3212 = vmatpush1.msra.mxu0 %v2831
        %3213 = vmatprep.subr.mxu0 %v2835
        %3214 = vmatpush1.msra.mxu0 %v2834
        %3215 = vmatprep.subr.mxu0 %v2838
        %3216 = vmatpush1.msra.mxu0 %v2837
        %3217 = vmatprep.subr.mxu0 %v2841
        %3218 = vmatpush1.msra.mxu0 %v2840
        %3219 = vmatprep.subr.mxu0 %v2844
        %3220 = vmatpush1.msra.mxu0 %v2843
        %3221 = vmatprep.mubr.f32.mxu0 %v2638
        %3222 = vmatmul.mubr.f32.gmra.mrb[0].mxu0 %v2637
        %v3223 = vpop.f32.mrb[0].mxu0
        %v3224 = vadd.f32 %v3153, %v3223
        %v3225 = vpop.f32.mrb[0].mxu0
        %v3226 = vadd.f32 %v3155, %v3225
        %3227 = vdwg.mxu0
        %3228 = vmatprep.subr.mxu0 %v2847
        %3229 = vmatpush1.msra.mxu0 %v2846
        %3230 = vmatprep.subr.mxu0 %v2850
        %3231 = vmatpush1.msra.mxu0 %v2849
        %3232 = vmatprep.subr.mxu0 %v2853
        %3233 = vmatpush1.msra.mxu0 %v2852
        %3234 = vmatprep.subr.mxu0 %v2856
        %3235 = vmatpush1.msra.mxu0 %v2855
        %3236 = vmatprep.subr.mxu0 %v2859
        %3237 = vmatpush1.msra.mxu0 %v2858
        %3238 = vmatprep.subr.mxu0 %v2862
        %3239 = vmatpush1.msra.mxu0 %v2861
        %3240 = vmatprep.subr.mxu0 %v2865
        %3241 = vmatpush1.msra.mxu0 %v2864
        %3242 = vmatprep.subr.mxu0 %v2868
        %3243 = vmatpush1.msra.mxu0 %v2867
        %3244 = vmatprep.subr.mxu0 %v2871
        %3245 = vmatpush1.msra.mxu0 %v2870
        %3246 = vmatprep.subr.mxu0 %v2874
        %3247 = vmatpush1.msra.mxu0 %v2873
        %3248 = vmatprep.subr.mxu0 %v2877
        %3249 = vmatpush1.msra.mxu0 %v2876
        %3250 = vmatprep.subr.mxu0 %v2880
        %3251 = vmatpush1.msra.mxu0 %v2879
        %3252 = vmatprep.subr.mxu0 %v2883
        %3253 = vmatpush1.msra.mxu0 %v2882
        %3254 = vmatprep.subr.mxu0 %v2886
        %3255 = vmatpush1.msra.mxu0 %v2885
        %3256 = vmatprep.subr.mxu0 %v2889
        %3257 = vmatpush1.msra.mxu0 %v2888
        %3258 = vmatprep.subr.mxu0 %v2892
        %3259 = vmatpush1.msra.mxu0 %v2891
        %3260 = vmatprep.subr.mxu0 %v2895
        %3261 = vmatpush1.msra.mxu0 %v2894
        %3262 = vmatprep.subr.mxu0 %v2898
        %3263 = vmatpush1.msra.mxu0 %v2897
        %3264 = vmatprep.subr.mxu0 %v2901
        %3265 = vmatpush1.msra.mxu0 %v2900
        %3266 = vmatprep.subr.mxu0 %v2904
        %3267 = vmatpush1.msra.mxu0 %v2903
        %3268 = vmatprep.subr.mxu0 %v2907
        %3269 = vmatpush1.msra.mxu0 %v2906
        %3270 = vmatprep.subr.mxu0 %v2910
        %3271 = vmatpush1.msra.mxu0 %v2909
        %3272 = vmatprep.subr.mxu0 %v2913
        %3273 = vmatpush1.msra.mxu0 %v2912
        %3274 = vmatprep.subr.mxu0 %v2916
        %3275 = vmatpush1.msra.mxu0 %v2915
        %3276 = vmatprep.subr.mxu0 %v2919
        %3277 = vmatpush1.msra.mxu0 %v2918
        %3278 = vmatprep.subr.mxu0 %v2922
        %3279 = vmatpush1.msra.mxu0 %v2921
        %3280 = vmatprep.subr.mxu0 %v2925
        %3281 = vmatpush1.msra.mxu0 %v2924
        %3282 = vmatprep.subr.mxu0 %v2928
        %3283 = vmatpush1.msra.mxu0 %v2927
        %3284 = vmatprep.subr.mxu0 %v2931
        %3285 = vmatpush1.msra.mxu0 %v2930
        %3286 = vmatprep.subr.mxu0 %v2934
        %3287 = vmatpush1.msra.mxu0 %v2933
        %3288 = vmatprep.subr.mxu0 %v2937
        %3289 = vmatpush1.msra.mxu0 %v2936
        %3290 = vmatprep.subr.mxu0 %v2940
        %3291 = vmatpush1.msra.mxu0 %v2939
        %3292 = vmatprep.mubr.f32.mxu0 %v2640
        %3293 = vmatmul.mubr.f32.gmra.mrb[0].mxu0 %v2639
        %v3294 = vpop.f32.mrb[0].mxu0
        %v3295 = vadd.f32 %v3224, %v3294
        %v3296 = vpop.f32.mrb[0].mxu0
        %v3297 = vadd.f32 %v3226, %v3296
        %3298 = vdwg.mxu0
        %3299 = vmatprep.subr.mxu0 %v2943
        %3300 = vmatpush1.msra.mxu0 %v2942
        %3301 = vmatprep.subr.mxu0 %v2946
        %3302 = vmatpush1.msra.mxu0 %v2945
        %3303 = vmatprep.subr.mxu0 %v2949
        %3304 = vmatpush1.msra.mxu0 %v2948
        %3305 = vmatprep.subr.mxu0 %v2952
        %3306 = vmatpush1.msra.mxu0 %v2951
        %3307 = vmatprep.subr.mxu0 %v2955
        %3308 = vmatpush1.msra.mxu0 %v2954
        %3309 = vmatprep.subr.mxu0 %v2958
        %3310 = vmatpush1.msra.mxu0 %v2957
        %3311 = vmatprep.subr.mxu0 %v2961
        %3312 = vmatpush1.msra.mxu0 %v2960
        %3313 = vmatprep.subr.mxu0 %v2964
        %3314 = vmatpush1.msra.mxu0 %v2963
        %3315 = vmatprep.subr.mxu0 %v2967
        %3316 = vmatpush1.msra.mxu0 %v2966
        %3317 = vmatprep.subr.mxu0 %v2970
        %3318 = vmatpush1.msra.mxu0 %v2969
        %3319 = vmatprep.subr.mxu0 %v2973
        %3320 = vmatpush1.msra.mxu0 %v2972
        %3321 = vmatprep.subr.mxu0 %v2976
        %3322 = vmatpush1.msra.mxu0 %v2975
        %3323 = vmatprep.subr.mxu0 %v2979
        %3324 = vmatpush1.msra.mxu0 %v2978
        %3325 = vmatprep.subr.mxu0 %v2982
        %3326 = vmatpush1.msra.mxu0 %v2981
        %3327 = vmatprep.subr.mxu0 %v2985
        %3328 = vmatpush1.msra.mxu0 %v2984
        %3329 = vmatprep.subr.mxu0 %v2988
        %3330 = vmatpush1.msra.mxu0 %v2987
        %3331 = vmatprep.subr.mxu0 %v2991
        %3332 = vmatpush1.msra.mxu0 %v2990
        %3333 = vmatprep.subr.mxu0 %v2994
        %3334 = vmatpush1.msra.mxu0 %v2993
        %3335 = vmatprep.subr.mxu0 %v2997
        %3336 = vmatpush1.msra.mxu0 %v2996
        %3337 = vmatprep.subr.mxu0 %v3000
        %3338 = vmatpush1.msra.mxu0 %v2999
        %3339 = vmatprep.subr.mxu0 %v3003
        %3340 = vmatpush1.msra.mxu0 %v3002
        %3341 = vmatprep.subr.mxu0 %v3006
        %3342 = vmatpush1.msra.mxu0 %v3005
        %3343 = vmatprep.subr.mxu0 %v3009
        %3344 = vmatpush1.msra.mxu0 %v3008
        %3345 = vmatprep.subr.mxu0 %v3012
        %3346 = vmatpush1.msra.mxu0 %v3011
        %3347 = vmatprep.subr.mxu0 %v3015
        %3348 = vmatpush1.msra.mxu0 %v3014
        %3349 = vmatprep.subr.mxu0 %v3018
        %3350 = vmatpush1.msra.mxu0 %v3017
        %3351 = vmatprep.subr.mxu0 %v3021
        %3352 = vmatpush1.msra.mxu0 %v3020
        %3353 = vmatprep.subr.mxu0 %v3024
        %3354 = vmatpush1.msra.mxu0 %v3023
        %3355 = vmatprep.subr.mxu0 %v3027
        %3356 = vmatpush1.msra.mxu0 %v3026
        %3357 = vmatprep.subr.mxu0 %v3030
        %3358 = vmatpush1.msra.mxu0 %v3029
        %3359 = vmatprep.subr.mxu0 %v3033
        %3360 = vmatpush1.msra.mxu0 %v3032
        %3361 = vmatprep.subr.mxu0 %v3036
        %3362 = vmatpush1.msra.mxu0 %v3035
        %3363 = vmatprep.mubr.f32.mxu0 %v2642
        %3364 = vmatmul.mubr.f32.gmra.mrb[0].mxu0 %v2641
        %v3365 = vpop.f32.mrb[0].mxu0
        %v3366 = vadd.f32 %v3295, %v3365
        %v3367 = vpop.f32.mrb[0].mxu0
        %v3368 = vadd.f32 %v3297, %v3367
        %3369 = vdwg.mxu0
        %3370 = vmatprep.subr.mxu0 %v3039
        %3371 = vmatpush1.msra.mxu0 %v3038
        %3372 = vmatprep.subr.mxu0 %v3042
        %3373 = vmatpush1.msra.mxu0 %v3041
        %3374 = vmatprep.subr.mxu0 %v3045
        %3375 = vmatpush1.msra.mxu0 %v3044
        %3376 = vmatprep.subr.mxu0 %v3048
        %3377 = vmatpush1.msra.mxu0 %v3047
        %3378 = vmatprep.subr.mxu0 %v3051
        %3379 = vmatpush1.msra.mxu0 %v3050
        %3380 = vmatprep.subr.mxu0 %v3054
        %3381 = vmatpush1.msra.mxu0 %v3053
        %3382 = vmatprep.subr.mxu0 %v3057
        %3383 = vmatpush1.msra.mxu0 %v3056
        %3384 = vmatprep.subr.mxu0 %v3060
        %3385 = vmatpush1.msra.mxu0 %v3059
        %3386 = vmatprep.subr.mxu0 %v3063
        %3387 = vmatpush1.msra.mxu0 %v3062
        %3388 = vmatprep.subr.mxu0 %v3066
        %3389 = vmatpush1.msra.mxu0 %v3065
        %3390 = vmatprep.subr.mxu0 %v3069
        %3391 = vmatpush1.msra.mxu0 %v3068
        %3392 = vmatprep.subr.mxu0 %v3072
        %3393 = vmatpush1.msra.mxu0 %v3071
        %3394 = vmatprep.subr.mxu0 %v3075
        %3395 = vmatpush1.msra.mxu0 %v3074
        %3396 = vmatprep.subr.mxu0 %v3078
        %3397 = vmatpush1.msra.mxu0 %v3077
        %3398 = vmatprep.subr.mxu0 %v3081
        %3399 = vmatpush1.msra.mxu0 %v3080
        %3400 = vmatprep.subr.mxu0 %v3084
        %3401 = vmatpush1.msra.mxu0 %v3083
        %3402 = vmatprep.subr.mxu0 0.0
        %3403 = vmatpush1.msra.mxu0 0.0
        %3404 = vmatprep.subr.mxu0 0.0
        %3405 = vmatpush1.msra.mxu0 0.0
        %3406 = vmatprep.subr.mxu0 0.0
        %3407 = vmatpush1.msra.mxu0 0.0
        %3408 = vmatprep.subr.mxu0 0.0
        %3409 = vmatpush1.msra.mxu0 0.0
        %3410 = vmatprep.subr.mxu0 0.0
        %3411 = vmatpush1.msra.mxu0 0.0
        %3412 = vmatprep.subr.mxu0 0.0
        %3413 = vmatpush1.msra.mxu0 0.0
        %3414 = vmatprep.subr.mxu0 0.0
        %3415 = vmatpush1.msra.mxu0 0.0
        %3416 = vmatprep.subr.mxu0 0.0
        %3417 = vmatpush1.msra.mxu0 0.0
        %3418 = vmatprep.subr.mxu0 0.0
        %3419 = vmatpush1.msra.mxu0 0.0
        %3420 = vmatprep.subr.mxu0 0.0
        %3421 = vmatpush1.msra.mxu0 0.0
        %3422 = vmatprep.subr.mxu0 0.0
        %3423 = vmatpush1.msra.mxu0 0.0
        %3424 = vmatprep.subr.mxu0 0.0
        %3425 = vmatpush1.msra.mxu0 0.0
        %3426 = vmatprep.subr.mxu0 0.0
        %3427 = vmatpush1.msra.mxu0 0.0
        %3428 = vmatprep.subr.mxu0 0.0
        %3429 = vmatpush1.msra.mxu0 0.0
        %3430 = vmatprep.subr.mxu0 0.0
        %3431 = vmatpush1.msra.mxu0 0.0
        %3432 = vmatprep.subr.mxu0 0.0
        %3433 = vmatpush1.msra.mxu0 0.0
        %3434 = vmatprep.mubr.f32.mxu0 0.0
        %3435 = vmatmul.mubr.f32.gmra.mrb[0].mxu0 %v2643
        %v3436 = vpop.f32.mrb[0].mxu0
        %v3437 = vadd.f32 %v3366, %v3436
        %v3438 = vpop.f32.mrb[0].mxu0
        %v3439 = vadd.f32 %v3368, %v3438
        %3440 = vdwg.mxu0
        %3441 = vmatprep.subr.mxu0 0.0
        %3442 = vmatpush1.msra.mxu0 %v2656
        %3443 = vmatprep.subr.mxu0 0.0
        %3444 = vmatpush1.msra.mxu0 %v2659
        %3445 = vmatprep.subr.mxu0 0.0
        %3446 = vmatpush1.msra.mxu0 %v2662
        %3447 = vmatprep.subr.mxu0 0.0
        %3448 = vmatpush1.msra.mxu0 %v2665
        %3449 = vmatprep.subr.mxu0 0.0
        %3450 = vmatpush1.msra.mxu0 %v2668
        %3451 = vmatprep.subr.mxu0 0.0
        %3452 = vmatpush1.msra.mxu0 %v2671
        %3453 = vmatprep.subr.mxu0 0.0
        %3454 = vmatpush1.msra.mxu0 %v2674
        %3455 = vmatprep.subr.mxu0 0.0
        %3456 = vmatpush1.msra.mxu0 %v2677
        %3457 = vmatprep.subr.mxu0 0.0
        %3458 = vmatpush1.msra.mxu0 %v2680
        %3459 = vmatprep.subr.mxu0 0.0
        %3460 = vmatpush1.msra.mxu0 %v2683
        %3461 = vmatprep.subr.mxu0 0.0
        %3462 = vmatpush1.msra.mxu0 %v2686
        %3463 = vmatprep.subr.mxu0 0.0
        %3464 = vmatpush1.msra.mxu0 %v2689
        %3465 = vmatprep.subr.mxu0 0.0
        %3466 = vmatpush1.msra.mxu0 %v2692
        %3467 = vmatprep.subr.mxu0 0.0
        %3468 = vmatpush1.msra.mxu0 %v2695
        %3469 = vmatprep.subr.mxu0 0.0
        %3470 = vmatpush1.msra.mxu0 %v2698
        %3471 = vmatprep.subr.mxu0 0.0
        %3472 = vmatpush1.msra.mxu0 %v2701
        %3473 = vmatprep.subr.mxu0 0.0
        %3474 = vmatpush1.msra.mxu0 %v2704
        %3475 = vmatprep.subr.mxu0 0.0
        %3476 = vmatpush1.msra.mxu0 %v2707
        %3477 = vmatprep.subr.mxu0 0.0
        %3478 = vmatpush1.msra.mxu0 %v2710
        %3479 = vmatprep.subr.mxu0 0.0
        %3480 = vmatpush1.msra.mxu0 %v2713
        %3481 = vmatprep.subr.mxu0 0.0
        %3482 = vmatpush1.msra.mxu0 %v2716
        %3483 = vmatprep.subr.mxu0 0.0
        %3484 = vmatpush1.msra.mxu0 %v2719
        %3485 = vmatprep.subr.mxu0 0.0
        %3486 = vmatpush1.msra.mxu0 %v2722
        %3487 = vmatprep.subr.mxu0 0.0
        %3488 = vmatpush1.msra.mxu0 %v2725
        %3489 = vmatprep.subr.mxu0 0.0
        %3490 = vmatpush1.msra.mxu0 %v2728
        %3491 = vmatprep.subr.mxu0 0.0
        %3492 = vmatpush1.msra.mxu0 %v2731
        %3493 = vmatprep.subr.mxu0 0.0
        %3494 = vmatpush1.msra.mxu0 %v2734
        %3495 = vmatprep.subr.mxu0 0.0
        %3496 = vmatpush1.msra.mxu0 %v2737
        %3497 = vmatprep.subr.mxu0 0.0
        %3498 = vmatpush1.msra.mxu0 %v2740
        %3499 = vmatprep.subr.mxu0 0.0
        %3500 = vmatpush1.msra.mxu0 %v2743
        %3501 = vmatprep.subr.mxu0 0.0
        %3502 = vmatpush1.msra.mxu0 %v2746
        %3503 = vmatprep.subr.mxu0 0.0
        %3504 = vmatpush1.msra.mxu0 %v2749
        %3505 = vmatprep.mubr.f32.mxu0 %v2636
        %3506 = vmatmul.mubr.f32.gmra.mrb[0].mxu0 %v2635
        %v3507 = vpop.f32.mrb[0].mxu0
        %v3508 = vadd.f32 0.0, %v3507
        %v3509 = vpop.f32.mrb[0].mxu0
        %3510 = vdwg.mxu0
        %3511 = vmatprep.subr.mxu0 0.0
        %3512 = vmatpush1.msra.mxu0 %v2752
        %3513 = vmatprep.subr.mxu0 0.0
        %3514 = vmatpush1.msra.mxu0 %v2755
        %3515 = vmatprep.subr.mxu0 0.0
        %3516 = vmatpush1.msra.mxu0 %v2758
        %3517 = vmatprep.subr.mxu0 0.0
        %3518 = vmatpush1.msra.mxu0 %v2761
        %3519 = vmatprep.subr.mxu0 0.0
        %3520 = vmatpush1.msra.mxu0 %v2764
        %3521 = vmatprep.subr.mxu0 0.0
        %3522 = vmatpush1.msra.mxu0 %v2767
        %3523 = vmatprep.subr.mxu0 0.0
        %3524 = vmatpush1.msra.mxu0 %v2770
        %3525 = vmatprep.subr.mxu0 0.0
        %3526 = vmatpush1.msra.mxu0 %v2773
        %3527 = vmatprep.subr.mxu0 0.0
        %3528 = vmatpush1.msra.mxu0 %v2776
        %3529 = vmatprep.subr.mxu0 0.0
        %3530 = vmatpush1.msra.mxu0 %v2779
        %3531 = vmatprep.subr.mxu0 0.0
        %3532 = vmatpush1.msra.mxu0 %v2782
        %3533 = vmatprep.subr.mxu0 0.0
        %3534 = vmatpush1.msra.mxu0 %v2785
        %3535 = vmatprep.subr.mxu0 0.0
        %3536 = vmatpush1.msra.mxu0 %v2788
        %3537 = vmatprep.subr.mxu0 0.0
        %3538 = vmatpush1.msra.mxu0 %v2791
        %3539 = vmatprep.subr.mxu0 0.0
        %3540 = vmatpush1.msra.mxu0 %v2794
        %3541 = vmatprep.subr.mxu0 0.0
        %3542 = vmatpush1.msra.mxu0 %v2797
        %3543 = vmatprep.subr.mxu0 0.0
        %3544 = vmatpush1.msra.mxu0 %v2800
        %3545 = vmatprep.subr.mxu0 0.0
        %3546 = vmatpush1.msra.mxu0 %v2803
        %3547 = vmatprep.subr.mxu0 0.0
        %3548 = vmatpush1.msra.mxu0 %v2806
        %3549 = vmatprep.subr.mxu0 0.0
        %3550 = vmatpush1.msra.mxu0 %v2809
        %3551 = vmatprep.subr.mxu0 0.0
        %3552 = vmatpush1.msra.mxu0 %v2812
        %3553 = vmatprep.subr.mxu0 0.0
        %3554 = vmatpush1.msra.mxu0 %v2815
        %3555 = vmatprep.subr.mxu0 0.0
        %3556 = vmatpush1.msra.mxu0 %v2818
        %3557 = vmatprep.subr.mxu0 0.0
        %3558 = vmatpush1.msra.mxu0 %v2821
        %3559 = vmatprep.subr.mxu0 0.0
        %3560 = vmatpush1.msra.mxu0 %v2824
        %3561 = vmatprep.subr.mxu0 0.0
        %3562 = vmatpush1.msra.mxu0 %v2827
        %3563 = vmatprep.subr.mxu0 0.0
        %3564 = vmatpush1.msra.mxu0 %v2830
        %3565 = vmatprep.subr.mxu0 0.0
        %3566 = vmatpush1.msra.mxu0 %v2833
        %3567 = vmatprep.subr.mxu0 0.0
        %3568 = vmatpush1.msra.mxu0 %v2836
        %3569 = vmatprep.subr.mxu0 0.0
        %3570 = vmatpush1.msra.mxu0 %v2839
        %3571 = vmatprep.subr.mxu0 0.0
        %3572 = vmatpush1.msra.mxu0 %v2842
        %3573 = vmatprep.subr.mxu0 0.0
        %3574 = vmatpush1.msra.mxu0 %v2845
        %3575 = vmatprep.mubr.f32.mxu0 %v2638
        %3576 = vmatmul.mubr.f32.gmra.mrb[0].mxu0 %v2637
        %v3577 = vpop.f32.mrb[0].mxu0
        %v3578 = vadd.f32 %v3508, %v3577
        %v3579 = vpop.f32.mrb[0].mxu0
        %3580 = vdwg.mxu0
        %3581 = vmatprep.subr.mxu0 0.0
        %3582 = vmatpush1.msra.mxu0 %v2848
        %3583 = vmatprep.subr.mxu0 0.0
        %3584 = vmatpush1.msra.mxu0 %v2851
        %3585 = vmatprep.subr.mxu0 0.0
        %3586 = vmatpush1.msra.mxu0 %v2854
        %3587 = vmatprep.subr.mxu0 0.0
        %3588 = vmatpush1.msra.mxu0 %v2857
        %3589 = vmatprep.subr.mxu0 0.0
        %3590 = vmatpush1.msra.mxu0 %v2860
        %3591 = vmatprep.subr.mxu0 0.0
        %3592 = vmatpush1.msra.mxu0 %v2863
        %3593 = vmatprep.subr.mxu0 0.0
        %3594 = vmatpush1.msra.mxu0 %v2866
        %3595 = vmatprep.subr.mxu0 0.0
        %3596 = vmatpush1.msra.mxu0 %v2869
        %3597 = vmatprep.subr.mxu0 0.0
        %3598 = vmatpush1.msra.mxu0 %v2872
        %3599 = vmatprep.subr.mxu0 0.0
        %3600 = vmatpush1.msra.mxu0 %v2875
        %3601 = vmatprep.subr.mxu0 0.0
        %3602 = vmatpush1.msra.mxu0 %v2878
        %3603 = vmatprep.subr.mxu0 0.0
        %3604 = vmatpush1.msra.mxu0 %v2881
        %3605 = vmatprep.subr.mxu0 0.0
        %3606 = vmatpush1.msra.mxu0 %v2884
        %3607 = vmatprep.subr.mxu0 0.0
        %3608 = vmatpush1.msra.mxu0 %v2887
        %3609 = vmatprep.subr.mxu0 0.0
        %3610 = vmatpush1.msra.mxu0 %v2890
        %3611 = vmatprep.subr.mxu0 0.0
        %3612 = vmatpush1.msra.mxu0 %v2893
        %3613 = vmatprep.subr.mxu0 0.0
        %3614 = vmatpush1.msra.mxu0 %v2896
        %3615 = vmatprep.subr.mxu0 0.0
        %3616 = vmatpush1.msra.mxu0 %v2899
        %3617 = vmatprep.subr.mxu0 0.0
        %3618 = vmatpush1.msra.mxu0 %v2902
        %3619 = vmatprep.subr.mxu0 0.0
        %3620 = vmatpush1.msra.mxu0 %v2905
        %3621 = vmatprep.subr.mxu0 0.0
        %3622 = vmatpush1.msra.mxu0 %v2908
        %3623 = vmatprep.subr.mxu0 0.0
        %3624 = vmatpush1.msra.mxu0 %v2911
        %3625 = vmatprep.subr.mxu0 0.0
        %3626 = vmatpush1.msra.mxu0 %v2914
        %3627 = vmatprep.subr.mxu0 0.0
        %3628 = vmatpush1.msra.mxu0 %v2917
        %3629 = vmatprep.subr.mxu0 0.0
        %3630 = vmatpush1.msra.mxu0 %v2920
        %3631 = vmatprep.subr.mxu0 0.0
        %3632 = vmatpush1.msra.mxu0 %v2923
        %3633 = vmatprep.subr.mxu0 0.0
        %3634 = vmatpush1.msra.mxu0 %v2926
        %3635 = vmatprep.subr.mxu0 0.0
        %3636 = vmatpush1.msra.mxu0 %v2929
        %3637 = vmatprep.subr.mxu0 0.0
        %3638 = vmatpush1.msra.mxu0 %v2932
        %3639 = vmatprep.subr.mxu0 0.0
        %3640 = vmatpush1.msra.mxu0 %v2935
        %3641 = vmatprep.subr.mxu0 0.0
        %3642 = vmatpush1.msra.mxu0 %v2938
        %3643 = vmatprep.subr.mxu0 0.0
        %3644 = vmatpush1.msra.mxu0 %v2941
        %3645 = vmatprep.mubr.f32.mxu0 %v2640
        %3646 = vmatmul.mubr.f32.gmra.mrb[0].mxu0 %v2639
        %v3647 = vpop.f32.mrb[0].mxu0
        %v3648 = vadd.f32 %v3578, %v3647
        %v3649 = vpop.f32.mrb[0].mxu0
        %3650 = vdwg.mxu0
        %3651 = vmatprep.subr.mxu0 0.0
        %3652 = vmatpush1.msra.mxu0 %v2944
        %3653 = vmatprep.subr.mxu0 0.0
        %3654 = vmatpush1.msra.mxu0 %v2947
        %3655 = vmatprep.subr.mxu0 0.0
        %3656 = vmatpush1.msra.mxu0 %v2950
        %3657 = vmatprep.subr.mxu0 0.0
        %3658 = vmatpush1.msra.mxu0 %v2953
        %3659 = vmatprep.subr.mxu0 0.0
        %3660 = vmatpush1.msra.mxu0 %v2956
        %3661 = vmatprep.subr.mxu0 0.0
        %3662 = vmatpush1.msra.mxu0 %v2959
        %3663 = vmatprep.subr.mxu0 0.0
        %3664 = vmatpush1.msra.mxu0 %v2962
        %3665 = vmatprep.subr.mxu0 0.0
        %3666 = vmatpush1.msra.mxu0 %v2965
        %3667 = vmatprep.subr.mxu0 0.0
        %3668 = vmatpush1.msra.mxu0 %v2968
        %3669 = vmatprep.subr.mxu0 0.0
        %3670 = vmatpush1.msra.mxu0 %v2971
        %3671 = vmatprep.subr.mxu0 0.0
        %3672 = vmatpush1.msra.mxu0 %v2974
        %3673 = vmatprep.subr.mxu0 0.0
        %3674 = vmatpush1.msra.mxu0 %v2977
        %3675 = vmatprep.subr.mxu0 0.0
        %3676 = vmatpush1.msra.mxu0 %v2980
        %3677 = vmatprep.subr.mxu0 0.0
        %3678 = vmatpush1.msra.mxu0 %v2983
        %3679 = vmatprep.subr.mxu0 0.0
        %3680 = vmatpush1.msra.mxu0 %v2986
        %3681 = vmatprep.subr.mxu0 0.0
        %3682 = vmatpush1.msra.mxu0 %v2989
        %3683 = vmatprep.subr.mxu0 0.0
        %3684 = vmatpush1.msra.mxu0 %v2992
        %3685 = vmatprep.subr.mxu0 0.0
        %3686 = vmatpush1.msra.mxu0 %v2995
        %3687 = vmatprep.subr.mxu0 0.0
        %3688 = vmatpush1.msra.mxu0 %v2998
        %3689 = vmatprep.subr.mxu0 0.0
        %3690 = vmatpush1.msra.mxu0 %v3001
        %3691 = vmatprep.subr.mxu0 0.0
        %3692 = vmatpush1.msra.mxu0 %v3004
        %3693 = vmatprep.subr.mxu0 0.0
        %3694 = vmatpush1.msra.mxu0 %v3007
        %3695 = vmatprep.subr.mxu0 0.0
        %3696 = vmatpush1.msra.mxu0 %v3010
        %3697 = vmatprep.subr.mxu0 0.0
        %3698 = vmatpush1.msra.mxu0 %v3013
        %3699 = vmatprep.subr.mxu0 0.0
        %3700 = vmatpush1.msra.mxu0 %v3016
        %3701 = vmatprep.subr.mxu0 0.0
        %3702 = vmatpush1.msra.mxu0 %v3019
        %3703 = vmatprep.subr.mxu0 0.0
        %3704 = vmatpush1.msra.mxu0 %v3022
        %3705 = vmatprep.subr.mxu0 0.0
        %3706 = vmatpush1.msra.mxu0 %v3025
        %3707 = vmatprep.subr.mxu0 0.0
        %3708 = vmatpush1.msra.mxu0 %v3028
        %3709 = vmatprep.subr.mxu0 0.0
        %3710 = vmatpush1.msra.mxu0 %v3031
        %3711 = vmatprep.subr.mxu0 0.0
        %3712 = vmatpush1.msra.mxu0 %v3034
        %3713 = vmatprep.subr.mxu0 0.0
        %3714 = vmatpush1.msra.mxu0 %v3037
        %3715 = vmatprep.mubr.f32.mxu0 %v2642
        %3716 = vmatmul.mubr.f32.gmra.mrb[0].mxu0 %v2641
        %v3717 = vpop.f32.mrb[0].mxu0
        %v3718 = vadd.f32 %v3648, %v3717
        %v3719 = vpop.f32.mrb[0].mxu0
        %3720 = vdwg.mxu0
        %3721 = vmatprep.subr.mxu0 0.0
        %3722 = vmatpush1.msra.mxu0 %v3040
        %3723 = vmatprep.subr.mxu0 0.0
        %3724 = vmatpush1.msra.mxu0 %v3043
        %3725 = vmatprep.subr.mxu0 0.0
        %3726 = vmatpush1.msra.mxu0 %v3046
        %3727 = vmatprep.subr.mxu0 0.0
        %3728 = vmatpush1.msra.mxu0 %v3049
        %3729 = vmatprep.subr.mxu0 0.0
        %3730 = vmatpush1.msra.mxu0 %v3052
        %3731 = vmatprep.subr.mxu0 0.0
        %3732 = vmatpush1.msra.mxu0 %v3055
        %3733 = vmatprep.subr.mxu0 0.0
        %3734 = vmatpush1.msra.mxu0 %v3058
        %3735 = vmatprep.subr.mxu0 0.0
        %3736 = vmatpush1.msra.mxu0 %v3061
        %3737 = vmatprep.subr.mxu0 0.0
        %3738 = vmatpush1.msra.mxu0 %v3064
        %3739 = vmatprep.subr.mxu0 0.0
        %3740 = vmatpush1.msra.mxu0 %v3067
        %3741 = vmatprep.subr.mxu0 0.0
        %3742 = vmatpush1.msra.mxu0 %v3070
        %3743 = vmatprep.subr.mxu0 0.0
        %3744 = vmatpush1.msra.mxu0 %v3073
        %3745 = vmatprep.subr.mxu0 0.0
        %3746 = vmatpush1.msra.mxu0 %v3076
        %3747 = vmatprep.subr.mxu0 0.0
        %3748 = vmatpush1.msra.mxu0 %v3079
        %3749 = vmatprep.subr.mxu0 0.0
        %3750 = vmatpush1.msra.mxu0 %v3082
        %3751 = vmatprep.subr.mxu0 0.0
        %3752 = vmatpush1.msra.mxu0 %v3085
        %3753 = vmatprep.subr.mxu0 0.0
        %3754 = vmatpush1.msra.mxu0 0.0
        %3755 = vmatprep.subr.mxu0 0.0
        %3756 = vmatpush1.msra.mxu0 0.0
        %3757 = vmatprep.subr.mxu0 0.0
        %3758 = vmatpush1.msra.mxu0 0.0
        %3759 = vmatprep.subr.mxu0 0.0
        %3760 = vmatpush1.msra.mxu0 0.0
        %3761 = vmatprep.subr.mxu0 0.0
        %3762 = vmatpush1.msra.mxu0 0.0
        %3763 = vmatprep.subr.mxu0 0.0
        %3764 = vmatpush1.msra.mxu0 0.0
        %3765 = vmatprep.subr.mxu0 0.0
        %3766 = vmatpush1.msra.mxu0 0.0
        %3767 = vmatprep.subr.mxu0 0.0
        %3768 = vmatpush1.msra.mxu0 0.0
        %3769 = vmatprep.subr.mxu0 0.0
        %3770 = vmatpush1.msra.mxu0 0.0
        %3771 = vmatprep.subr.mxu0 0.0
        %3772 = vmatpush1.msra.mxu0 0.0
        %3773 = vmatprep.subr.mxu0 0.0
        %3774 = vmatpush1.msra.mxu0 0.0
        %3775 = vmatprep.subr.mxu0 0.0
        %3776 = vmatpush1.msra.mxu0 0.0
        %3777 = vmatprep.subr.mxu0 0.0
        %3778 = vmatpush1.msra.mxu0 0.0
        %3779 = vmatprep.subr.mxu0 0.0
        %3780 = vmatpush1.msra.mxu0 0.0
        %3781 = vmatprep.subr.mxu0 0.0
        %3782 = vmatpush1.msra.mxu0 0.0
        %3783 = vmatprep.subr.mxu0 0.0
        %3784 = vmatpush1.msra.mxu0 0.0
        %3785 = vmatprep.mubr.f32.mxu0 0.0
        %3786 = vmatmul.mubr.f32.gmra.mrb[0].mxu0 %v2643
        %v3787 = vpop.f32.mrb[0].mxu0
        %v3788 = vadd.f32 %v3718, %v3787
        %v3789 = vpop.f32.mrb[0].mxu0
        %3790 = vdwg.mxu0
        %s3791 = scalar_lea.vmem %s490, 24 [#allocation16]
        %3792 = vst [vmem:[%s3791] sm:$0xff] %v3437
        %3793 = vst [vmem:[%s3791 + $0x8] sm:$0xff] %v3439
        %3794 = vst [vmem:[%s3791 + $0x10] sm:$0xff] %v3788
        %3804 = vrot.lane.b32.xlu0 %v836, 125
        %v3805 = vpop.permute.xlu0 %3804
        %3806 = vrot.lane.b32.xlu0 %v837, 125
        %v3807 = vpop.permute.xlu0 %3806
        %3808 = vrot.lane.b32.xlu0 %v838, 125
        %v3809 = vpop.permute.xlu0 %3808
        %3810 = vrot.lane.b32.xlu0 %v839, 125
        %v3811 = vpop.permute.xlu0 %3810
        %3812 = vrot.lane.b32.xlu0 %v840, 125
        %v3813 = vpop.permute.xlu0 %3812
        %3814 = vrot.lane.b32.xlu0 %v841, 125
        %v3815 = vpop.permute.xlu0 %3814
        %3816 = vrot.lane.b32.xlu0 %v842, 125
        %v3817 = vpop.permute.xlu0 %3816
        %3818 = vrot.lane.b32.xlu0 %v843, 125
        %v3819 = vpop.permute.xlu0 %3818
        %3820 = vrot.lane.b32.xlu0 %v844, 125
        %v3821 = vpop.permute.xlu0 %3820
        %v3822 = vsel %vm644, %v3805, %v3807
        %v3823 = vsel %vm644, %v3807, %v3809
        %v3824 = vsel %vm644, %v3809, %v3811
        %v3825 = vsel %vm644, %v3811, %v3813
        %v3826 = vsel %vm644, %v3813, %v3815
        %v3827 = vsel %vm644, %v3815, %v3817
        %v3828 = vsel %vm644, %v3817, %v3819
        %v3829 = vsel %vm644, %v3819, %v3821
        %v3840 = vsel %vm644, %v3821, %v3805
        %3841 = vrot.lane.b32.xlu0 %v836, 122
        %v3842 = vpop.permute.xlu0 %3841
        %3843 = vrot.lane.b32.xlu0 %v837, 122
        %v3844 = vpop.permute.xlu0 %3843
        %3845 = vrot.lane.b32.xlu0 %v838, 122
        %v3846 = vpop.permute.xlu0 %3845
        %3847 = vrot.lane.b32.xlu0 %v839, 122
        %v3848 = vpop.permute.xlu0 %3847
        %3849 = vrot.lane.b32.xlu0 %v840, 122
        %v3850 = vpop.permute.xlu0 %3849
        %3851 = vrot.lane.b32.xlu0 %v841, 122
        %v3852 = vpop.permute.xlu0 %3851
        %3853 = vrot.lane.b32.xlu0 %v842, 122
        %v3854 = vpop.permute.xlu0 %3853
        %3855 = vrot.lane.b32.xlu0 %v843, 122
        %v3856 = vpop.permute.xlu0 %3855
        %3857 = vrot.lane.b32.xlu0 %v844, 122
        %v3858 = vpop.permute.xlu0 %3857
        %vm3859 = vcmask 998400
        %v3860 = vsel %vm3859, %v3842, %v3844
        %v3861 = vsel %vm3859, %v3844, %v3846
        %v3862 = vsel %vm3859, %v3846, %v3848
        %v3863 = vsel %vm3859, %v3848, %v3850
        %v3864 = vsel %vm3859, %v3850, %v3852
        %v3865 = vsel %vm3859, %v3852, %v3854
        %v3866 = vsel %vm3859, %v3854, %v3856
        %v3867 = vsel %vm3859, %v3856, %v3858
        %v3878 = vsel %vm3859, %v3858, %v3842
        %3879 = vrot.lane.b32.xlu0 %v836, 119
        %v3880 = vpop.permute.xlu0 %3879
        %3881 = vrot.lane.b32.xlu0 %v837, 119
        %v3882 = vpop.permute.xlu0 %3881
        %3883 = vrot.lane.b32.xlu0 %v838, 119
        %v3884 = vpop.permute.xlu0 %3883
        %3885 = vrot.lane.b32.xlu0 %v839, 119
        %v3886 = vpop.permute.xlu0 %3885
        %3887 = vrot.lane.b32.xlu0 %v840, 119
        %v3888 = vpop.permute.xlu0 %3887
        %3889 = vrot.lane.b32.xlu0 %v841, 119
        %v3890 = vpop.permute.xlu0 %3889
        %3891 = vrot.lane.b32.xlu0 %v842, 119
        %v3892 = vpop.permute.xlu0 %3891
        %3893 = vrot.lane.b32.xlu0 %v843, 119
        %v3894 = vpop.permute.xlu0 %3893
        %3895 = vrot.lane.b32.xlu0 %v844, 119
        %v3896 = vpop.permute.xlu0 %3895
        %vm3897 = vcmask 973824
        %v3898 = vsel %vm3897, %v3880, %v3882
        %v3899 = vsel %vm3897, %v3882, %v3884
        %v3900 = vsel %vm3897, %v3884, %v3886
        %v3901 = vsel %vm3897, %v3886, %v3888
        %v3902 = vsel %vm3897, %v3888, %v3890
        %v3903 = vsel %vm3897, %v3890, %v3892
        %v3904 = vsel %vm3897, %v3892, %v3894
        %v3905 = vsel %vm3897, %v3894, %v3896
        %v3916 = vsel %vm3897, %v3896, %v3880
        %3917 = vrot.lane.b32.xlu0 %v836, 116
        %v3918 = vpop.permute.xlu0 %3917
        %3919 = vrot.lane.b32.xlu0 %v837, 116
        %v3920 = vpop.permute.xlu0 %3919
        %3921 = vrot.lane.b32.xlu0 %v838, 116
        %v3922 = vpop.permute.xlu0 %3921
        %3923 = vrot.lane.b32.xlu0 %v839, 116
        %v3924 = vpop.permute.xlu0 %3923
        %3925 = vrot.lane.b32.xlu0 %v840, 116
        %v3926 = vpop.permute.xlu0 %3925
        %3927 = vrot.lane.b32.xlu0 %v841, 116
        %v3928 = vpop.permute.xlu0 %3927
        %3929 = vrot.lane.b32.xlu0 %v842, 116
        %v3930 = vpop.permute.xlu0 %3929
        %3931 = vrot.lane.b32.xlu0 %v843, 116
        %v3932 = vpop.permute.xlu0 %3931
        %3933 = vrot.lane.b32.xlu0 %v844, 116
        %v3934 = vpop.permute.xlu0 %3933
        %vm3935 = vcmask 949248
        %v3936 = vsel %vm3935, %v3918, %v3920
        %v3937 = vsel %vm3935, %v3920, %v3922
        %v3938 = vsel %vm3935, %v3922, %v3924
        %v3939 = vsel %vm3935, %v3924, %v3926
        %v3940 = vsel %vm3935, %v3926, %v3928
        %v3941 = vsel %vm3935, %v3928, %v3930
        %v3942 = vsel %vm3935, %v3930, %v3932
        %v3943 = vsel %vm3935, %v3932, %v3934
        %v3954 = vsel %vm3935, %v3934, %v3918
        %3955 = vrot.lane.b32.xlu0 %v836, 113
        %v3956 = vpop.permute.xlu0 %3955
        %3957 = vrot.lane.b32.xlu0 %v837, 113
        %v3958 = vpop.permute.xlu0 %3957
        %3959 = vrot.lane.b32.xlu0 %v838, 113
        %v3960 = vpop.permute.xlu0 %3959
        %3961 = vrot.lane.b32.xlu0 %v839, 113
        %v3962 = vpop.permute.xlu0 %3961
        %3963 = vrot.lane.b32.xlu0 %v840, 113
        %v3964 = vpop.permute.xlu0 %3963
        %3965 = vrot.lane.b32.xlu0 %v841, 113
        %v3966 = vpop.permute.xlu0 %3965
        %3967 = vrot.lane.b32.xlu0 %v842, 113
        %v3968 = vpop.permute.xlu0 %3967
        %3969 = vrot.lane.b32.xlu0 %v843, 113
        %v3970 = vpop.permute.xlu0 %3969
        %3971 = vrot.lane.b32.xlu0 %v844, 113
        %v3972 = vpop.permute.xlu0 %3971
        %vm3973 = vcmask 924672
        %v3974 = vsel %vm3973, %v3956, %v3958
        %v3975 = vsel %vm3973, %v3958, %v3960
        %v3976 = vsel %vm3973, %v3960, %v3962
        %v3977 = vsel %vm3973, %v3962, %v3964
        %v3978 = vsel %vm3973, %v3964, %v3966
        %v3979 = vsel %vm3973, %v3966, %v3968
        %v3980 = vsel %vm3973, %v3968, %v3970
        %v3981 = vsel %vm3973, %v3970, %v3972
        %v3992 = vsel %vm3973, %v3972, %v3956
        %v3993 = vmul.f32 %v836, %v740
        %v3994 = vmul.f32 %v837, %v740
        %v3995 = vmul.f32 %v838, %v740
        %v3996 = vmul.f32 %v839, %v740
        %v3997 = vmul.f32 %v840, %v740
        %v3998 = vmul.f32 %v841, %v740
        %v3999 = vmul.f32 %v842, %v740
        %v4000 = vmul.f32 %v843, %v740
        %v4001 = vmul.f32 %v844, %v740
        %v4002 = vmul.f32 %v3822, %v750
        %v4003 = vmul.f32 %v3823, %v750
        %v4004 = vmul.f32 %v3824, %v750
        %v4005 = vmul.f32 %v3825, %v750
        %v4006 = vmul.f32 %v3826, %v750
        %v4007 = vmul.f32 %v3827, %v750
        %v4008 = vmul.f32 %v3828, %v750
        %v4009 = vmul.f32 %v3829, %v750
        %v4010 = vmul.f32 %v3840, %v750
        %v4011 = vmul.f32 %v3860, %v760
        %v4012 = vmul.f32 %v3861, %v760
        %v4013 = vmul.f32 %v3862, %v760
        %v4014 = vmul.f32 %v3863, %v760
        %v4015 = vmul.f32 %v3864, %v760
        %v4016 = vmul.f32 %v3865, %v760
        %v4017 = vmul.f32 %v3866, %v760
        %v4018 = vmul.f32 %v3867, %v760
        %v4019 = vmul.f32 %v3878, %v760
        %v4020 = vmul.f32 %v3898, %v770
        %v4021 = vmul.f32 %v3899, %v770
        %v4022 = vmul.f32 %v3900, %v770
        %v4023 = vmul.f32 %v3901, %v770
        %v4024 = vmul.f32 %v3902, %v770
        %v4025 = vmul.f32 %v3903, %v770
        %v4026 = vmul.f32 %v3904, %v770
        %v4027 = vmul.f32 %v3905, %v770
        %v4028 = vmul.f32 %v3916, %v770
        %v4029 = vmul.f32 %v3936, %v780
        %v4030 = vmul.f32 %v3937, %v780
        %v4031 = vmul.f32 %v3938, %v780
        %v4032 = vmul.f32 %v3939, %v780
        %v4033 = vmul.f32 %v3940, %v780
        %v4034 = vmul.f32 %v3941, %v780
        %v4035 = vmul.f32 %v3942, %v780
        %v4036 = vmul.f32 %v3943, %v780
        %v4037 = vmul.f32 %v3954, %v780
        %v4038 = vmul.f32 %v3974, %v790
        %v4039 = vmul.f32 %v3975, %v790
        %v4040 = vmul.f32 %v3976, %v790
        %v4041 = vmul.f32 %v3977, %v790
        %v4042 = vmul.f32 %v3978, %v790
        %v4043 = vmul.f32 %v3979, %v790
        %v4044 = vmul.f32 %v3980, %v790
        %v4045 = vmul.f32 %v3981, %v790
        %v4046 = vmul.f32 %v3992, %v790
        %v4047 = vadd.f32 %v3993, %v4002
        %v4048 = vadd.f32 %v3994, %v4003
        %v4049 = vadd.f32 %v3995, %v4004
        %v4050 = vadd.f32 %v3996, %v4005
        %v4051 = vadd.f32 %v3997, %v4006
        %v4052 = vadd.f32 %v3998, %v4007
        %v4053 = vadd.f32 %v3999, %v4008
        %v4054 = vadd.f32 %v4000, %v4009
        %v4055 = vadd.f32 %v4001, %v4010
        %v4056 = vadd.f32 %v4011, %v4020
        %v4057 = vadd.f32 %v4012, %v4021
        %v4058 = vadd.f32 %v4013, %v4022
        %v4059 = vadd.f32 %v4014, %v4023
        %v4060 = vadd.f32 %v4015, %v4024
        %v4061 = vadd.f32 %v4016, %v4025
        %v4062 = vadd.f32 %v4017, %v4026
        %v4063 = vadd.f32 %v4018, %v4027
        %v4064 = vadd.f32 %v4019, %v4028
        %v4065 = vadd.f32 %v4029, %v4038
        %v4066 = vadd.f32 %v4030, %v4039
        %v4067 = vadd.f32 %v4031, %v4040
        %v4068 = vadd.f32 %v4032, %v4041
        %v4069 = vadd.f32 %v4033, %v4042
        %v4070 = vadd.f32 %v4034, %v4043
        %v4071 = vadd.f32 %v4035, %v4044
        %v4072 = vadd.f32 %v4036, %v4045
        %v4073 = vadd.f32 %v4037, %v4046
        %v4074 = vadd.f32 %v4047, %v4056
        %v4075 = vadd.f32 %v4048, %v4057
        %v4076 = vadd.f32 %v4049, %v4058
        %v4077 = vadd.f32 %v4050, %v4059
        %v4078 = vadd.f32 %v4051, %v4060
        %v4079 = vadd.f32 %v4052, %v4061
        %v4080 = vadd.f32 %v4053, %v4062
        %v4081 = vadd.f32 %v4054, %v4063
        %v4082 = vadd.f32 %v4055, %v4064
        %v4083 = vadd.f32 %v4074, %v4065
        %v4084 = vadd.f32 %v4075, %v4066
        %v4085 = vadd.f32 %v4076, %v4067
        %v4086 = vadd.f32 %v4077, %v4068
        %v4087 = vadd.f32 %v4078, %v4069
        %v4088 = vadd.f32 %v4079, %v4070
        %v4089 = vadd.f32 %v4080, %v4071
        %v4090 = vadd.f32 %v4081, %v4072
        %v4091 = vadd.f32 %v4082, %v4073
        %v4092 = vmul.f32 %v836, %v845
        %v4093 = vmul.f32 %v837, %v845
        %v4094 = vmul.f32 %v838, %v845
        %v4095 = vmul.f32 %v839, %v845
        %v4096 = vmul.f32 %v840, %v845
        %v4097 = vmul.f32 %v841, %v845
        %v4098 = vmul.f32 %v842, %v845
        %v4099 = vmul.f32 %v843, %v845
        %v4100 = vmul.f32 %v844, %v845
        %v4101 = vmul.f32 %v3822, %v855
        %v4102 = vmul.f32 %v3823, %v855
        %v4103 = vmul.f32 %v3824, %v855
        %v4104 = vmul.f32 %v3825, %v855
        %v4105 = vmul.f32 %v3826, %v855
        %v4106 = vmul.f32 %v3827, %v855
        %v4107 = vmul.f32 %v3828, %v855
        %v4108 = vmul.f32 %v3829, %v855
        %v4109 = vmul.f32 %v3840, %v855
        %v4110 = vmul.f32 %v3860, %v865
        %v4111 = vmul.f32 %v3861, %v865
        %v4112 = vmul.f32 %v3862, %v865
        %v4113 = vmul.f32 %v3863, %v865
        %v4114 = vmul.f32 %v3864, %v865
        %v4115 = vmul.f32 %v3865, %v865
        %v4116 = vmul.f32 %v3866, %v865
        %v4117 = vmul.f32 %v3867, %v865
        %v4118 = vmul.f32 %v3878, %v865
        %v4119 = vmul.f32 %v3898, %v875
        %v4120 = vmul.f32 %v3899, %v875
        %v4121 = vmul.f32 %v3900, %v875
        %v4122 = vmul.f32 %v3901, %v875
        %v4123 = vmul.f32 %v3902, %v875
        %v4124 = vmul.f32 %v3903, %v875
        %v4125 = vmul.f32 %v3904, %v875
        %v4126 = vmul.f32 %v3905, %v875
        %v4127 = vmul.f32 %v3916, %v875
        %v4128 = vmul.f32 %v3936, %v885
        %v4129 = vmul.f32 %v3937, %v885
        %v4130 = vmul.f32 %v3938, %v885
        %v4131 = vmul.f32 %v3939, %v885
        %v4132 = vmul.f32 %v3940, %v885
        %v4133 = vmul.f32 %v3941, %v885
        %v4134 = vmul.f32 %v3942, %v885
        %v4135 = vmul.f32 %v3943, %v885
        %v4136 = vmul.f32 %v3954, %v885
        %v4137 = vmul.f32 %v3974, %v895
        %v4138 = vmul.f32 %v3975, %v895
        %v4139 = vmul.f32 %v3976, %v895
        %v4140 = vmul.f32 %v3977, %v895
        %v4141 = vmul.f32 %v3978, %v895
        %v4142 = vmul.f32 %v3979, %v895
        %v4143 = vmul.f32 %v3980, %v895
        %v4144 = vmul.f32 %v3981, %v895
        %v4145 = vmul.f32 %v3992, %v895
        %v4146 = vadd.f32 %v4092, %v4101
        %v4147 = vadd.f32 %v4093, %v4102
        %v4148 = vadd.f32 %v4094, %v4103
        %v4149 = vadd.f32 %v4095, %v4104
        %v4150 = vadd.f32 %v4096, %v4105
        %v4151 = vadd.f32 %v4097, %v4106
        %v4152 = vadd.f32 %v4098, %v4107
        %v4153 = vadd.f32 %v4099, %v4108
        %v4154 = vadd.f32 %v4100, %v4109
        %v4155 = vadd.f32 %v4110, %v4119
        %v4156 = vadd.f32 %v4111, %v4120
        %v4157 = vadd.f32 %v4112, %v4121
        %v4158 = vadd.f32 %v4113, %v4122
        %v4159 = vadd.f32 %v4114, %v4123
        %v4160 = vadd.f32 %v4115, %v4124
        %v4161 = vadd.f32 %v4116, %v4125
        %v4162 = vadd.f32 %v4117, %v4126
        %v4163 = vadd.f32 %v4118, %v4127
        %v4164 = vadd.f32 %v4128, %v4137
        %v4165 = vadd.f32 %v4129, %v4138
        %v4166 = vadd.f32 %v4130, %v4139
        %v4167 = vadd.f32 %v4131, %v4140
        %v4168 = vadd.f32 %v4132, %v4141
        %v4169 = vadd.f32 %v4133, %v4142
        %v4170 = vadd.f32 %v4134, %v4143
        %v4171 = vadd.f32 %v4135, %v4144
        %v4172 = vadd.f32 %v4136, %v4145
        %v4173 = vadd.f32 %v4146, %v4155
        %v4174 = vadd.f32 %v4147, %v4156
        %v4175 = vadd.f32 %v4148, %v4157
        %v4176 = vadd.f32 %v4149, %v4158
        %v4177 = vadd.f32 %v4150, %v4159
        %v4178 = vadd.f32 %v4151, %v4160
        %v4179 = vadd.f32 %v4152, %v4161
        %v4180 = vadd.f32 %v4153, %v4162
        %v4181 = vadd.f32 %v4154, %v4163
        %v4182 = vadd.f32 %v4173, %v4164
        %v4183 = vadd.f32 %v4174, %v4165
        %v4184 = vadd.f32 %v4175, %v4166
        %v4185 = vadd.f32 %v4176, %v4167
        %v4186 = vadd.f32 %v4177, %v4168
        %v4187 = vadd.f32 %v4178, %v4169
        %v4188 = vadd.f32 %v4179, %v4170
        %v4189 = vadd.f32 %v4180, %v4171
        %v4190 = vadd.f32 %v4181, %v4172
        %v4191 = vmul.f32 %v836, %v950
        %v4192 = vmul.f32 %v837, %v950
        %v4193 = vmul.f32 %v838, %v950
        %v4194 = vmul.f32 %v839, %v950
        %v4195 = vmul.f32 %v840, %v950
        %v4196 = vmul.f32 %v841, %v950
        %v4197 = vmul.f32 %v842, %v950
        %v4198 = vmul.f32 %v843, %v950
        %v4199 = vmul.f32 %v844, %v950
        %v4200 = vmul.f32 %v3822, %v960
        %v4201 = vmul.f32 %v3823, %v960
        %v4202 = vmul.f32 %v3824, %v960
        %v4203 = vmul.f32 %v3825, %v960
        %v4204 = vmul.f32 %v3826, %v960
        %v4205 = vmul.f32 %v3827, %v960
        %v4206 = vmul.f32 %v3828, %v960
        %v4207 = vmul.f32 %v3829, %v960
        %v4208 = vmul.f32 %v3840, %v960
        %v4209 = vmul.f32 %v3860, %v970
        %v4210 = vmul.f32 %v3861, %v970
        %v4211 = vmul.f32 %v3862, %v970
        %v4212 = vmul.f32 %v3863, %v970
        %v4213 = vmul.f32 %v3864, %v970
        %v4214 = vmul.f32 %v3865, %v970
        %v4215 = vmul.f32 %v3866, %v970
        %v4216 = vmul.f32 %v3867, %v970
        %v4217 = vmul.f32 %v3878, %v970
        %v4218 = vmul.f32 %v3898, %v980
        %v4219 = vmul.f32 %v3899, %v980
        %v4220 = vmul.f32 %v3900, %v980
        %v4221 = vmul.f32 %v3901, %v980
        %v4222 = vmul.f32 %v3902, %v980
        %v4223 = vmul.f32 %v3903, %v980
        %v4224 = vmul.f32 %v3904, %v980
        %v4225 = vmul.f32 %v3905, %v980
        %v4226 = vmul.f32 %v3916, %v980
        %v4227 = vmul.f32 %v3936, %v990
        %v4228 = vmul.f32 %v3937, %v990
        %v4229 = vmul.f32 %v3938, %v990
        %v4230 = vmul.f32 %v3939, %v990
        %v4231 = vmul.f32 %v3940, %v990
        %v4232 = vmul.f32 %v3941, %v990
        %v4233 = vmul.f32 %v3942, %v990
        %v4234 = vmul.f32 %v3943, %v990
        %v4235 = vmul.f32 %v3954, %v990
        %v4236 = vmul.f32 %v3974, %v1000
        %v4237 = vmul.f32 %v3975, %v1000
        %v4238 = vmul.f32 %v3976, %v1000
        %v4239 = vmul.f32 %v3977, %v1000
        %v4240 = vmul.f32 %v3978, %v1000
        %v4241 = vmul.f32 %v3979, %v1000
        %v4242 = vmul.f32 %v3980, %v1000
        %v4243 = vmul.f32 %v3981, %v1000
        %v4244 = vmul.f32 %v3992, %v1000
        %v4245 = vadd.f32 %v4191, %v4200
        %v4246 = vadd.f32 %v4192, %v4201
        %v4247 = vadd.f32 %v4193, %v4202
        %v4248 = vadd.f32 %v4194, %v4203
        %v4249 = vadd.f32 %v4195, %v4204
        %v4250 = vadd.f32 %v4196, %v4205
        %v4251 = vadd.f32 %v4197, %v4206
        %v4252 = vadd.f32 %v4198, %v4207
        %v4253 = vadd.f32 %v4199, %v4208
        %v4254 = vadd.f32 %v4209, %v4218
        %v4255 = vadd.f32 %v4210, %v4219
        %v4256 = vadd.f32 %v4211, %v4220
        %v4257 = vadd.f32 %v4212, %v4221
        %v4258 = vadd.f32 %v4213, %v4222
        %v4259 = vadd.f32 %v4214, %v4223
        %v4260 = vadd.f32 %v4215, %v4224
        %v4261 = vadd.f32 %v4216, %v4225
        %v4262 = vadd.f32 %v4217, %v4226
        %v4263 = vadd.f32 %v4227, %v4236
        %v4264 = vadd.f32 %v4228, %v4237
        %v4265 = vadd.f32 %v4229, %v4238
        %v4266 = vadd.f32 %v4230, %v4239
        %v4267 = vadd.f32 %v4231, %v4240
        %v4268 = vadd.f32 %v4232, %v4241
        %v4269 = vadd.f32 %v4233, %v4242
        %v4270 = vadd.f32 %v4234, %v4243
        %v4271 = vadd.f32 %v4235, %v4244
        %v4272 = vadd.f32 %v4245, %v4254
        %v4273 = vadd.f32 %v4246, %v4255
        %v4274 = vadd.f32 %v4247, %v4256
        %v4275 = vadd.f32 %v4248, %v4257
        %v4276 = vadd.f32 %v4249, %v4258
        %v4277 = vadd.f32 %v4250, %v4259
        %v4278 = vadd.f32 %v4251, %v4260
        %v4279 = vadd.f32 %v4252, %v4261
        %v4280 = vadd.f32 %v4253, %v4262
        %v4281 = vadd.f32 %v4272, %v4263
        %v4282 = vadd.f32 %v4273, %v4264
        %v4283 = vadd.f32 %v4274, %v4265
        %v4284 = vadd.f32 %v4275, %v4266
        %v4285 = vadd.f32 %v4276, %v4267
        %v4286 = vadd.f32 %v4277, %v4268
        %v4287 = vadd.f32 %v4278, %v4269
        %v4288 = vadd.f32 %v4279, %v4270
        %v4289 = vadd.f32 %v4280, %v4271
        %s4290 = sld [smem:[#allocation13 + $0x80]]
        %s4291 = sld [smem:[#allocation15 + $0x80]]
        %v4292 = vstv %s4291
        %v4293 = vsub.f32 %v4182, %v4292
        %v4294 = vsub.f32 %v4183, %v4292
        %v4295 = vsub.f32 %v4184, %v4292
        %v4296 = vsub.f32 %v4185, %v4292
        %v4297 = vsub.f32 %v4186, %v4292
        %v4298 = vsub.f32 %v4187, %v4292
        %v4299 = vsub.f32 %v4188, %v4292
        %v4300 = vsub.f32 %v4189, %v4292
        %v4301 = vsub.f32 %v4190, %v4292
        %v4302 = vmul.f32 %v4293, 100.0
        %v4303 = vmul.f32 %v4294, 100.0
        %v4304 = vmul.f32 %v4295, 100.0
        %v4305 = vmul.f32 %v4296, 100.0
        %v4306 = vmul.f32 %v4297, 100.0
        %v4307 = vmul.f32 %v4298, 100.0
        %v4308 = vmul.f32 %v4299, 100.0
        %v4309 = vmul.f32 %v4300, 100.0
        %v4310 = vmul.f32 %v4301, 100.0
        %v4311 = vand.u32 2147483647, %v4302
        %v4312 = vand.u32 2147483647, %v4303
        %v4313 = vand.u32 2147483647, %v4304
        %v4314 = vand.u32 2147483647, %v4305
        %v4315 = vand.u32 2147483647, %v4306
        %v4316 = vand.u32 2147483647, %v4307
        %v4317 = vand.u32 2147483647, %v4308
        %v4318 = vand.u32 2147483647, %v4309
        %v4319 = vand.u32 2147483647, %v4310
        %v4320 = vsub.f32 0.0, %v4311
        %v4321 = vsub.f32 0.0, %v4312
        %v4322 = vsub.f32 0.0, %v4313
        %v4323 = vsub.f32 0.0, %v4314
        %v4324 = vsub.f32 0.0, %v4315
        %v4325 = vsub.f32 0.0, %v4316
        %v4326 = vsub.f32 0.0, %v4317
        %v4327 = vsub.f32 0.0, %v4318
        %v4328 = vsub.f32 0.0, %v4319
        %v4329 = vmul.f32 %v4320, 1.442695
        %v4330 = vpow.pop %v4329
        %v4331 = vmul.f32 %v4321, 1.442695
        %v4332 = vpow.pop %v4331
        %v4333 = vmul.f32 %v4322, 1.442695
        %v4334 = vpow.pop %v4333
        %v4335 = vmul.f32 %v4323, 1.442695
        %v4336 = vpow.pop %v4335
        %v4337 = vmul.f32 %v4324, 1.442695
        %v4338 = vpow.pop %v4337
        %v4339 = vmul.f32 %v4325, 1.442695
        %v4340 = vpow.pop %v4339
        %v4341 = vmul.f32 %v4326, 1.442695
        %v4342 = vpow.pop %v4341
        %v4343 = vmul.f32 %v4327, 1.442695
        %v4344 = vpow.pop %v4343
        %v4345 = vmul.f32 %v4328, 1.442695
        %v4346 = vpow.pop %v4345
        %v4347 = vadd.f32 %v4330, 1.0
        %v4348 = vadd.f32 %v4332, 1.0
        %v4349 = vadd.f32 %v4334, 1.0
        %v4350 = vadd.f32 %v4336, 1.0
        %v4351 = vadd.f32 %v4338, 1.0
        %v4352 = vadd.f32 %v4340, 1.0
        %v4353 = vadd.f32 %v4342, 1.0
        %v4354 = vadd.f32 %v4344, 1.0
        %v4355 = vadd.f32 %v4346, 1.0
        %v4356 = vrcp.pop %v4347
        %v4357 = vrcp.pop %v4348
        %v4358 = vrcp.pop %v4349
        %v4359 = vrcp.pop %v4350
        %v4360 = vrcp.pop %v4351
        %v4361 = vrcp.pop %v4352
        %v4362 = vrcp.pop %v4353
        %v4363 = vrcp.pop %v4354
        %v4364 = vrcp.pop %v4355
        %vm4365 = vcmp.ge.f32.partialorder %v4302, 0.0
        %vm4366 = vcmp.ge.f32.partialorder %v4303, 0.0
        %vm4367 = vcmp.ge.f32.partialorder %v4304, 0.0
        %vm4368 = vcmp.ge.f32.partialorder %v4305, 0.0
        %vm4369 = vcmp.ge.f32.partialorder %v4306, 0.0
        %vm4370 = vcmp.ge.f32.partialorder %v4307, 0.0
        %vm4371 = vcmp.ge.f32.partialorder %v4308, 0.0
        %vm4372 = vcmp.ge.f32.partialorder %v4309, 0.0
        %vm4373 = vcmp.ge.f32.partialorder %v4310, 0.0
        %v4374 = vmul.f32 %v4330, %v4356
        %v4375 = vmul.f32 %v4332, %v4357
        %v4376 = vmul.f32 %v4334, %v4358
        %v4377 = vmul.f32 %v4336, %v4359
        %v4378 = vmul.f32 %v4338, %v4360
        %v4379 = vmul.f32 %v4340, %v4361
        %v4380 = vmul.f32 %v4342, %v4362
        %v4381 = vmul.f32 %v4344, %v4363
        %v4382 = vmul.f32 %v4346, %v4364
        %v4383 = vsel %vm4365, %v4356, %v4374
        %v4384 = vsel %vm4366, %v4357, %v4375
        %v4385 = vsel %vm4367, %v4358, %v4376
        %v4386 = vsel %vm4368, %v4359, %v4377
        %v4387 = vsel %vm4369, %v4360, %v4378
        %v4388 = vsel %vm4370, %v4361, %v4379
        %v4389 = vsel %vm4371, %v4362, %v4380
        %v4390 = vsel %vm4372, %v4363, %v4381
        %v4391 = vsel %vm4373, %v4364, %v4382
        %v4392 = vstv %s4290
        %v4393 = vadd.f32 %v4182, %v4392
        %v4394 = vadd.f32 %v4183, %v4392
        %v4395 = vadd.f32 %v4184, %v4392
        %v4396 = vadd.f32 %v4185, %v4392
        %v4397 = vadd.f32 %v4186, %v4392
        %v4398 = vadd.f32 %v4187, %v4392
        %v4399 = vadd.f32 %v4188, %v4392
        %v4400 = vadd.f32 %v4189, %v4392
        %v4401 = vadd.f32 %v4190, %v4392
        %v4402 = vmul.f32 %v4393, -100.0
        %v4403 = vmul.f32 %v4394, -100.0
        %v4404 = vmul.f32 %v4395, -100.0
        %v4405 = vmul.f32 %v4396, -100.0
        %v4406 = vmul.f32 %v4397, -100.0
        %v4407 = vmul.f32 %v4398, -100.0
        %v4408 = vmul.f32 %v4399, -100.0
        %v4409 = vmul.f32 %v4400, -100.0
        %v4410 = vmul.f32 %v4401, -100.0
        %v4411 = vand.u32 2147483647, %v4402
        %v4412 = vand.u32 2147483647, %v4403
        %v4413 = vand.u32 2147483647, %v4404
        %v4414 = vand.u32 2147483647, %v4405
        %v4415 = vand.u32 2147483647, %v4406
        %v4416 = vand.u32 2147483647, %v4407
        %v4417 = vand.u32 2147483647, %v4408
        %v4418 = vand.u32 2147483647, %v4409
        %v4419 = vand.u32 2147483647, %v4410
        %v4420 = vsub.f32 0.0, %v4411
        %v4421 = vsub.f32 0.0, %v4412
        %v4422 = vsub.f32 0.0, %v4413
        %v4423 = vsub.f32 0.0, %v4414
        %v4424 = vsub.f32 0.0, %v4415
        %v4425 = vsub.f32 0.0, %v4416
        %v4426 = vsub.f32 0.0, %v4417
        %v4427 = vsub.f32 0.0, %v4418
        %v4428 = vsub.f32 0.0, %v4419
        %v4429 = vmul.f32 %v4420, 1.442695
        %v4430 = vpow.pop %v4429
        %v4431 = vmul.f32 %v4421, 1.442695
        %v4432 = vpow.pop %v4431
        %v4433 = vmul.f32 %v4422, 1.442695
        %v4434 = vpow.pop %v4433
        %v4435 = vmul.f32 %v4423, 1.442695
        %v4436 = vpow.pop %v4435
        %v4437 = vmul.f32 %v4424, 1.442695
        %v4438 = vpow.pop %v4437
        %v4439 = vmul.f32 %v4425, 1.442695
        %v4440 = vpow.pop %v4439
        %v4441 = vmul.f32 %v4426, 1.442695
        %v4442 = vpow.pop %v4441
        %v4443 = vmul.f32 %v4427, 1.442695
        %v4444 = vpow.pop %v4443
        %v4445 = vmul.f32 %v4428, 1.442695
        %v4446 = vpow.pop %v4445
        %v4447 = vadd.f32 %v4430, 1.0
        %v4448 = vadd.f32 %v4432, 1.0
        %v4449 = vadd.f32 %v4434, 1.0
        %v4450 = vadd.f32 %v4436, 1.0
        %v4451 = vadd.f32 %v4438, 1.0
        %v4452 = vadd.f32 %v4440, 1.0
        %v4453 = vadd.f32 %v4442, 1.0
        %v4454 = vadd.f32 %v4444, 1.0
        %v4455 = vadd.f32 %v4446, 1.0
        %v4456 = vrcp.pop %v4447
        %v4457 = vrcp.pop %v4448
        %v4458 = vrcp.pop %v4449
        %v4459 = vrcp.pop %v4450
        %v4460 = vrcp.pop %v4451
        %v4461 = vrcp.pop %v4452
        %v4462 = vrcp.pop %v4453
        %v4463 = vrcp.pop %v4454
        %v4464 = vrcp.pop %v4455
        %vm4465 = vcmp.ge.f32.partialorder %v4402, 0.0
        %vm4466 = vcmp.ge.f32.partialorder %v4403, 0.0
        %vm4467 = vcmp.ge.f32.partialorder %v4404, 0.0
        %vm4468 = vcmp.ge.f32.partialorder %v4405, 0.0
        %vm4469 = vcmp.ge.f32.partialorder %v4406, 0.0
        %vm4470 = vcmp.ge.f32.partialorder %v4407, 0.0
        %vm4471 = vcmp.ge.f32.partialorder %v4408, 0.0
        %vm4472 = vcmp.ge.f32.partialorder %v4409, 0.0
        %vm4473 = vcmp.ge.f32.partialorder %v4410, 0.0
        %v4474 = vmul.f32 %v4430, %v4456
        %v4475 = vmul.f32 %v4432, %v4457
        %v4476 = vmul.f32 %v4434, %v4458
        %v4477 = vmul.f32 %v4436, %v4459
        %v4478 = vmul.f32 %v4438, %v4460
        %v4479 = vmul.f32 %v4440, %v4461
        %v4480 = vmul.f32 %v4442, %v4462
        %v4481 = vmul.f32 %v4444, %v4463
        %v4482 = vmul.f32 %v4446, %v4464
        %v4483 = vsel %vm4465, %v4456, %v4474
        %v4484 = vsel %vm4466, %v4457, %v4475
        %v4485 = vsel %vm4467, %v4458, %v4476
        %v4486 = vsel %vm4468, %v4459, %v4477
        %v4487 = vsel %vm4469, %v4460, %v4478
        %v4488 = vsel %vm4470, %v4461, %v4479
        %v4489 = vsel %vm4471, %v4462, %v4480
        %v4490 = vsel %vm4472, %v4463, %v4481
        %v4491 = vsel %vm4473, %v4464, %v4482
        %v4492 = vadd.f32 %v4383, %v4483
        %v4493 = vadd.f32 %v4384, %v4484
        %v4494 = vadd.f32 %v4385, %v4485
        %v4495 = vadd.f32 %v4386, %v4486
        %v4496 = vadd.f32 %v4387, %v4487
        %v4497 = vadd.f32 %v4388, %v4488
        %v4498 = vadd.f32 %v4389, %v4489
        %v4499 = vadd.f32 %v4390, %v4490
        %v4500 = vadd.f32 %v4391, %v4491
        %v4501 = vmul.f32 %v4182, %v4492
        %v4502 = vmul.f32 %v4183, %v4493
        %v4503 = vmul.f32 %v4184, %v4494
        %v4504 = vmul.f32 %v4185, %v4495
        %v4505 = vmul.f32 %v4186, %v4496
        %v4506 = vmul.f32 %v4187, %v4497
        %v4507 = vmul.f32 %v4188, %v4498
        %v4508 = vmul.f32 %v4189, %v4499
        %v4509 = vmul.f32 %v4190, %v4500
        %s4510 = scalar_lea.vmem [#allocation2], 144
        %4511 = vst [vmem:[%s4510] sm:$0xff] %v4501
        %4512 = vst [vmem:[%s4510 + $0x8] sm:$0xff] %v4502
        %4513 = vst [vmem:[%s4510 + $0x10] sm:$0xff] %v4503
        %4514 = vst [vmem:[%s4510 + $0x18] sm:$0xff] %v4504
        %4515 = vst [vmem:[%s4510 + $0x20] sm:$0xff] %v4505
        %4516 = vst [vmem:[%s4510 + $0x28] sm:$0xff] %v4506
        %4517 = vst [vmem:[%s4510 + $0x30] sm:$0xff] %v4507
        %4518 = vst [vmem:[%s4510 + $0x38] sm:$0xff] %v4508
        %4519 = vst [vmem:[%s4510 + $0x40] sm:$0xff] %v4509
        %v4520 = vld [vmem:[#allocation11] sm:$0xff]
        %v4521 = vld [vmem:[#allocation11 + $0x8] sm:$0xff]
        %v4522 = vld [vmem:[#allocation11 + $0x10] sm:$0xff]
        %v4523 = vld [vmem:[#allocation11 + $0x18] sm:$0xff]
        %v4524 = vld [vmem:[#allocation11 + $0x20] sm:$0xff]
        %v4525 = vld [vmem:[#allocation11 + $0x28] sm:$0xff]
        %v4526 = vld [vmem:[#allocation11 + $0x30] sm:$0xff]
        %v4527 = vld [vmem:[#allocation11 + $0x38] sm:$0xff]
        %v4528 = vld [vmem:[#allocation11 + $0x40] sm:$0xff]
        %v4529 = vld [vmem:[#allocation11 + $0x48] sm:$0xff]
        %v4530 = vld [vmem:[#allocation11 + $0x50] sm:$0xff]
        %v4531 = vld [vmem:[#allocation11 + $0x58] sm:$0xff]
        %v4532 = vld [vmem:[#allocation11 + $0x60] sm:$0xff]
        %v4533 = vld [vmem:[#allocation11 + $0x68] sm:$0xff]
        %v4534 = vld [vmem:[#allocation11 + $0x70] sm:$0xff]
        %v4535 = vld [vmem:[#allocation11 + $0x78] sm:$0xff]
        %v4536 = vld [vmem:[#allocation11 + $0x80] sm:$0xff]
        %v4537 = vld [vmem:[#allocation11 + $0x88] sm:$0xff]
        %v4538 = vld [vmem:[#allocation11 + $0x90] sm:$0xff]
        %v4539 = vld [vmem:[#allocation11 + $0x98] sm:$0xff]
        %v4540 = vld [vmem:[#allocation11 + $0xa0] sm:$0xff]
        %v4541 = vld [vmem:[#allocation11 + $0xa8] sm:$0xff]
        %v4542 = vld [vmem:[#allocation11 + $0xb0] sm:$0xff]
        %v4543 = vld [vmem:[#allocation11 + $0xb8] sm:$0xff]
        %v4544 = vld [vmem:[#allocation11 + $0xc0] sm:$0xff]
        %v4545 = vld [vmem:[#allocation11 + $0xc8] sm:$0xff]
        %v4546 = vld [vmem:[#allocation11 + $0xd0] sm:$0xff]
        %v4547 = vld [vmem:[#allocation11 + $0xd8] sm:$0xff]
        %v4548 = vld [vmem:[#allocation11 + $0xe0] sm:$0xff]
        %v4549 = vld [vmem:[#allocation11 + $0xe8] sm:$0xff]
        %v4550 = vld [vmem:[#allocation11 + $0xf0] sm:$0xff]
        %v4551 = vld [vmem:[#allocation11 + $0xf8] sm:$0xff]
        %v4552 = vld [vmem:[#allocation11 + $0x100] sm:$0xff]
        %v4553 = vld [vmem:[#allocation11 + $0x108] sm:$0xff]
        %v4554 = vld [vmem:[#allocation11 + $0x110] sm:$0xff]
        %v4555 = vld [vmem:[#allocation11 + $0x118] sm:$0xff]
        %v4556 = vld [vmem:[#allocation11 + $0x120] sm:$0xff]
        %v4557 = vld [vmem:[#allocation11 + $0x128] sm:$0xff]
        %v4558 = vld [vmem:[#allocation11 + $0x130] sm:$0xff]
        %v4559 = vld [vmem:[#allocation11 + $0x138] sm:$0xff]
        %v4560 = vld [vmem:[#allocation11 + $0x140] sm:$0xff]
        %v4561 = vld [vmem:[#allocation11 + $0x148] sm:$0xff]
        %v4562 = vld [vmem:[#allocation11 + $0x150] sm:$0xff]
        %v4563 = vld [vmem:[#allocation11 + $0x158] sm:$0xff]
        %v4564 = vld [vmem:[#allocation11 + $0x160] sm:$0xff]
        %v4565 = vld [vmem:[#allocation11 + $0x168] sm:$0xff]
        %v4566 = vld [vmem:[#allocation11 + $0x170] sm:$0xff]
        %v4567 = vld [vmem:[#allocation11 + $0x178] sm:$0xff]
        %v4568 = vld [vmem:[#allocation11 + $0x180] sm:$0xff]
        %v4569 = vld [vmem:[#allocation11 + $0x188] sm:$0xff]
        %v4570 = vld [vmem:[#allocation11 + $0x190] sm:$0xff]
        %v4571 = vld [vmem:[#allocation11 + $0x198] sm:$0xff]
        %v4572 = vld [vmem:[#allocation11 + $0x1a0] sm:$0xff]
        %v4573 = vld [vmem:[#allocation11 + $0x1a8] sm:$0xff]
        %v4574 = vld [vmem:[#allocation11 + $0x1b0] sm:$0xff]
        %v4575 = vld [vmem:[#allocation11 + $0x1b8] sm:$0xff]
        %v4576 = vld [vmem:[#allocation11 + $0x1c0] sm:$0xff]
        %v4577 = vld [vmem:[#allocation11 + $0x1c8] sm:$0xff]
        %v4578 = vld [vmem:[#allocation11 + $0x1d0] sm:$0xff]
        %v4579 = vld [vmem:[#allocation11 + $0x1d8] sm:$0xff]
        %v4580 = vld [vmem:[#allocation11 + $0x1e0] sm:$0xff]
        %v4581 = vld [vmem:[#allocation11 + $0x1e8] sm:$0xff]
        %v4582 = vld [vmem:[#allocation11 + $0x1f0] sm:$0xff]
        %v4583 = vld [vmem:[#allocation11 + $0x1f8] sm:$0xff]
        %v4584 = vld [vmem:[#allocation11 + $0x200] sm:$0xff]
        %v4585 = vld [vmem:[#allocation11 + $0x208] sm:$0xff]
        %v4586 = vld [vmem:[#allocation11 + $0x210] sm:$0xff]
        %v4587 = vld [vmem:[#allocation11 + $0x218] sm:$0xff]
        %v4588 = vld [vmem:[#allocation11 + $0x220] sm:$0xff]
        %v4589 = vld [vmem:[#allocation11 + $0x228] sm:$0xff]
        %v4590 = vld [vmem:[#allocation11 + $0x230] sm:$0xff]
        %v4591 = vld [vmem:[#allocation11 + $0x238] sm:$0xff]
        %v4592 = vld [vmem:[#allocation11 + $0x240] sm:$0xff]
        %v4593 = vld [vmem:[#allocation11 + $0x248] sm:$0xff]
        %v4594 = vld [vmem:[#allocation11 + $0x250] sm:$0xff]
        %v4595 = vld [vmem:[#allocation11 + $0x258] sm:$0xff]
        %v4596 = vld [vmem:[#allocation11 + $0x260] sm:$0xff]
        %v4597 = vld [vmem:[#allocation11 + $0x268] sm:$0xff]
        %v4598 = vld [vmem:[#allocation11 + $0x270] sm:$0xff]
        %v4599 = vld [vmem:[#allocation11 + $0x278] sm:$0xff]
        %v4600 = vld [vmem:[#allocation11 + $0x280] sm:$0xff]
        %v4601 = vld [vmem:[#allocation11 + $0x288] sm:$0xff]
        %v4602 = vld [vmem:[#allocation11 + $0x290] sm:$0xff]
        %v4603 = vld [vmem:[#allocation11 + $0x298] sm:$0xff]
        %v4604 = vld [vmem:[#allocation11 + $0x2a0] sm:$0xff]
        %v4605 = vld [vmem:[#allocation11 + $0x2a8] sm:$0xff]
        %v4606 = vld [vmem:[#allocation11 + $0x2b0] sm:$0xff]
        %v4607 = vld [vmem:[#allocation11 + $0x2b8] sm:$0xff]
        %v4608 = vld [vmem:[#allocation11 + $0x2c0] sm:$0xff]
        %v4609 = vld [vmem:[#allocation11 + $0x2c8] sm:$0xff]
        %v4610 = vld [vmem:[#allocation11 + $0x2d0] sm:$0xff]
        %v4611 = vld [vmem:[#allocation11 + $0x2d8] sm:$0xff]
        %v4612 = vld [vmem:[#allocation11 + $0x2e0] sm:$0xff]
        %v4613 = vld [vmem:[#allocation11 + $0x2e8] sm:$0xff]
        %v4614 = vld [vmem:[#allocation11 + $0x2f0] sm:$0xff]
        %v4615 = vld [vmem:[#allocation11 + $0x2f8] sm:$0xff]
        %v4616 = vld [vmem:[#allocation11 + $0x300] sm:$0xff]
        %v4617 = vld [vmem:[#allocation11 + $0x308] sm:$0xff]
        %v4618 = vld [vmem:[#allocation11 + $0x310] sm:$0xff]
        %v4619 = vld [vmem:[#allocation11 + $0x318] sm:$0xff]
        %v4620 = vld [vmem:[#allocation11 + $0x320] sm:$0xff]
        %v4621 = vld [vmem:[#allocation11 + $0x328] sm:$0xff]
        %v4622 = vld [vmem:[#allocation11 + $0x330] sm:$0xff]
        %v4623 = vld [vmem:[#allocation11 + $0x338] sm:$0xff]
        %v4624 = vld [vmem:[#allocation11 + $0x340] sm:$0xff]
        %v4625 = vld [vmem:[#allocation11 + $0x348] sm:$0xff]
        %v4626 = vld [vmem:[#allocation11 + $0x350] sm:$0xff]
        %v4627 = vld [vmem:[#allocation11 + $0x358] sm:$0xff]
        %v4628 = vld [vmem:[#allocation11 + $0x360] sm:$0xff]
        %v4629 = vld [vmem:[#allocation11 + $0x368] sm:$0xff]
        %v4630 = vld [vmem:[#allocation11 + $0x370] sm:$0xff]
        %v4631 = vld [vmem:[#allocation11 + $0x378] sm:$0xff]
        %v4632 = vld [vmem:[#allocation11 + $0x380] sm:$0xff]
        %v4633 = vld [vmem:[#allocation11 + $0x388] sm:$0xff]
        %v4634 = vld [vmem:[#allocation11 + $0x390] sm:$0xff]
        %v4635 = vld [vmem:[#allocation11 + $0x398] sm:$0xff]
        %v4636 = vld [vmem:[#allocation11 + $0x3a0] sm:$0xff]
        %v4637 = vld [vmem:[#allocation11 + $0x3a8] sm:$0xff]
        %v4638 = vld [vmem:[#allocation11 + $0x3b0] sm:$0xff]
        %v4639 = vld [vmem:[#allocation11 + $0x3b8] sm:$0xff]
        %v4640 = vld [vmem:[#allocation11 + $0x3c0] sm:$0xff]
        %v4641 = vld [vmem:[#allocation11 + $0x3c8] sm:$0xff]
        %v4642 = vld [vmem:[#allocation11 + $0x3d0] sm:$0xff]
        %v4643 = vld [vmem:[#allocation11 + $0x3d8] sm:$0xff]
        %v4644 = vld [vmem:[#allocation11 + $0x3e0] sm:$0xff]
        %v4645 = vld [vmem:[#allocation11 + $0x3e8] sm:$0xff]
        %v4646 = vld [vmem:[#allocation11 + $0x3f0] sm:$0xff]
        %v4647 = vld [vmem:[#allocation11 + $0x3f8] sm:$0xff]
        %v4648 = vld [vmem:[#allocation11 + $0x400] sm:$0xff]
        %v4649 = vld [vmem:[#allocation11 + $0x408] sm:$0xff]
        %v4650 = vld [vmem:[#allocation11 + $0x410] sm:$0xff]
        %v4651 = vld [vmem:[#allocation11 + $0x418] sm:$0xff]
        %v4652 = vld [vmem:[#allocation11 + $0x420] sm:$0xff]
        %v4653 = vld [vmem:[#allocation11 + $0x428] sm:$0xff]
        %v4654 = vld [vmem:[#allocation11 + $0x430] sm:$0xff]
        %v4655 = vld [vmem:[#allocation11 + $0x438] sm:$0xff]
        %v4656 = vld [vmem:[#allocation11 + $0x440] sm:$0xff]
        %v4657 = vld [vmem:[#allocation11 + $0x448] sm:$0xff]
        %v4658 = vld [vmem:[#allocation11 + $0x450] sm:$0xff]
        %v4659 = vld [vmem:[#allocation11 + $0x458] sm:$0xff]
        %v4660 = vld [vmem:[#allocation11 + $0x460] sm:$0xff]
        %v4661 = vld [vmem:[#allocation11 + $0x468] sm:$0xff]
        %v4662 = vld [vmem:[#allocation11 + $0x470] sm:$0xff]
        %v4663 = vld [vmem:[#allocation11 + $0x478] sm:$0xff]
        %4664 = vmatprep.subr.mxu0 0.0
        %4665 = vmatpush1.msra.mxu0 %v4520
        %4666 = vmatprep.subr.mxu0 0.0
        %4667 = vmatpush1.msra.mxu0 %v4521
        %4668 = vmatprep.subr.mxu0 0.0
        %4669 = vmatpush1.msra.mxu0 %v4522
        %4670 = vmatprep.subr.mxu0 0.0
        %4671 = vmatpush1.msra.mxu0 %v4523
        %4672 = vmatprep.subr.mxu0 0.0
        %4673 = vmatpush1.msra.mxu0 %v4524
        %4674 = vmatprep.subr.mxu0 0.0
        %4675 = vmatpush1.msra.mxu0 %v4525
        %4676 = vmatprep.subr.mxu0 0.0
        %4677 = vmatpush1.msra.mxu0 %v4526
        %4678 = vmatprep.subr.mxu0 0.0
        %4679 = vmatpush1.msra.mxu0 %v4527
        %4680 = vmatprep.subr.mxu0 0.0
        %4681 = vmatpush1.msra.mxu0 %v4528
        %4682 = vmatprep.subr.mxu0 0.0
        %4683 = vmatpush1.msra.mxu0 %v4529
        %4684 = vmatprep.subr.mxu0 0.0
        %4685 = vmatpush1.msra.mxu0 %v4530
        %4686 = vmatprep.subr.mxu0 0.0
        %4687 = vmatpush1.msra.mxu0 %v4531
        %4688 = vmatprep.subr.mxu0 0.0
        %4689 = vmatpush1.msra.mxu0 %v4532
        %4690 = vmatprep.subr.mxu0 0.0
        %4691 = vmatpush1.msra.mxu0 %v4533
        %4692 = vmatprep.subr.mxu0 0.0
        %4693 = vmatpush1.msra.mxu0 %v4534
        %4694 = vmatprep.subr.mxu0 0.0
        %4695 = vmatpush1.msra.mxu0 %v4535
        %4696 = vmatprep.subr.mxu0 0.0
        %4697 = vmatpush1.msra.mxu0 %v4536
        %4698 = vmatprep.subr.mxu0 0.0
        %4699 = vmatpush1.msra.mxu0 %v4537
        %4700 = vmatprep.subr.mxu0 0.0
        %4701 = vmatpush1.msra.mxu0 %v4538
        %4702 = vmatprep.subr.mxu0 0.0
        %4703 = vmatpush1.msra.mxu0 %v4539
        %4704 = vmatprep.subr.mxu0 0.0
        %4705 = vmatpush1.msra.mxu0 %v4540
        %4706 = vmatprep.subr.mxu0 0.0
        %4707 = vmatpush1.msra.mxu0 %v4541
        %4708 = vmatprep.subr.mxu0 0.0
        %4709 = vmatpush1.msra.mxu0 %v4542
        %4710 = vmatprep.subr.mxu0 0.0
        %4711 = vmatpush1.msra.mxu0 %v4543
        %4712 = vmatprep.subr.mxu0 0.0
        %4713 = vmatpush1.msra.mxu0 %v4544
        %4714 = vmatprep.subr.mxu0 0.0
        %4715 = vmatpush1.msra.mxu0 %v4545
        %4716 = vmatprep.subr.mxu0 0.0
        %4717 = vmatpush1.msra.mxu0 %v4546
        %4718 = vmatprep.subr.mxu0 0.0
        %4719 = vmatpush1.msra.mxu0 %v4547
        %4720 = vmatprep.subr.mxu0 0.0
        %4721 = vmatpush1.msra.mxu0 %v4548
        %4722 = vmatprep.subr.mxu0 0.0
        %4723 = vmatpush1.msra.mxu0 %v4549
        %4724 = vmatprep.subr.mxu0 0.0
        %4725 = vmatpush1.msra.mxu0 %v4550
        %4726 = vmatprep.subr.mxu0 0.0
        %4727 = vmatpush1.msra.mxu0 %v4551
        %4728 = vmatprep.mubr.f32.mxu0 %v4502
        %4729 = vmatmul.mubr.f32.gmra.mrb[0].mxu0 %v4501
        %v4730 = vpop.f32.mrb[0].mxu0
        %v4731 = vadd.f32 0.0, %v4730
        %v4732 = vpop.f32.mrb[0].mxu0
        %4733 = vdwg.mxu0
        %4734 = vmatprep.subr.mxu0 0.0
        %4735 = vmatpush1.msra.mxu0 %v4552
        %4736 = vmatprep.subr.mxu0 0.0
        %4737 = vmatpush1.msra.mxu0 %v4553
        %4738 = vmatprep.subr.mxu0 0.0
        %4739 = vmatpush1.msra.mxu0 %v4554
        %4740 = vmatprep.subr.mxu0 0.0
        %4741 = vmatpush1.msra.mxu0 %v4555
        %4742 = vmatprep.subr.mxu0 0.0
        %4743 = vmatpush1.msra.mxu0 %v4556
        %4744 = vmatprep.subr.mxu0 0.0
        %4745 = vmatpush1.msra.mxu0 %v4557
        %4746 = vmatprep.subr.mxu0 0.0
        %4747 = vmatpush1.msra.mxu0 %v4558
        %4748 = vmatprep.subr.mxu0 0.0
        %4749 = vmatpush1.msra.mxu0 %v4559
        %4750 = vmatprep.subr.mxu0 0.0
        %4751 = vmatpush1.msra.mxu0 %v4560
        %4752 = vmatprep.subr.mxu0 0.0
        %4753 = vmatpush1.msra.mxu0 %v4561
        %4754 = vmatprep.subr.mxu0 0.0
        %4755 = vmatpush1.msra.mxu0 %v4562
        %4756 = vmatprep.subr.mxu0 0.0
        %4757 = vmatpush1.msra.mxu0 %v4563
        %4758 = vmatprep.subr.mxu0 0.0
        %4759 = vmatpush1.msra.mxu0 %v4564
        %4760 = vmatprep.subr.mxu0 0.0
        %4761 = vmatpush1.msra.mxu0 %v4565
        %4762 = vmatprep.subr.mxu0 0.0
        %4763 = vmatpush1.msra.mxu0 %v4566
        %4764 = vmatprep.subr.mxu0 0.0
        %4765 = vmatpush1.msra.mxu0 %v4567
        %4766 = vmatprep.subr.mxu0 0.0
        %4767 = vmatpush1.msra.mxu0 %v4568
        %4768 = vmatprep.subr.mxu0 0.0
        %4769 = vmatpush1.msra.mxu0 %v4569
        %4770 = vmatprep.subr.mxu0 0.0
        %4771 = vmatpush1.msra.mxu0 %v4570
        %4772 = vmatprep.subr.mxu0 0.0
        %4773 = vmatpush1.msra.mxu0 %v4571
        %4774 = vmatprep.subr.mxu0 0.0
        %4775 = vmatpush1.msra.mxu0 %v4572
        %4776 = vmatprep.subr.mxu0 0.0
        %4777 = vmatpush1.msra.mxu0 %v4573
        %4778 = vmatprep.subr.mxu0 0.0
        %4779 = vmatpush1.msra.mxu0 %v4574
        %4780 = vmatprep.subr.mxu0 0.0
        %4781 = vmatpush1.msra.mxu0 %v4575
        %4782 = vmatprep.subr.mxu0 0.0
        %4783 = vmatpush1.msra.mxu0 %v4576
        %4784 = vmatprep.subr.mxu0 0.0
        %4785 = vmatpush1.msra.mxu0 %v4577
        %4786 = vmatprep.subr.mxu0 0.0
        %4787 = vmatpush1.msra.mxu0 %v4578
        %4788 = vmatprep.subr.mxu0 0.0
        %4789 = vmatpush1.msra.mxu0 %v4579
        %4790 = vmatprep.subr.mxu0 0.0
        %4791 = vmatpush1.msra.mxu0 %v4580
        %4792 = vmatprep.subr.mxu0 0.0
        %4793 = vmatpush1.msra.mxu0 %v4581
        %4794 = vmatprep.subr.mxu0 0.0
        %4795 = vmatpush1.msra.mxu0 %v4582
        %4796 = vmatprep.subr.mxu0 0.0
        %4797 = vmatpush1.msra.mxu0 %v4583
        %4798 = vmatprep.mubr.f32.mxu0 %v4504
        %4799 = vmatmul.mubr.f32.gmra.mrb[0].mxu0 %v4503
        %v4800 = vpop.f32.mrb[0].mxu0
        %v4801 = vadd.f32 %v4731, %v4800
        %v4802 = vpop.f32.mrb[0].mxu0
        %4803 = vdwg.mxu0
        %4804 = vmatprep.subr.mxu0 0.0
        %4805 = vmatpush1.msra.mxu0 %v4584
        %4806 = vmatprep.subr.mxu0 0.0
        %4807 = vmatpush1.msra.mxu0 %v4585
        %4808 = vmatprep.subr.mxu0 0.0
        %4809 = vmatpush1.msra.mxu0 %v4586
        %4810 = vmatprep.subr.mxu0 0.0
        %4811 = vmatpush1.msra.mxu0 %v4587
        %4812 = vmatprep.subr.mxu0 0.0
        %4813 = vmatpush1.msra.mxu0 %v4588
        %4814 = vmatprep.subr.mxu0 0.0
        %4815 = vmatpush1.msra.mxu0 %v4589
        %4816 = vmatprep.subr.mxu0 0.0
        %4817 = vmatpush1.msra.mxu0 %v4590
        %4818 = vmatprep.subr.mxu0 0.0
        %4819 = vmatpush1.msra.mxu0 %v4591
        %4820 = vmatprep.subr.mxu0 0.0
        %4821 = vmatpush1.msra.mxu0 %v4592
        %4822 = vmatprep.subr.mxu0 0.0
        %4823 = vmatpush1.msra.mxu0 %v4593
        %4824 = vmatprep.subr.mxu0 0.0
        %4825 = vmatpush1.msra.mxu0 %v4594
        %4826 = vmatprep.subr.mxu0 0.0
        %4827 = vmatpush1.msra.mxu0 %v4595
        %4828 = vmatprep.subr.mxu0 0.0
        %4829 = vmatpush1.msra.mxu0 %v4596
        %4830 = vmatprep.subr.mxu0 0.0
        %4831 = vmatpush1.msra.mxu0 %v4597
        %4832 = vmatprep.subr.mxu0 0.0
        %4833 = vmatpush1.msra.mxu0 %v4598
        %4834 = vmatprep.subr.mxu0 0.0
        %4835 = vmatpush1.msra.mxu0 %v4599
        %4836 = vmatprep.subr.mxu0 0.0
        %4837 = vmatpush1.msra.mxu0 %v4600
        %4838 = vmatprep.subr.mxu0 0.0
        %4839 = vmatpush1.msra.mxu0 %v4601
        %4840 = vmatprep.subr.mxu0 0.0
        %4841 = vmatpush1.msra.mxu0 %v4602
        %4842 = vmatprep.subr.mxu0 0.0
        %4843 = vmatpush1.msra.mxu0 %v4603
        %4844 = vmatprep.subr.mxu0 0.0
        %4845 = vmatpush1.msra.mxu0 %v4604
        %4846 = vmatprep.subr.mxu0 0.0
        %4847 = vmatpush1.msra.mxu0 %v4605
        %4848 = vmatprep.subr.mxu0 0.0
        %4849 = vmatpush1.msra.mxu0 %v4606
        %4850 = vmatprep.subr.mxu0 0.0
        %4851 = vmatpush1.msra.mxu0 %v4607
        %4852 = vmatprep.subr.mxu0 0.0
        %4853 = vmatpush1.msra.mxu0 %v4608
        %4854 = vmatprep.subr.mxu0 0.0
        %4855 = vmatpush1.msra.mxu0 %v4609
        %4856 = vmatprep.subr.mxu0 0.0
        %4857 = vmatpush1.msra.mxu0 %v4610
        %4858 = vmatprep.subr.mxu0 0.0
        %4859 = vmatpush1.msra.mxu0 %v4611
        %4860 = vmatprep.subr.mxu0 0.0
        %4861 = vmatpush1.msra.mxu0 %v4612
        %4862 = vmatprep.subr.mxu0 0.0
        %4863 = vmatpush1.msra.mxu0 %v4613
        %4864 = vmatprep.subr.mxu0 0.0
        %4865 = vmatpush1.msra.mxu0 %v4614
        %4866 = vmatprep.subr.mxu0 0.0
        %4867 = vmatpush1.msra.mxu0 %v4615
        %4868 = vmatprep.mubr.f32.mxu0 %v4506
        %4869 = vmatmul.mubr.f32.gmra.mrb[0].mxu0 %v4505
        %v4870 = vpop.f32.mrb[0].mxu0
        %v4871 = vadd.f32 %v4801, %v4870
        %v4872 = vpop.f32.mrb[0].mxu0
        %4873 = vdwg.mxu0
        %4874 = vmatprep.subr.mxu0 0.0
        %4875 = vmatpush1.msra.mxu0 %v4616
        %4876 = vmatprep.subr.mxu0 0.0
        %4877 = vmatpush1.msra.mxu0 %v4617
        %4878 = vmatprep.subr.mxu0 0.0
        %4879 = vmatpush1.msra.mxu0 %v4618
        %4880 = vmatprep.subr.mxu0 0.0
        %4881 = vmatpush1.msra.mxu0 %v4619
        %4882 = vmatprep.subr.mxu0 0.0
        %4883 = vmatpush1.msra.mxu0 %v4620
        %4884 = vmatprep.subr.mxu0 0.0
        %4885 = vmatpush1.msra.mxu0 %v4621
        %4886 = vmatprep.subr.mxu0 0.0
        %4887 = vmatpush1.msra.mxu0 %v4622
        %4888 = vmatprep.subr.mxu0 0.0
        %4889 = vmatpush1.msra.mxu0 %v4623
        %4890 = vmatprep.subr.mxu0 0.0
        %4891 = vmatpush1.msra.mxu0 %v4624
        %4892 = vmatprep.subr.mxu0 0.0
        %4893 = vmatpush1.msra.mxu0 %v4625
        %4894 = vmatprep.subr.mxu0 0.0
        %4895 = vmatpush1.msra.mxu0 %v4626
        %4896 = vmatprep.subr.mxu0 0.0
        %4897 = vmatpush1.msra.mxu0 %v4627
        %4898 = vmatprep.subr.mxu0 0.0
        %4899 = vmatpush1.msra.mxu0 %v4628
        %4900 = vmatprep.subr.mxu0 0.0
        %4901 = vmatpush1.msra.mxu0 %v4629
        %4902 = vmatprep.subr.mxu0 0.0
        %4903 = vmatpush1.msra.mxu0 %v4630
        %4904 = vmatprep.subr.mxu0 0.0
        %4905 = vmatpush1.msra.mxu0 %v4631
        %4906 = vmatprep.subr.mxu0 0.0
        %4907 = vmatpush1.msra.mxu0 %v4632
        %4908 = vmatprep.subr.mxu0 0.0
        %4909 = vmatpush1.msra.mxu0 %v4633
        %4910 = vmatprep.subr.mxu0 0.0
        %4911 = vmatpush1.msra.mxu0 %v4634
        %4912 = vmatprep.subr.mxu0 0.0
        %4913 = vmatpush1.msra.mxu0 %v4635
        %4914 = vmatprep.subr.mxu0 0.0
        %4915 = vmatpush1.msra.mxu0 %v4636
        %4916 = vmatprep.subr.mxu0 0.0
        %4917 = vmatpush1.msra.mxu0 %v4637
        %4918 = vmatprep.subr.mxu0 0.0
        %4919 = vmatpush1.msra.mxu0 %v4638
        %4920 = vmatprep.subr.mxu0 0.0
        %4921 = vmatpush1.msra.mxu0 %v4639
        %4922 = vmatprep.subr.mxu0 0.0
        %4923 = vmatpush1.msra.mxu0 %v4640
        %4924 = vmatprep.subr.mxu0 0.0
        %4925 = vmatpush1.msra.mxu0 %v4641
        %4926 = vmatprep.subr.mxu0 0.0
        %4927 = vmatpush1.msra.mxu0 %v4642
        %4928 = vmatprep.subr.mxu0 0.0
        %4929 = vmatpush1.msra.mxu0 %v4643
        %4930 = vmatprep.subr.mxu0 0.0
        %4931 = vmatpush1.msra.mxu0 %v4644
        %4932 = vmatprep.subr.mxu0 0.0
        %4933 = vmatpush1.msra.mxu0 %v4645
        %4934 = vmatprep.subr.mxu0 0.0
        %4935 = vmatpush1.msra.mxu0 %v4646
        %4936 = vmatprep.subr.mxu0 0.0
        %4937 = vmatpush1.msra.mxu0 %v4647
        %4938 = vmatprep.mubr.f32.mxu0 %v4508
        %4939 = vmatmul.mubr.f32.gmra.mrb[0].mxu0 %v4507
        %v4940 = vpop.f32.mrb[0].mxu0
        %v4941 = vadd.f32 %v4871, %v4940
        %v4942 = vpop.f32.mrb[0].mxu0
        %4943 = vdwg.mxu0
        %4944 = vmatprep.subr.mxu0 0.0
        %4945 = vmatpush1.msra.mxu0 %v4648
        %4946 = vmatprep.subr.mxu0 0.0
        %4947 = vmatpush1.msra.mxu0 %v4649
        %4948 = vmatprep.subr.mxu0 0.0
        %4949 = vmatpush1.msra.mxu0 %v4650
        %4950 = vmatprep.subr.mxu0 0.0
        %4951 = vmatpush1.msra.mxu0 %v4651
        %4952 = vmatprep.subr.mxu0 0.0
        %4953 = vmatpush1.msra.mxu0 %v4652
        %4954 = vmatprep.subr.mxu0 0.0
        %4955 = vmatpush1.msra.mxu0 %v4653
        %4956 = vmatprep.subr.mxu0 0.0
        %4957 = vmatpush1.msra.mxu0 %v4654
        %4958 = vmatprep.subr.mxu0 0.0
        %4959 = vmatpush1.msra.mxu0 %v4655
        %4960 = vmatprep.subr.mxu0 0.0
        %4961 = vmatpush1.msra.mxu0 %v4656
        %4962 = vmatprep.subr.mxu0 0.0
        %4963 = vmatpush1.msra.mxu0 %v4657
        %4964 = vmatprep.subr.mxu0 0.0
        %4965 = vmatpush1.msra.mxu0 %v4658
        %4966 = vmatprep.subr.mxu0 0.0
        %4967 = vmatpush1.msra.mxu0 %v4659
        %4968 = vmatprep.subr.mxu0 0.0
        %4969 = vmatpush1.msra.mxu0 %v4660
        %4970 = vmatprep.subr.mxu0 0.0
        %4971 = vmatpush1.msra.mxu0 %v4661
        %4972 = vmatprep.subr.mxu0 0.0
        %4973 = vmatpush1.msra.mxu0 %v4662
        %4974 = vmatprep.subr.mxu0 0.0
        %4975 = vmatpush1.msra.mxu0 %v4663
        %4976 = vmatprep.subr.mxu0 0.0
        %4977 = vmatpush1.msra.mxu0 0.0
        %4978 = vmatprep.subr.mxu0 0.0
        %4979 = vmatpush1.msra.mxu0 0.0
        %4980 = vmatprep.subr.mxu0 0.0
        %4981 = vmatpush1.msra.mxu0 0.0
        %4982 = vmatprep.subr.mxu0 0.0
        %4983 = vmatpush1.msra.mxu0 0.0
        %4984 = vmatprep.subr.mxu0 0.0
        %4985 = vmatpush1.msra.mxu0 0.0
        %4986 = vmatprep.subr.mxu0 0.0
        %4987 = vmatpush1.msra.mxu0 0.0
        %4988 = vmatprep.subr.mxu0 0.0
        %4989 = vmatpush1.msra.mxu0 0.0
        %4990 = vmatprep.subr.mxu0 0.0
        %4991 = vmatpush1.msra.mxu0 0.0
        %4992 = vmatprep.subr.mxu0 0.0
        %4993 = vmatpush1.msra.mxu0 0.0
        %4994 = vmatprep.subr.mxu0 0.0
        %4995 = vmatpush1.msra.mxu0 0.0
        %4996 = vmatprep.subr.mxu0 0.0
        %4997 = vmatpush1.msra.mxu0 0.0
        %4998 = vmatprep.subr.mxu0 0.0
        %4999 = vmatpush1.msra.mxu0 0.0
        %5000 = vmatprep.subr.mxu0 0.0
        %5001 = vmatpush1.msra.mxu0 0.0
        %5002 = vmatprep.subr.mxu0 0.0
        %5003 = vmatpush1.msra.mxu0 0.0
        %5004 = vmatprep.subr.mxu0 0.0
        %5005 = vmatpush1.msra.mxu0 0.0
        %5006 = vmatprep.subr.mxu0 0.0
        %5007 = vmatpush1.msra.mxu0 0.0
        %5008 = vmatprep.mubr.f32.mxu0 0.0
        %5009 = vmatmul.mubr.f32.gmra.mrb[0].mxu0 %v4509
        %v5010 = vpop.f32.mrb[0].mxu0
        %v5011 = vadd.f32 %v4941, %v5010
        %v5012 = vpop.f32.mrb[0].mxu0
        %5013 = vdwg.mxu0
        %5014 = vst [vmem:[%s496] sm:$0xff] %v5011
        %s5015 = sld [smem:[#allocation13 + $0x81]]
        %s5016 = sld [smem:[#allocation15 + $0x81]]
        %v5017 = vstv %s5016
        %v5018 = vsub.f32 %v4281, %v5017
        %v5019 = vsub.f32 %v4282, %v5017
        %v5020 = vsub.f32 %v4283, %v5017
        %v5021 = vsub.f32 %v4284, %v5017
        %v5022 = vsub.f32 %v4285, %v5017
        %v5023 = vsub.f32 %v4286, %v5017
        %v5024 = vsub.f32 %v4287, %v5017
        %v5025 = vsub.f32 %v4288, %v5017
        %v5026 = vsub.f32 %v4289, %v5017
        %v5027 = vmul.f32 %v5018, 100.0
        %v5028 = vmul.f32 %v5019, 100.0
        %v5029 = vmul.f32 %v5020, 100.0
        %v5030 = vmul.f32 %v5021, 100.0
        %v5031 = vmul.f32 %v5022, 100.0
        %v5032 = vmul.f32 %v5023, 100.0
        %v5033 = vmul.f32 %v5024, 100.0
        %v5034 = vmul.f32 %v5025, 100.0
        %v5035 = vmul.f32 %v5026, 100.0
        %v5036 = vand.u32 2147483647, %v5027
        %v5037 = vand.u32 2147483647, %v5028
        %v5038 = vand.u32 2147483647, %v5029
        %v5039 = vand.u32 2147483647, %v5030
        %v5040 = vand.u32 2147483647, %v5031
        %v5041 = vand.u32 2147483647, %v5032
        %v5042 = vand.u32 2147483647, %v5033
        %v5043 = vand.u32 2147483647, %v5034
        %v5044 = vand.u32 2147483647, %v5035
        %v5045 = vsub.f32 0.0, %v5036
        %v5046 = vsub.f32 0.0, %v5037
        %v5047 = vsub.f32 0.0, %v5038
        %v5048 = vsub.f32 0.0, %v5039
        %v5049 = vsub.f32 0.0, %v5040
        %v5050 = vsub.f32 0.0, %v5041
        %v5051 = vsub.f32 0.0, %v5042
        %v5052 = vsub.f32 0.0, %v5043
        %v5053 = vsub.f32 0.0, %v5044
        %v5054 = vmul.f32 %v5045, 1.442695
        %v5055 = vpow.pop %v5054
        %v5056 = vmul.f32 %v5046, 1.442695
        %v5057 = vpow.pop %v5056
        %v5058 = vmul.f32 %v5047, 1.442695
        %v5059 = vpow.pop %v5058
        %v5060 = vmul.f32 %v5048, 1.442695
        %v5061 = vpow.pop %v5060
        %v5062 = vmul.f32 %v5049, 1.442695
        %v5063 = vpow.pop %v5062
        %v5064 = vmul.f32 %v5050, 1.442695
        %v5065 = vpow.pop %v5064
        %v5066 = vmul.f32 %v5051, 1.442695
        %v5067 = vpow.pop %v5066
        %v5068 = vmul.f32 %v5052, 1.442695
        %v5069 = vpow.pop %v5068
        %v5070 = vmul.f32 %v5053, 1.442695
        %v5071 = vpow.pop %v5070
        %v5072 = vadd.f32 %v5055, 1.0
        %v5073 = vadd.f32 %v5057, 1.0
        %v5074 = vadd.f32 %v5059, 1.0
        %v5075 = vadd.f32 %v5061, 1.0
        %v5076 = vadd.f32 %v5063, 1.0
        %v5077 = vadd.f32 %v5065, 1.0
        %v5078 = vadd.f32 %v5067, 1.0
        %v5079 = vadd.f32 %v5069, 1.0
        %v5080 = vadd.f32 %v5071, 1.0
        %v5081 = vrcp.pop %v5072
        %v5082 = vrcp.pop %v5073
        %v5083 = vrcp.pop %v5074
        %v5084 = vrcp.pop %v5075
        %v5085 = vrcp.pop %v5076
        %v5086 = vrcp.pop %v5077
        %v5087 = vrcp.pop %v5078
        %v5088 = vrcp.pop %v5079
        %v5089 = vrcp.pop %v5080
        %vm5090 = vcmp.ge.f32.partialorder %v5027, 0.0
        %vm5091 = vcmp.ge.f32.partialorder %v5028, 0.0
        %vm5092 = vcmp.ge.f32.partialorder %v5029, 0.0
        %vm5093 = vcmp.ge.f32.partialorder %v5030, 0.0
        %vm5094 = vcmp.ge.f32.partialorder %v5031, 0.0
        %vm5095 = vcmp.ge.f32.partialorder %v5032, 0.0
        %vm5096 = vcmp.ge.f32.partialorder %v5033, 0.0
        %vm5097 = vcmp.ge.f32.partialorder %v5034, 0.0
        %vm5098 = vcmp.ge.f32.partialorder %v5035, 0.0
        %v5099 = vmul.f32 %v5055, %v5081
        %v5100 = vmul.f32 %v5057, %v5082
        %v5101 = vmul.f32 %v5059, %v5083
        %v5102 = vmul.f32 %v5061, %v5084
        %v5103 = vmul.f32 %v5063, %v5085
        %v5104 = vmul.f32 %v5065, %v5086
        %v5105 = vmul.f32 %v5067, %v5087
        %v5106 = vmul.f32 %v5069, %v5088
        %v5107 = vmul.f32 %v5071, %v5089
        %v5108 = vsel %vm5090, %v5081, %v5099
        %v5109 = vsel %vm5091, %v5082, %v5100
        %v5110 = vsel %vm5092, %v5083, %v5101
        %v5111 = vsel %vm5093, %v5084, %v5102
        %v5112 = vsel %vm5094, %v5085, %v5103
        %v5113 = vsel %vm5095, %v5086, %v5104
        %v5114 = vsel %vm5096, %v5087, %v5105
        %v5115 = vsel %vm5097, %v5088, %v5106
        %v5116 = vsel %vm5098, %v5089, %v5107
        %v5117 = vstv %s5015
        %v5118 = vadd.f32 %v4281, %v5117
        %v5119 = vadd.f32 %v4282, %v5117
        %v5120 = vadd.f32 %v4283, %v5117
        %v5121 = vadd.f32 %v4284, %v5117
        %v5122 = vadd.f32 %v4285, %v5117
        %v5123 = vadd.f32 %v4286, %v5117
        %v5124 = vadd.f32 %v4287, %v5117
        %v5125 = vadd.f32 %v4288, %v5117
        %v5126 = vadd.f32 %v4289, %v5117
        %v5127 = vmul.f32 %v5118, -100.0
        %v5128 = vmul.f32 %v5119, -100.0
        %v5129 = vmul.f32 %v5120, -100.0
        %v5130 = vmul.f32 %v5121, -100.0
        %v5131 = vmul.f32 %v5122, -100.0
        %v5132 = vmul.f32 %v5123, -100.0
        %v5133 = vmul.f32 %v5124, -100.0
        %v5134 = vmul.f32 %v5125, -100.0
        %v5135 = vmul.f32 %v5126, -100.0
        %v5136 = vand.u32 2147483647, %v5127
        %v5137 = vand.u32 2147483647, %v5128
        %v5138 = vand.u32 2147483647, %v5129
        %v5139 = vand.u32 2147483647, %v5130
        %v5140 = vand.u32 2147483647, %v5131
        %v5141 = vand.u32 2147483647, %v5132
        %v5142 = vand.u32 2147483647, %v5133
        %v5143 = vand.u32 2147483647, %v5134
        %v5144 = vand.u32 2147483647, %v5135
        %v5145 = vsub.f32 0.0, %v5136
        %v5146 = vsub.f32 0.0, %v5137
        %v5147 = vsub.f32 0.0, %v5138
        %v5148 = vsub.f32 0.0, %v5139
        %v5149 = vsub.f32 0.0, %v5140
        %v5150 = vsub.f32 0.0, %v5141
        %v5151 = vsub.f32 0.0, %v5142
        %v5152 = vsub.f32 0.0, %v5143
        %v5153 = vsub.f32 0.0, %v5144
        %v5154 = vmul.f32 %v5145, 1.442695
        %v5155 = vpow.pop %v5154
        %v5156 = vmul.f32 %v5146, 1.442695
        %v5157 = vpow.pop %v5156
        %v5158 = vmul.f32 %v5147, 1.442695
        %v5159 = vpow.pop %v5158
        %v5160 = vmul.f32 %v5148, 1.442695
        %v5161 = vpow.pop %v5160
        %v5162 = vmul.f32 %v5149, 1.442695
        %v5163 = vpow.pop %v5162
        %v5164 = vmul.f32 %v5150, 1.442695
        %v5165 = vpow.pop %v5164
        %v5166 = vmul.f32 %v5151, 1.442695
        %v5167 = vpow.pop %v5166
        %v5168 = vmul.f32 %v5152, 1.442695
        %v5169 = vpow.pop %v5168
        %v5170 = vmul.f32 %v5153, 1.442695
        %v5171 = vpow.pop %v5170
        %v5172 = vadd.f32 %v5155, 1.0
        %v5173 = vadd.f32 %v5157, 1.0
        %v5174 = vadd.f32 %v5159, 1.0
        %v5175 = vadd.f32 %v5161, 1.0
        %v5176 = vadd.f32 %v5163, 1.0
        %v5177 = vadd.f32 %v5165, 1.0
        %v5178 = vadd.f32 %v5167, 1.0
        %v5179 = vadd.f32 %v5169, 1.0
        %v5180 = vadd.f32 %v5171, 1.0
        %v5181 = vrcp.pop %v5172
        %v5182 = vrcp.pop %v5173
        %v5183 = vrcp.pop %v5174
        %v5184 = vrcp.pop %v5175
        %v5185 = vrcp.pop %v5176
        %v5186 = vrcp.pop %v5177
        %v5187 = vrcp.pop %v5178
        %v5188 = vrcp.pop %v5179
        %v5189 = vrcp.pop %v5180
        %vm5190 = vcmp.ge.f32.partialorder %v5127, 0.0
        %vm5191 = vcmp.ge.f32.partialorder %v5128, 0.0
        %vm5192 = vcmp.ge.f32.partialorder %v5129, 0.0
        %vm5193 = vcmp.ge.f32.partialorder %v5130, 0.0
        %vm5194 = vcmp.ge.f32.partialorder %v5131, 0.0
        %vm5195 = vcmp.ge.f32.partialorder %v5132, 0.0
        %vm5196 = vcmp.ge.f32.partialorder %v5133, 0.0
        %vm5197 = vcmp.ge.f32.partialorder %v5134, 0.0
        %vm5198 = vcmp.ge.f32.partialorder %v5135, 0.0
        %v5199 = vmul.f32 %v5155, %v5181
        %v5200 = vmul.f32 %v5157, %v5182
        %v5201 = vmul.f32 %v5159, %v5183
        %v5202 = vmul.f32 %v5161, %v5184
        %v5203 = vmul.f32 %v5163, %v5185
        %v5204 = vmul.f32 %v5165, %v5186
        %v5205 = vmul.f32 %v5167, %v5187
        %v5206 = vmul.f32 %v5169, %v5188
        %v5207 = vmul.f32 %v5171, %v5189
        %v5208 = vsel %vm5190, %v5181, %v5199
        %v5209 = vsel %vm5191, %v5182, %v5200
        %v5210 = vsel %vm5192, %v5183, %v5201
        %v5211 = vsel %vm5193, %v5184, %v5202
        %v5212 = vsel %vm5194, %v5185, %v5203
        %v5213 = vsel %vm5195, %v5186, %v5204
        %v5214 = vsel %vm5196, %v5187, %v5205
        %v5215 = vsel %vm5197, %v5188, %v5206
        %v5216 = vsel %vm5198, %v5189, %v5207
        %v5217 = vadd.f32 %v5108, %v5208
        %v5218 = vadd.f32 %v5109, %v5209
        %v5219 = vadd.f32 %v5110, %v5210
        %v5220 = vadd.f32 %v5111, %v5211
        %v5221 = vadd.f32 %v5112, %v5212
        %v5222 = vadd.f32 %v5113, %v5213
        %v5223 = vadd.f32 %v5114, %v5214
        %v5224 = vadd.f32 %v5115, %v5215
        %v5225 = vadd.f32 %v5116, %v5216
        %v5226 = vmul.f32 %v4281, %v5217
        %v5227 = vmul.f32 %v4282, %v5218
        %v5228 = vmul.f32 %v4283, %v5219
        %v5229 = vmul.f32 %v4284, %v5220
        %v5230 = vmul.f32 %v4285, %v5221
        %v5231 = vmul.f32 %v4286, %v5222
        %v5232 = vmul.f32 %v4287, %v5223
        %v5233 = vmul.f32 %v4288, %v5224
        %v5234 = vmul.f32 %v4289, %v5225
        %s5235 = scalar_lea.vmem [#allocation2], 216
        %5236 = vst [vmem:[%s5235] sm:$0xff] %v5226
        %5237 = vst [vmem:[%s5235 + $0x8] sm:$0xff] %v5227
        %5238 = vst [vmem:[%s5235 + $0x10] sm:$0xff] %v5228
        %5239 = vst [vmem:[%s5235 + $0x18] sm:$0xff] %v5229
        %5240 = vst [vmem:[%s5235 + $0x20] sm:$0xff] %v5230
        %5241 = vst [vmem:[%s5235 + $0x28] sm:$0xff] %v5231
        %5242 = vst [vmem:[%s5235 + $0x30] sm:$0xff] %v5232
        %5243 = vst [vmem:[%s5235 + $0x38] sm:$0xff] %v5233
        %5244 = vst [vmem:[%s5235 + $0x40] sm:$0xff] %v5234
        %v5245 = vld [vmem:[#allocation11] sm:$0xff]
        %v5246 = vld [vmem:[#allocation11 + $0x8] sm:$0xff]
        %v5247 = vld [vmem:[#allocation11 + $0x10] sm:$0xff]
        %v5248 = vld [vmem:[#allocation11 + $0x18] sm:$0xff]
        %v5249 = vld [vmem:[#allocation11 + $0x20] sm:$0xff]
        %v5250 = vld [vmem:[#allocation11 + $0x28] sm:$0xff]
        %v5251 = vld [vmem:[#allocation11 + $0x30] sm:$0xff]
        %v5252 = vld [vmem:[#allocation11 + $0x38] sm:$0xff]
        %v5253 = vld [vmem:[#allocation11 + $0x40] sm:$0xff]
        %v5254 = vld [vmem:[#allocation11 + $0x48] sm:$0xff]
        %v5255 = vld [vmem:[#allocation11 + $0x50] sm:$0xff]
        %v5256 = vld [vmem:[#allocation11 + $0x58] sm:$0xff]
        %v5257 = vld [vmem:[#allocation11 + $0x60] sm:$0xff]
        %v5258 = vld [vmem:[#allocation11 + $0x68] sm:$0xff]
        %v5259 = vld [vmem:[#allocation11 + $0x70] sm:$0xff]
        %v5260 = vld [vmem:[#allocation11 + $0x78] sm:$0xff]
        %v5261 = vld [vmem:[#allocation11 + $0x80] sm:$0xff]
        %v5262 = vld [vmem:[#allocation11 + $0x88] sm:$0xff]
        %v5263 = vld [vmem:[#allocation11 + $0x90] sm:$0xff]
        %v5264 = vld [vmem:[#allocation11 + $0x98] sm:$0xff]
        %v5265 = vld [vmem:[#allocation11 + $0xa0] sm:$0xff]
        %v5266 = vld [vmem:[#allocation11 + $0xa8] sm:$0xff]
        %v5267 = vld [vmem:[#allocation11 + $0xb0] sm:$0xff]
        %v5268 = vld [vmem:[#allocation11 + $0xb8] sm:$0xff]
        %v5269 = vld [vmem:[#allocation11 + $0xc0] sm:$0xff]
        %v5270 = vld [vmem:[#allocation11 + $0xc8] sm:$0xff]
        %v5271 = vld [vmem:[#allocation11 + $0xd0] sm:$0xff]
        %v5272 = vld [vmem:[#allocation11 + $0xd8] sm:$0xff]
        %v5273 = vld [vmem:[#allocation11 + $0xe0] sm:$0xff]
        %v5274 = vld [vmem:[#allocation11 + $0xe8] sm:$0xff]
        %v5275 = vld [vmem:[#allocation11 + $0xf0] sm:$0xff]
        %v5276 = vld [vmem:[#allocation11 + $0xf8] sm:$0xff]
        %v5277 = vld [vmem:[#allocation11 + $0x100] sm:$0xff]
        %v5278 = vld [vmem:[#allocation11 + $0x108] sm:$0xff]
        %v5279 = vld [vmem:[#allocation11 + $0x110] sm:$0xff]
        %v5280 = vld [vmem:[#allocation11 + $0x118] sm:$0xff]
        %v5281 = vld [vmem:[#allocation11 + $0x120] sm:$0xff]
        %v5282 = vld [vmem:[#allocation11 + $0x128] sm:$0xff]
        %v5283 = vld [vmem:[#allocation11 + $0x130] sm:$0xff]
        %v5284 = vld [vmem:[#allocation11 + $0x138] sm:$0xff]
        %v5285 = vld [vmem:[#allocation11 + $0x140] sm:$0xff]
        %v5286 = vld [vmem:[#allocation11 + $0x148] sm:$0xff]
        %v5287 = vld [vmem:[#allocation11 + $0x150] sm:$0xff]
        %v5288 = vld [vmem:[#allocation11 + $0x158] sm:$0xff]
        %v5289 = vld [vmem:[#allocation11 + $0x160] sm:$0xff]
        %v5290 = vld [vmem:[#allocation11 + $0x168] sm:$0xff]
        %v5291 = vld [vmem:[#allocation11 + $0x170] sm:$0xff]
        %v5292 = vld [vmem:[#allocation11 + $0x178] sm:$0xff]
        %v5293 = vld [vmem:[#allocation11 + $0x180] sm:$0xff]
        %v5294 = vld [vmem:[#allocation11 + $0x188] sm:$0xff]
        %v5295 = vld [vmem:[#allocation11 + $0x190] sm:$0xff]
        %v5296 = vld [vmem:[#allocation11 + $0x198] sm:$0xff]
        %v5297 = vld [vmem:[#allocation11 + $0x1a0] sm:$0xff]
        %v5298 = vld [vmem:[#allocation11 + $0x1a8] sm:$0xff]
        %v5299 = vld [vmem:[#allocation11 + $0x1b0] sm:$0xff]
        %v5300 = vld [vmem:[#allocation11 + $0x1b8] sm:$0xff]
        %v5301 = vld [vmem:[#allocation11 + $0x1c0] sm:$0xff]
        %v5302 = vld [vmem:[#allocation11 + $0x1c8] sm:$0xff]
        %v5303 = vld [vmem:[#allocation11 + $0x1d0] sm:$0xff]
        %v5304 = vld [vmem:[#allocation11 + $0x1d8] sm:$0xff]
        %v5305 = vld [vmem:[#allocation11 + $0x1e0] sm:$0xff]
        %v5306 = vld [vmem:[#allocation11 + $0x1e8] sm:$0xff]
        %v5307 = vld [vmem:[#allocation11 + $0x1f0] sm:$0xff]
        %v5308 = vld [vmem:[#allocation11 + $0x1f8] sm:$0xff]
        %v5309 = vld [vmem:[#allocation11 + $0x200] sm:$0xff]
        %v5310 = vld [vmem:[#allocation11 + $0x208] sm:$0xff]
        %v5311 = vld [vmem:[#allocation11 + $0x210] sm:$0xff]
        %v5312 = vld [vmem:[#allocation11 + $0x218] sm:$0xff]
        %v5313 = vld [vmem:[#allocation11 + $0x220] sm:$0xff]
        %v5314 = vld [vmem:[#allocation11 + $0x228] sm:$0xff]
        %v5315 = vld [vmem:[#allocation11 + $0x230] sm:$0xff]
        %v5316 = vld [vmem:[#allocation11 + $0x238] sm:$0xff]
        %v5317 = vld [vmem:[#allocation11 + $0x240] sm:$0xff]
        %v5318 = vld [vmem:[#allocation11 + $0x248] sm:$0xff]
        %v5319 = vld [vmem:[#allocation11 + $0x250] sm:$0xff]
        %v5320 = vld [vmem:[#allocation11 + $0x258] sm:$0xff]
        %v5321 = vld [vmem:[#allocation11 + $0x260] sm:$0xff]
        %v5322 = vld [vmem:[#allocation11 + $0x268] sm:$0xff]
        %v5323 = vld [vmem:[#allocation11 + $0x270] sm:$0xff]
        %v5324 = vld [vmem:[#allocation11 + $0x278] sm:$0xff]
        %v5325 = vld [vmem:[#allocation11 + $0x280] sm:$0xff]
        %v5326 = vld [vmem:[#allocation11 + $0x288] sm:$0xff]
        %v5327 = vld [vmem:[#allocation11 + $0x290] sm:$0xff]
        %v5328 = vld [vmem:[#allocation11 + $0x298] sm:$0xff]
        %v5329 = vld [vmem:[#allocation11 + $0x2a0] sm:$0xff]
        %v5330 = vld [vmem:[#allocation11 + $0x2a8] sm:$0xff]
        %v5331 = vld [vmem:[#allocation11 + $0x2b0] sm:$0xff]
        %v5332 = vld [vmem:[#allocation11 + $0x2b8] sm:$0xff]
        %v5333 = vld [vmem:[#allocation11 + $0x2c0] sm:$0xff]
        %v5334 = vld [vmem:[#allocation11 + $0x2c8] sm:$0xff]
        %v5335 = vld [vmem:[#allocation11 + $0x2d0] sm:$0xff]
        %v5336 = vld [vmem:[#allocation11 + $0x2d8] sm:$0xff]
        %v5337 = vld [vmem:[#allocation11 + $0x2e0] sm:$0xff]
        %v5338 = vld [vmem:[#allocation11 + $0x2e8] sm:$0xff]
        %v5339 = vld [vmem:[#allocation11 + $0x2f0] sm:$0xff]
        %v5340 = vld [vmem:[#allocation11 + $0x2f8] sm:$0xff]
        %v5341 = vld [vmem:[#allocation11 + $0x300] sm:$0xff]
        %v5342 = vld [vmem:[#allocation11 + $0x308] sm:$0xff]
        %v5343 = vld [vmem:[#allocation11 + $0x310] sm:$0xff]
        %v5344 = vld [vmem:[#allocation11 + $0x318] sm:$0xff]
        %v5345 = vld [vmem:[#allocation11 + $0x320] sm:$0xff]
        %v5346 = vld [vmem:[#allocation11 + $0x328] sm:$0xff]
        %v5347 = vld [vmem:[#allocation11 + $0x330] sm:$0xff]
        %v5348 = vld [vmem:[#allocation11 + $0x338] sm:$0xff]
        %v5349 = vld [vmem:[#allocation11 + $0x340] sm:$0xff]
        %v5350 = vld [vmem:[#allocation11 + $0x348] sm:$0xff]
        %v5351 = vld [vmem:[#allocation11 + $0x350] sm:$0xff]
        %v5352 = vld [vmem:[#allocation11 + $0x358] sm:$0xff]
        %v5353 = vld [vmem:[#allocation11 + $0x360] sm:$0xff]
        %v5354 = vld [vmem:[#allocation11 + $0x368] sm:$0xff]
        %v5355 = vld [vmem:[#allocation11 + $0x370] sm:$0xff]
        %v5356 = vld [vmem:[#allocation11 + $0x378] sm:$0xff]
        %v5357 = vld [vmem:[#allocation11 + $0x380] sm:$0xff]
        %v5358 = vld [vmem:[#allocation11 + $0x388] sm:$0xff]
        %v5359 = vld [vmem:[#allocation11 + $0x390] sm:$0xff]
        %v5360 = vld [vmem:[#allocation11 + $0x398] sm:$0xff]
        %v5361 = vld [vmem:[#allocation11 + $0x3a0] sm:$0xff]
        %v5362 = vld [vmem:[#allocation11 + $0x3a8] sm:$0xff]
        %v5363 = vld [vmem:[#allocation11 + $0x3b0] sm:$0xff]
        %v5364 = vld [vmem:[#allocation11 + $0x3b8] sm:$0xff]
        %v5365 = vld [vmem:[#allocation11 + $0x3c0] sm:$0xff]
        %v5366 = vld [vmem:[#allocation11 + $0x3c8] sm:$0xff]
        %v5367 = vld [vmem:[#allocation11 + $0x3d0] sm:$0xff]
        %v5368 = vld [vmem:[#allocation11 + $0x3d8] sm:$0xff]
        %v5369 = vld [vmem:[#allocation11 + $0x3e0] sm:$0xff]
        %v5370 = vld [vmem:[#allocation11 + $0x3e8] sm:$0xff]
        %v5371 = vld [vmem:[#allocation11 + $0x3f0] sm:$0xff]
        %v5372 = vld [vmem:[#allocation11 + $0x3f8] sm:$0xff]
        %v5373 = vld [vmem:[#allocation11 + $0x400] sm:$0xff]
        %v5374 = vld [vmem:[#allocation11 + $0x408] sm:$0xff]
        %v5375 = vld [vmem:[#allocation11 + $0x410] sm:$0xff]
        %v5376 = vld [vmem:[#allocation11 + $0x418] sm:$0xff]
        %v5377 = vld [vmem:[#allocation11 + $0x420] sm:$0xff]
        %v5378 = vld [vmem:[#allocation11 + $0x428] sm:$0xff]
        %v5379 = vld [vmem:[#allocation11 + $0x430] sm:$0xff]
        %v5380 = vld [vmem:[#allocation11 + $0x438] sm:$0xff]
        %v5381 = vld [vmem:[#allocation11 + $0x440] sm:$0xff]
        %v5382 = vld [vmem:[#allocation11 + $0x448] sm:$0xff]
        %v5383 = vld [vmem:[#allocation11 + $0x450] sm:$0xff]
        %v5384 = vld [vmem:[#allocation11 + $0x458] sm:$0xff]
        %v5385 = vld [vmem:[#allocation11 + $0x460] sm:$0xff]
        %v5386 = vld [vmem:[#allocation11 + $0x468] sm:$0xff]
        %v5387 = vld [vmem:[#allocation11 + $0x470] sm:$0xff]
        %v5388 = vld [vmem:[#allocation11 + $0x478] sm:$0xff]
        %5389 = vmatprep.subr.mxu0 0.0
        %5390 = vmatpush1.msra.mxu0 %v5245
        %5391 = vmatprep.subr.mxu0 0.0
        %5392 = vmatpush1.msra.mxu0 %v5246
        %5393 = vmatprep.subr.mxu0 0.0
        %5394 = vmatpush1.msra.mxu0 %v5247
        %5395 = vmatprep.subr.mxu0 0.0
        %5396 = vmatpush1.msra.mxu0 %v5248
        %5397 = vmatprep.subr.mxu0 0.0
        %5398 = vmatpush1.msra.mxu0 %v5249
        %5399 = vmatprep.subr.mxu0 0.0
        %5400 = vmatpush1.msra.mxu0 %v5250
        %5401 = vmatprep.subr.mxu0 0.0
        %5402 = vmatpush1.msra.mxu0 %v5251
        %5403 = vmatprep.subr.mxu0 0.0
        %5404 = vmatpush1.msra.mxu0 %v5252
        %5405 = vmatprep.subr.mxu0 0.0
        %5406 = vmatpush1.msra.mxu0 %v5253
        %5407 = vmatprep.subr.mxu0 0.0
        %5408 = vmatpush1.msra.mxu0 %v5254
        %5409 = vmatprep.subr.mxu0 0.0
        %5410 = vmatpush1.msra.mxu0 %v5255
        %5411 = vmatprep.subr.mxu0 0.0
        %5412 = vmatpush1.msra.mxu0 %v5256
        %5413 = vmatprep.subr.mxu0 0.0
        %5414 = vmatpush1.msra.mxu0 %v5257
        %5415 = vmatprep.subr.mxu0 0.0
        %5416 = vmatpush1.msra.mxu0 %v5258
        %5417 = vmatprep.subr.mxu0 0.0
        %5418 = vmatpush1.msra.mxu0 %v5259
        %5419 = vmatprep.subr.mxu0 0.0
        %5420 = vmatpush1.msra.mxu0 %v5260
        %5421 = vmatprep.subr.mxu0 0.0
        %5422 = vmatpush1.msra.mxu0 %v5261
        %5423 = vmatprep.subr.mxu0 0.0
        %5424 = vmatpush1.msra.mxu0 %v5262
        %5425 = vmatprep.subr.mxu0 0.0
        %5426 = vmatpush1.msra.mxu0 %v5263
        %5427 = vmatprep.subr.mxu0 0.0
        %5428 = vmatpush1.msra.mxu0 %v5264
        %5429 = vmatprep.subr.mxu0 0.0
        %5430 = vmatpush1.msra.mxu0 %v5265
        %5431 = vmatprep.subr.mxu0 0.0
        %5432 = vmatpush1.msra.mxu0 %v5266
        %5433 = vmatprep.subr.mxu0 0.0
        %5434 = vmatpush1.msra.mxu0 %v5267
        %5435 = vmatprep.subr.mxu0 0.0
        %5436 = vmatpush1.msra.mxu0 %v5268
        %5437 = vmatprep.subr.mxu0 0.0
        %5438 = vmatpush1.msra.mxu0 %v5269
        %5439 = vmatprep.subr.mxu0 0.0
        %5440 = vmatpush1.msra.mxu0 %v5270
        %5441 = vmatprep.subr.mxu0 0.0
        %5442 = vmatpush1.msra.mxu0 %v5271
        %5443 = vmatprep.subr.mxu0 0.0
        %5444 = vmatpush1.msra.mxu0 %v5272
        %5445 = vmatprep.subr.mxu0 0.0
        %5446 = vmatpush1.msra.mxu0 %v5273
        %5447 = vmatprep.subr.mxu0 0.0
        %5448 = vmatpush1.msra.mxu0 %v5274
        %5449 = vmatprep.subr.mxu0 0.0
        %5450 = vmatpush1.msra.mxu0 %v5275
        %5451 = vmatprep.subr.mxu0 0.0
        %5452 = vmatpush1.msra.mxu0 %v5276
        %5453 = vmatprep.mubr.f32.mxu0 %v5227
        %5454 = vmatmul.mubr.f32.gmra.mrb[0].mxu0 %v5226
        %v5455 = vpop.f32.mrb[0].mxu0
        %v5456 = vadd.f32 0.0, %v5455
        %v5457 = vpop.f32.mrb[0].mxu0
        %5458 = vdwg.mxu0
        %5459 = vmatprep.subr.mxu0 0.0
        %5460 = vmatpush1.msra.mxu0 %v5277
        %5461 = vmatprep.subr.mxu0 0.0
        %5462 = vmatpush1.msra.mxu0 %v5278
        %5463 = vmatprep.subr.mxu0 0.0
        %5464 = vmatpush1.msra.mxu0 %v5279
        %5465 = vmatprep.subr.mxu0 0.0
        %5466 = vmatpush1.msra.mxu0 %v5280
        %5467 = vmatprep.subr.mxu0 0.0
        %5468 = vmatpush1.msra.mxu0 %v5281
        %5469 = vmatprep.subr.mxu0 0.0
        %5470 = vmatpush1.msra.mxu0 %v5282
        %5471 = vmatprep.subr.mxu0 0.0
        %5472 = vmatpush1.msra.mxu0 %v5283
        %5473 = vmatprep.subr.mxu0 0.0
        %5474 = vmatpush1.msra.mxu0 %v5284
        %5475 = vmatprep.subr.mxu0 0.0
        %5476 = vmatpush1.msra.mxu0 %v5285
        %5477 = vmatprep.subr.mxu0 0.0
        %5478 = vmatpush1.msra.mxu0 %v5286
        %5479 = vmatprep.subr.mxu0 0.0
        %5480 = vmatpush1.msra.mxu0 %v5287
        %5481 = vmatprep.subr.mxu0 0.0
        %5482 = vmatpush1.msra.mxu0 %v5288
        %5483 = vmatprep.subr.mxu0 0.0
        %5484 = vmatpush1.msra.mxu0 %v5289
        %5485 = vmatprep.subr.mxu0 0.0
        %5486 = vmatpush1.msra.mxu0 %v5290
        %5487 = vmatprep.subr.mxu0 0.0
        %5488 = vmatpush1.msra.mxu0 %v5291
        %5489 = vmatprep.subr.mxu0 0.0
        %5490 = vmatpush1.msra.mxu0 %v5292
        %5491 = vmatprep.subr.mxu0 0.0
        %5492 = vmatpush1.msra.mxu0 %v5293
        %5493 = vmatprep.subr.mxu0 0.0
        %5494 = vmatpush1.msra.mxu0 %v5294
        %5495 = vmatprep.subr.mxu0 0.0
        %5496 = vmatpush1.msra.mxu0 %v5295
        %5497 = vmatprep.subr.mxu0 0.0
        %5498 = vmatpush1.msra.mxu0 %v5296
        %5499 = vmatprep.subr.mxu0 0.0
        %5500 = vmatpush1.msra.mxu0 %v5297
        %5501 = vmatprep.subr.mxu0 0.0
        %5502 = vmatpush1.msra.mxu0 %v5298
        %5503 = vmatprep.subr.mxu0 0.0
        %5504 = vmatpush1.msra.mxu0 %v5299
        %5505 = vmatprep.subr.mxu0 0.0
        %5506 = vmatpush1.msra.mxu0 %v5300
        %5507 = vmatprep.subr.mxu0 0.0
        %5508 = vmatpush1.msra.mxu0 %v5301
        %5509 = vmatprep.subr.mxu0 0.0
        %5510 = vmatpush1.msra.mxu0 %v5302
        %5511 = vmatprep.subr.mxu0 0.0
        %5512 = vmatpush1.msra.mxu0 %v5303
        %5513 = vmatprep.subr.mxu0 0.0
        %5514 = vmatpush1.msra.mxu0 %v5304
        %5515 = vmatprep.subr.mxu0 0.0
        %5516 = vmatpush1.msra.mxu0 %v5305
        %5517 = vmatprep.subr.mxu0 0.0
        %5518 = vmatpush1.msra.mxu0 %v5306
        %5519 = vmatprep.subr.mxu0 0.0
        %5520 = vmatpush1.msra.mxu0 %v5307
        %5521 = vmatprep.subr.mxu0 0.0
        %5522 = vmatpush1.msra.mxu0 %v5308
        %5523 = vmatprep.mubr.f32.mxu0 %v5229
        %5524 = vmatmul.mubr.f32.gmra.mrb[0].mxu0 %v5228
        %v5525 = vpop.f32.mrb[0].mxu0
        %v5526 = vadd.f32 %v5456, %v5525
        %v5527 = vpop.f32.mrb[0].mxu0
        %5528 = vdwg.mxu0
        %5529 = vmatprep.subr.mxu0 0.0
        %5530 = vmatpush1.msra.mxu0 %v5309
        %5531 = vmatprep.subr.mxu0 0.0
        %5532 = vmatpush1.msra.mxu0 %v5310
        %5533 = vmatprep.subr.mxu0 0.0
        %5534 = vmatpush1.msra.mxu0 %v5311
        %5535 = vmatprep.subr.mxu0 0.0
        %5536 = vmatpush1.msra.mxu0 %v5312
        %5537 = vmatprep.subr.mxu0 0.0
        %5538 = vmatpush1.msra.mxu0 %v5313
        %5539 = vmatprep.subr.mxu0 0.0
        %5540 = vmatpush1.msra.mxu0 %v5314
        %5541 = vmatprep.subr.mxu0 0.0
        %5542 = vmatpush1.msra.mxu0 %v5315
        %5543 = vmatprep.subr.mxu0 0.0
        %5544 = vmatpush1.msra.mxu0 %v5316
        %5545 = vmatprep.subr.mxu0 0.0
        %5546 = vmatpush1.msra.mxu0 %v5317
        %5547 = vmatprep.subr.mxu0 0.0
        %5548 = vmatpush1.msra.mxu0 %v5318
        %5549 = vmatprep.subr.mxu0 0.0
        %5550 = vmatpush1.msra.mxu0 %v5319
        %5551 = vmatprep.subr.mxu0 0.0
        %5552 = vmatpush1.msra.mxu0 %v5320
        %5553 = vmatprep.subr.mxu0 0.0
        %5554 = vmatpush1.msra.mxu0 %v5321
        %5555 = vmatprep.subr.mxu0 0.0
        %5556 = vmatpush1.msra.mxu0 %v5322
        %5557 = vmatprep.subr.mxu0 0.0
        %5558 = vmatpush1.msra.mxu0 %v5323
        %5559 = vmatprep.subr.mxu0 0.0
        %5560 = vmatpush1.msra.mxu0 %v5324
        %5561 = vmatprep.subr.mxu0 0.0
        %5562 = vmatpush1.msra.mxu0 %v5325
        %5563 = vmatprep.subr.mxu0 0.0
        %5564 = vmatpush1.msra.mxu0 %v5326
        %5565 = vmatprep.subr.mxu0 0.0
        %5566 = vmatpush1.msra.mxu0 %v5327
        %5567 = vmatprep.subr.mxu0 0.0
        %5568 = vmatpush1.msra.mxu0 %v5328
        %5569 = vmatprep.subr.mxu0 0.0
        %5570 = vmatpush1.msra.mxu0 %v5329
        %5571 = vmatprep.subr.mxu0 0.0
        %5572 = vmatpush1.msra.mxu0 %v5330
        %5573 = vmatprep.subr.mxu0 0.0
        %5574 = vmatpush1.msra.mxu0 %v5331
        %5575 = vmatprep.subr.mxu0 0.0
        %5576 = vmatpush1.msra.mxu0 %v5332
        %5577 = vmatprep.subr.mxu0 0.0
        %5578 = vmatpush1.msra.mxu0 %v5333
        %5579 = vmatprep.subr.mxu0 0.0
        %5580 = vmatpush1.msra.mxu0 %v5334
        %5581 = vmatprep.subr.mxu0 0.0
        %5582 = vmatpush1.msra.mxu0 %v5335
        %5583 = vmatprep.subr.mxu0 0.0
        %5584 = vmatpush1.msra.mxu0 %v5336
        %5585 = vmatprep.subr.mxu0 0.0
        %5586 = vmatpush1.msra.mxu0 %v5337
        %5587 = vmatprep.subr.mxu0 0.0
        %5588 = vmatpush1.msra.mxu0 %v5338
        %5589 = vmatprep.subr.mxu0 0.0
        %5590 = vmatpush1.msra.mxu0 %v5339
        %5591 = vmatprep.subr.mxu0 0.0
        %5592 = vmatpush1.msra.mxu0 %v5340
        %5593 = vmatprep.mubr.f32.mxu0 %v5231
        %5594 = vmatmul.mubr.f32.gmra.mrb[0].mxu0 %v5230
        %v5595 = vpop.f32.mrb[0].mxu0
        %v5596 = vadd.f32 %v5526, %v5595
        %v5597 = vpop.f32.mrb[0].mxu0
        %5598 = vdwg.mxu0
        %5599 = vmatprep.subr.mxu0 0.0
        %5600 = vmatpush1.msra.mxu0 %v5341
        %5601 = vmatprep.subr.mxu0 0.0
        %5602 = vmatpush1.msra.mxu0 %v5342
        %5603 = vmatprep.subr.mxu0 0.0
        %5604 = vmatpush1.msra.mxu0 %v5343
        %5605 = vmatprep.subr.mxu0 0.0
        %5606 = vmatpush1.msra.mxu0 %v5344
        %5607 = vmatprep.subr.mxu0 0.0
        %5608 = vmatpush1.msra.mxu0 %v5345
        %5609 = vmatprep.subr.mxu0 0.0
        %5610 = vmatpush1.msra.mxu0 %v5346
        %5611 = vmatprep.subr.mxu0 0.0
        %5612 = vmatpush1.msra.mxu0 %v5347
        %5613 = vmatprep.subr.mxu0 0.0
        %5614 = vmatpush1.msra.mxu0 %v5348
        %5615 = vmatprep.subr.mxu0 0.0
        %5616 = vmatpush1.msra.mxu0 %v5349
        %5617 = vmatprep.subr.mxu0 0.0
        %5618 = vmatpush1.msra.mxu0 %v5350
        %5619 = vmatprep.subr.mxu0 0.0
        %5620 = vmatpush1.msra.mxu0 %v5351
        %5621 = vmatprep.subr.mxu0 0.0
        %5622 = vmatpush1.msra.mxu0 %v5352
        %5623 = vmatprep.subr.mxu0 0.0
        %5624 = vmatpush1.msra.mxu0 %v5353
        %5625 = vmatprep.subr.mxu0 0.0
        %5626 = vmatpush1.msra.mxu0 %v5354
        %5627 = vmatprep.subr.mxu0 0.0
        %5628 = vmatpush1.msra.mxu0 %v5355
        %5629 = vmatprep.subr.mxu0 0.0
        %5630 = vmatpush1.msra.mxu0 %v5356
        %5631 = vmatprep.subr.mxu0 0.0
        %5632 = vmatpush1.msra.mxu0 %v5357
        %5633 = vmatprep.subr.mxu0 0.0
        %5634 = vmatpush1.msra.mxu0 %v5358
        %5635 = vmatprep.subr.mxu0 0.0
        %5636 = vmatpush1.msra.mxu0 %v5359
        %5637 = vmatprep.subr.mxu0 0.0
        %5638 = vmatpush1.msra.mxu0 %v5360
        %5639 = vmatprep.subr.mxu0 0.0
        %5640 = vmatpush1.msra.mxu0 %v5361
        %5641 = vmatprep.subr.mxu0 0.0
        %5642 = vmatpush1.msra.mxu0 %v5362
        %5643 = vmatprep.subr.mxu0 0.0
        %5644 = vmatpush1.msra.mxu0 %v5363
        %5645 = vmatprep.subr.mxu0 0.0
        %5646 = vmatpush1.msra.mxu0 %v5364
        %5647 = vmatprep.subr.mxu0 0.0
        %5648 = vmatpush1.msra.mxu0 %v5365
        %5649 = vmatprep.subr.mxu0 0.0
        %5650 = vmatpush1.msra.mxu0 %v5366
        %5651 = vmatprep.subr.mxu0 0.0
        %5652 = vmatpush1.msra.mxu0 %v5367
        %5653 = vmatprep.subr.mxu0 0.0
        %5654 = vmatpush1.msra.mxu0 %v5368
        %5655 = vmatprep.subr.mxu0 0.0
        %5656 = vmatpush1.msra.mxu0 %v5369
        %5657 = vmatprep.subr.mxu0 0.0
        %5658 = vmatpush1.msra.mxu0 %v5370
        %5659 = vmatprep.subr.mxu0 0.0
        %5660 = vmatpush1.msra.mxu0 %v5371
        %5661 = vmatprep.subr.mxu0 0.0
        %5662 = vmatpush1.msra.mxu0 %v5372
        %5663 = vmatprep.mubr.f32.mxu0 %v5233
        %5664 = vmatmul.mubr.f32.gmra.mrb[0].mxu0 %v5232
        %v5665 = vpop.f32.mrb[0].mxu0
        %v5666 = vadd.f32 %v5596, %v5665
        %v5667 = vpop.f32.mrb[0].mxu0
        %5668 = vdwg.mxu0
        %5669 = vmatprep.subr.mxu0 0.0
        %5670 = vmatpush1.msra.mxu0 %v5373
        %5671 = vmatprep.subr.mxu0 0.0
        %5672 = vmatpush1.msra.mxu0 %v5374
        %5673 = vmatprep.subr.mxu0 0.0
        %5674 = vmatpush1.msra.mxu0 %v5375
        %5675 = vmatprep.subr.mxu0 0.0
        %5676 = vmatpush1.msra.mxu0 %v5376
        %5677 = vmatprep.subr.mxu0 0.0
        %5678 = vmatpush1.msra.mxu0 %v5377
        %5679 = vmatprep.subr.mxu0 0.0
        %5680 = vmatpush1.msra.mxu0 %v5378
        %5681 = vmatprep.subr.mxu0 0.0
        %5682 = vmatpush1.msra.mxu0 %v5379
        %5683 = vmatprep.subr.mxu0 0.0
        %5684 = vmatpush1.msra.mxu0 %v5380
        %5685 = vmatprep.subr.mxu0 0.0
        %5686 = vmatpush1.msra.mxu0 %v5381
        %5687 = vmatprep.subr.mxu0 0.0
        %5688 = vmatpush1.msra.mxu0 %v5382
        %5689 = vmatprep.subr.mxu0 0.0
        %5690 = vmatpush1.msra.mxu0 %v5383
        %5691 = vmatprep.subr.mxu0 0.0
        %5692 = vmatpush1.msra.mxu0 %v5384
        %5693 = vmatprep.subr.mxu0 0.0
        %5694 = vmatpush1.msra.mxu0 %v5385
        %5695 = vmatprep.subr.mxu0 0.0
        %5696 = vmatpush1.msra.mxu0 %v5386
        %5697 = vmatprep.subr.mxu0 0.0
        %5698 = vmatpush1.msra.mxu0 %v5387
        %5699 = vmatprep.subr.mxu0 0.0
        %5700 = vmatpush1.msra.mxu0 %v5388
        %5701 = vmatprep.subr.mxu0 0.0
        %5702 = vmatpush1.msra.mxu0 0.0
        %5703 = vmatprep.subr.mxu0 0.0
        %5704 = vmatpush1.msra.mxu0 0.0
        %5705 = vmatprep.subr.mxu0 0.0
        %5706 = vmatpush1.msra.mxu0 0.0
        %5707 = vmatprep.subr.mxu0 0.0
        %5708 = vmatpush1.msra.mxu0 0.0
        %5709 = vmatprep.subr.mxu0 0.0
        %5710 = vmatpush1.msra.mxu0 0.0
        %5711 = vmatprep.subr.mxu0 0.0
        %5712 = vmatpush1.msra.mxu0 0.0
        %5713 = vmatprep.subr.mxu0 0.0
        %5714 = vmatpush1.msra.mxu0 0.0
        %5715 = vmatprep.subr.mxu0 0.0
        %5716 = vmatpush1.msra.mxu0 0.0
        %5717 = vmatprep.subr.mxu0 0.0
        %5718 = vmatpush1.msra.mxu0 0.0
        %5719 = vmatprep.subr.mxu0 0.0
        %5720 = vmatpush1.msra.mxu0 0.0
        %5721 = vmatprep.subr.mxu0 0.0
        %5722 = vmatpush1.msra.mxu0 0.0
        %5723 = vmatprep.subr.mxu0 0.0
        %5724 = vmatpush1.msra.mxu0 0.0
        %5725 = vmatprep.subr.mxu0 0.0
        %5726 = vmatpush1.msra.mxu0 0.0
        %5727 = vmatprep.subr.mxu0 0.0
        %5728 = vmatpush1.msra.mxu0 0.0
        %5729 = vmatprep.subr.mxu0 0.0
        %5730 = vmatpush1.msra.mxu0 0.0
        %5731 = vmatprep.subr.mxu0 0.0
        %5732 = vmatpush1.msra.mxu0 0.0
        %5733 = vmatprep.mubr.f32.mxu0 0.0
        %5734 = vmatmul.mubr.f32.gmra.mrb[0].mxu0 %v5234
        %v5735 = vpop.f32.mrb[0].mxu0
        %v5736 = vadd.f32 %v5666, %v5735
        %v5737 = vpop.f32.mrb[0].mxu0
        %5738 = vdwg.mxu0
        %s5739 = scalar_lea.vmem %s496, 8 [#allocation17]
        %5740 = vst [vmem:[%s5739] sm:$0xff] %v5736
        %s5741 = sld [smem:[#allocation3]]
        %s5742 = sld [smem:[#allocation4]]
        %v5743 = vstv %s5742
        %v5744 = vsub.f32 %v4083, %v5743
        %v5745 = vsub.f32 %v4084, %v5743
        %v5746 = vsub.f32 %v4085, %v5743
        %v5747 = vsub.f32 %v4086, %v5743
        %v5748 = vsub.f32 %v4087, %v5743
        %v5749 = vsub.f32 %v4088, %v5743
        %v5750 = vsub.f32 %v4089, %v5743
        %v5751 = vsub.f32 %v4090, %v5743
        %v5752 = vsub.f32 %v4091, %v5743
        %v5753 = vmul.f32 %v5744, 100.0
        %v5754 = vmul.f32 %v5745, 100.0
        %v5755 = vmul.f32 %v5746, 100.0
        %v5756 = vmul.f32 %v5747, 100.0
        %v5757 = vmul.f32 %v5748, 100.0
        %v5758 = vmul.f32 %v5749, 100.0
        %v5759 = vmul.f32 %v5750, 100.0
        %v5760 = vmul.f32 %v5751, 100.0
        %v5761 = vmul.f32 %v5752, 100.0
        %v5762 = vand.u32 2147483647, %v5753
        %v5763 = vand.u32 2147483647, %v5754
        %v5764 = vand.u32 2147483647, %v5755
        %v5765 = vand.u32 2147483647, %v5756
        %v5766 = vand.u32 2147483647, %v5757
        %v5767 = vand.u32 2147483647, %v5758
        %v5768 = vand.u32 2147483647, %v5759
        %v5769 = vand.u32 2147483647, %v5760
        %v5770 = vand.u32 2147483647, %v5761
        %v5771 = vsub.f32 0.0, %v5762
        %v5772 = vsub.f32 0.0, %v5763
        %v5773 = vsub.f32 0.0, %v5764
        %v5774 = vsub.f32 0.0, %v5765
        %v5775 = vsub.f32 0.0, %v5766
        %v5776 = vsub.f32 0.0, %v5767
        %v5777 = vsub.f32 0.0, %v5768
        %v5778 = vsub.f32 0.0, %v5769
        %v5779 = vsub.f32 0.0, %v5770
        %v5780 = vmul.f32 %v5771, 1.442695
        %v5781 = vpow.pop %v5780
        %v5782 = vmul.f32 %v5772, 1.442695
        %v5783 = vpow.pop %v5782
        %v5784 = vmul.f32 %v5773, 1.442695
        %v5785 = vpow.pop %v5784
        %v5786 = vmul.f32 %v5774, 1.442695
        %v5787 = vpow.pop %v5786
        %v5788 = vmul.f32 %v5775, 1.442695
        %v5789 = vpow.pop %v5788
        %v5790 = vmul.f32 %v5776, 1.442695
        %v5791 = vpow.pop %v5790
        %v5792 = vmul.f32 %v5777, 1.442695
        %v5793 = vpow.pop %v5792
        %v5794 = vmul.f32 %v5778, 1.442695
        %v5795 = vpow.pop %v5794
        %v5796 = vmul.f32 %v5779, 1.442695
        %v5797 = vpow.pop %v5796
        %v5798 = vadd.f32 %v5781, 1.0
        %v5799 = vadd.f32 %v5783, 1.0
        %v5800 = vadd.f32 %v5785, 1.0
        %v5801 = vadd.f32 %v5787, 1.0
        %v5802 = vadd.f32 %v5789, 1.0
        %v5803 = vadd.f32 %v5791, 1.0
        %v5804 = vadd.f32 %v5793, 1.0
        %v5805 = vadd.f32 %v5795, 1.0
        %v5806 = vadd.f32 %v5797, 1.0
        %v5807 = vrcp.pop %v5798
        %v5808 = vrcp.pop %v5799
        %v5809 = vrcp.pop %v5800
        %v5810 = vrcp.pop %v5801
        %v5811 = vrcp.pop %v5802
        %v5812 = vrcp.pop %v5803
        %v5813 = vrcp.pop %v5804
        %v5814 = vrcp.pop %v5805
        %v5815 = vrcp.pop %v5806
        %vm5816 = vcmp.ge.f32.partialorder %v5753, 0.0
        %vm5817 = vcmp.ge.f32.partialorder %v5754, 0.0
        %vm5818 = vcmp.ge.f32.partialorder %v5755, 0.0
        %vm5819 = vcmp.ge.f32.partialorder %v5756, 0.0
        %vm5820 = vcmp.ge.f32.partialorder %v5757, 0.0
        %vm5821 = vcmp.ge.f32.partialorder %v5758, 0.0
        %vm5822 = vcmp.ge.f32.partialorder %v5759, 0.0
        %vm5823 = vcmp.ge.f32.partialorder %v5760, 0.0
        %vm5824 = vcmp.ge.f32.partialorder %v5761, 0.0
        %v5825 = vmul.f32 %v5781, %v5807
        %v5826 = vmul.f32 %v5783, %v5808
        %v5827 = vmul.f32 %v5785, %v5809
        %v5828 = vmul.f32 %v5787, %v5810
        %v5829 = vmul.f32 %v5789, %v5811
        %v5830 = vmul.f32 %v5791, %v5812
        %v5831 = vmul.f32 %v5793, %v5813
        %v5832 = vmul.f32 %v5795, %v5814
        %v5833 = vmul.f32 %v5797, %v5815
        %v5834 = vsel %vm5816, %v5807, %v5825
        %v5835 = vsel %vm5817, %v5808, %v5826
        %v5836 = vsel %vm5818, %v5809, %v5827
        %v5837 = vsel %vm5819, %v5810, %v5828
        %v5838 = vsel %vm5820, %v5811, %v5829
        %v5839 = vsel %vm5821, %v5812, %v5830
        %v5840 = vsel %vm5822, %v5813, %v5831
        %v5841 = vsel %vm5823, %v5814, %v5832
        %v5842 = vsel %vm5824, %v5815, %v5833
        %v5843 = vstv %s5741
        %v5844 = vadd.f32 %v4083, %v5843
        %v5845 = vadd.f32 %v4084, %v5843
        %v5846 = vadd.f32 %v4085, %v5843
        %v5847 = vadd.f32 %v4086, %v5843
        %v5848 = vadd.f32 %v4087, %v5843
        %v5849 = vadd.f32 %v4088, %v5843
        %v5850 = vadd.f32 %v4089, %v5843
        %v5851 = vadd.f32 %v4090, %v5843
        %v5852 = vadd.f32 %v4091, %v5843
        %v5853 = vmul.f32 %v5844, -100.0
        %v5854 = vmul.f32 %v5845, -100.0
        %v5855 = vmul.f32 %v5846, -100.0
        %v5856 = vmul.f32 %v5847, -100.0
        %v5857 = vmul.f32 %v5848, -100.0
        %v5858 = vmul.f32 %v5849, -100.0
        %v5859 = vmul.f32 %v5850, -100.0
        %v5860 = vmul.f32 %v5851, -100.0
        %v5861 = vmul.f32 %v5852, -100.0
        %v5862 = vand.u32 2147483647, %v5853
        %v5863 = vand.u32 2147483647, %v5854
        %v5864 = vand.u32 2147483647, %v5855
        %v5865 = vand.u32 2147483647, %v5856
        %v5866 = vand.u32 2147483647, %v5857
        %v5867 = vand.u32 2147483647, %v5858
        %v5868 = vand.u32 2147483647, %v5859
        %v5869 = vand.u32 2147483647, %v5860
        %v5870 = vand.u32 2147483647, %v5861
        %v5871 = vsub.f32 0.0, %v5862
        %v5872 = vsub.f32 0.0, %v5863
        %v5873 = vsub.f32 0.0, %v5864
        %v5874 = vsub.f32 0.0, %v5865
        %v5875 = vsub.f32 0.0, %v5866
        %v5876 = vsub.f32 0.0, %v5867
        %v5877 = vsub.f32 0.0, %v5868
        %v5878 = vsub.f32 0.0, %v5869
        %v5879 = vsub.f32 0.0, %v5870
        %v5880 = vmul.f32 %v5871, 1.442695
        %v5881 = vpow.pop %v5880
        %v5882 = vmul.f32 %v5872, 1.442695
        %v5883 = vpow.pop %v5882
        %v5884 = vmul.f32 %v5873, 1.442695
        %v5885 = vpow.pop %v5884
        %v5886 = vmul.f32 %v5874, 1.442695
        %v5887 = vpow.pop %v5886
        %v5888 = vmul.f32 %v5875, 1.442695
        %v5889 = vpow.pop %v5888
        %v5890 = vmul.f32 %v5876, 1.442695
        %v5891 = vpow.pop %v5890
        %v5892 = vmul.f32 %v5877, 1.442695
        %v5893 = vpow.pop %v5892
        %v5894 = vmul.f32 %v5878, 1.442695
        %v5895 = vpow.pop %v5894
        %v5896 = vmul.f32 %v5879, 1.442695
        %v5897 = vpow.pop %v5896
        %v5898 = vadd.f32 %v5881, 1.0
        %v5899 = vadd.f32 %v5883, 1.0
        %v5900 = vadd.f32 %v5885, 1.0
        %v5901 = vadd.f32 %v5887, 1.0
        %v5902 = vadd.f32 %v5889, 1.0
        %v5903 = vadd.f32 %v5891, 1.0
        %v5904 = vadd.f32 %v5893, 1.0
        %v5905 = vadd.f32 %v5895, 1.0
        %v5906 = vadd.f32 %v5897, 1.0
        %v5907 = vrcp.pop %v5898
        %v5908 = vrcp.pop %v5899
        %v5909 = vrcp.pop %v5900
        %v5910 = vrcp.pop %v5901
        %v5911 = vrcp.pop %v5902
        %v5912 = vrcp.pop %v5903
        %v5913 = vrcp.pop %v5904
        %v5914 = vrcp.pop %v5905
        %v5915 = vrcp.pop %v5906
        %vm5916 = vcmp.ge.f32.partialorder %v5853, 0.0
        %vm5917 = vcmp.ge.f32.partialorder %v5854, 0.0
        %vm5918 = vcmp.ge.f32.partialorder %v5855, 0.0
        %vm5919 = vcmp.ge.f32.partialorder %v5856, 0.0
        %vm5920 = vcmp.ge.f32.partialorder %v5857, 0.0
        %vm5921 = vcmp.ge.f32.partialorder %v5858, 0.0
        %vm5922 = vcmp.ge.f32.partialorder %v5859, 0.0
        %vm5923 = vcmp.ge.f32.partialorder %v5860, 0.0
        %vm5924 = vcmp.ge.f32.partialorder %v5861, 0.0
        %v5925 = vmul.f32 %v5881, %v5907
        %v5926 = vmul.f32 %v5883, %v5908
        %v5927 = vmul.f32 %v5885, %v5909
        %v5928 = vmul.f32 %v5887, %v5910
        %v5929 = vmul.f32 %v5889, %v5911
        %v5930 = vmul.f32 %v5891, %v5912
        %v5931 = vmul.f32 %v5893, %v5913
        %v5932 = vmul.f32 %v5895, %v5914
        %v5933 = vmul.f32 %v5897, %v5915
        %v5934 = vsel %vm5916, %v5907, %v5925
        %v5935 = vsel %vm5917, %v5908, %v5926
        %v5936 = vsel %vm5918, %v5909, %v5927
        %v5937 = vsel %vm5919, %v5910, %v5928
        %v5938 = vsel %vm5920, %v5911, %v5929
        %v5939 = vsel %vm5921, %v5912, %v5930
        %v5940 = vsel %vm5922, %v5913, %v5931
        %v5941 = vsel %vm5923, %v5914, %v5932
        %v5942 = vsel %vm5924, %v5915, %v5933
        %v5943 = vadd.f32 %v5834, %v5934
        %v5944 = vadd.f32 %v5835, %v5935
        %v5945 = vadd.f32 %v5836, %v5936
        %v5946 = vadd.f32 %v5837, %v5937
        %v5947 = vadd.f32 %v5838, %v5938
        %v5948 = vadd.f32 %v5839, %v5939
        %v5949 = vadd.f32 %v5840, %v5940
        %v5950 = vadd.f32 %v5841, %v5941
        %v5951 = vadd.f32 %v5842, %v5942
        %v5952 = vmul.f32 %v4083, %v5943
        %v5953 = vmul.f32 %v4084, %v5944
        %v5954 = vmul.f32 %v4085, %v5945
        %v5955 = vmul.f32 %v4086, %v5946
        %v5956 = vmul.f32 %v4087, %v5947
        %v5957 = vmul.f32 %v4088, %v5948
        %v5958 = vmul.f32 %v4089, %v5949
        %v5959 = vmul.f32 %v4090, %v5950
        %v5960 = vmul.f32 %v4091, %v5951
        %v5961 = vld [vmem:[#allocation11] sm:$0xff]
        %v5962 = vld [vmem:[#allocation11 + $0x8] sm:$0xff]
        %v5963 = vld [vmem:[#allocation11 + $0x10] sm:$0xff]
        %v5964 = vld [vmem:[#allocation11 + $0x18] sm:$0xff]
        %v5965 = vld [vmem:[#allocation11 + $0x20] sm:$0xff]
        %v5966 = vld [vmem:[#allocation11 + $0x28] sm:$0xff]
        %v5967 = vld [vmem:[#allocation11 + $0x30] sm:$0xff]
        %v5968 = vld [vmem:[#allocation11 + $0x38] sm:$0xff]
        %v5969 = vld [vmem:[#allocation11 + $0x40] sm:$0xff]
        %v5970 = vld [vmem:[#allocation11 + $0x48] sm:$0xff]
        %v5971 = vld [vmem:[#allocation11 + $0x50] sm:$0xff]
        %v5972 = vld [vmem:[#allocation11 + $0x58] sm:$0xff]
        %v5973 = vld [vmem:[#allocation11 + $0x60] sm:$0xff]
        %v5974 = vld [vmem:[#allocation11 + $0x68] sm:$0xff]
        %v5975 = vld [vmem:[#allocation11 + $0x70] sm:$0xff]
        %v5976 = vld [vmem:[#allocation11 + $0x78] sm:$0xff]
        %v5977 = vld [vmem:[#allocation11 + $0x80] sm:$0xff]
        %v5978 = vld [vmem:[#allocation11 + $0x88] sm:$0xff]
        %v5979 = vld [vmem:[#allocation11 + $0x90] sm:$0xff]
        %v5980 = vld [vmem:[#allocation11 + $0x98] sm:$0xff]
        %v5981 = vld [vmem:[#allocation11 + $0xa0] sm:$0xff]
        %v5982 = vld [vmem:[#allocation11 + $0xa8] sm:$0xff]
        %v5983 = vld [vmem:[#allocation11 + $0xb0] sm:$0xff]
        %v5984 = vld [vmem:[#allocation11 + $0xb8] sm:$0xff]
        %v5985 = vld [vmem:[#allocation11 + $0xc0] sm:$0xff]
        %v5986 = vld [vmem:[#allocation11 + $0xc8] sm:$0xff]
        %v5987 = vld [vmem:[#allocation11 + $0xd0] sm:$0xff]
        %v5988 = vld [vmem:[#allocation11 + $0xd8] sm:$0xff]
        %v5989 = vld [vmem:[#allocation11 + $0xe0] sm:$0xff]
        %v5990 = vld [vmem:[#allocation11 + $0xe8] sm:$0xff]
        %v5991 = vld [vmem:[#allocation11 + $0xf0] sm:$0xff]
        %v5992 = vld [vmem:[#allocation11 + $0xf8] sm:$0xff]
        %v5993 = vld [vmem:[#allocation11 + $0x100] sm:$0xff]
        %v5994 = vld [vmem:[#allocation11 + $0x108] sm:$0xff]
        %v5995 = vld [vmem:[#allocation11 + $0x110] sm:$0xff]
        %v5996 = vld [vmem:[#allocation11 + $0x118] sm:$0xff]
        %v5997 = vld [vmem:[#allocation11 + $0x120] sm:$0xff]
        %v5998 = vld [vmem:[#allocation11 + $0x128] sm:$0xff]
        %v5999 = vld [vmem:[#allocation11 + $0x130] sm:$0xff]
        %v6000 = vld [vmem:[#allocation11 + $0x138] sm:$0xff]
        %v6001 = vld [vmem:[#allocation11 + $0x140] sm:$0xff]
        %v6002 = vld [vmem:[#allocation11 + $0x148] sm:$0xff]
        %v6003 = vld [vmem:[#allocation11 + $0x150] sm:$0xff]
        %v6004 = vld [vmem:[#allocation11 + $0x158] sm:$0xff]
        %v6005 = vld [vmem:[#allocation11 + $0x160] sm:$0xff]
        %v6006 = vld [vmem:[#allocation11 + $0x168] sm:$0xff]
        %v6007 = vld [vmem:[#allocation11 + $0x170] sm:$0xff]
        %v6008 = vld [vmem:[#allocation11 + $0x178] sm:$0xff]
        %v6009 = vld [vmem:[#allocation11 + $0x180] sm:$0xff]
        %v6010 = vld [vmem:[#allocation11 + $0x188] sm:$0xff]
        %v6011 = vld [vmem:[#allocation11 + $0x190] sm:$0xff]
        %v6012 = vld [vmem:[#allocation11 + $0x198] sm:$0xff]
        %v6013 = vld [vmem:[#allocation11 + $0x1a0] sm:$0xff]
        %v6014 = vld [vmem:[#allocation11 + $0x1a8] sm:$0xff]
        %v6015 = vld [vmem:[#allocation11 + $0x1b0] sm:$0xff]
        %v6016 = vld [vmem:[#allocation11 + $0x1b8] sm:$0xff]
        %v6017 = vld [vmem:[#allocation11 + $0x1c0] sm:$0xff]
        %v6018 = vld [vmem:[#allocation11 + $0x1c8] sm:$0xff]
        %v6019 = vld [vmem:[#allocation11 + $0x1d0] sm:$0xff]
        %v6020 = vld [vmem:[#allocation11 + $0x1d8] sm:$0xff]
        %v6021 = vld [vmem:[#allocation11 + $0x1e0] sm:$0xff]
        %v6022 = vld [vmem:[#allocation11 + $0x1e8] sm:$0xff]
        %v6023 = vld [vmem:[#allocation11 + $0x1f0] sm:$0xff]
        %v6024 = vld [vmem:[#allocation11 + $0x1f8] sm:$0xff]
        %v6025 = vld [vmem:[#allocation11 + $0x200] sm:$0xff]
        %v6026 = vld [vmem:[#allocation11 + $0x208] sm:$0xff]
        %v6027 = vld [vmem:[#allocation11 + $0x210] sm:$0xff]
        %v6028 = vld [vmem:[#allocation11 + $0x218] sm:$0xff]
        %v6029 = vld [vmem:[#allocation11 + $0x220] sm:$0xff]
        %v6030 = vld [vmem:[#allocation11 + $0x228] sm:$0xff]
        %v6031 = vld [vmem:[#allocation11 + $0x230] sm:$0xff]
        %v6032 = vld [vmem:[#allocation11 + $0x238] sm:$0xff]
        %v6033 = vld [vmem:[#allocation11 + $0x240] sm:$0xff]
        %v6034 = vld [vmem:[#allocation11 + $0x248] sm:$0xff]
        %v6035 = vld [vmem:[#allocation11 + $0x250] sm:$0xff]
        %v6036 = vld [vmem:[#allocation11 + $0x258] sm:$0xff]
        %v6037 = vld [vmem:[#allocation11 + $0x260] sm:$0xff]
        %v6038 = vld [vmem:[#allocation11 + $0x268] sm:$0xff]
        %v6039 = vld [vmem:[#allocation11 + $0x270] sm:$0xff]
        %v6040 = vld [vmem:[#allocation11 + $0x278] sm:$0xff]
        %v6041 = vld [vmem:[#allocation11 + $0x280] sm:$0xff]
        %v6042 = vld [vmem:[#allocation11 + $0x288] sm:$0xff]
        %v6043 = vld [vmem:[#allocation11 + $0x290] sm:$0xff]
        %v6044 = vld [vmem:[#allocation11 + $0x298] sm:$0xff]
        %v6045 = vld [vmem:[#allocation11 + $0x2a0] sm:$0xff]
        %v6046 = vld [vmem:[#allocation11 + $0x2a8] sm:$0xff]
        %v6047 = vld [vmem:[#allocation11 + $0x2b0] sm:$0xff]
        %v6048 = vld [vmem:[#allocation11 + $0x2b8] sm:$0xff]
        %v6049 = vld [vmem:[#allocation11 + $0x2c0] sm:$0xff]
        %v6050 = vld [vmem:[#allocation11 + $0x2c8] sm:$0xff]
        %v6051 = vld [vmem:[#allocation11 + $0x2d0] sm:$0xff]
        %v6052 = vld [vmem:[#allocation11 + $0x2d8] sm:$0xff]
        %v6053 = vld [vmem:[#allocation11 + $0x2e0] sm:$0xff]
        %v6054 = vld [vmem:[#allocation11 + $0x2e8] sm:$0xff]
        %v6055 = vld [vmem:[#allocation11 + $0x2f0] sm:$0xff]
        %v6056 = vld [vmem:[#allocation11 + $0x2f8] sm:$0xff]
        %v6057 = vld [vmem:[#allocation11 + $0x300] sm:$0xff]
        %v6058 = vld [vmem:[#allocation11 + $0x308] sm:$0xff]
        %v6059 = vld [vmem:[#allocation11 + $0x310] sm:$0xff]
        %v6060 = vld [vmem:[#allocation11 + $0x318] sm:$0xff]
        %v6061 = vld [vmem:[#allocation11 + $0x320] sm:$0xff]
        %v6062 = vld [vmem:[#allocation11 + $0x328] sm:$0xff]
        %v6063 = vld [vmem:[#allocation11 + $0x330] sm:$0xff]
        %v6064 = vld [vmem:[#allocation11 + $0x338] sm:$0xff]
        %v6065 = vld [vmem:[#allocation11 + $0x340] sm:$0xff]
        %v6066 = vld [vmem:[#allocation11 + $0x348] sm:$0xff]
        %v6067 = vld [vmem:[#allocation11 + $0x350] sm:$0xff]
        %v6068 = vld [vmem:[#allocation11 + $0x358] sm:$0xff]
        %v6069 = vld [vmem:[#allocation11 + $0x360] sm:$0xff]
        %v6070 = vld [vmem:[#allocation11 + $0x368] sm:$0xff]
        %v6071 = vld [vmem:[#allocation11 + $0x370] sm:$0xff]
        %v6072 = vld [vmem:[#allocation11 + $0x378] sm:$0xff]
        %v6073 = vld [vmem:[#allocation11 + $0x380] sm:$0xff]
        %v6074 = vld [vmem:[#allocation11 + $0x388] sm:$0xff]
        %v6075 = vld [vmem:[#allocation11 + $0x390] sm:$0xff]
        %v6076 = vld [vmem:[#allocation11 + $0x398] sm:$0xff]
        %v6077 = vld [vmem:[#allocation11 + $0x3a0] sm:$0xff]
        %v6078 = vld [vmem:[#allocation11 + $0x3a8] sm:$0xff]
        %v6079 = vld [vmem:[#allocation11 + $0x3b0] sm:$0xff]
        %v6080 = vld [vmem:[#allocation11 + $0x3b8] sm:$0xff]
        %v6081 = vld [vmem:[#allocation11 + $0x3c0] sm:$0xff]
        %v6082 = vld [vmem:[#allocation11 + $0x3c8] sm:$0xff]
        %v6083 = vld [vmem:[#allocation11 + $0x3d0] sm:$0xff]
        %v6084 = vld [vmem:[#allocation11 + $0x3d8] sm:$0xff]
        %v6085 = vld [vmem:[#allocation11 + $0x3e0] sm:$0xff]
        %v6086 = vld [vmem:[#allocation11 + $0x3e8] sm:$0xff]
        %v6087 = vld [vmem:[#allocation11 + $0x3f0] sm:$0xff]
        %v6088 = vld [vmem:[#allocation11 + $0x3f8] sm:$0xff]
        %v6089 = vld [vmem:[#allocation11 + $0x400] sm:$0xff]
        %v6090 = vld [vmem:[#allocation11 + $0x408] sm:$0xff]
        %v6091 = vld [vmem:[#allocation11 + $0x410] sm:$0xff]
        %v6092 = vld [vmem:[#allocation11 + $0x418] sm:$0xff]
        %v6093 = vld [vmem:[#allocation11 + $0x420] sm:$0xff]
        %v6094 = vld [vmem:[#allocation11 + $0x428] sm:$0xff]
        %v6095 = vld [vmem:[#allocation11 + $0x430] sm:$0xff]
        %v6096 = vld [vmem:[#allocation11 + $0x438] sm:$0xff]
        %v6097 = vld [vmem:[#allocation11 + $0x440] sm:$0xff]
        %v6098 = vld [vmem:[#allocation11 + $0x448] sm:$0xff]
        %v6099 = vld [vmem:[#allocation11 + $0x450] sm:$0xff]
        %v6100 = vld [vmem:[#allocation11 + $0x458] sm:$0xff]
        %v6101 = vld [vmem:[#allocation11 + $0x460] sm:$0xff]
        %v6102 = vld [vmem:[#allocation11 + $0x468] sm:$0xff]
        %v6103 = vld [vmem:[#allocation11 + $0x470] sm:$0xff]
        %v6104 = vld [vmem:[#allocation11 + $0x478] sm:$0xff]
        %6105 = vmatprep.subr.mxu0 0.0
        %6106 = vmatpush1.msra.mxu0 %v5961
        %6107 = vmatprep.subr.mxu0 0.0
        %6108 = vmatpush1.msra.mxu0 %v5962
        %6109 = vmatprep.subr.mxu0 0.0
        %6110 = vmatpush1.msra.mxu0 %v5963
        %6111 = vmatprep.subr.mxu0 0.0
        %6112 = vmatpush1.msra.mxu0 %v5964
        %6113 = vmatprep.subr.mxu0 0.0
        %6114 = vmatpush1.msra.mxu0 %v5965
        %6115 = vmatprep.subr.mxu0 0.0
        %6116 = vmatpush1.msra.mxu0 %v5966
        %6117 = vmatprep.subr.mxu0 0.0
        %6118 = vmatpush1.msra.mxu0 %v5967
        %6119 = vmatprep.subr.mxu0 0.0
        %6120 = vmatpush1.msra.mxu0 %v5968
        %6121 = vmatprep.subr.mxu0 0.0
        %6122 = vmatpush1.msra.mxu0 %v5969
        %6123 = vmatprep.subr.mxu0 0.0
        %6124 = vmatpush1.msra.mxu0 %v5970
        %6125 = vmatprep.subr.mxu0 0.0
        %6126 = vmatpush1.msra.mxu0 %v5971
        %6127 = vmatprep.subr.mxu0 0.0
        %6128 = vmatpush1.msra.mxu0 %v5972
        %6129 = vmatprep.subr.mxu0 0.0
        %6130 = vmatpush1.msra.mxu0 %v5973
        %6131 = vmatprep.subr.mxu0 0.0
        %6132 = vmatpush1.msra.mxu0 %v5974
        %6133 = vmatprep.subr.mxu0 0.0
        %6134 = vmatpush1.msra.mxu0 %v5975
        %6135 = vmatprep.subr.mxu0 0.0
        %6136 = vmatpush1.msra.mxu0 %v5976
        %6137 = vmatprep.subr.mxu0 0.0
        %6138 = vmatpush1.msra.mxu0 %v5977
        %6139 = vmatprep.subr.mxu0 0.0
        %6140 = vmatpush1.msra.mxu0 %v5978
        %6141 = vmatprep.subr.mxu0 0.0
        %6142 = vmatpush1.msra.mxu0 %v5979
        %6143 = vmatprep.subr.mxu0 0.0
        %6144 = vmatpush1.msra.mxu0 %v5980
        %6145 = vmatprep.subr.mxu0 0.0
        %6146 = vmatpush1.msra.mxu0 %v5981
        %6147 = vmatprep.subr.mxu0 0.0
        %6148 = vmatpush1.msra.mxu0 %v5982
        %6149 = vmatprep.subr.mxu0 0.0
        %6150 = vmatpush1.msra.mxu0 %v5983
        %6151 = vmatprep.subr.mxu0 0.0
        %6152 = vmatpush1.msra.mxu0 %v5984
        %6153 = vmatprep.subr.mxu0 0.0
        %6154 = vmatpush1.msra.mxu0 %v5985
        %6155 = vmatprep.subr.mxu0 0.0
        %6156 = vmatpush1.msra.mxu0 %v5986
        %6157 = vmatprep.subr.mxu0 0.0
        %6158 = vmatpush1.msra.mxu0 %v5987
        %6159 = vmatprep.subr.mxu0 0.0
        %6160 = vmatpush1.msra.mxu0 %v5988
        %6161 = vmatprep.subr.mxu0 0.0
        %6162 = vmatpush1.msra.mxu0 %v5989
        %6163 = vmatprep.subr.mxu0 0.0
        %6164 = vmatpush1.msra.mxu0 %v5990
        %6165 = vmatprep.subr.mxu0 0.0
        %6166 = vmatpush1.msra.mxu0 %v5991
        %6167 = vmatprep.subr.mxu0 0.0
        %6168 = vmatpush1.msra.mxu0 %v5992
        %6169 = vmatprep.mubr.f32.mxu0 %v5953
        %6170 = vmatmul.mubr.f32.gmra.mrb[0].mxu0 %v5952
        %v6171 = vpop.f32.mrb[0].mxu0
        %v6172 = vadd.f32 0.0, %v6171
        %v6173 = vpop.f32.mrb[0].mxu0
        %6174 = vdwg.mxu0
        %6175 = vmatprep.subr.mxu0 0.0
        %6176 = vmatpush1.msra.mxu0 %v5993
        %6177 = vmatprep.subr.mxu0 0.0
        %6178 = vmatpush1.msra.mxu0 %v5994
        %6179 = vmatprep.subr.mxu0 0.0
        %6180 = vmatpush1.msra.mxu0 %v5995
        %6181 = vmatprep.subr.mxu0 0.0
        %6182 = vmatpush1.msra.mxu0 %v5996
        %6183 = vmatprep.subr.mxu0 0.0
        %6184 = vmatpush1.msra.mxu0 %v5997
        %6185 = vmatprep.subr.mxu0 0.0
        %6186 = vmatpush1.msra.mxu0 %v5998
        %6187 = vmatprep.subr.mxu0 0.0
        %6188 = vmatpush1.msra.mxu0 %v5999
        %6189 = vmatprep.subr.mxu0 0.0
        %6190 = vmatpush1.msra.mxu0 %v6000
        %6191 = vmatprep.subr.mxu0 0.0
        %6192 = vmatpush1.msra.mxu0 %v6001
        %6193 = vmatprep.subr.mxu0 0.0
        %6194 = vmatpush1.msra.mxu0 %v6002
        %6195 = vmatprep.subr.mxu0 0.0
        %6196 = vmatpush1.msra.mxu0 %v6003
        %6197 = vmatprep.subr.mxu0 0.0
        %6198 = vmatpush1.msra.mxu0 %v6004
        %6199 = vmatprep.subr.mxu0 0.0
        %6200 = vmatpush1.msra.mxu0 %v6005
        %6201 = vmatprep.subr.mxu0 0.0
        %6202 = vmatpush1.msra.mxu0 %v6006
        %6203 = vmatprep.subr.mxu0 0.0
        %6204 = vmatpush1.msra.mxu0 %v6007
        %6205 = vmatprep.subr.mxu0 0.0
        %6206 = vmatpush1.msra.mxu0 %v6008
        %6207 = vmatprep.subr.mxu0 0.0
        %6208 = vmatpush1.msra.mxu0 %v6009
        %6209 = vmatprep.subr.mxu0 0.0
        %6210 = vmatpush1.msra.mxu0 %v6010
        %6211 = vmatprep.subr.mxu0 0.0
        %6212 = vmatpush1.msra.mxu0 %v6011
        %6213 = vmatprep.subr.mxu0 0.0
        %6214 = vmatpush1.msra.mxu0 %v6012
        %6215 = vmatprep.subr.mxu0 0.0
        %6216 = vmatpush1.msra.mxu0 %v6013
        %6217 = vmatprep.subr.mxu0 0.0
        %6218 = vmatpush1.msra.mxu0 %v6014
        %6219 = vmatprep.subr.mxu0 0.0
        %6220 = vmatpush1.msra.mxu0 %v6015
        %6221 = vmatprep.subr.mxu0 0.0
        %6222 = vmatpush1.msra.mxu0 %v6016
        %6223 = vmatprep.subr.mxu0 0.0
        %6224 = vmatpush1.msra.mxu0 %v6017
        %6225 = vmatprep.subr.mxu0 0.0
        %6226 = vmatpush1.msra.mxu0 %v6018
        %6227 = vmatprep.subr.mxu0 0.0
        %6228 = vmatpush1.msra.mxu0 %v6019
        %6229 = vmatprep.subr.mxu0 0.0
        %6230 = vmatpush1.msra.mxu0 %v6020
        %6231 = vmatprep.subr.mxu0 0.0
        %6232 = vmatpush1.msra.mxu0 %v6021
        %6233 = vmatprep.subr.mxu0 0.0
        %6234 = vmatpush1.msra.mxu0 %v6022
        %6235 = vmatprep.subr.mxu0 0.0
        %6236 = vmatpush1.msra.mxu0 %v6023
        %6237 = vmatprep.subr.mxu0 0.0
        %6238 = vmatpush1.msra.mxu0 %v6024
        %6239 = vmatprep.mubr.f32.mxu0 %v5955
        %6240 = vmatmul.mubr.f32.gmra.mrb[0].mxu0 %v5954
        %v6241 = vpop.f32.mrb[0].mxu0
        %v6242 = vadd.f32 %v6172, %v6241
        %v6243 = vpop.f32.mrb[0].mxu0
        %6244 = vdwg.mxu0
        %6245 = vmatprep.subr.mxu0 0.0
        %6246 = vmatpush1.msra.mxu0 %v6025
        %6247 = vmatprep.subr.mxu0 0.0
        %6248 = vmatpush1.msra.mxu0 %v6026
        %6249 = vmatprep.subr.mxu0 0.0
        %6250 = vmatpush1.msra.mxu0 %v6027
        %6251 = vmatprep.subr.mxu0 0.0
        %6252 = vmatpush1.msra.mxu0 %v6028
        %6253 = vmatprep.subr.mxu0 0.0
        %6254 = vmatpush1.msra.mxu0 %v6029
        %6255 = vmatprep.subr.mxu0 0.0
        %6256 = vmatpush1.msra.mxu0 %v6030
        %6257 = vmatprep.subr.mxu0 0.0
        %6258 = vmatpush1.msra.mxu0 %v6031
        %6259 = vmatprep.subr.mxu0 0.0
        %6260 = vmatpush1.msra.mxu0 %v6032
        %6261 = vmatprep.subr.mxu0 0.0
        %6262 = vmatpush1.msra.mxu0 %v6033
        %6263 = vmatprep.subr.mxu0 0.0
        %6264 = vmatpush1.msra.mxu0 %v6034
        %6265 = vmatprep.subr.mxu0 0.0
        %6266 = vmatpush1.msra.mxu0 %v6035
        %6267 = vmatprep.subr.mxu0 0.0
        %6268 = vmatpush1.msra.mxu0 %v6036
        %6269 = vmatprep.subr.mxu0 0.0
        %6270 = vmatpush1.msra.mxu0 %v6037
        %6271 = vmatprep.subr.mxu0 0.0
        %6272 = vmatpush1.msra.mxu0 %v6038
        %6273 = vmatprep.subr.mxu0 0.0
        %6274 = vmatpush1.msra.mxu0 %v6039
        %6275 = vmatprep.subr.mxu0 0.0
        %6276 = vmatpush1.msra.mxu0 %v6040
        %6277 = vmatprep.subr.mxu0 0.0
        %6278 = vmatpush1.msra.mxu0 %v6041
        %6279 = vmatprep.subr.mxu0 0.0
        %6280 = vmatpush1.msra.mxu0 %v6042
        %6281 = vmatprep.subr.mxu0 0.0
        %6282 = vmatpush1.msra.mxu0 %v6043
        %6283 = vmatprep.subr.mxu0 0.0
        %6284 = vmatpush1.msra.mxu0 %v6044
        %6285 = vmatprep.subr.mxu0 0.0
        %6286 = vmatpush1.msra.mxu0 %v6045
        %6287 = vmatprep.subr.mxu0 0.0
        %6288 = vmatpush1.msra.mxu0 %v6046
        %6289 = vmatprep.subr.mxu0 0.0
        %6290 = vmatpush1.msra.mxu0 %v6047
        %6291 = vmatprep.subr.mxu0 0.0
        %6292 = vmatpush1.msra.mxu0 %v6048
        %6293 = vmatprep.subr.mxu0 0.0
        %6294 = vmatpush1.msra.mxu0 %v6049
        %6295 = vmatprep.subr.mxu0 0.0
        %6296 = vmatpush1.msra.mxu0 %v6050
        %6297 = vmatprep.subr.mxu0 0.0
        %6298 = vmatpush1.msra.mxu0 %v6051
        %6299 = vmatprep.subr.mxu0 0.0
        %6300 = vmatpush1.msra.mxu0 %v6052
        %6301 = vmatprep.subr.mxu0 0.0
        %6302 = vmatpush1.msra.mxu0 %v6053
        %6303 = vmatprep.subr.mxu0 0.0
        %6304 = vmatpush1.msra.mxu0 %v6054
        %6305 = vmatprep.subr.mxu0 0.0
        %6306 = vmatpush1.msra.mxu0 %v6055
        %6307 = vmatprep.subr.mxu0 0.0
        %6308 = vmatpush1.msra.mxu0 %v6056
        %6309 = vmatprep.mubr.f32.mxu0 %v5957
        %6310 = vmatmul.mubr.f32.gmra.mrb[0].mxu0 %v5956
        %v6311 = vpop.f32.mrb[0].mxu0
        %v6312 = vadd.f32 %v6242, %v6311
        %v6313 = vpop.f32.mrb[0].mxu0
        %6314 = vdwg.mxu0
        %6315 = vmatprep.subr.mxu0 0.0
        %6316 = vmatpush1.msra.mxu0 %v6057
        %6317 = vmatprep.subr.mxu0 0.0
        %6318 = vmatpush1.msra.mxu0 %v6058
        %6319 = vmatprep.subr.mxu0 0.0
        %6320 = vmatpush1.msra.mxu0 %v6059
        %6321 = vmatprep.subr.mxu0 0.0
        %6322 = vmatpush1.msra.mxu0 %v6060
        %6323 = vmatprep.subr.mxu0 0.0
        %6324 = vmatpush1.msra.mxu0 %v6061
        %6325 = vmatprep.subr.mxu0 0.0
        %6326 = vmatpush1.msra.mxu0 %v6062
        %6327 = vmatprep.subr.mxu0 0.0
        %6328 = vmatpush1.msra.mxu0 %v6063
        %6329 = vmatprep.subr.mxu0 0.0
        %6330 = vmatpush1.msra.mxu0 %v6064
        %6331 = vmatprep.subr.mxu0 0.0
        %6332 = vmatpush1.msra.mxu0 %v6065
        %6333 = vmatprep.subr.mxu0 0.0
        %6334 = vmatpush1.msra.mxu0 %v6066
        %6335 = vmatprep.subr.mxu0 0.0
        %6336 = vmatpush1.msra.mxu0 %v6067
        %6337 = vmatprep.subr.mxu0 0.0
        %6338 = vmatpush1.msra.mxu0 %v6068
        %6339 = vmatprep.subr.mxu0 0.0
        %6340 = vmatpush1.msra.mxu0 %v6069
        %6341 = vmatprep.subr.mxu0 0.0
        %6342 = vmatpush1.msra.mxu0 %v6070
        %6343 = vmatprep.subr.mxu0 0.0
        %6344 = vmatpush1.msra.mxu0 %v6071
        %6345 = vmatprep.subr.mxu0 0.0
        %6346 = vmatpush1.msra.mxu0 %v6072
        %6347 = vmatprep.subr.mxu0 0.0
        %6348 = vmatpush1.msra.mxu0 %v6073
        %6349 = vmatprep.subr.mxu0 0.0
        %6350 = vmatpush1.msra.mxu0 %v6074
        %6351 = vmatprep.subr.mxu0 0.0
        %6352 = vmatpush1.msra.mxu0 %v6075
        %6353 = vmatprep.subr.mxu0 0.0
        %6354 = vmatpush1.msra.mxu0 %v6076
        %6355 = vmatprep.subr.mxu0 0.0
        %6356 = vmatpush1.msra.mxu0 %v6077
        %6357 = vmatprep.subr.mxu0 0.0
        %6358 = vmatpush1.msra.mxu0 %v6078
        %6359 = vmatprep.subr.mxu0 0.0
        %6360 = vmatpush1.msra.mxu0 %v6079
        %6361 = vmatprep.subr.mxu0 0.0
        %6362 = vmatpush1.msra.mxu0 %v6080
        %6363 = vmatprep.subr.mxu0 0.0
        %6364 = vmatpush1.msra.mxu0 %v6081
        %6365 = vmatprep.subr.mxu0 0.0
        %6366 = vmatpush1.msra.mxu0 %v6082
        %6367 = vmatprep.subr.mxu0 0.0
        %6368 = vmatpush1.msra.mxu0 %v6083
        %6369 = vmatprep.subr.mxu0 0.0
        %6370 = vmatpush1.msra.mxu0 %v6084
        %6371 = vmatprep.subr.mxu0 0.0
        %6372 = vmatpush1.msra.mxu0 %v6085
        %6373 = vmatprep.subr.mxu0 0.0
        %6374 = vmatpush1.msra.mxu0 %v6086
        %6375 = vmatprep.subr.mxu0 0.0
        %6376 = vmatpush1.msra.mxu0 %v6087
        %6377 = vmatprep.subr.mxu0 0.0
        %6378 = vmatpush1.msra.mxu0 %v6088
        %6379 = vmatprep.mubr.f32.mxu0 %v5959
        %6380 = vmatmul.mubr.f32.gmra.mrb[0].mxu0 %v5958
        %v6381 = vpop.f32.mrb[0].mxu0
        %v6382 = vadd.f32 %v6312, %v6381
        %v6383 = vpop.f32.mrb[0].mxu0
        %6384 = vdwg.mxu0
        %6385 = vmatprep.subr.mxu0 0.0
        %6386 = vmatpush1.msra.mxu0 %v6089
        %6387 = vmatprep.subr.mxu0 0.0
        %6388 = vmatpush1.msra.mxu0 %v6090
        %6389 = vmatprep.subr.mxu0 0.0
        %6390 = vmatpush1.msra.mxu0 %v6091
        %6391 = vmatprep.subr.mxu0 0.0
        %6392 = vmatpush1.msra.mxu0 %v6092
        %6393 = vmatprep.subr.mxu0 0.0
        %6394 = vmatpush1.msra.mxu0 %v6093
        %6395 = vmatprep.subr.mxu0 0.0
        %6396 = vmatpush1.msra.mxu0 %v6094
        %6397 = vmatprep.subr.mxu0 0.0
        %6398 = vmatpush1.msra.mxu0 %v6095
        %6399 = vmatprep.subr.mxu0 0.0
        %6400 = vmatpush1.msra.mxu0 %v6096
        %6401 = vmatprep.subr.mxu0 0.0
        %6402 = vmatpush1.msra.mxu0 %v6097
        %6403 = vmatprep.subr.mxu0 0.0
        %6404 = vmatpush1.msra.mxu0 %v6098
        %6405 = vmatprep.subr.mxu0 0.0
        %6406 = vmatpush1.msra.mxu0 %v6099
        %6407 = vmatprep.subr.mxu0 0.0
        %6408 = vmatpush1.msra.mxu0 %v6100
        %6409 = vmatprep.subr.mxu0 0.0
        %6410 = vmatpush1.msra.mxu0 %v6101
        %6411 = vmatprep.subr.mxu0 0.0
        %6412 = vmatpush1.msra.mxu0 %v6102
        %6413 = vmatprep.subr.mxu0 0.0
        %6414 = vmatpush1.msra.mxu0 %v6103
        %6415 = vmatprep.subr.mxu0 0.0
        %6416 = vmatpush1.msra.mxu0 %v6104
        %6417 = vmatprep.subr.mxu0 0.0
        %6418 = vmatpush1.msra.mxu0 0.0
        %6419 = vmatprep.subr.mxu0 0.0
        %6420 = vmatpush1.msra.mxu0 0.0
        %6421 = vmatprep.subr.mxu0 0.0
        %6422 = vmatpush1.msra.mxu0 0.0
        %6423 = vmatprep.subr.mxu0 0.0
        %6424 = vmatpush1.msra.mxu0 0.0
        %6425 = vmatprep.subr.mxu0 0.0
        %6426 = vmatpush1.msra.mxu0 0.0
        %6427 = vmatprep.subr.mxu0 0.0
        %6428 = vmatpush1.msra.mxu0 0.0
        %6429 = vmatprep.subr.mxu0 0.0
        %6430 = vmatpush1.msra.mxu0 0.0
        %6431 = vmatprep.subr.mxu0 0.0
        %6432 = vmatpush1.msra.mxu0 0.0
        %6433 = vmatprep.subr.mxu0 0.0
        %6434 = vmatpush1.msra.mxu0 0.0
        %6435 = vmatprep.subr.mxu0 0.0
        %6436 = vmatpush1.msra.mxu0 0.0
        %6437 = vmatprep.subr.mxu0 0.0
        %6438 = vmatpush1.msra.mxu0 0.0
        %6439 = vmatprep.subr.mxu0 0.0
        %6440 = vmatpush1.msra.mxu0 0.0
        %6441 = vmatprep.subr.mxu0 0.0
        %6442 = vmatpush1.msra.mxu0 0.0
        %6443 = vmatprep.subr.mxu0 0.0
        %6444 = vmatpush1.msra.mxu0 0.0
        %6445 = vmatprep.subr.mxu0 0.0
        %6446 = vmatpush1.msra.mxu0 0.0
        %6447 = vmatprep.subr.mxu0 0.0
        %6448 = vmatpush1.msra.mxu0 0.0
        %6449 = vmatprep.mubr.f32.mxu0 0.0
        %6450 = vmatmul.mubr.f32.gmra.mrb[0].mxu0 %v5960
        %v6451 = vpop.f32.mrb[0].mxu0
        %v6452 = vadd.f32 %v6382, %v6451
        %v6453 = vpop.f32.mrb[0].mxu0
        %6454 = vdwg.mxu0
        %6455 = vst [vmem:[%s503] sm:$0xff] %v6452
        %s6456 = scalar_lea.vmem [#allocation5], 1
        %v6457 = vld [vmem:[%s6456] ss:$2 sm:$0xff]
        %s6458 = scalar_lea.vmem [#allocation5], 17
        %v6459 = vld [vmem:[%s6458] ss:$2 sm:$0x1]
        %v6462 = vlaneseq
        %v6463 = vshrl.u32 %v6462, 7
        %v6464 = vsub.s32 0, %v6463
        %v6465 = vrot.slane %v6457, %v6464
        %v6466 = vlaneseq
        %v6467 = vshrl.u32 %v6466, 7
        %v6468 = vsub.s32 1, %v6467
        %v6469 = vrot.slane %v6457, %v6468
        %v6470 = vlaneseq
        %v6471 = vshrl.u32 %v6470, 7
        %v6472 = vsub.s32 2, %v6471
        %v6473 = vrot.slane %v6457, %v6472
        %v6474 = vlaneseq
        %v6475 = vshrl.u32 %v6474, 7
        %v6476 = vsub.s32 3, %v6475
        %v6477 = vrot.slane %v6457, %v6476
        %v6478 = vlaneseq
        %v6479 = vshrl.u32 %v6478, 7
        %v6480 = vsub.s32 4, %v6479
        %v6481 = vrot.slane %v6457, %v6480
        %v6482 = vlaneseq
        %v6483 = vshrl.u32 %v6482, 7
        %v6484 = vsub.s32 5, %v6483
        %v6485 = vrot.slane %v6457, %v6484
        %v6486 = vlaneseq
        %v6487 = vshrl.u32 %v6486, 7
        %v6488 = vsub.s32 6, %v6487
        %v6489 = vrot.slane %v6457, %v6488
        %v6490 = vlaneseq
        %v6491 = vshrl.u32 %v6490, 7
        %v6492 = vsub.s32 7, %v6491
        %v6493 = vrot.slane %v6457, %v6492
        %v6494 = vlaneseq
        %v6495 = vshrl.u32 %v6494, 7
        %v6496 = vsub.s32 0, %v6495
        %v6497 = vrot.slane %v6459, %v6496
        %v6507 = vmul.f32 %v5952, %v6465
        %v6508 = vmul.f32 %v5953, %v6469
        %v6509 = vmul.f32 %v5954, %v6473
        %v6510 = vmul.f32 %v5955, %v6477
        %v6511 = vmul.f32 %v5956, %v6481
        %v6512 = vmul.f32 %v5957, %v6485
        %v6513 = vmul.f32 %v5958, %v6489
        %v6514 = vmul.f32 %v5959, %v6493
        %v6515 = vmul.f32 %v5960, %v6497
        %v6516 = vld [vmem:[%s4510] sm:$0xff]
        %v6517 = vld [vmem:[%s4510 + $0x8] sm:$0xff]
        %v6518 = vld [vmem:[%s4510 + $0x10] sm:$0xff]
        %v6519 = vld [vmem:[%s4510 + $0x18] sm:$0xff]
        %v6520 = vld [vmem:[%s4510 + $0x20] sm:$0xff]
        %v6521 = vld [vmem:[%s4510 + $0x28] sm:$0xff]
        %v6522 = vld [vmem:[%s4510 + $0x30] sm:$0xff]
        %v6523 = vld [vmem:[%s4510 + $0x38] sm:$0xff]
        %v6524 = vld [vmem:[%s4510 + $0x40] sm:$0xff]
        %v6525 = vmul.f32 %v6516, %v6465
        %v6526 = vmul.f32 %v6517, %v6469
        %v6527 = vmul.f32 %v6518, %v6473
        %v6528 = vmul.f32 %v6519, %v6477
        %v6529 = vmul.f32 %v6520, %v6481
        %v6530 = vmul.f32 %v6521, %v6485
        %v6531 = vmul.f32 %v6522, %v6489
        %v6532 = vmul.f32 %v6523, %v6493
        %v6533 = vmul.f32 %v6524, %v6497
        %v6534 = vld [vmem:[%s5235] sm:$0xff]
        %v6535 = vld [vmem:[%s5235 + $0x8] sm:$0xff]
        %v6536 = vld [vmem:[%s5235 + $0x10] sm:$0xff]
        %v6537 = vld [vmem:[%s5235 + $0x18] sm:$0xff]
        %v6538 = vld [vmem:[%s5235 + $0x20] sm:$0xff]
        %v6539 = vld [vmem:[%s5235 + $0x28] sm:$0xff]
        %v6540 = vld [vmem:[%s5235 + $0x30] sm:$0xff]
        %v6541 = vld [vmem:[%s5235 + $0x38] sm:$0xff]
        %v6542 = vld [vmem:[%s5235 + $0x40] sm:$0xff]
        %v6543 = vmul.f32 %v6534, %v6465
        %v6544 = vmul.f32 %v6535, %v6469
        %v6545 = vmul.f32 %v6536, %v6473
        %v6546 = vmul.f32 %v6537, %v6477
        %v6547 = vmul.f32 %v6538, %v6481
        %v6548 = vmul.f32 %v6539, %v6485
        %v6549 = vmul.f32 %v6540, %v6489
        %v6550 = vmul.f32 %v6541, %v6493
        %v6551 = vmul.f32 %v6542, %v6497
        %v6552 = vmul.f32 %v6507, %v740
        %v6553 = vmul.f32 %v6508, %v740
        %v6554 = vmul.f32 %v6509, %v740
        %v6555 = vmul.f32 %v6510, %v740
        %v6556 = vmul.f32 %v6511, %v740
        %v6557 = vmul.f32 %v6512, %v740
        %v6558 = vmul.f32 %v6513, %v740
        %v6559 = vmul.f32 %v6514, %v740
        %v6560 = vmul.f32 %v6515, %v740
        %v6561 = vmul.f32 %v6525, %v845
        %v6562 = vmul.f32 %v6526, %v845
        %v6563 = vmul.f32 %v6527, %v845
        %v6564 = vmul.f32 %v6528, %v845
        %v6565 = vmul.f32 %v6529, %v845
        %v6566 = vmul.f32 %v6530, %v845
        %v6567 = vmul.f32 %v6531, %v845
        %v6568 = vmul.f32 %v6532, %v845
        %v6569 = vmul.f32 %v6533, %v845
        %v6570 = vmul.f32 %v6543, %v950
        %v6571 = vmul.f32 %v6544, %v950
        %v6572 = vmul.f32 %v6545, %v950
        %v6573 = vmul.f32 %v6546, %v950
        %v6574 = vmul.f32 %v6547, %v950
        %v6575 = vmul.f32 %v6548, %v950
        %v6576 = vmul.f32 %v6549, %v950
        %v6577 = vmul.f32 %v6550, %v950
        %v6578 = vmul.f32 %v6551, %v950
        %v6579 = vadd.f32 %v6552, %v6561
        %v6580 = vadd.f32 %v6553, %v6562
        %v6581 = vadd.f32 %v6554, %v6563
        %v6582 = vadd.f32 %v6555, %v6564
        %v6583 = vadd.f32 %v6556, %v6565
        %v6584 = vadd.f32 %v6557, %v6566
        %v6585 = vadd.f32 %v6558, %v6567
        %v6586 = vadd.f32 %v6559, %v6568
        %v6587 = vadd.f32 %v6560, %v6569
        %v6588 = vadd.f32 %v6579, %v6570
        %v6589 = vadd.f32 %v6580, %v6571
        %v6590 = vadd.f32 %v6581, %v6572
        %v6591 = vadd.f32 %v6582, %v6573
        %v6592 = vadd.f32 %v6583, %v6574
        %v6593 = vadd.f32 %v6584, %v6575
        %v6594 = vadd.f32 %v6585, %v6576
        %v6595 = vadd.f32 %v6586, %v6577
        %v6596 = vadd.f32 %v6587, %v6578
        %v6597 = vmul.f32 %v6507, %v750
        %v6598 = vmul.f32 %v6508, %v750
        %v6599 = vmul.f32 %v6509, %v750
        %v6600 = vmul.f32 %v6510, %v750
        %v6601 = vmul.f32 %v6511, %v750
        %v6602 = vmul.f32 %v6512, %v750
        %v6603 = vmul.f32 %v6513, %v750
        %v6604 = vmul.f32 %v6514, %v750
        %v6605 = vmul.f32 %v6515, %v750
        %v6606 = vmul.f32 %v6525, %v855
        %v6607 = vmul.f32 %v6526, %v855
        %v6608 = vmul.f32 %v6527, %v855
        %v6609 = vmul.f32 %v6528, %v855
        %v6610 = vmul.f32 %v6529, %v855
        %v6611 = vmul.f32 %v6530, %v855
        %v6612 = vmul.f32 %v6531, %v855
        %v6613 = vmul.f32 %v6532, %v855
        %v6614 = vmul.f32 %v6533, %v855
        %v6615 = vmul.f32 %v6543, %v960
        %v6616 = vmul.f32 %v6544, %v960
        %v6617 = vmul.f32 %v6545, %v960
        %v6618 = vmul.f32 %v6546, %v960
        %v6619 = vmul.f32 %v6547, %v960
        %v6620 = vmul.f32 %v6548, %v960
        %v6621 = vmul.f32 %v6549, %v960
        %v6622 = vmul.f32 %v6550, %v960
        %v6623 = vmul.f32 %v6551, %v960
        %v6624 = vadd.f32 %v6597, %v6606
        %v6625 = vadd.f32 %v6598, %v6607
        %v6626 = vadd.f32 %v6599, %v6608
        %v6627 = vadd.f32 %v6600, %v6609
        %v6628 = vadd.f32 %v6601, %v6610
        %v6629 = vadd.f32 %v6602, %v6611
        %v6630 = vadd.f32 %v6603, %v6612
        %v6631 = vadd.f32 %v6604, %v6613
        %v6632 = vadd.f32 %v6605, %v6614
        %v6633 = vadd.f32 %v6624, %v6615
        %v6634 = vadd.f32 %v6625, %v6616
        %v6635 = vadd.f32 %v6626, %v6617
        %v6636 = vadd.f32 %v6627, %v6618
        %v6637 = vadd.f32 %v6628, %v6619
        %v6638 = vadd.f32 %v6629, %v6620
        %v6639 = vadd.f32 %v6630, %v6621
        %v6640 = vadd.f32 %v6631, %v6622
        %v6641 = vadd.f32 %v6632, %v6623
        %6643 = vrot.lane.b32.xlu0 %v6641, 3
        %v6644 = vpop.permute.xlu0 %6643
        %6654 = vrot.lane.b32.xlu0 %v6633, 3
        %v6655 = vpop.permute.xlu0 %6654
        %6656 = vrot.lane.b32.xlu0 %v6634, 3
        %v6657 = vpop.permute.xlu0 %6656
        %6658 = vrot.lane.b32.xlu0 %v6635, 3
        %v6659 = vpop.permute.xlu0 %6658
        %6660 = vrot.lane.b32.xlu0 %v6636, 3
        %v6661 = vpop.permute.xlu0 %6660
        %6662 = vrot.lane.b32.xlu0 %v6637, 3
        %v6663 = vpop.permute.xlu0 %6662
        %6664 = vrot.lane.b32.xlu0 %v6638, 3
        %v6665 = vpop.permute.xlu0 %6664
        %6666 = vrot.lane.b32.xlu0 %v6639, 3
        %v6667 = vpop.permute.xlu0 %6666
        %6668 = vrot.lane.b32.xlu0 %v6640, 3
        %v6669 = vpop.permute.xlu0 %6668
        %vm6670 = vcmask 23552
        %v6671 = vsel %vm6670, %v6655, %v6657
        %v6672 = vsel %vm6670, %v6657, %v6659
        %v6673 = vsel %vm6670, %v6659, %v6661
        %v6674 = vsel %vm6670, %v6661, %v6663
        %v6675 = vsel %vm6670, %v6663, %v6665
        %v6676 = vsel %vm6670, %v6665, %v6667
        %v6677 = vsel %vm6670, %v6667, %v6669
        %v6678 = vsel %vm6670, %v6669, %v6644
        %v6688 = vsel %vm6670, %v6644, %v6655
        %v6689 = vmul.f32 %v6507, %v760
        %v6690 = vmul.f32 %v6508, %v760
        %v6691 = vmul.f32 %v6509, %v760
        %v6692 = vmul.f32 %v6510, %v760
        %v6693 = vmul.f32 %v6511, %v760
        %v6694 = vmul.f32 %v6512, %v760
        %v6695 = vmul.f32 %v6513, %v760
        %v6696 = vmul.f32 %v6514, %v760
        %v6697 = vmul.f32 %v6515, %v760
        %v6698 = vmul.f32 %v6525, %v865
        %v6699 = vmul.f32 %v6526, %v865
        %v6700 = vmul.f32 %v6527, %v865
        %v6701 = vmul.f32 %v6528, %v865
        %v6702 = vmul.f32 %v6529, %v865
        %v6703 = vmul.f32 %v6530, %v865
        %v6704 = vmul.f32 %v6531, %v865
        %v6705 = vmul.f32 %v6532, %v865
        %v6706 = vmul.f32 %v6533, %v865
        %v6707 = vmul.f32 %v6543, %v970
        %v6708 = vmul.f32 %v6544, %v970
        %v6709 = vmul.f32 %v6545, %v970
        %v6710 = vmul.f32 %v6546, %v970
        %v6711 = vmul.f32 %v6547, %v970
        %v6712 = vmul.f32 %v6548, %v970
        %v6713 = vmul.f32 %v6549, %v970
        %v6714 = vmul.f32 %v6550, %v970
        %v6715 = vmul.f32 %v6551, %v970
        %v6716 = vadd.f32 %v6689, %v6698
        %v6717 = vadd.f32 %v6690, %v6699
        %v6718 = vadd.f32 %v6691, %v6700
        %v6719 = vadd.f32 %v6692, %v6701
        %v6720 = vadd.f32 %v6693, %v6702
        %v6721 = vadd.f32 %v6694, %v6703
        %v6722 = vadd.f32 %v6695, %v6704
        %v6723 = vadd.f32 %v6696, %v6705
        %v6724 = vadd.f32 %v6697, %v6706
        %v6725 = vadd.f32 %v6716, %v6707
        %v6726 = vadd.f32 %v6717, %v6708
        %v6727 = vadd.f32 %v6718, %v6709
        %v6728 = vadd.f32 %v6719, %v6710
        %v6729 = vadd.f32 %v6720, %v6711
        %v6730 = vadd.f32 %v6721, %v6712
        %v6731 = vadd.f32 %v6722, %v6713
        %v6732 = vadd.f32 %v6723, %v6714
        %v6733 = vadd.f32 %v6724, %v6715
        %6735 = vrot.lane.b32.xlu0 %v6733, 6
        %v6736 = vpop.permute.xlu0 %6735
        %6746 = vrot.lane.b32.xlu0 %v6725, 6
        %v6747 = vpop.permute.xlu0 %6746
        %6748 = vrot.lane.b32.xlu0 %v6726, 6
        %v6749 = vpop.permute.xlu0 %6748
        %6750 = vrot.lane.b32.xlu0 %v6727, 6
        %v6751 = vpop.permute.xlu0 %6750
        %6752 = vrot.lane.b32.xlu0 %v6728, 6
        %v6753 = vpop.permute.xlu0 %6752
        %6754 = vrot.lane.b32.xlu0 %v6729, 6
        %v6755 = vpop.permute.xlu0 %6754
        %6756 = vrot.lane.b32.xlu0 %v6730, 6
        %v6757 = vpop.permute.xlu0 %6756
        %6758 = vrot.lane.b32.xlu0 %v6731, 6
        %v6759 = vpop.permute.xlu0 %6758
        %6760 = vrot.lane.b32.xlu0 %v6732, 6
        %v6761 = vpop.permute.xlu0 %6760
        %vm6762 = vcmask 48128
        %v6763 = vsel %vm6762, %v6747, %v6749
        %v6764 = vsel %vm6762, %v6749, %v6751
        %v6765 = vsel %vm6762, %v6751, %v6753
        %v6766 = vsel %vm6762, %v6753, %v6755
        %v6767 = vsel %vm6762, %v6755, %v6757
        %v6768 = vsel %vm6762, %v6757, %v6759
        %v6769 = vsel %vm6762, %v6759, %v6761
        %v6770 = vsel %vm6762, %v6761, %v6736
        %v6780 = vsel %vm6762, %v6736, %v6747
        %v6781 = vmul.f32 %v6507, %v770
        %v6782 = vmul.f32 %v6508, %v770
        %v6783 = vmul.f32 %v6509, %v770
        %v6784 = vmul.f32 %v6510, %v770
        %v6785 = vmul.f32 %v6511, %v770
        %v6786 = vmul.f32 %v6512, %v770
        %v6787 = vmul.f32 %v6513, %v770
        %v6788 = vmul.f32 %v6514, %v770
        %v6789 = vmul.f32 %v6515, %v770
        %v6790 = vmul.f32 %v6525, %v875
        %v6791 = vmul.f32 %v6526, %v875
        %v6792 = vmul.f32 %v6527, %v875
        %v6793 = vmul.f32 %v6528, %v875
        %v6794 = vmul.f32 %v6529, %v875
        %v6795 = vmul.f32 %v6530, %v875
        %v6796 = vmul.f32 %v6531, %v875
        %v6797 = vmul.f32 %v6532, %v875
        %v6798 = vmul.f32 %v6533, %v875
        %v6799 = vmul.f32 %v6543, %v980
        %v6800 = vmul.f32 %v6544, %v980
        %v6801 = vmul.f32 %v6545, %v980
        %v6802 = vmul.f32 %v6546, %v980
        %v6803 = vmul.f32 %v6547, %v980
        %v6804 = vmul.f32 %v6548, %v980
        %v6805 = vmul.f32 %v6549, %v980
        %v6806 = vmul.f32 %v6550, %v980
        %v6807 = vmul.f32 %v6551, %v980
        %v6808 = vadd.f32 %v6781, %v6790
        %v6809 = vadd.f32 %v6782, %v6791
        %v6810 = vadd.f32 %v6783, %v6792
        %v6811 = vadd.f32 %v6784, %v6793
        %v6812 = vadd.f32 %v6785, %v6794
        %v6813 = vadd.f32 %v6786, %v6795
        %v6814 = vadd.f32 %v6787, %v6796
        %v6815 = vadd.f32 %v6788, %v6797
        %v6816 = vadd.f32 %v6789, %v6798
        %v6817 = vadd.f32 %v6808, %v6799
        %v6818 = vadd.f32 %v6809, %v6800
        %v6819 = vadd.f32 %v6810, %v6801
        %v6820 = vadd.f32 %v6811, %v6802
        %v6821 = vadd.f32 %v6812, %v6803
        %v6822 = vadd.f32 %v6813, %v6804
        %v6823 = vadd.f32 %v6814, %v6805
        %v6824 = vadd.f32 %v6815, %v6806
        %v6825 = vadd.f32 %v6816, %v6807
        %6827 = vrot.lane.b32.xlu0 %v6825, 9
        %v6828 = vpop.permute.xlu0 %6827
        %6838 = vrot.lane.b32.xlu0 %v6817, 9
        %v6839 = vpop.permute.xlu0 %6838
        %6840 = vrot.lane.b32.xlu0 %v6818, 9
        %v6841 = vpop.permute.xlu0 %6840
        %6842 = vrot.lane.b32.xlu0 %v6819, 9
        %v6843 = vpop.permute.xlu0 %6842
        %6844 = vrot.lane.b32.xlu0 %v6820, 9
        %v6845 = vpop.permute.xlu0 %6844
        %6846 = vrot.lane.b32.xlu0 %v6821, 9
        %v6847 = vpop.permute.xlu0 %6846
        %6848 = vrot.lane.b32.xlu0 %v6822, 9
        %v6849 = vpop.permute.xlu0 %6848
        %6850 = vrot.lane.b32.xlu0 %v6823, 9
        %v6851 = vpop.permute.xlu0 %6850
        %6852 = vrot.lane.b32.xlu0 %v6824, 9
        %v6853 = vpop.permute.xlu0 %6852
        %vm6854 = vcmask 72704
        %v6855 = vsel %vm6854, %v6839, %v6841
        %v6856 = vsel %vm6854, %v6841, %v6843
        %v6857 = vsel %vm6854, %v6843, %v6845
        %v6858 = vsel %vm6854, %v6845, %v6847
        %v6859 = vsel %vm6854, %v6847, %v6849
        %v6860 = vsel %vm6854, %v6849, %v6851
        %v6861 = vsel %vm6854, %v6851, %v6853
        %v6862 = vsel %vm6854, %v6853, %v6828
        %v6872 = vsel %vm6854, %v6828, %v6839
        %v6873 = vmul.f32 %v6507, %v780
        %v6874 = vmul.f32 %v6508, %v780
        %v6875 = vmul.f32 %v6509, %v780
        %v6876 = vmul.f32 %v6510, %v780
        %v6877 = vmul.f32 %v6511, %v780
        %v6878 = vmul.f32 %v6512, %v780
        %v6879 = vmul.f32 %v6513, %v780
        %v6880 = vmul.f32 %v6514, %v780
        %v6881 = vmul.f32 %v6515, %v780
        %v6882 = vmul.f32 %v6525, %v885
        %v6883 = vmul.f32 %v6526, %v885
        %v6884 = vmul.f32 %v6527, %v885
        %v6885 = vmul.f32 %v6528, %v885
        %v6886 = vmul.f32 %v6529, %v885
        %v6887 = vmul.f32 %v6530, %v885
        %v6888 = vmul.f32 %v6531, %v885
        %v6889 = vmul.f32 %v6532, %v885
        %v6890 = vmul.f32 %v6533, %v885
        %v6891 = vmul.f32 %v6543, %v990
        %v6892 = vmul.f32 %v6544, %v990
        %v6893 = vmul.f32 %v6545, %v990
        %v6894 = vmul.f32 %v6546, %v990
        %v6895 = vmul.f32 %v6547, %v990
        %v6896 = vmul.f32 %v6548, %v990
        %v6897 = vmul.f32 %v6549, %v990
        %v6898 = vmul.f32 %v6550, %v990
        %v6899 = vmul.f32 %v6551, %v990
        %v6900 = vadd.f32 %v6873, %v6882
        %v6901 = vadd.f32 %v6874, %v6883
        %v6902 = vadd.f32 %v6875, %v6884
        %v6903 = vadd.f32 %v6876, %v6885
        %v6904 = vadd.f32 %v6877, %v6886
        %v6905 = vadd.f32 %v6878, %v6887
        %v6906 = vadd.f32 %v6879, %v6888
        %v6907 = vadd.f32 %v6880, %v6889
        %v6908 = vadd.f32 %v6881, %v6890
        %v6909 = vadd.f32 %v6900, %v6891
        %v6910 = vadd.f32 %v6901, %v6892
        %v6911 = vadd.f32 %v6902, %v6893
        %v6912 = vadd.f32 %v6903, %v6894
        %v6913 = vadd.f32 %v6904, %v6895
        %v6914 = vadd.f32 %v6905, %v6896
        %v6915 = vadd.f32 %v6906, %v6897
        %v6916 = vadd.f32 %v6907, %v6898
        %v6917 = vadd.f32 %v6908, %v6899
        %6919 = vrot.lane.b32.xlu0 %v6917, 12
        %v6920 = vpop.permute.xlu0 %6919
        %6930 = vrot.lane.b32.xlu0 %v6909, 12
        %v6931 = vpop.permute.xlu0 %6930
        %6932 = vrot.lane.b32.xlu0 %v6910, 12
        %v6933 = vpop.permute.xlu0 %6932
        %6934 = vrot.lane.b32.xlu0 %v6911, 12
        %v6935 = vpop.permute.xlu0 %6934
        %6936 = vrot.lane.b32.xlu0 %v6912, 12
        %v6937 = vpop.permute.xlu0 %6936
        %6938 = vrot.lane.b32.xlu0 %v6913, 12
        %v6939 = vpop.permute.xlu0 %6938
        %6940 = vrot.lane.b32.xlu0 %v6914, 12
        %v6941 = vpop.permute.xlu0 %6940
        %6942 = vrot.lane.b32.xlu0 %v6915, 12
        %v6943 = vpop.permute.xlu0 %6942
        %6944 = vrot.lane.b32.xlu0 %v6916, 12
        %v6945 = vpop.permute.xlu0 %6944
        %vm6946 = vcmask 97280
        %v6947 = vsel %vm6946, %v6931, %v6933
        %v6948 = vsel %vm6946, %v6933, %v6935
        %v6949 = vsel %vm6946, %v6935, %v6937
        %v6950 = vsel %vm6946, %v6937, %v6939
        %v6951 = vsel %vm6946, %v6939, %v6941
        %v6952 = vsel %vm6946, %v6941, %v6943
        %v6953 = vsel %vm6946, %v6943, %v6945
        %v6954 = vsel %vm6946, %v6945, %v6920
        %v6964 = vsel %vm6946, %v6920, %v6931
        %v6965 = vmul.f32 %v6507, %v790
        %v6966 = vmul.f32 %v6508, %v790
        %v6967 = vmul.f32 %v6509, %v790
        %v6968 = vmul.f32 %v6510, %v790
        %v6969 = vmul.f32 %v6511, %v790
        %v6970 = vmul.f32 %v6512, %v790
        %v6971 = vmul.f32 %v6513, %v790
        %v6972 = vmul.f32 %v6514, %v790
        %v6973 = vmul.f32 %v6515, %v790
        %v6974 = vmul.f32 %v6525, %v895
        %v6975 = vmul.f32 %v6526, %v895
        %v6976 = vmul.f32 %v6527, %v895
        %v6977 = vmul.f32 %v6528, %v895
        %v6978 = vmul.f32 %v6529, %v895
        %v6979 = vmul.f32 %v6530, %v895
        %v6980 = vmul.f32 %v6531, %v895
        %v6981 = vmul.f32 %v6532, %v895
        %v6982 = vmul.f32 %v6533, %v895
        %v6983 = vmul.f32 %v6543, %v1000
        %v6984 = vmul.f32 %v6544, %v1000
        %v6985 = vmul.f32 %v6545, %v1000
        %v6986 = vmul.f32 %v6546, %v1000
        %v6987 = vmul.f32 %v6547, %v1000
        %v6988 = vmul.f32 %v6548, %v1000
        %v6989 = vmul.f32 %v6549, %v1000
        %v6990 = vmul.f32 %v6550, %v1000
        %v6991 = vmul.f32 %v6551, %v1000
        %v6992 = vadd.f32 %v6965, %v6974
        %v6993 = vadd.f32 %v6966, %v6975
        %v6994 = vadd.f32 %v6967, %v6976
        %v6995 = vadd.f32 %v6968, %v6977
        %v6996 = vadd.f32 %v6969, %v6978
        %v6997 = vadd.f32 %v6970, %v6979
        %v6998 = vadd.f32 %v6971, %v6980
        %v6999 = vadd.f32 %v6972, %v6981
        %v7000 = vadd.f32 %v6973, %v6982
        %v7001 = vadd.f32 %v6992, %v6983
        %v7002 = vadd.f32 %v6993, %v6984
        %v7003 = vadd.f32 %v6994, %v6985
        %v7004 = vadd.f32 %v6995, %v6986
        %v7005 = vadd.f32 %v6996, %v6987
        %v7006 = vadd.f32 %v6997, %v6988
        %v7007 = vadd.f32 %v6998, %v6989
        %v7008 = vadd.f32 %v6999, %v6990
        %v7009 = vadd.f32 %v7000, %v6991
        %7011 = vrot.lane.b32.xlu0 %v7009, 15
        %v7012 = vpop.permute.xlu0 %7011
        %7022 = vrot.lane.b32.xlu0 %v7001, 15
        %v7023 = vpop.permute.xlu0 %7022
        %7024 = vrot.lane.b32.xlu0 %v7002, 15
        %v7025 = vpop.permute.xlu0 %7024
        %7026 = vrot.lane.b32.xlu0 %v7003, 15
        %v7027 = vpop.permute.xlu0 %7026
        %7028 = vrot.lane.b32.xlu0 %v7004, 15
        %v7029 = vpop.permute.xlu0 %7028
        %7030 = vrot.lane.b32.xlu0 %v7005, 15
        %v7031 = vpop.permute.xlu0 %7030
        %7032 = vrot.lane.b32.xlu0 %v7006, 15
        %v7033 = vpop.permute.xlu0 %7032
        %7034 = vrot.lane.b32.xlu0 %v7007, 15
        %v7035 = vpop.permute.xlu0 %7034
        %7036 = vrot.lane.b32.xlu0 %v7008, 15
        %v7037 = vpop.permute.xlu0 %7036
        %vm7038 = vcmask 121856
        %v7039 = vsel %vm7038, %v7023, %v7025
        %v7040 = vsel %vm7038, %v7025, %v7027
        %v7041 = vsel %vm7038, %v7027, %v7029
        %v7042 = vsel %vm7038, %v7029, %v7031
        %v7043 = vsel %vm7038, %v7031, %v7033
        %v7044 = vsel %vm7038, %v7033, %v7035
        %v7045 = vsel %vm7038, %v7035, %v7037
        %v7046 = vsel %vm7038, %v7037, %v7012
        %v7056 = vsel %vm7038, %v7012, %v7023
        %v7057 = vadd.f32 %v6588, %v6688
        %v7058 = vadd.f32 %v6589, %v6671
        %v7059 = vadd.f32 %v6590, %v6672
        %v7060 = vadd.f32 %v6591, %v6673
        %v7061 = vadd.f32 %v6592, %v6674
        %v7062 = vadd.f32 %v6593, %v6675
        %v7063 = vadd.f32 %v6594, %v6676
        %v7064 = vadd.f32 %v6595, %v6677
        %v7065 = vadd.f32 %v6596, %v6678
        %v7066 = vadd.f32 %v6780, %v6872
        %v7067 = vadd.f32 %v6763, %v6855
        %v7068 = vadd.f32 %v6764, %v6856
        %v7069 = vadd.f32 %v6765, %v6857
        %v7070 = vadd.f32 %v6766, %v6858
        %v7071 = vadd.f32 %v6767, %v6859
        %v7072 = vadd.f32 %v6768, %v6860
        %v7073 = vadd.f32 %v6769, %v6861
        %v7074 = vadd.f32 %v6770, %v6862
        %v7075 = vadd.f32 %v6964, %v7056
        %v7076 = vadd.f32 %v6947, %v7039
        %v7077 = vadd.f32 %v6948, %v7040
        %v7078 = vadd.f32 %v6949, %v7041
        %v7079 = vadd.f32 %v6950, %v7042
        %v7080 = vadd.f32 %v6951, %v7043
        %v7081 = vadd.f32 %v6952, %v7044
        %v7082 = vadd.f32 %v6953, %v7045
        %v7083 = vadd.f32 %v6954, %v7046
        %v7084 = vadd.f32 %v7057, %v7066
        %v7085 = vadd.f32 %v7058, %v7067
        %v7086 = vadd.f32 %v7059, %v7068
        %v7087 = vadd.f32 %v7060, %v7069
        %v7088 = vadd.f32 %v7061, %v7070
        %v7089 = vadd.f32 %v7062, %v7071
        %v7090 = vadd.f32 %v7063, %v7072
        %v7091 = vadd.f32 %v7064, %v7073
        %v7092 = vadd.f32 %v7065, %v7074
        %v7093 = vadd.f32 %v7084, %v7075
        %v7094 = vadd.f32 %v7085, %v7076
        %v7095 = vadd.f32 %v7086, %v7077
        %v7096 = vadd.f32 %v7087, %v7078
        %v7097 = vadd.f32 %v7088, %v7079
        %v7098 = vadd.f32 %v7089, %v7080
        %v7099 = vadd.f32 %v7090, %v7081
        %v7100 = vadd.f32 %v7091, %v7082
        %v7101 = vadd.f32 %v7092, %v7083
        %v7102 = vld [vmem:[#allocation5] ss:$2 sm:$0xff]
        %s7103 = scalar_lea.vmem [#allocation5], 16
        %v7104 = vld [vmem:[%s7103] ss:$2 sm:$0x1]
        %v7107 = vlaneseq
        %v7108 = vshrl.u32 %v7107, 7
        %v7109 = vsub.s32 0, %v7108
        %v7110 = vrot.slane %v7102, %v7109
        %v7111 = vlaneseq
        %v7112 = vshrl.u32 %v7111, 7
        %v7113 = vsub.s32 1, %v7112
        %v7114 = vrot.slane %v7102, %v7113
        %v7115 = vlaneseq
        %v7116 = vshrl.u32 %v7115, 7
        %v7117 = vsub.s32 2, %v7116
        %v7118 = vrot.slane %v7102, %v7117
        %v7119 = vlaneseq
        %v7120 = vshrl.u32 %v7119, 7
        %v7121 = vsub.s32 3, %v7120
        %v7122 = vrot.slane %v7102, %v7121
        %v7123 = vlaneseq
        %v7124 = vshrl.u32 %v7123, 7
        %v7125 = vsub.s32 4, %v7124
        %v7126 = vrot.slane %v7102, %v7125
        %v7127 = vlaneseq
        %v7128 = vshrl.u32 %v7127, 7
        %v7129 = vsub.s32 5, %v7128
        %v7130 = vrot.slane %v7102, %v7129
        %v7131 = vlaneseq
        %v7132 = vshrl.u32 %v7131, 7
        %v7133 = vsub.s32 6, %v7132
        %v7134 = vrot.slane %v7102, %v7133
        %v7135 = vlaneseq
        %v7136 = vshrl.u32 %v7135, 7
        %v7137 = vsub.s32 7, %v7136
        %v7138 = vrot.slane %v7102, %v7137
        %v7139 = vlaneseq
        %v7140 = vshrl.u32 %v7139, 7
        %v7141 = vsub.s32 0, %v7140
        %v7142 = vrot.slane %v7104, %v7141
        %v7152 = vmul.f32 %v7093, %v7110
        %v7153 = vmul.f32 %v7094, %v7114
        %v7154 = vmul.f32 %v7095, %v7118
        %v7155 = vmul.f32 %v7096, %v7122
        %v7156 = vmul.f32 %v7097, %v7126
        %v7157 = vmul.f32 %v7098, %v7130
        %v7158 = vmul.f32 %v7099, %v7134
        %v7159 = vmul.f32 %v7100, %v7138
        %v7160 = vmul.f32 %v7101, %v7142
        %v7161 = vld [vmem:[#allocation2] sm:$0xff]
        %v7162 = vld [vmem:[#allocation2 + $0x8] sm:$0xff]
        %v7163 = vld [vmem:[#allocation2 + $0x10] sm:$0xff]
        %v7164 = vld [vmem:[#allocation2 + $0x18] sm:$0xff]
        %v7165 = vld [vmem:[#allocation2 + $0x20] sm:$0xff]
        %v7166 = vld [vmem:[#allocation2 + $0x28] sm:$0xff]
        %v7167 = vld [vmem:[#allocation2 + $0x30] sm:$0xff]
        %v7168 = vld [vmem:[#allocation2 + $0x38] sm:$0xff]
        %v7169 = vld [vmem:[#allocation2 + $0x40] sm:$0xff]
        %v7170 = vmul.f32 %v7161, %v7110
        %v7171 = vmul.f32 %v7162, %v7114
        %v7172 = vmul.f32 %v7163, %v7118
        %v7173 = vmul.f32 %v7164, %v7122
        %v7174 = vmul.f32 %v7165, %v7126
        %v7175 = vmul.f32 %v7166, %v7130
        %v7176 = vmul.f32 %v7167, %v7134
        %v7177 = vmul.f32 %v7168, %v7138
        %v7178 = vmul.f32 %v7169, %v7142
        %v7179 = vld [vmem:[%s2644] sm:$0xff]
        %v7180 = vld [vmem:[%s2644 + $0x8] sm:$0xff]
        %v7181 = vld [vmem:[%s2644 + $0x10] sm:$0xff]
        %v7182 = vld [vmem:[%s2644 + $0x18] sm:$0xff]
        %v7183 = vld [vmem:[%s2644 + $0x20] sm:$0xff]
        %v7184 = vld [vmem:[%s2644 + $0x28] sm:$0xff]
        %v7185 = vld [vmem:[%s2644 + $0x30] sm:$0xff]
        %v7186 = vld [vmem:[%s2644 + $0x38] sm:$0xff]
        %v7187 = vld [vmem:[%s2644 + $0x40] sm:$0xff]
        %v7188 = vmul.f32 %v7179, %v7110
        %v7189 = vmul.f32 %v7180, %v7114
        %v7190 = vmul.f32 %v7181, %v7118
        %v7191 = vmul.f32 %v7182, %v7122
        %v7192 = vmul.f32 %v7183, %v7126
        %v7193 = vmul.f32 %v7184, %v7130
        %v7194 = vmul.f32 %v7185, %v7134
        %v7195 = vmul.f32 %v7186, %v7138
        %v7196 = vmul.f32 %v7187, %v7142
        %v7197 = vmul.f32 %v7152, %v740
        %v7198 = vmul.f32 %v7153, %v740
        %v7199 = vmul.f32 %v7154, %v740
        %v7200 = vmul.f32 %v7155, %v740
        %v7201 = vmul.f32 %v7156, %v740
        %v7202 = vmul.f32 %v7157, %v740
        %v7203 = vmul.f32 %v7158, %v740
        %v7204 = vmul.f32 %v7159, %v740
        %v7205 = vmul.f32 %v7160, %v740
        %v7206 = vmul.f32 %v7170, %v845
        %v7207 = vmul.f32 %v7171, %v845
        %v7208 = vmul.f32 %v7172, %v845
        %v7209 = vmul.f32 %v7173, %v845
        %v7210 = vmul.f32 %v7174, %v845
        %v7211 = vmul.f32 %v7175, %v845
        %v7212 = vmul.f32 %v7176, %v845
        %v7213 = vmul.f32 %v7177, %v845
        %v7214 = vmul.f32 %v7178, %v845
        %v7215 = vmul.f32 %v7188, %v950
        %v7216 = vmul.f32 %v7189, %v950
        %v7217 = vmul.f32 %v7190, %v950
        %v7218 = vmul.f32 %v7191, %v950
        %v7219 = vmul.f32 %v7192, %v950
        %v7220 = vmul.f32 %v7193, %v950
        %v7221 = vmul.f32 %v7194, %v950
        %v7222 = vmul.f32 %v7195, %v950
        %v7223 = vmul.f32 %v7196, %v950
        %v7224 = vadd.f32 %v7197, %v7206
        %v7225 = vadd.f32 %v7198, %v7207
        %v7226 = vadd.f32 %v7199, %v7208
        %v7227 = vadd.f32 %v7200, %v7209
        %v7228 = vadd.f32 %v7201, %v7210
        %v7229 = vadd.f32 %v7202, %v7211
        %v7230 = vadd.f32 %v7203, %v7212
        %v7231 = vadd.f32 %v7204, %v7213
        %v7232 = vadd.f32 %v7205, %v7214
        %v7233 = vadd.f32 %v7224, %v7215
        %v7234 = vadd.f32 %v7225, %v7216
        %v7235 = vadd.f32 %v7226, %v7217
        %v7236 = vadd.f32 %v7227, %v7218
        %v7237 = vadd.f32 %v7228, %v7219
        %v7238 = vadd.f32 %v7229, %v7220
        %v7239 = vadd.f32 %v7230, %v7221
        %v7240 = vadd.f32 %v7231, %v7222
        %v7241 = vadd.f32 %v7232, %v7223
        %v7242 = vmul.f32 %v7152, %v750
        %v7243 = vmul.f32 %v7153, %v750
        %v7244 = vmul.f32 %v7154, %v750
        %v7245 = vmul.f32 %v7155, %v750
        %v7246 = vmul.f32 %v7156, %v750
        %v7247 = vmul.f32 %v7157, %v750
        %v7248 = vmul.f32 %v7158, %v750
        %v7249 = vmul.f32 %v7159, %v750
        %v7250 = vmul.f32 %v7160, %v750
        %v7251 = vmul.f32 %v7170, %v855
        %v7252 = vmul.f32 %v7171, %v855
        %v7253 = vmul.f32 %v7172, %v855
        %v7254 = vmul.f32 %v7173, %v855
        %v7255 = vmul.f32 %v7174, %v855
        %v7256 = vmul.f32 %v7175, %v855
        %v7257 = vmul.f32 %v7176, %v855
        %v7258 = vmul.f32 %v7177, %v855
        %v7259 = vmul.f32 %v7178, %v855
        %v7260 = vmul.f32 %v7188, %v960
        %v7261 = vmul.f32 %v7189, %v960
        %v7262 = vmul.f32 %v7190, %v960
        %v7263 = vmul.f32 %v7191, %v960
        %v7264 = vmul.f32 %v7192, %v960
        %v7265 = vmul.f32 %v7193, %v960
        %v7266 = vmul.f32 %v7194, %v960
        %v7267 = vmul.f32 %v7195, %v960
        %v7268 = vmul.f32 %v7196, %v960
        %v7269 = vadd.f32 %v7242, %v7251
        %v7270 = vadd.f32 %v7243, %v7252
        %v7271 = vadd.f32 %v7244, %v7253
        %v7272 = vadd.f32 %v7245, %v7254
        %v7273 = vadd.f32 %v7246, %v7255
        %v7274 = vadd.f32 %v7247, %v7256
        %v7275 = vadd.f32 %v7248, %v7257
        %v7276 = vadd.f32 %v7249, %v7258
        %v7277 = vadd.f32 %v7250, %v7259
        %v7278 = vadd.f32 %v7269, %v7260
        %v7279 = vadd.f32 %v7270, %v7261
        %v7280 = vadd.f32 %v7271, %v7262
        %v7281 = vadd.f32 %v7272, %v7263
        %v7282 = vadd.f32 %v7273, %v7264
        %v7283 = vadd.f32 %v7274, %v7265
        %v7284 = vadd.f32 %v7275, %v7266
        %v7285 = vadd.f32 %v7276, %v7267
        %v7286 = vadd.f32 %v7277, %v7268
        %7288 = vrot.lane.b32.xlu0 %v7286, 1
        %v7289 = vpop.permute.xlu0 %7288
        %7299 = vrot.lane.b32.xlu0 %v7278, 1
        %v7300 = vpop.permute.xlu0 %7299
        %7301 = vrot.lane.b32.xlu0 %v7279, 1
        %v7302 = vpop.permute.xlu0 %7301
        %7303 = vrot.lane.b32.xlu0 %v7280, 1
        %v7304 = vpop.permute.xlu0 %7303
        %7305 = vrot.lane.b32.xlu0 %v7281, 1
        %v7306 = vpop.permute.xlu0 %7305
        %7307 = vrot.lane.b32.xlu0 %v7282, 1
        %v7308 = vpop.permute.xlu0 %7307
        %7309 = vrot.lane.b32.xlu0 %v7283, 1
        %v7310 = vpop.permute.xlu0 %7309
        %7311 = vrot.lane.b32.xlu0 %v7284, 1
        %v7312 = vpop.permute.xlu0 %7311
        %7313 = vrot.lane.b32.xlu0 %v7285, 1
        %v7314 = vpop.permute.xlu0 %7313
        %vm7315 = vcmask 7168
        %v7316 = vsel %vm7315, %v7300, %v7302
        %v7317 = vsel %vm7315, %v7302, %v7304
        %v7318 = vsel %vm7315, %v7304, %v7306
        %v7319 = vsel %vm7315, %v7306, %v7308
        %v7320 = vsel %vm7315, %v7308, %v7310
        %v7321 = vsel %vm7315, %v7310, %v7312
        %v7322 = vsel %vm7315, %v7312, %v7314
        %v7323 = vsel %vm7315, %v7314, %v7289
        %v7333 = vsel %vm7315, %v7289, %v7300
        %v7334 = vmul.f32 %v7152, %v760
        %v7335 = vmul.f32 %v7153, %v760
        %v7336 = vmul.f32 %v7154, %v760
        %v7337 = vmul.f32 %v7155, %v760
        %v7338 = vmul.f32 %v7156, %v760
        %v7339 = vmul.f32 %v7157, %v760
        %v7340 = vmul.f32 %v7158, %v760
        %v7341 = vmul.f32 %v7159, %v760
        %v7342 = vmul.f32 %v7160, %v760
        %v7343 = vmul.f32 %v7170, %v865
        %v7344 = vmul.f32 %v7171, %v865
        %v7345 = vmul.f32 %v7172, %v865
        %v7346 = vmul.f32 %v7173, %v865
        %v7347 = vmul.f32 %v7174, %v865
        %v7348 = vmul.f32 %v7175, %v865
        %v7349 = vmul.f32 %v7176, %v865
        %v7350 = vmul.f32 %v7177, %v865
        %v7351 = vmul.f32 %v7178, %v865
        %v7352 = vmul.f32 %v7188, %v970
        %v7353 = vmul.f32 %v7189, %v970
        %v7354 = vmul.f32 %v7190, %v970
        %v7355 = vmul.f32 %v7191, %v970
        %v7356 = vmul.f32 %v7192, %v970
        %v7357 = vmul.f32 %v7193, %v970
        %v7358 = vmul.f32 %v7194, %v970
        %v7359 = vmul.f32 %v7195, %v970
        %v7360 = vmul.f32 %v7196, %v970
        %v7361 = vadd.f32 %v7334, %v7343
        %v7362 = vadd.f32 %v7335, %v7344
        %v7363 = vadd.f32 %v7336, %v7345
        %v7364 = vadd.f32 %v7337, %v7346
        %v7365 = vadd.f32 %v7338, %v7347
        %v7366 = vadd.f32 %v7339, %v7348
        %v7367 = vadd.f32 %v7340, %v7349
        %v7368 = vadd.f32 %v7341, %v7350
        %v7369 = vadd.f32 %v7342, %v7351
        %v7370 = vadd.f32 %v7361, %v7352
        %v7371 = vadd.f32 %v7362, %v7353
        %v7372 = vadd.f32 %v7363, %v7354
        %v7373 = vadd.f32 %v7364, %v7355
        %v7374 = vadd.f32 %v7365, %v7356
        %v7375 = vadd.f32 %v7366, %v7357
        %v7376 = vadd.f32 %v7367, %v7358
        %v7377 = vadd.f32 %v7368, %v7359
        %v7378 = vadd.f32 %v7369, %v7360
        %7380 = vrot.lane.b32.xlu0 %v7378, 2
        %v7381 = vpop.permute.xlu0 %7380
        %7391 = vrot.lane.b32.xlu0 %v7370, 2
        %v7392 = vpop.permute.xlu0 %7391
        %7393 = vrot.lane.b32.xlu0 %v7371, 2
        %v7394 = vpop.permute.xlu0 %7393
        %7395 = vrot.lane.b32.xlu0 %v7372, 2
        %v7396 = vpop.permute.xlu0 %7395
        %7397 = vrot.lane.b32.xlu0 %v7373, 2
        %v7398 = vpop.permute.xlu0 %7397
        %7399 = vrot.lane.b32.xlu0 %v7374, 2
        %v7400 = vpop.permute.xlu0 %7399
        %7401 = vrot.lane.b32.xlu0 %v7375, 2
        %v7402 = vpop.permute.xlu0 %7401
        %7403 = vrot.lane.b32.xlu0 %v7376, 2
        %v7404 = vpop.permute.xlu0 %7403
        %7405 = vrot.lane.b32.xlu0 %v7377, 2
        %v7406 = vpop.permute.xlu0 %7405
        %vm7407 = vcmask 15360
        %v7408 = vsel %vm7407, %v7392, %v7394
        %v7409 = vsel %vm7407, %v7394, %v7396
        %v7410 = vsel %vm7407, %v7396, %v7398
        %v7411 = vsel %vm7407, %v7398, %v7400
        %v7412 = vsel %vm7407, %v7400, %v7402
        %v7413 = vsel %vm7407, %v7402, %v7404
        %v7414 = vsel %vm7407, %v7404, %v7406
        %v7415 = vsel %vm7407, %v7406, %v7381
        %v7425 = vsel %vm7407, %v7381, %v7392
        %v7426 = vmul.f32 %v7152, %v770
        %v7427 = vmul.f32 %v7153, %v770
        %v7428 = vmul.f32 %v7154, %v770
        %v7429 = vmul.f32 %v7155, %v770
        %v7430 = vmul.f32 %v7156, %v770
        %v7431 = vmul.f32 %v7157, %v770
        %v7432 = vmul.f32 %v7158, %v770
        %v7433 = vmul.f32 %v7159, %v770
        %v7434 = vmul.f32 %v7160, %v770
        %v7435 = vmul.f32 %v7170, %v875
        %v7436 = vmul.f32 %v7171, %v875
        %v7437 = vmul.f32 %v7172, %v875
        %v7438 = vmul.f32 %v7173, %v875
        %v7439 = vmul.f32 %v7174, %v875
        %v7440 = vmul.f32 %v7175, %v875
        %v7441 = vmul.f32 %v7176, %v875
        %v7442 = vmul.f32 %v7177, %v875
        %v7443 = vmul.f32 %v7178, %v875
        %v7444 = vmul.f32 %v7188, %v980
        %v7445 = vmul.f32 %v7189, %v980
        %v7446 = vmul.f32 %v7190, %v980
        %v7447 = vmul.f32 %v7191, %v980
        %v7448 = vmul.f32 %v7192, %v980
        %v7449 = vmul.f32 %v7193, %v980
        %v7450 = vmul.f32 %v7194, %v980
        %v7451 = vmul.f32 %v7195, %v980
        %v7452 = vmul.f32 %v7196, %v980
        %v7453 = vadd.f32 %v7426, %v7435
        %v7454 = vadd.f32 %v7427, %v7436
        %v7455 = vadd.f32 %v7428, %v7437
        %v7456 = vadd.f32 %v7429, %v7438
        %v7457 = vadd.f32 %v7430, %v7439
        %v7458 = vadd.f32 %v7431, %v7440
        %v7459 = vadd.f32 %v7432, %v7441
        %v7460 = vadd.f32 %v7433, %v7442
        %v7461 = vadd.f32 %v7434, %v7443
        %v7462 = vadd.f32 %v7453, %v7444
        %v7463 = vadd.f32 %v7454, %v7445
        %v7464 = vadd.f32 %v7455, %v7446
        %v7465 = vadd.f32 %v7456, %v7447
        %v7466 = vadd.f32 %v7457, %v7448
        %v7467 = vadd.f32 %v7458, %v7449
        %v7468 = vadd.f32 %v7459, %v7450
        %v7469 = vadd.f32 %v7460, %v7451
        %v7470 = vadd.f32 %v7461, %v7452
        %7472 = vrot.lane.b32.xlu0 %v7470, 3
        %v7473 = vpop.permute.xlu0 %7472
        %7483 = vrot.lane.b32.xlu0 %v7462, 3
        %v7484 = vpop.permute.xlu0 %7483
        %7485 = vrot.lane.b32.xlu0 %v7463, 3
        %v7486 = vpop.permute.xlu0 %7485
        %7487 = vrot.lane.b32.xlu0 %v7464, 3
        %v7488 = vpop.permute.xlu0 %7487
        %7489 = vrot.lane.b32.xlu0 %v7465, 3
        %v7490 = vpop.permute.xlu0 %7489
        %7491 = vrot.lane.b32.xlu0 %v7466, 3
        %v7492 = vpop.permute.xlu0 %7491
        %7493 = vrot.lane.b32.xlu0 %v7467, 3
        %v7494 = vpop.permute.xlu0 %7493
        %7495 = vrot.lane.b32.xlu0 %v7468, 3
        %v7496 = vpop.permute.xlu0 %7495
        %7497 = vrot.lane.b32.xlu0 %v7469, 3
        %v7498 = vpop.permute.xlu0 %7497
        %v7499 = vsel %vm6670, %v7484, %v7486
        %v7500 = vsel %vm6670, %v7486, %v7488
        %v7501 = vsel %vm6670, %v7488, %v7490
        %v7502 = vsel %vm6670, %v7490, %v7492
        %v7503 = vsel %vm6670, %v7492, %v7494
        %v7504 = vsel %vm6670, %v7494, %v7496
        %v7505 = vsel %vm6670, %v7496, %v7498
        %v7506 = vsel %vm6670, %v7498, %v7473
        %v7516 = vsel %vm6670, %v7473, %v7484
        %v7517 = vmul.f32 %v7152, %v780
        %v7518 = vmul.f32 %v7153, %v780
        %v7519 = vmul.f32 %v7154, %v780
        %v7520 = vmul.f32 %v7155, %v780
        %v7521 = vmul.f32 %v7156, %v780
        %v7522 = vmul.f32 %v7157, %v780
        %v7523 = vmul.f32 %v7158, %v780
        %v7524 = vmul.f32 %v7159, %v780
        %v7525 = vmul.f32 %v7160, %v780
        %v7526 = vmul.f32 %v7170, %v885
        %v7527 = vmul.f32 %v7171, %v885
        %v7528 = vmul.f32 %v7172, %v885
        %v7529 = vmul.f32 %v7173, %v885
        %v7530 = vmul.f32 %v7174, %v885
        %v7531 = vmul.f32 %v7175, %v885
        %v7532 = vmul.f32 %v7176, %v885
        %v7533 = vmul.f32 %v7177, %v885
        %v7534 = vmul.f32 %v7178, %v885
        %v7535 = vmul.f32 %v7188, %v990
        %v7536 = vmul.f32 %v7189, %v990
        %v7537 = vmul.f32 %v7190, %v990
        %v7538 = vmul.f32 %v7191, %v990
        %v7539 = vmul.f32 %v7192, %v990
        %v7540 = vmul.f32 %v7193, %v990
        %v7541 = vmul.f32 %v7194, %v990
        %v7542 = vmul.f32 %v7195, %v990
        %v7543 = vmul.f32 %v7196, %v990
        %v7544 = vadd.f32 %v7517, %v7526
        %v7545 = vadd.f32 %v7518, %v7527
        %v7546 = vadd.f32 %v7519, %v7528
        %v7547 = vadd.f32 %v7520, %v7529
        %v7548 = vadd.f32 %v7521, %v7530
        %v7549 = vadd.f32 %v7522, %v7531
        %v7550 = vadd.f32 %v7523, %v7532
        %v7551 = vadd.f32 %v7524, %v7533
        %v7552 = vadd.f32 %v7525, %v7534
        %v7553 = vadd.f32 %v7544, %v7535
        %v7554 = vadd.f32 %v7545, %v7536
        %v7555 = vadd.f32 %v7546, %v7537
        %v7556 = vadd.f32 %v7547, %v7538
        %v7557 = vadd.f32 %v7548, %v7539
        %v7558 = vadd.f32 %v7549, %v7540
        %v7559 = vadd.f32 %v7550, %v7541
        %v7560 = vadd.f32 %v7551, %v7542
        %v7561 = vadd.f32 %v7552, %v7543
        %7563 = vrot.lane.b32.xlu0 %v7561, 4
        %v7564 = vpop.permute.xlu0 %7563
        %7574 = vrot.lane.b32.xlu0 %v7553, 4
        %v7575 = vpop.permute.xlu0 %7574
        %7576 = vrot.lane.b32.xlu0 %v7554, 4
        %v7577 = vpop.permute.xlu0 %7576
        %7578 = vrot.lane.b32.xlu0 %v7555, 4
        %v7579 = vpop.permute.xlu0 %7578
        %7580 = vrot.lane.b32.xlu0 %v7556, 4
        %v7581 = vpop.permute.xlu0 %7580
        %7582 = vrot.lane.b32.xlu0 %v7557, 4
        %v7583 = vpop.permute.xlu0 %7582
        %7584 = vrot.lane.b32.xlu0 %v7558, 4
        %v7585 = vpop.permute.xlu0 %7584
        %7586 = vrot.lane.b32.xlu0 %v7559, 4
        %v7587 = vpop.permute.xlu0 %7586
        %7588 = vrot.lane.b32.xlu0 %v7560, 4
        %v7589 = vpop.permute.xlu0 %7588
        %vm7590 = vcmask 31744
        %v7591 = vsel %vm7590, %v7575, %v7577
        %v7592 = vsel %vm7590, %v7577, %v7579
        %v7593 = vsel %vm7590, %v7579, %v7581
        %v7594 = vsel %vm7590, %v7581, %v7583
        %v7595 = vsel %vm7590, %v7583, %v7585
        %v7596 = vsel %vm7590, %v7585, %v7587
        %v7597 = vsel %vm7590, %v7587, %v7589
        %v7598 = vsel %vm7590, %v7589, %v7564
        %v7608 = vsel %vm7590, %v7564, %v7575
        %v7609 = vmul.f32 %v7152, %v790
        %v7610 = vmul.f32 %v7153, %v790
        %v7611 = vmul.f32 %v7154, %v790
        %v7612 = vmul.f32 %v7155, %v790
        %v7613 = vmul.f32 %v7156, %v790
        %v7614 = vmul.f32 %v7157, %v790
        %v7615 = vmul.f32 %v7158, %v790
        %v7616 = vmul.f32 %v7159, %v790
        %v7617 = vmul.f32 %v7160, %v790
        %v7618 = vmul.f32 %v7170, %v895
        %v7619 = vmul.f32 %v7171, %v895
        %v7620 = vmul.f32 %v7172, %v895
        %v7621 = vmul.f32 %v7173, %v895
        %v7622 = vmul.f32 %v7174, %v895
        %v7623 = vmul.f32 %v7175, %v895
        %v7624 = vmul.f32 %v7176, %v895
        %v7625 = vmul.f32 %v7177, %v895
        %v7626 = vmul.f32 %v7178, %v895
        %v7627 = vmul.f32 %v7188, %v1000
        %v7628 = vmul.f32 %v7189, %v1000
        %v7629 = vmul.f32 %v7190, %v1000
        %v7630 = vmul.f32 %v7191, %v1000
        %v7631 = vmul.f32 %v7192, %v1000
        %v7632 = vmul.f32 %v7193, %v1000
        %v7633 = vmul.f32 %v7194, %v1000
        %v7634 = vmul.f32 %v7195, %v1000
        %v7635 = vmul.f32 %v7196, %v1000
        %v7636 = vadd.f32 %v7609, %v7618
        %v7637 = vadd.f32 %v7610, %v7619
        %v7638 = vadd.f32 %v7611, %v7620
        %v7639 = vadd.f32 %v7612, %v7621
        %v7640 = vadd.f32 %v7613, %v7622
        %v7641 = vadd.f32 %v7614, %v7623
        %v7642 = vadd.f32 %v7615, %v7624
        %v7643 = vadd.f32 %v7616, %v7625
        %v7644 = vadd.f32 %v7617, %v7626
        %v7645 = vadd.f32 %v7636, %v7627
        %v7646 = vadd.f32 %v7637, %v7628
        %v7647 = vadd.f32 %v7638, %v7629
        %v7648 = vadd.f32 %v7639, %v7630
        %v7649 = vadd.f32 %v7640, %v7631
        %v7650 = vadd.f32 %v7641, %v7632
        %v7651 = vadd.f32 %v7642, %v7633
        %v7652 = vadd.f32 %v7643, %v7634
        %v7653 = vadd.f32 %v7644, %v7635
        %7655 = vrot.lane.b32.xlu0 %v7653, 5
        %v7656 = vpop.permute.xlu0 %7655
        %7666 = vrot.lane.b32.xlu0 %v7645, 5
        %v7667 = vpop.permute.xlu0 %7666
        %7668 = vrot.lane.b32.xlu0 %v7646, 5
        %v7669 = vpop.permute.xlu0 %7668
        %7670 = vrot.lane.b32.xlu0 %v7647, 5
        %v7671 = vpop.permute.xlu0 %7670
        %7672 = vrot.lane.b32.xlu0 %v7648, 5
        %v7673 = vpop.permute.xlu0 %7672
        %7674 = vrot.lane.b32.xlu0 %v7649, 5
        %v7675 = vpop.permute.xlu0 %7674
        %7676 = vrot.lane.b32.xlu0 %v7650, 5
        %v7677 = vpop.permute.xlu0 %7676
        %7678 = vrot.lane.b32.xlu0 %v7651, 5
        %v7679 = vpop.permute.xlu0 %7678
        %7680 = vrot.lane.b32.xlu0 %v7652, 5
        %v7681 = vpop.permute.xlu0 %7680
        %vm7682 = vcmask 39936
        %v7683 = vsel %vm7682, %v7667, %v7669
        %v7684 = vsel %vm7682, %v7669, %v7671
        %v7685 = vsel %vm7682, %v7671, %v7673
        %v7686 = vsel %vm7682, %v7673, %v7675
        %v7687 = vsel %vm7682, %v7675, %v7677
        %v7688 = vsel %vm7682, %v7677, %v7679
        %v7689 = vsel %vm7682, %v7679, %v7681
        %v7690 = vsel %vm7682, %v7681, %v7656
        %v7700 = vsel %vm7682, %v7656, %v7667
        %v7701 = vadd.f32 %v7233, %v7333
        %v7702 = vadd.f32 %v7234, %v7316
        %v7703 = vadd.f32 %v7235, %v7317
        %v7704 = vadd.f32 %v7236, %v7318
        %v7705 = vadd.f32 %v7237, %v7319
        %v7706 = vadd.f32 %v7238, %v7320
        %v7707 = vadd.f32 %v7239, %v7321
        %v7708 = vadd.f32 %v7240, %v7322
        %v7709 = vadd.f32 %v7241, %v7323
        %v7710 = vadd.f32 %v7425, %v7516
        %v7711 = vadd.f32 %v7408, %v7499
        %v7712 = vadd.f32 %v7409, %v7500
        %v7713 = vadd.f32 %v7410, %v7501
        %v7714 = vadd.f32 %v7411, %v7502
        %v7715 = vadd.f32 %v7412, %v7503
        %v7716 = vadd.f32 %v7413, %v7504
        %v7717 = vadd.f32 %v7414, %v7505
        %v7718 = vadd.f32 %v7415, %v7506
        %v7719 = vadd.f32 %v7608, %v7700
        %v7720 = vadd.f32 %v7591, %v7683
        %v7721 = vadd.f32 %v7592, %v7684
        %v7722 = vadd.f32 %v7593, %v7685
        %v7723 = vadd.f32 %v7594, %v7686
        %v7724 = vadd.f32 %v7595, %v7687
        %v7725 = vadd.f32 %v7596, %v7688
        %v7726 = vadd.f32 %v7597, %v7689
        %v7727 = vadd.f32 %v7598, %v7690
        %v7728 = vadd.f32 %v7701, %v7710
        %v7729 = vadd.f32 %v7702, %v7711
        %v7730 = vadd.f32 %v7703, %v7712
        %v7731 = vadd.f32 %v7704, %v7713
        %v7732 = vadd.f32 %v7705, %v7714
        %v7733 = vadd.f32 %v7706, %v7715
        %v7734 = vadd.f32 %v7707, %v7716
        %v7735 = vadd.f32 %v7708, %v7717
        %v7736 = vadd.f32 %v7709, %v7718
        %v7737 = vadd.f32 %v7728, %v7719
        %v7738 = vadd.f32 %v7729, %v7720
        %v7739 = vadd.f32 %v7730, %v7721
        %v7740 = vadd.f32 %v7731, %v7722
        %v7741 = vadd.f32 %v7732, %v7723
        %v7742 = vadd.f32 %v7733, %v7724
        %v7743 = vadd.f32 %v7734, %v7725
        %v7744 = vadd.f32 %v7735, %v7726
        %v7745 = vadd.f32 %v7736, %v7727
        %7746 = vst [vmem:[%s513] sm:$0xff] %v7737
        %7747 = vst [vmem:[%s513 + $0x8] sm:$0xff] %v7738
        %7748 = vst [vmem:[%s513 + $0x10] sm:$0xff] %v7739
        %7749 = vst [vmem:[%s513 + $0x18] sm:$0xff] %v7740
        %7750 = vst [vmem:[%s513 + $0x20] sm:$0xff] %v7741
        %7751 = vst [vmem:[%s513 + $0x28] sm:$0xff] %v7742
        %7752 = vst [vmem:[%s513 + $0x30] sm:$0xff] %v7743
        %7753 = vst [vmem:[%s513 + $0x38] sm:$0xff] %v7744
        %7754 = vst [vmem:[%s513 + $0x40] sm:$0xff] %v7745
        %p7755 = scmp.lt.s32.totalorder %s33, 1
        %s7756 = scalar_select %p7755, %s33, 1
        %s7757 = smul.addr %s7756, 9
        %s7758 = smul.addr %s7757, 8
        %s7759 = scalar_lea.vmem %s9, %s7758
        %s7760 = sand.u32 %s261, 1
        %s7761 = sand.u32 %s261, 1
        %s7762 = smul.addr %s7761, 48
        %s7763 = scalar_lea.vmem [#allocation16], %s7762
        %s7764 = sand.u32 %s287, 1
        %s7765 = sand.u32 %s287, 1
        %s7766 = smul.addr %s7765, 16
        %s7767 = scalar_lea.vmem [#allocation17], %s7766
        %s7768 = sand.u32 %s313, 1
        %s7769 = scalar_lea.sflag [#allocation7], %s7768
        %s7770 = sand.u32 %s313, 1
        %s7771 = smul.addr %s7770, 8
        %s7772 = scalar_lea.vmem [#allocation18], %s7771
        // Predicated region
        $region81: #{fmwn_forward.1} parent=55 // pred_check
          %p7773 = pneg %p245
        $region82: #{fmwn_forward.1} parent=55 // pred_check_branch
          %7775 = sbr.rel (%p7773) target = $region84
        $region83: #{fmwn_forward.1} parent=55 // pred_region
          _
        $region84: #{fmwn_forward.1} parent=55 // pred_fallthru
          _
        // Predicated region
        $region85: #{fmwn_forward.1} parent=55 // pred_check
          %p7776 = pneg %p271
        $region86: #{fmwn_forward.1} parent=55 // pred_check_branch
          %7778 = sbr.rel (%p7776) target = $region88
        $region87: #{fmwn_forward.1} parent=55 // pred_region
          %s7779 = smul.addr %s33, 3
          %s7780 = smul.addr %s7779, 8
          %s7781 = scalar_lea.vmem %s10, %s7780
          // Predicated region
          $region89: #{fmwn_forward.1} parent=87 // pred_check
            _
          $region90: #{fmwn_forward.1} parent=87 // pred_check_branch
            %7783 = sbr.rel (0) target = $region92
          $region91: #{fmwn_forward.1} parent=87 // pred_region
            // Predicated region
            $region93: #{fmwn_forward.1} parent=91 // pred_check
              _
            $region94: #{fmwn_forward.1} parent=91 // pred_check_branch
              %7785 = sbr.rel (0) target = $region96
            $region95: #{fmwn_forward.1} parent=91 // pred_region
              loop: start=0, step=1, limit=1
              $region97: #{fmwn_forward.1} parent=95 // loop_pre_header
                _
              $region98: #{fmwn_forward.1} parent=95 // loop_header
                %s7787 = sphi 0, %s7791
                %p7788 = scmp.ge.s32.totalorder %s7787, 1
                %s7792 = sphi %s7763, %s7763
                %s7793 = sphi %s7781, %s7781
              $region99: #{fmwn_forward.1} parent=95 // loop_header_branch
                %7790 = sbr.rel (%p7788) target = $region103
              $region100: #{fmwn_forward.1} parent=95 // loop_body
                %v7794 = vld [vmem:[%s7792] sm:$0xff]
                %7795 = vst [vmem:[%s7793] sm:$0xff] %v7794
                %v7796 = vld [vmem:[%s7792 + $0x8] sm:$0xff]
                %7797 = vst [vmem:[%s7793 + $0x8] sm:$0xff] %v7796
                %v7798 = vld [vmem:[%s7792 + $0x10] sm:$0xff]
                %7799 = vst [vmem:[%s7793 + $0x10] sm:$0xff] %v7798
                %v7800 = vld [vmem:[%s7792 + $0x18] sm:$0xff]
                %7801 = vst [vmem:[%s7793 + $0x30] sm:$0xff] %v7800
                %v7802 = vld [vmem:[%s7792 + $0x20] sm:$0xff]
                %7803 = vst [vmem:[%s7793 + $0x38] sm:$0xff] %v7802
                %v7804 = vld [vmem:[%s7792 + $0x28] sm:$0xff]
                %7805 = vst [vmem:[%s7793 + $0x40] sm:$0xff] %v7804
              $region101: #{fmwn_forward.1} parent=95 // loop_footer
                %s7791 = sadd.s32 1, %s7787
              $region102: #{fmwn_forward.1} parent=95 // loop_footer_branch
                %7786 = sbr.rel target = $region98
              $region103: #{fmwn_forward.1} parent=95 // loop_exit
                _
            $region96: #{fmwn_forward.1} parent=91 // pred_fallthru
              _
            // Predicated region
            $region104: #{fmwn_forward.1} parent=91 // pred_check
              _
            $region105: #{fmwn_forward.1} parent=91 // pred_check_branch
              %7807 = sbr.rel target = $region107
            $region106: #{fmwn_forward.1} parent=91 // pred_region
              _
            $region107: #{fmwn_forward.1} parent=91 // pred_fallthru
              _
          $region92: #{fmwn_forward.1} parent=87 // pred_fallthru
            _
          %7808 = vnop
        $region88: #{fmwn_forward.1} parent=55 // pred_fallthru
          _
        // Predicated region
        $region108: #{fmwn_forward.1} parent=55 // pred_check
          %p7809 = pneg %p297
        $region109: #{fmwn_forward.1} parent=55 // pred_check_branch
          %7811 = sbr.rel (%p7809) target = $region111
        $region110: #{fmwn_forward.1} parent=55 // pred_region
          %s7812 = smul.addr %s33, 8
          %s7813 = scalar_lea.vmem %s11, %s7812
          // Predicated region
          $region112: #{fmwn_forward.1} parent=110 // pred_check
            _
          $region113: #{fmwn_forward.1} parent=110 // pred_check_branch
            %7815 = sbr.rel (0) target = $region115
          $region114: #{fmwn_forward.1} parent=110 // pred_region
            // Predicated region
            $region116: #{fmwn_forward.1} parent=114 // pred_check
              _
            $region117: #{fmwn_forward.1} parent=114 // pred_check_branch
              %7817 = sbr.rel (0) target = $region119
            $region118: #{fmwn_forward.1} parent=114 // pred_region
              // Predicated region
              $region131: #{fmwn_forward.1} parent=118 // pred_check
                _
              $region132: #{fmwn_forward.1} parent=118 // pred_check_branch
                %7834 = sbr.rel (0) target = $region134
              $region133: #{fmwn_forward.1} parent=118 // pred_region
                loop: start=0, step=1, limit=1
                $region135: #{fmwn_forward.1} parent=133 // loop_pre_header
                  _
                $region136: #{fmwn_forward.1} parent=133 // loop_header
                  %s7836 = sphi 0, %s7840
                  %p7837 = scmp.ge.s32.totalorder %s7836, 1
                  %s7841 = sphi %s7767, %s7767
                  %s7842 = sphi %s7813, %s7813
                $region137: #{fmwn_forward.1} parent=133 // loop_header_branch
                  %7839 = sbr.rel (%p7837) target = $region141
                $region138: #{fmwn_forward.1} parent=133 // loop_body
                  %v7843 = vld [vmem:[%s7841] sm:$0xff]
                  %7844 = vst [vmem:[%s7842] sm:$0xff] %v7843
                  %v7845 = vld [vmem:[%s7841 + $0x8] sm:$0xff]
                  %7846 = vst [vmem:[%s7842 + $0x10] sm:$0xff] %v7845
                $region139: #{fmwn_forward.1} parent=133 // loop_footer
                  %s7840 = sadd.s32 1, %s7836
                $region140: #{fmwn_forward.1} parent=133 // loop_footer_branch
                  %7835 = sbr.rel target = $region136
                $region141: #{fmwn_forward.1} parent=133 // loop_exit
                  _
              $region134: #{fmwn_forward.1} parent=118 // pred_fallthru
                _
              // Predicated region
              $region142: #{fmwn_forward.1} parent=118 // pred_check
                _
              $region143: #{fmwn_forward.1} parent=118 // pred_check_branch
                %7848 = sbr.rel target = $region145
              $region144: #{fmwn_forward.1} parent=118 // pred_region
                _
              $region145: #{fmwn_forward.1} parent=118 // pred_fallthru
                _
            $region119: #{fmwn_forward.1} parent=114 // pred_fallthru
              _
            // Predicated region
            $region120: #{fmwn_forward.1} parent=114 // pred_check
              _
            $region121: #{fmwn_forward.1} parent=114 // pred_check_branch
              %7819 = sbr.rel target = $region123
            $region122: #{fmwn_forward.1} parent=114 // pred_region
              loop: start=0, step=1, limit=1
              $region124: #{fmwn_forward.1} parent=122 // loop_pre_header
                _
              $region125: #{fmwn_forward.1} parent=122 // loop_header
                %s7822 = sphi 0, %s7826
                %p7823 = scmp.ge.s32.totalorder %s7822, 1
                %s7827 = sphi %s7767, %s7767
                %s7828 = sphi %s7813, %s7813
              $region126: #{fmwn_forward.1} parent=122 // loop_header_branch
                %7825 = sbr.rel (%p7823) target = $region130
              $region127: #{fmwn_forward.1} parent=122 // loop_body
                %v7829 = vld [vmem:[%s7827] sm:$0xff]
                %7830 = vst [vmem:[%s7828] sm:$0xff] %v7829
                %v7831 = vld [vmem:[%s7827 + $0x8] sm:$0xff]
                %7832 = vst [vmem:[%s7828 + $0x10] sm:$0xff] %v7831
              $region128: #{fmwn_forward.1} parent=122 // loop_footer
                %s7826 = sadd.s32 1, %s7822
              $region129: #{fmwn_forward.1} parent=122 // loop_footer_branch
                %7821 = sbr.rel target = $region125
              $region130: #{fmwn_forward.1} parent=122 // loop_exit
                _
            $region123: #{fmwn_forward.1} parent=114 // pred_fallthru
              _
          $region115: #{fmwn_forward.1} parent=110 // pred_fallthru
            _
          %7849 = vnop
        $region111: #{fmwn_forward.1} parent=55 // pred_fallthru
          _
        // Predicated region
        $region146: #{fmwn_forward.1} parent=55 // pred_check
          %p7850 = pneg %p323
        $region147: #{fmwn_forward.1} parent=55 // pred_check_branch
          %7852 = sbr.rel (%p7850) target = $region149
        $region148: #{fmwn_forward.1} parent=55 // pred_region
          %s7854 = ssub.s32 128, 128
          %7855 = vsyncadd %s7769, %s7854
          %s7856 = smul.addr %s33, 128
          %s7857 = scalar_lea.hbm %s12, %s7856
          %s7859 = sshll.u32 %s7772, 4
          %s7860 = int_to_ptr.vmem [resolvable:$true] %s7859
          %7862 = dma.vmem_to_hbm [thread:$0]  %s7860, 128, %s7857, %s7769
        $region149: #{fmwn_forward.1} parent=55 // pred_fallthru
          _
      $region56: #{fmwn_forward.1} parent=5 // pred_fallthru
        _
      %p7863 = scmp.le.s32.totalorder 2, %s28
      // Predicated region
      $region150: #{fmwn_forward.1} parent=5 // pred_check
        %p7864 = pneg %p7863
      $region151: #{fmwn_forward.1} parent=5 // pred_check_branch
        %7866 = sbr.rel (%p7864) target = $region153
      $region152: #{fmwn_forward.1} parent=5 // pred_region
        %s7867 = ssub.s32 %s28, 2
        // Predicated region
        $region154: #{fmwn_forward.1} parent=152 // pred_check
          %p7868 = pneg %p251
        $region155: #{fmwn_forward.1} parent=152 // pred_check_branch
          %7870 = sbr.rel (%p7868) target = $region157
        $region156: #{fmwn_forward.1} parent=152 // pred_region
          %p7871 = scmp.lt.s32.totalorder %s34, 1
          %s7872 = scalar_select %p7871, %s34, 1
          %s7873 = smul.addr %s7872, 9
          %s7874 = smul.addr %s7873, 8
          %s7875 = scalar_lea.vmem %s9, %s7874
        $region157: #{fmwn_forward.1} parent=152 // pred_fallthru
          _
        // Predicated region
        $region158: #{fmwn_forward.1} parent=152 // pred_check
          %p7876 = pneg %p277
        $region159: #{fmwn_forward.1} parent=152 // pred_check_branch
          %7878 = sbr.rel (%p7876) target = $region161
        $region160: #{fmwn_forward.1} parent=152 // pred_region
          %s7879 = sand.u32 %s262, 1
          %s7880 = sand.u32 %s262, 1
          %s7881 = smul.addr %s7880, 48
          %s7882 = scalar_lea.vmem [#allocation16], %s7881
        $region161: #{fmwn_forward.1} parent=152 // pred_fallthru
          _
        // Predicated region
        $region162: #{fmwn_forward.1} parent=152 // pred_check
          %p7883 = pneg %p303
        $region163: #{fmwn_forward.1} parent=152 // pred_check_branch
          %7885 = sbr.rel (%p7883) target = $region165
        $region164: #{fmwn_forward.1} parent=152 // pred_region
          %s7886 = sand.u32 %s288, 1
          %s7887 = sand.u32 %s288, 1
          %s7888 = smul.addr %s7887, 16
          %s7889 = scalar_lea.vmem [#allocation17], %s7888
        $region165: #{fmwn_forward.1} parent=152 // pred_fallthru
          _
        // Predicated region
        $region166: #{fmwn_forward.1} parent=152 // pred_check
          %p7890 = pneg %p329
        $region167: #{fmwn_forward.1} parent=152 // pred_check_branch
          %7892 = sbr.rel (%p7890) target = $region169
        $region168: #{fmwn_forward.1} parent=152 // pred_region
          %s7893 = sand.u32 %s314, 1
          %s7894 = scalar_lea.sflag [#allocation7], %s7893
          %s7895 = sand.u32 %s314, 1
          %s7896 = smul.addr %s7895, 8
          %s7897 = scalar_lea.vmem [#allocation18], %s7896
          %7898 = dma.done %s7894, 128
        $region169: #{fmwn_forward.1} parent=152 // pred_fallthru
          _
      $region153: #{fmwn_forward.1} parent=5 // pred_fallthru
        _
    $region6: #{fmwn_forward.1} parent=1 // loop_footer
      %s32 = sadd.s32 1, %s28
    $region7: #{fmwn_forward.1} parent=1 // loop_footer_branch
      %27 = sbr.rel target = $region3
    $region8: #{fmwn_forward.1} parent=1 // loop_exit
      _
    %7899 = vsyncpa [#allocation6], 1
    %s7900 = scalar_lea.sflag [#allocation6], 1
    %7901 = vsyncpa %s7900, 1
    %7902 = vsyncpa [#allocation10], 1
    %7903 = vsyncpa [#allocation7], 1
    %s7904 = scalar_lea.sflag [#allocation7], 1
    %7905 = vsyncpa %s7904, 1
    %7906 = vsyncpa [#allocation8], 1
    %s7907 = scalar_lea.sflag [#allocation8], 1
    %7908 = vsyncpa %s7907, 1
    %7909 = vsyncpa [#allocation14], 1

</llo_original>
